<compile_context>
chip_gen: v5e
topology: v5e:2x2
jax: 0.10.0
libtpu: 0.0.40
codegen_flags: <defaults>
</compile_context>

<pallas_src>
import numpy as np
import jax
import jax.numpy as jnp
from jax.experimental import pallas as pl
from jax.experimental.pallas import tpu as pltpu

# ----------------------------------------------------------------------------------------
# Configuration (MLPConfig: mv_channels=[4, 8, 4], s_channels=[4, 8, 4], activation=gelu,
# dropout_prob=None).  Hidden channels of GeometricBilinear = out_mv // 2 (GATr default).
# ----------------------------------------------------------------------------------------
C0, C1, C2 = 4, 8, 4          # multivector channels per layer
S0, S1, S2 = 4, 8, 4          # scalar channels per layer
H = C1 // 2                   # hidden mv channels inside GeometricBilinear (4)
H16 = H * 16                  # 64
JW = 2 * H16                  # 128: one paired j-block [gp_j(64) | join_j(64)]
LRW = 16 * JW                 # 2048: left (or right) bilinear-operand slab width
SO_PAD = 8                    # [scalars(4), 1.0, 0, 0, 0] row block inside the weight stacks
XW = 128                      # packed input lane width
ONE_COL = C0 * 16 + S0        # 68: constant-1 lane
REF_COL = ONE_COL + 1         # 69: e0123 component of the reference multivector
W2W = 512                     # fused lin_out width: [val(256) | gate(256)]
ACTW = 256
OW = 128                      # output lane width: [mv_out(64) | s_out(4) | 0-pad]
W1W = 2 * LRW + W2W           # 4608
# TODO(synk): GradeDropout is omitted (config.dropout_prob=None); only the 3-entry channel
#             configuration (one GeometricBilinear + one gated EquiLinear block) is built.

# ----------------------------------------------------------------------------------------
# PGA(3,0,1) algebra tables, computed in-script (GATr blade ordering).
# ----------------------------------------------------------------------------------------
BLADES = [(), (0,), (1,), (2,), (3,),
          (0, 1), (0, 2), (0, 3), (1, 2), (1, 3), (2, 3),
          (0, 1, 2), (0, 1, 3), (0, 2, 3), (1, 2, 3), (0, 1, 2, 3)]
IDX = {b: i for i, b in enumerate(BLADES)}
METRIC = [0.0, 1.0, 1.0, 1.0]     # e0^2 = 0 (degenerate), e1^2 = e2^2 = e3^2 = 1


def _simplify(factors):
    coef = 1.0
    arr = list(factors)
    swapped = True
    while swapped:
        swapped = False
        for i in range(len(arr) - 1):
            if arr[i] > arr[i + 1]:
                arr[i], arr[i + 1] = arr[i + 1], arr[i]
                coef = -coef
                swapped = True
    out, i = [], 0
    while i < len(arr):
        if i + 1 < len(arr) and arr[i] == arr[i + 1]:
            coef *= METRIC[arr[i]]
            i += 2
        else:
            out.append(arr[i])
            i += 1
    return coef, tuple(out)


def _blade_gp(a, b):
    return _simplify(a + b)


def _blade_wedge(a, b):
    if set(a) & set(b):
        return 0.0, ()
    return _simplify(a + b)


def _build_tables():
    gp = np.zeros((16, 16, 16), np.float32)
    for j, a in enumerate(BLADES):
        for k, b in enumerate(BLADES):
            c, r = _blade_gp(a, b)
            if c != 0.0:
                gp[IDX[r], j, k] += c
    dual_idx = np.zeros(16, np.int64)
    dual_sign = np.zeros(16, np.float32)
    for i, a in enumerate(BLADES):
        comp = tuple(x for x in (0, 1, 2, 3) if x not in a)
        s, _ = _simplify(a + comp)
        dual_idx[i] = IDX[comp]
        dual_sign[i] = s
    join = np.zeros((16, 16, 16), np.float32)
    for j in range(16):
        for k in range(16):
            c, r = _blade_wedge(BLADES[int(dual_idx[j])], BLADES[int(dual_idx[k])])
            if c != 0.0:
                d = int(np.where(dual_idx == IDX[r])[0][0])
                join[d, j, k] += dual_sign[j] * dual_sign[k] * c * dual_sign[d]
    # 9 Pin(3,0,1)-equivariant linear basis maps: 5 grade projections + 4 e0-multiplications
    lin = np.zeros((9, 16, 16), np.float32)
    for i, b in enumerate(BLADES):
        g = len(b)
        lin[g, i, i] = 1.0
        if 0 not in b and g <= 3:
            lin[5 + g, IDX[(0,) + b], i] = 1.0
    return gp, join, lin


GP_TABLE, JOIN_TABLE, LIN_BASIS = _build_tables()

# ----------------------------------------------------------------------------------------
# Parameters (deterministic synthetic init; shapes follow EquiLinear / GeometricBilinear)
# ----------------------------------------------------------------------------------------
def _init_equilinear(key, in_mv, out_mv, in_s, out_s):
    ks = jax.random.split(key, 6)
    p = {
        "w": jax.random.normal(ks[0], (out_mv, in_mv, 9), jnp.float32) / np.sqrt(3.0 * in_mv),
        "b": 0.1 * jax.random.normal(ks[1], (out_mv,), jnp.float32),
        "w_s2mv": (jax.random.normal(ks[2], (out_mv, in_s), jnp.float32) / np.sqrt(in_s)
                   if in_s else None),
    }
    if out_s:
        p["w_mvs2s"] = jax.random.normal(ks[3], (out_s, in_mv), jnp.float32) / np.sqrt(in_mv)
        p["b_mvs2s"] = 0.1 * jax.random.normal(ks[4], (out_s,), jnp.float32)
        p["w_s2s"] = (jax.random.normal(ks[5], (out_s, in_s), jnp.float32) / np.sqrt(in_s)
                      if in_s else None)
    else:
        p["w_mvs2s"] = p["b_mvs2s"] = p["w_s2s"] = None
    return p


def init_geomlp_params(key):
    ks = jax.random.split(key, 6)
    bilinear = {
        "lin_left": _init_equilinear(ks[0], C0, H, S0, 0),
        "lin_right": _init_equilinear(ks[1], C0, H, S0, 0),
        "lin_left_join": _init_equilinear(ks[2], C0, H, S0, 0),
        "lin_right_join": _init_equilinear(ks[3], C0, H, S0, 0),
        "lin_out": _init_equilinear(ks[4], 2 * H, C1, S0, S1),
    }
    final = _init_equilinear(ks[5], C1, C2, S1, S2)
    return {"bilinear": bilinear, "final": final}


# ----------------------------------------------------------------------------------------
# Fused weight-matrix construction (glue; plain numpy, runs once per parameter set)
# ----------------------------------------------------------------------------------------
def _equilinear_mv_mats(p, in_mv, out_mv, in_s, s_pad):
    """mv_out_flat = mv_flat @ Wmv + so @ Wso  with so = [scalars, 1, 0-pad]."""
    w = np.asarray(p["w"], np.float32)
    Wmv = np.einsum("ocb,bij->cjoi", w, LIN_BASIS).reshape(in_mv * 16, out_mv * 16)
    Wso = np.zeros((s_pad, out_mv * 16), np.float32)
    b = np.asarray(p["b"], np.float32)
    for o in range(out_mv):
        if p["w_s2mv"] is not None:
            Wso[:in_s, o * 16] = np.asarray(p["w_s2mv"], np.float32)[o]
        Wso[in_s, o * 16] = b[o]           # bias lives on the scalar blade
    return Wmv.astype(np.float32), Wso


def _equilinear_s_mats(p, in_mv, out_s, in_s, s_pad):
    """s_out = mv_flat @ Wmv + so @ Wso."""
    Wmv = np.zeros((in_mv * 16, out_s), np.float32)
    wm = np.asarray(p["w_mvs2s"], np.float32)
    for c in range(in_mv):
        Wmv[c * 16, :] = wm[:, c]
    Wso = np.zeros((s_pad, out_s), np.float32)
    if p["w_s2s"] is not None:
        Wso[:in_s, :] = np.asarray(p["w_s2s"], np.float32).T
    Wso[in_s, :] = np.asarray(p["b_mvs2s"], np.float32)
    return Wmv, Wso


def _final_mats(p, in_mv, out_mv, out_s, in_s):
    w = np.asarray(p["w"], np.float32)
    Wmv_mv = np.einsum("ocb,bij->cjoi", w, LIN_BASIS).reshape(in_mv * 16, out_mv * 16)
    Wmv_s = np.zeros((in_s, out_mv * 16), np.float32)
    bmv = np.zeros((1, out_mv * 16), np.float32)
    for o in range(out_mv):
        Wmv_s[:, o * 16] = np.asarray(p["w_s2mv"], np.float32)[o]
        bmv[0, o * 16] = np.asarray(p["b"], np.float32)[o]
    Ws_mv = np.zeros((in_mv * 16, out_s), np.float32)
    wm = np.asarray(p["w_mvs2s"], np.float32)
    for c in range(in_mv):
        Ws_mv[c * 16, :] = wm[:, c]
    Ws_s = np.asarray(p["w_s2s"], np.float32).T
    bs = np.asarray(p["b_mvs2s"], np.float32)[None, :]
    return Wmv_mv.astype(np.float32), Wmv_s, bmv, Ws_mv, Ws_s, bs


def _make_E(j, h_ch):
    """Broadcast component j of each channel to all 16 slots of that channel."""
    E = np.zeros((h_ch * 16, h_ch * 16), np.float32)
    for h in range(h_ch):
        E[h * 16 + j, h * 16:(h + 1) * 16] = 1.0
    return E


def _make_M(j, h_ch, table):
    """Per-channel application of table[i, j, k] to the right operand."""
    M = np.zeros((h_ch * 16, h_ch * 16), np.float32)
    blk = table[:, j, :].T                       # (k, i)
    for h in range(h_ch):
        M[h * 16:(h + 1) * 16, h * 16:(h + 1) * 16] = blk
    return M


def build_fused_weights(params):
    pb = params["bilinear"]
    WLmv, WLso = _equilinear_mv_mats(pb["lin_left"], C0, H, S0, SO_PAD)
    WRmv, WRso = _equilinear_mv_mats(pb["lin_right"], C0, H, S0, SO_PAD)
    WJLmv, WJLso = _equilinear_mv_mats(pb["lin_left_join"], C0, H, S0, SO_PAD)
    WJRmv, WJRso = _equilinear_mv_mats(pb["lin_right_join"], C0, H, S0, SO_PAD)

    def stack_rows(Wmv, Wso):
        # (XW, out): rows 0:64 <- mv path, rows 64:72 <- [scalars, 1, ref(unused=0), 0, 0] path
        out = np.zeros((XW, Wmv.shape[1]), np.float32)
        out[:C0 * 16] = Wmv
        out[C0 * 16:C0 * 16 + SO_PAD] = Wso
        return out

    SL, SR = stack_rows(WLmv, WLso), stack_rows(WRmv, WRso)
    SJL, SJR = stack_rows(WJLmv, WJLso), stack_rows(WJRmv, WJRso)

    # Left / right bilinear-operand slabs, paired per j as [gp_j(64) | join_j(64)] so the
    # kernel's j-reduction is 16 lane-aligned 128-wide VPU multiply-adds (no Rsum matmul).
    # TODO(synk): (measure first) the L slab is a rank-1 E_j expansion; computing the left
    #             projection once and lane-replicating in-kernel would cut matmul-1 width
    #             ~40% but costs XLU relayout work — prototype before committing.
    L_blocks, R_blocks = [], []
    for j in range(16):
        Ej = _make_E(j, H)
        L_blocks.append(np.concatenate([SL @ Ej, SJL @ Ej], axis=1))                # (128, 128)
        R_blocks.append(np.concatenate([SR @ _make_M(j, H, GP_TABLE),
                                        SJR @ _make_M(j, H, JOIN_TABLE)], axis=1))  # (128, 128)
    L = np.concatenate(L_blocks, axis=1)        # (128, 2048)
    R = np.concatenate(R_blocks, axis=1)        # (128, 2048)

    # lin_out of the bilinear block, fused with the scalar-gated nonlinearity:
    #   columns [0:128]=mv1, [128:136]=1.0 (value for the scalar head), [256:384]=gate pre-act
    #   (mv1 @ Sel), [384:392]=s1 (gates the constant-1 -> gelu(s1)); everything else zero.
    W2mv_full, W2so_full = _equilinear_mv_mats(pb["lin_out"], 2 * H, C1, S0, SO_PAD)
    W2smv_full, W2sso_full = _equilinear_s_mats(pb["lin_out"], 2 * H, S1, S0, SO_PAD)
    Sel = np.zeros((C1 * 16, C1 * 16), np.float32)
    for c in range(C1):
        Sel[c * 16, c * 16:(c + 1) * 16] = 1.0

    W2g = np.zeros((2 * H16, W2W), np.float32)            # gpjn path (K = 128)
    W2g[:, 0:C1 * 16] = W2mv_full
    W2g[:, 256:256 + C1 * 16] = W2mv_full @ Sel
    W2g[:, 256 + C1 * 16:256 + C1 * 16 + S1] = W2smv_full

    W2x = np.zeros((XW, W2W), np.float32)                 # x path (so / bias), rows 64:72 live
    W2x[C0 * 16:C0 * 16 + SO_PAD, 0:C1 * 16] = W2so_full
    W2x[ONE_COL, C1 * 16:C1 * 16 + S1] = 1.0              # constant-1 values for the scalar head
    W2x[C0 * 16:C0 * 16 + SO_PAD, 256:256 + C1 * 16] = W2so_full @ Sel
    W2x[C0 * 16:C0 * 16 + SO_PAD, 256 + C1 * 16:256 + C1 * 16 + S1] = W2sso_full

    # One big layer-1 weight: [left j-blocks | right j-blocks | lin_out x-path]
    W1 = np.concatenate([L, R, W2x], axis=1)              # (128, 4608)
    assert W1.shape == (XW, W1W)

    # Final EquiLinear, stacked on act = [mv_gated(128) | gelu(s1)(8) | zeros(120)]
    W3mv_mv, W3mv_s, b3mv, W3s_mv, W3s_s, b3s = _final_mats(params["final"], C1, C2, S2, S1)
    W3 = np.zeros((ACTW, OW), np.float32)
    W3[0:C1 * 16, 0:C2 * 16] = W3mv_mv
    W3[0:C1 * 16, C2 * 16:C2 * 16 + S2] = W3s_mv
    W3[C1 * 16:C1 * 16 + S1, 0:C2 * 16] = W3mv_s
    W3[C1 * 16:C1 * 16 + S1, C2 * 16:C2 * 16 + S2] = W3s_s
    b3 = np.zeros((1, OW), np.float32)
    b3[0, 0:C2 * 16] = b3mv[0]
    b3[0, C2 * 16:C2 * 16 + S2] = b3s[0]

    return W1, W2g, W3, b3


# ----------------------------------------------------------------------------------------
# Pallas kernel: full GeoMLP forward for one tile of tokens (3 matmuls + VPU j-reduction)
# ----------------------------------------------------------------------------------------
def _geomlp_kernel(x_ref, w1_ref, w2_ref, w3_ref, consts_ref, out_ref):
    f32, bf16 = jnp.float32, jnp.bfloat16
    dot = lambda a, b: jnp.dot(a, b, preferred_element_type=f32)

    x = x_ref[...]                                         # (TN, 128) f32

    # matmul 1: all four bilinear operand projections + lin_out's scalar/bias path.
    # Stored in bf16 (halves the widest intermediate's VMEM traffic); f32 accumulation.
    t1 = dot(x.astype(bf16), w1_ref[...]).astype(bf16)     # (TN, 4608) bf16

    # GeometricBilinear j-reduction: 16 lane-aligned (TN,128) multiplies + 15 adds on the
    # VPU (replaces the old 2048x128 0/1 summing matmul on the MXU).  Each 128-wide block
    # pairs [gp_j(64) | join_j(64)] of the left vs right operand.
    gpjn = t1[:, 0:JW].astype(f32) * t1[:, LRW:LRW + JW].astype(f32)
    for j in range(1, 16):
        o = j * JW
        gpjn = gpjn + t1[:, o:o + JW].astype(f32) * t1[:, LRW + o:LRW + o + JW].astype(f32)

    # equivariant join: scale the join half (lanes 64:128) by the reference's e0123
    # component; precomputed lane masks avoid an iota + compare + select per tile.
    ref_fac = x[:, REF_COL:REF_COL + 1]                    # (TN, 1)
    scale = consts_ref[0:1, :] + consts_ref[1:2, :] * ref_fac
    gpjn = gpjn * scale

    # lin_out (+ gate pre-activation): values | gate; the x/bias path rides inside t1.
    t2 = dot(gpjn.astype(bf16), w2_ref[...]) + t1[:, 2 * LRW:2 * LRW + W2W]    # (TN, 512) f32

    # ScalarGatedNonlinearity, folded: act = [mv1*gelu(gate) | 1*gelu(s1) | 0]
    act = t2[:, 0:ACTW] * jax.nn.gelu(t2[:, ACTW:2 * ACTW], approximate=True)

    # final EquiLinear -> single lane-dense output [mv_out(64) | s_out(4) | 0-pad] + bias
    out_ref[...] = dot(act.astype(bf16), w3_ref[...]) + consts_ref[2:3, :]


def make_geomlp_fn(params, tile_n=512, vmem_limit_mb=48):
    """Builds fused weights once (host side) and returns a jitted GeoMLP forward.

    tile_n=512 / 48 MiB is safe on v5e/v6e (128 MiB VMEM) and v7x (64 MiB per TC);
    on v5e/v6e tile_n=1024 with vmem_limit_mb=96 also fits.
    """
    assert tile_n % 8 == 0
    W1, W2g, W3, b3 = build_fused_weights(params)
    w1 = jnp.asarray(W1, jnp.bfloat16)
    w2 = jnp.asarray(W2g, jnp.bfloat16)
    w3 = jnp.asarray(W3, jnp.bfloat16)
    # TODO(synk): on v7x, fp8 for W1 / x of matmul 1 is a possible further MXU-rate win;
    #             treat as an experiment and re-validate against the tolerance first.

    # Small constant slab: row0 = gp-lane mask, row1 = join-lane mask, row2 = final bias.
    consts_np = np.zeros((8, OW), np.float32)
    consts_np[0, :H16] = 1.0          # gp lanes keep scale 1
    consts_np[1, H16:2 * H16] = 1.0   # join lanes are scaled by the reference e0123
    consts_np[2, :] = b3[0]
    consts = jnp.asarray(consts_np)

    @jax.jit
    def fn(multivectors, scalars, reference_mv):
        batch_shape = multivectors.shape[:-2]
        N = int(np.prod(batch_shape)) if batch_shape else 1

        mv_flat = multivectors.reshape(N, C0 * 16).astype(jnp.float32)
        s_flat = scalars.reshape(N, S0).astype(jnp.float32)
        ref_fac = reference_mv.reshape(N, 16)[:, 15:16].astype(jnp.float32)
        # TODO(synk): this lane-dense packing costs one extra (N,128) f32 HBM round-trip;
        #             assembling the slab in-kernel from separate mv/s/ref inputs would
        #             remove it (low priority per review).
        x = jnp.concatenate(
            [mv_flat, s_flat, jnp.ones((N, 1), jnp.float32), ref_fac,
             jnp.zeros((N, XW - C0 * 16 - S0 - 2), jnp.float32)], axis=-1)

        # Keep the grid >= 2 steps whenever there are enough rows so that
        # dimension_semantics=("parallel",) gives work to both v7x TensorCores and the
        # input/output pipeline overlaps compute with DMA.
        tn = tile_n
        half = ((N + 1) // 2 + 7) // 8 * 8
        if half < tn:
            tn = max(half, 8)

        n_pad = (-N) % tn                                  # host-side token padding
        if n_pad:
            x = jnp.concatenate([x, jnp.zeros((n_pad, XW), jnp.float32)], axis=0)
        Np = N + n_pad

        out = pl.pallas_call(
            _geomlp_kernel,
            out_shape=jax.ShapeDtypeStruct((Np, OW), jnp.float32),
            grid_spec=pltpu.PrefetchScalarGridSpec(
                num_scalar_prefetch=0,
                grid=(Np // tn,),
                in_specs=[
                    pl.BlockSpec((tn, XW), lambda i: (i, 0)),
                    # Constant-index weight blocks: DMA'd once, resident across the grid.
                    # (Single-buffering them via pl.Buffered(1) would save ~1.3 MiB of
                    # VMEM; left at the default since headroom is ample at these tiles.)
                    pl.BlockSpec(w1.shape, lambda i: (0, 0)),
                    pl.BlockSpec(w2.shape, lambda i: (0, 0)),
                    pl.BlockSpec(w3.shape, lambda i: (0, 0)),
                    pl.BlockSpec(consts.shape, lambda i: (0, 0)),
                ],
                out_specs=pl.BlockSpec((tn, OW), lambda i: (i, 0)),
            ),
            compiler_params=pltpu.CompilerParams(
                dimension_semantics=("parallel",),
                vmem_limit_bytes=vmem_limit_mb * 1024 * 1024,
            ),
        )(x, w1, w2, w3, consts)

        out = out[:N]
        mv_out = out[:, :C2 * 16].reshape(*batch_shape, C2, 16)
        s_out = out[:, C2 * 16:C2 * 16 + S2].reshape(*batch_shape, S2)
        return mv_out, s_out

    return fn


# ----------------------------------------------------------------------------------------
# Pure-JAX reference (built from the unfused parameters, validates the fusion)
# ----------------------------------------------------------------------------------------
_HI = jax.lax.Precision.HIGHEST


def _equi_linear_ref(p, mv, s):
    B = jnp.asarray(LIN_BASIS)
    out = jnp.einsum("yxb,bij,...xj->...yi", p["w"], B, mv, precision=_HI)
    out = out.at[..., 0].add(p["b"])
    if p["w_s2mv"] is not None and s is not None:
        out = out.at[..., 0].add(jnp.einsum("ys,...s->...y", p["w_s2mv"], s, precision=_HI))
    if p["w_mvs2s"] is not None:
        s_out = jnp.einsum("yx,...x->...y", p["w_mvs2s"], mv[..., 0], precision=_HI) + p["b_mvs2s"]
        if p["w_s2s"] is not None and s is not None:
            s_out = s_out + jnp.einsum("ys,...s->...y", p["w_s2s"], s, precision=_HI)
    else:
        s_out = None
    return out, s_out


def geomlp_reference(params, mv, s, ref):
    pb = params["bilinear"]
    gp_t, join_t = jnp.asarray(GP_TABLE), jnp.asarray(JOIN_TABLE)
    left = _equi_linear_ref(pb["lin_left"], mv, s)[0]
    right = _equi_linear_ref(pb["lin_right"], mv, s)[0]
    gp = jnp.einsum("ijk,...cj,...ck->...ci", gp_t, left, right, precision=_HI)
    lj = _equi_linear_ref(pb["lin_left_join"], mv, s)[0]
    rj = _equi_linear_ref(pb["lin_right_join"], mv, s)[0]
    jn = jnp.einsum("ijk,...cj,...ck->...ci", join_t, lj, rj, precision=_HI)
    jn = jn * ref[..., 15][..., None, None]
    h = jnp.concatenate([gp, jn], axis=-2)
    mv1, s1 = _equi_linear_ref(pb["lin_out"], h, s)
    mv2 = mv1 * jax.nn.gelu(mv1[..., 0:1], approximate=True)
    s2 = jax.nn.gelu(s1, approximate=True)
    return _equi_linear_ref(params["final"], mv2, s2)


# ----------------------------------------------------------------------------------------
if __name__ == "__main__":
    key = jax.random.PRNGKey(0)
    kp, kmv, ksc, kr = jax.random.split(key, 4)
    params = init_geomlp_params(kp)

    B, T = 4, 96                                  # 384 tokens -> adaptive tile 192 -> grid of 2
    mv = jax.random.normal(kmv, (B, T, C0, 16), jnp.float32)
    s = jax.random.normal(ksc, (B, T, S0), jnp.float32)
    ref = jax.random.normal(kr, (B, T, 16), jnp.float32)

    geomlp = make_geomlp_fn(params)               # fused weights built & uploaded once
    mv_out, s_out = jax.block_until_ready(geomlp(mv, s, ref))

    mv_ref_out, s_ref_out = geomlp_reference(params, mv, s, ref)

    assert mv_out.shape == (B, T, C2, 16) and s_out.shape == (B, T, S2)
    assert bool(jnp.all(jnp.isfinite(mv_out))) and bool(jnp.all(jnp.isfinite(s_out)))

    def _check(a, b, name):
        scale = float(jnp.maximum(jnp.max(jnp.abs(b)), 1.0))
        err = float(jnp.max(jnp.abs(a - b)))
        # bf16 weights + bf16 storage of the t1 intermediate (f32 accumulation throughout):
        # budget ~4% of the output scale.
        assert err <= 4e-2 * scale + 4e-2, f"{name}: max_err={err:.4f} scale={scale:.2f}"

    _check(mv_out, mv_ref_out, "mv_out")
    _check(s_out, s_ref_out, "s_out")
    print("KERNEL_OK")
</pallas_src>

<mosaic_0001>
module attributes {stable_mosaic.version = 11 : i64} {
  func.func @_geomlp_kernel(%arg0: i32, %arg1: memref<192x128xf32, #tpu.memory_space<vmem>>, %arg2: memref<128x4608xbf16, #tpu.memory_space<vmem>>, %arg3: memref<128x512xbf16, #tpu.memory_space<vmem>>, %arg4: memref<256x128xbf16, #tpu.memory_space<vmem>>, %arg5: memref<8x128xf32, #tpu.memory_space<vmem>>, %arg6: memref<192x128xf32, #tpu.memory_space<vmem>>) attributes {dimension_semantics = [#tpu.dimension_semantics<parallel>], iteration_bounds = array<i64: 2>, scalar_prefetch = 0 : i64, scratch_operands = 0 : i64, tpu.core_type = #tpu.core_type<tc>, window_params = [{transform_indices = @transform_0, window_bounds = array<i64: 192, 128>}, {pipeline_mode = #tpu.pipeline_mode<synchronous>, transform_indices = @transform_1, window_bounds = array<i64: 128, 4608>}, {pipeline_mode = #tpu.pipeline_mode<synchronous>, transform_indices = @transform_2, window_bounds = array<i64: 128, 512>}, {pipeline_mode = #tpu.pipeline_mode<synchronous>, transform_indices = @transform_3, window_bounds = array<i64: 256, 128>}, {pipeline_mode = #tpu.pipeline_mode<synchronous>, transform_indices = @transform_4, window_bounds = array<i64: 8, 128>}, {transform_indices = @transform_5, window_bounds = array<i64: 192, 128>}]} {
    %c0 = arith.constant 0 : index
    %c0_0 = arith.constant 0 : index
    %0 = vector.load %arg1[%c0, %c0_0] : memref<192x128xf32, #tpu.memory_space<vmem>>, vector<192x128xf32>
    %1 = arith.truncf %0 : vector<192x128xf32> to vector<192x128xbf16>
    %c0_1 = arith.constant 0 : index
    %c0_2 = arith.constant 0 : index
    %2 = vector.load %arg2[%c0_1, %c0_2] : memref<128x4608xbf16, #tpu.memory_space<vmem>>, vector<128x4608xbf16>
    %cst = arith.constant dense<0.000000e+00> : vector<192x4608xf32>
    %3 = tpu.matmul %1, %2, %cst {dimension_numbers = #tpu.dot_dimension_numbers<[1], [0], [0], [1], [0, 0, 1, 1], [], []>} : vector<192x128xbf16>, vector<128x4608xbf16>, vector<192x4608xf32> -> vector<192x4608xf32>
    %4 = arith.truncf %3 : vector<192x4608xf32> to vector<192x4608xbf16>
    %5 = vector.extract_strided_slice %4 {offsets = [0, 0], sizes = [192, 128], strides = [1, 1]} : vector<192x4608xbf16> to vector<192x128xbf16>
    %6 = arith.extf %5 : vector<192x128xbf16> to vector<192x128xf32>
    %7 = vector.extract_strided_slice %4 {offsets = [0, 2048], sizes = [192, 128], strides = [1, 1]} : vector<192x4608xbf16> to vector<192x128xbf16>
    %8 = arith.extf %7 : vector<192x128xbf16> to vector<192x128xf32>
    %9 = arith.mulf %6, %8 : vector<192x128xf32>
    %10 = vector.extract_strided_slice %4 {offsets = [0, 128], sizes = [192, 128], strides = [1, 1]} : vector<192x4608xbf16> to vector<192x128xbf16>
    %11 = arith.extf %10 : vector<192x128xbf16> to vector<192x128xf32>
    %12 = vector.extract_strided_slice %4 {offsets = [0, 2176], sizes = [192, 128], strides = [1, 1]} : vector<192x4608xbf16> to vector<192x128xbf16>
    %13 = arith.extf %12 : vector<192x128xbf16> to vector<192x128xf32>
    %14 = arith.mulf %11, %13 : vector<192x128xf32>
    %15 = arith.addf %9, %14 : vector<192x128xf32>
    %16 = vector.extract_strided_slice %4 {offsets = [0, 256], sizes = [192, 128], strides = [1, 1]} : vector<192x4608xbf16> to vector<192x128xbf16>
    %17 = arith.extf %16 : vector<192x128xbf16> to vector<192x128xf32>
    %18 = vector.extract_strided_slice %4 {offsets = [0, 2304], sizes = [192, 128], strides = [1, 1]} : vector<192x4608xbf16> to vector<192x128xbf16>
    %19 = arith.extf %18 : vector<192x128xbf16> to vector<192x128xf32>
    %20 = arith.mulf %17, %19 : vector<192x128xf32>
    %21 = arith.addf %15, %20 : vector<192x128xf32>
    %22 = vector.extract_strided_slice %4 {offsets = [0, 384], sizes = [192, 128], strides = [1, 1]} : vector<192x4608xbf16> to vector<192x128xbf16>
    %23 = arith.extf %22 : vector<192x128xbf16> to vector<192x128xf32>
    %24 = vector.extract_strided_slice %4 {offsets = [0, 2432], sizes = [192, 128], strides = [1, 1]} : vector<192x4608xbf16> to vector<192x128xbf16>
    %25 = arith.extf %24 : vector<192x128xbf16> to vector<192x128xf32>
    %26 = arith.mulf %23, %25 : vector<192x128xf32>
    %27 = arith.addf %21, %26 : vector<192x128xf32>
    %28 = vector.extract_strided_slice %4 {offsets = [0, 512], sizes = [192, 128], strides = [1, 1]} : vector<192x4608xbf16> to vector<192x128xbf16>
    %29 = arith.extf %28 : vector<192x128xbf16> to vector<192x128xf32>
    %30 = vector.extract_strided_slice %4 {offsets = [0, 2560], sizes = [192, 128], strides = [1, 1]} : vector<192x4608xbf16> to vector<192x128xbf16>
    %31 = arith.extf %30 : vector<192x128xbf16> to vector<192x128xf32>
    %32 = arith.mulf %29, %31 : vector<192x128xf32>
    %33 = arith.addf %27, %32 : vector<192x128xf32>
    %34 = vector.extract_strided_slice %4 {offsets = [0, 640], sizes = [192, 128], strides = [1, 1]} : vector<192x4608xbf16> to vector<192x128xbf16>
    %35 = arith.extf %34 : vector<192x128xbf16> to vector<192x128xf32>
    %36 = vector.extract_strided_slice %4 {offsets = [0, 2688], sizes = [192, 128], strides = [1, 1]} : vector<192x4608xbf16> to vector<192x128xbf16>
    %37 = arith.extf %36 : vector<192x128xbf16> to vector<192x128xf32>
    %38 = arith.mulf %35, %37 : vector<192x128xf32>
    %39 = arith.addf %33, %38 : vector<192x128xf32>
    %40 = vector.extract_strided_slice %4 {offsets = [0, 768], sizes = [192, 128], strides = [1, 1]} : vector<192x4608xbf16> to vector<192x128xbf16>
    %41 = arith.extf %40 : vector<192x128xbf16> to vector<192x128xf32>
    %42 = vector.extract_strided_slice %4 {offsets = [0, 2816], sizes = [192, 128], strides = [1, 1]} : vector<192x4608xbf16> to vector<192x128xbf16>
    %43 = arith.extf %42 : vector<192x128xbf16> to vector<192x128xf32>
    %44 = arith.mulf %41, %43 : vector<192x128xf32>
    %45 = arith.addf %39, %44 : vector<192x128xf32>
    %46 = vector.extract_strided_slice %4 {offsets = [0, 896], sizes = [192, 128], strides = [1, 1]} : vector<192x4608xbf16> to vector<192x128xbf16>
    %47 = arith.extf %46 : vector<192x128xbf16> to vector<192x128xf32>
    %48 = vector.extract_strided_slice %4 {offsets = [0, 2944], sizes = [192, 128], strides = [1, 1]} : vector<192x4608xbf16> to vector<192x128xbf16>
    %49 = arith.extf %48 : vector<192x128xbf16> to vector<192x128xf32>
    %50 = arith.mulf %47, %49 : vector<192x128xf32>
    %51 = arith.addf %45, %50 : vector<192x128xf32>
    %52 = vector.extract_strided_slice %4 {offsets = [0, 1024], sizes = [192, 128], strides = [1, 1]} : vector<192x4608xbf16> to vector<192x128xbf16>
    %53 = arith.extf %52 : vector<192x128xbf16> to vector<192x128xf32>
    %54 = vector.extract_strided_slice %4 {offsets = [0, 3072], sizes = [192, 128], strides = [1, 1]} : vector<192x4608xbf16> to vector<192x128xbf16>
    %55 = arith.extf %54 : vector<192x128xbf16> to vector<192x128xf32>
    %56 = arith.mulf %53, %55 : vector<192x128xf32>
    %57 = arith.addf %51, %56 : vector<192x128xf32>
    %58 = vector.extract_strided_slice %4 {offsets = [0, 1152], sizes = [192, 128], strides = [1, 1]} : vector<192x4608xbf16> to vector<192x128xbf16>
    %59 = arith.extf %58 : vector<192x128xbf16> to vector<192x128xf32>
    %60 = vector.extract_strided_slice %4 {offsets = [0, 3200], sizes = [192, 128], strides = [1, 1]} : vector<192x4608xbf16> to vector<192x128xbf16>
    %61 = arith.extf %60 : vector<192x128xbf16> to vector<192x128xf32>
    %62 = arith.mulf %59, %61 : vector<192x128xf32>
    %63 = arith.addf %57, %62 : vector<192x128xf32>
    %64 = vector.extract_strided_slice %4 {offsets = [0, 1280], sizes = [192, 128], strides = [1, 1]} : vector<192x4608xbf16> to vector<192x128xbf16>
    %65 = arith.extf %64 : vector<192x128xbf16> to vector<192x128xf32>
    %66 = vector.extract_strided_slice %4 {offsets = [0, 3328], sizes = [192, 128], strides = [1, 1]} : vector<192x4608xbf16> to vector<192x128xbf16>
    %67 = arith.extf %66 : vector<192x128xbf16> to vector<192x128xf32>
    %68 = arith.mulf %65, %67 : vector<192x128xf32>
    %69 = arith.addf %63, %68 : vector<192x128xf32>
    %70 = vector.extract_strided_slice %4 {offsets = [0, 1408], sizes = [192, 128], strides = [1, 1]} : vector<192x4608xbf16> to vector<192x128xbf16>
    %71 = arith.extf %70 : vector<192x128xbf16> to vector<192x128xf32>
    %72 = vector.extract_strided_slice %4 {offsets = [0, 3456], sizes = [192, 128], strides = [1, 1]} : vector<192x4608xbf16> to vector<192x128xbf16>
    %73 = arith.extf %72 : vector<192x128xbf16> to vector<192x128xf32>
    %74 = arith.mulf %71, %73 : vector<192x128xf32>
    %75 = arith.addf %69, %74 : vector<192x128xf32>
    %76 = vector.extract_strided_slice %4 {offsets = [0, 1536], sizes = [192, 128], strides = [1, 1]} : vector<192x4608xbf16> to vector<192x128xbf16>
    %77 = arith.extf %76 : vector<192x128xbf16> to vector<192x128xf32>
    %78 = vector.extract_strided_slice %4 {offsets = [0, 3584], sizes = [192, 128], strides = [1, 1]} : vector<192x4608xbf16> to vector<192x128xbf16>
    %79 = arith.extf %78 : vector<192x128xbf16> to vector<192x128xf32>
    %80 = arith.mulf %77, %79 : vector<192x128xf32>
    %81 = arith.addf %75, %80 : vector<192x128xf32>
    %82 = vector.extract_strided_slice %4 {offsets = [0, 1664], sizes = [192, 128], strides = [1, 1]} : vector<192x4608xbf16> to vector<192x128xbf16>
    %83 = arith.extf %82 : vector<192x128xbf16> to vector<192x128xf32>
    %84 = vector.extract_strided_slice %4 {offsets = [0, 3712], sizes = [192, 128], strides = [1, 1]} : vector<192x4608xbf16> to vector<192x128xbf16>
    %85 = arith.extf %84 : vector<192x128xbf16> to vector<192x128xf32>
    %86 = arith.mulf %83, %85 : vector<192x128xf32>
    %87 = arith.addf %81, %86 : vector<192x128xf32>
    %88 = vector.extract_strided_slice %4 {offsets = [0, 1792], sizes = [192, 128], strides = [1, 1]} : vector<192x4608xbf16> to vector<192x128xbf16>
    %89 = arith.extf %88 : vector<192x128xbf16> to vector<192x128xf32>
    %90 = vector.extract_strided_slice %4 {offsets = [0, 3840], sizes = [192, 128], strides = [1, 1]} : vector<192x4608xbf16> to vector<192x128xbf16>
    %91 = arith.extf %90 : vector<192x128xbf16> to vector<192x128xf32>
    %92 = arith.mulf %89, %91 : vector<192x128xf32>
    %93 = arith.addf %87, %92 : vector<192x128xf32>
    %94 = vector.extract_strided_slice %4 {offsets = [0, 1920], sizes = [192, 128], strides = [1, 1]} : vector<192x4608xbf16> to vector<192x128xbf16>
    %95 = arith.extf %94 : vector<192x128xbf16> to vector<192x128xf32>
    %96 = vector.extract_strided_slice %4 {offsets = [0, 3968], sizes = [192, 128], strides = [1, 1]} : vector<192x4608xbf16> to vector<192x128xbf16>
    %97 = arith.extf %96 : vector<192x128xbf16> to vector<192x128xf32>
    %98 = arith.mulf %95, %97 : vector<192x128xf32>
    %99 = arith.addf %93, %98 : vector<192x128xf32>
    %100 = vector.extract_strided_slice %0 {offsets = [0, 69], sizes = [192, 1], strides = [1, 1]} : vector<192x128xf32> to vector<192x1xf32>
    %c0_3 = arith.constant 0 : index
    %c0_4 = arith.constant 0 : index
    %101 = vector.load %arg5[%c0_3, %c0_4] : memref<8x128xf32, #tpu.memory_space<vmem>>, vector<1x128xf32>
    %c1 = arith.constant 1 : index
    %c0_5 = arith.constant 0 : index
    %102 = vector.load %arg5[%c1, %c0_5] : memref<8x128xf32, #tpu.memory_space<vmem>>, vector<1x128xf32>
    %103 = vector.broadcast %102 : vector<1x128xf32> to vector<192x128xf32>
    %104 = vector.broadcast %100 : vector<192x1xf32> to vector<192x128xf32>
    %105 = arith.mulf %103, %104 : vector<192x128xf32>
    %106 = vector.broadcast %101 : vector<1x128xf32> to vector<192x128xf32>
    %107 = arith.addf %106, %105 : vector<192x128xf32>
    %108 = arith.mulf %99, %107 : vector<192x128xf32>
    %109 = arith.truncf %108 : vector<192x128xf32> to vector<192x128xbf16>
    %c0_6 = arith.constant 0 : index
    %c0_7 = arith.constant 0 : index
    %110 = vector.load %arg3[%c0_6, %c0_7] : memref<128x512xbf16, #tpu.memory_space<vmem>>, vector<128x512xbf16>
    %cst_8 = arith.constant dense<0.000000e+00> : vector<192x512xf32>
    %111 = tpu.matmul %109, %110, %cst_8 {dimension_numbers = #tpu.dot_dimension_numbers<[1], [0], [0], [1], [0, 0, 1, 1], [], []>} : vector<192x128xbf16>, vector<128x512xbf16>, vector<192x512xf32> -> vector<192x512xf32>
    %112 = vector.extract_strided_slice %4 {offsets = [0, 4096], sizes = [192, 512], strides = [1, 1]} : vector<192x4608xbf16> to vector<192x512xbf16>
    %113 = arith.extf %112 : vector<192x512xbf16> to vector<192x512xf32>
    %114 = arith.addf %111, %113 : vector<192x512xf32>
    %115 = vector.extract_strided_slice %114 {offsets = [0, 0], sizes = [192, 256], strides = [1, 1]} : vector<192x512xf32> to vector<192x256xf32>
    %116 = vector.extract_strided_slice %114 {offsets = [0, 256], sizes = [192, 256], strides = [1, 1]} : vector<192x512xf32> to vector<192x256xf32>
    %117 = arith.mulf %116, %116 : vector<192x256xf32>
    %118 = arith.mulf %116, %117 : vector<192x256xf32>
    %cst_9 = arith.constant 4.471500e-02 : f32
    %119 = vector.broadcast %cst_9 : f32 to vector<192x256xf32>
    %120 = arith.mulf %119, %118 : vector<192x256xf32>
    %121 = arith.addf %116, %120 : vector<192x256xf32>
    %cst_10 = arith.constant 0.797884583 : f32
    %122 = vector.broadcast %cst_10 : f32 to vector<192x256xf32>
    %123 = arith.mulf %122, %121 : vector<192x256xf32>
    %124 = math.tanh %123 : vector<192x256xf32>
    %cst_11 = arith.constant 1.000000e+00 : f32
    %125 = vector.broadcast %cst_11 : f32 to vector<192x256xf32>
    %126 = arith.addf %125, %124 : vector<192x256xf32>
    %cst_12 = arith.constant 5.000000e-01 : f32
    %127 = vector.broadcast %cst_12 : f32 to vector<192x256xf32>
    %128 = arith.mulf %127, %126 : vector<192x256xf32>
    %129 = arith.mulf %116, %128 : vector<192x256xf32>
    %130 = arith.mulf %115, %129 : vector<192x256xf32>
    %131 = arith.truncf %130 : vector<192x256xf32> to vector<192x256xbf16>
    %c0_13 = arith.constant 0 : index
    %c0_14 = arith.constant 0 : index
    %132 = vector.load %arg4[%c0_13, %c0_14] : memref<256x128xbf16, #tpu.memory_space<vmem>>, vector<256x128xbf16>
    %cst_15 = arith.constant dense<0.000000e+00> : vector<192x128xf32>
    %133 = tpu.matmul %131, %132, %cst_15 {dimension_numbers = #tpu.dot_dimension_numbers<[1], [0], [0], [1], [0, 0, 1, 1], [], []>} : vector<192x256xbf16>, vector<256x128xbf16>, vector<192x128xf32> -> vector<192x128xf32>
    %c2 = arith.constant 2 : index
    %c0_16 = arith.constant 0 : index
    %134 = vector.load %arg5[%c2, %c0_16] : memref<8x128xf32, #tpu.memory_space<vmem>>, vector<1x128xf32>
    %135 = vector.broadcast %134 : vector<1x128xf32> to vector<192x128xf32>
    %136 = arith.addf %133, %135 : vector<192x128xf32>
    %c0_17 = arith.constant 0 : index
    %c0_18 = arith.constant 0 : index
    %137 = vector.load %arg6[%c0_17, %c0_18] : memref<192x128xf32, #tpu.memory_space<vmem>>, vector<192x128xf32>
    tpu.vector_store %arg6[%c0_17, %c0_18], %136 {strides = array<i32>} : memref<192x128xf32, #tpu.memory_space<vmem>>, vector<192x128xf32>,
    return
  }
  func.func @transform_0(%arg0: i32) -> (i32, i32) {
    %c0_i32 = arith.constant 0 : i32
    %c0_i32_0 = arith.constant 0 : i32
    return %arg0, %c0_i32 : i32, i32
  }
  func.func @transform_1(%arg0: i32) -> (i32, i32) {
    %c0_i32 = arith.constant 0 : i32
    %c0_i32_0 = arith.constant 0 : i32
    %c0_i32_1 = arith.constant 0 : i32
    return %c0_i32, %c0_i32_0 : i32, i32
  }
  func.func @transform_2(%arg0: i32) -> (i32, i32) {
    %c0_i32 = arith.constant 0 : i32
    %c0_i32_0 = arith.constant 0 : i32
    %c0_i32_1 = arith.constant 0 : i32
    return %c0_i32, %c0_i32_0 : i32, i32
  }
  func.func @transform_3(%arg0: i32) -> (i32, i32) {
    %c0_i32 = arith.constant 0 : i32
    %c0_i32_0 = arith.constant 0 : i32
    %c0_i32_1 = arith.constant 0 : i32
    return %c0_i32, %c0_i32_0 : i32, i32
  }
  func.func @transform_4(%arg0: i32) -> (i32, i32) {
    %c0_i32 = arith.constant 0 : i32
    %c0_i32_0 = arith.constant 0 : i32
    %c0_i32_1 = arith.constant 0 : i32
    return %c0_i32, %c0_i32_0 : i32, i32
  }
  func.func @transform_5(%arg0: i32) -> (i32, i32) {
    %c0_i32 = arith.constant 0 : i32
    %c0_i32_0 = arith.constant 0 : i32
    return %arg0, %c0_i32 : i32, i32
  }
}

</mosaic_0001>

<llo_original>
// kernel: fn.1
$region0: #{fn.1}
  #allocation0 [shape = 'u32[]', space=smem, size = 0x4, offset = 0x4, fixed_abs, tag = 'smem constant byte address 0x4 - core index']
  #allocation1 [shape = 'u32[72,128]{1,0:T(1,128)}', space=vmem, size = 0x9000, scoped, tag = 'internal scratch']
  %s0 = inlined_call_operand.vmem [shape: f32[384,128], index: 0, kind: input, shape index: {}]
  %s1 = inlined_call_operand.vmem [shape: bf16[128,4608], index: 1, kind: input, shape index: {}]
  %s2 = inlined_call_operand.vmem [shape: bf16[128,512], index: 2, kind: input, shape index: {}]
  %s3 = inlined_call_operand.vmem [shape: bf16[256,128], index: 3, kind: input, shape index: {}]
  %s4 = inlined_call_operand.vmem [shape: f32[8,128], index: 4, kind: input, shape index: {}]
  %s5 = inlined_call_operand.vmem [shape: f32[384,128], index: 5, kind: output, shape index: {}]
  %s6 = sld [smem:[#allocation0]]
  $region53: #{fn.1} parent=0
    _
  %s8 = ssub.s32 1, %s6
  %s9 = scalar_select 0, %s8, %s6
  loop: start=0, step=1, limit=4
  $region2: #{fn.1} parent=0 // loop_pre_header
    _
  $region3: #{fn.1} parent=0 // loop_header
    %s11 = sphi 0, %s15
    %p12 = scmp.ge.s32.totalorder %s11, 4
    %s21 = sphi 0, %s23
    %s24 = sphi 0, %s21
    %s25 = sphi 0, %s24
    %s41 = sphi 0, %s25
    %s45 = sphi 0, %s45
    %s47 = sphi 0, %s45
    %s48 = sphi 0, %s47
    %s62 = sphi 0, %s48
    %s66 = sphi 0, %s66
    %s68 = sphi 0, %s66
    %s69 = sphi 0, %s68
    %s83 = sphi 0, %s69
    %s87 = sphi 0, %s87
    %s89 = sphi 0, %s87
    %s90 = sphi 0, %s89
    %s104 = sphi 0, %s90
    %s108 = sphi 0, %s108
    %s110 = sphi 0, %s108
    %s111 = sphi 0, %s110
    %s125 = sphi 0, %s111
    %s131 = sphi 0, %s133
    %s134 = sphi 0, %s131
    %s135 = sphi 0, %s134
    %s151 = sphi 0, %s135
  $region4: #{fn.1} parent=0 // loop_header_branch
    %14 = sbr.rel (%p12) target = $region8
  $region5: #{fn.1} parent=0 // loop_body
    %s16 = ssub.s32 %s11, 1
    %s17 = ssub.s32 %s11, 2
    %s18 = sadd.s32 %s11, 1
    %s19 = ssub.s32 %s11, %s18
    %p20 = scmp.eq.s32.totalorder %s19, 0
    %s22 = sadd.s32 %s21, 1
    %s23 = scalar_select %p20, %s21, %s22
    %p26 = pneg %p20
    %p27 = scmp.eq.s32.totalorder %s11, 1
    %p28 = por %p26, %p27
    %p29 = scmp.ne.s32.totalorder %s21, %s24
    %p30 = scmp.eq.s32.totalorder %s11, 0
    %p31 = por %p29, %p30
    %p32 = scmp.ne.s32.totalorder %s21, %s24
    %p33 = scmp.eq.s32.totalorder %s16, 1
    %p34 = por %p32, %p33
    %p35 = scmp.ne.s32.totalorder %s24, %s25
    %p36 = scmp.eq.s32.totalorder %s16, 0
    %p37 = por %p35, %p36
    %p38 = scmp.ne.s32.totalorder %s24, %s25
    %p39 = scmp.eq.s32.totalorder %s17, 1
    %p40 = por %p38, %p39
    %p42 = scmp.ne.s32.totalorder %s25, %s41
    %p43 = scmp.eq.s32.totalorder %s17, 0
    %p44 = por %p42, %p43
    %s46 = sadd.s32 %s45, 1
    %p49 = scmp.eq.s32.totalorder %s11, 1
    %p50 = scmp.ne.s32.totalorder %s45, %s47
    %p51 = scmp.eq.s32.totalorder %s11, 0
    %p52 = por %p50, %p51
    %p53 = scmp.ne.s32.totalorder %s45, %s47
    %p54 = scmp.eq.s32.totalorder %s16, 1
    %p55 = por %p53, %p54
    %p56 = scmp.ne.s32.totalorder %s47, %s48
    %p57 = scmp.eq.s32.totalorder %s16, 0
    %p58 = por %p56, %p57
    %p59 = scmp.ne.s32.totalorder %s47, %s48
    %p60 = scmp.eq.s32.totalorder %s17, 1
    %p61 = por %p59, %p60
    %p63 = scmp.ne.s32.totalorder %s48, %s62
    %p64 = scmp.eq.s32.totalorder %s17, 0
    %p65 = por %p63, %p64
    %s67 = sadd.s32 %s66, 1
    %p70 = scmp.eq.s32.totalorder %s11, 1
    %p71 = scmp.ne.s32.totalorder %s66, %s68
    %p72 = scmp.eq.s32.totalorder %s11, 0
    %p73 = por %p71, %p72
    %p74 = scmp.ne.s32.totalorder %s66, %s68
    %p75 = scmp.eq.s32.totalorder %s16, 1
    %p76 = por %p74, %p75
    %p77 = scmp.ne.s32.totalorder %s68, %s69
    %p78 = scmp.eq.s32.totalorder %s16, 0
    %p79 = por %p77, %p78
    %p80 = scmp.ne.s32.totalorder %s68, %s69
    %p81 = scmp.eq.s32.totalorder %s17, 1
    %p82 = por %p80, %p81
    %p84 = scmp.ne.s32.totalorder %s69, %s83
    %p85 = scmp.eq.s32.totalorder %s17, 0
    %p86 = por %p84, %p85
    %s88 = sadd.s32 %s87, 1
    %p91 = scmp.eq.s32.totalorder %s11, 1
    %p92 = scmp.ne.s32.totalorder %s87, %s89
    %p93 = scmp.eq.s32.totalorder %s11, 0
    %p94 = por %p92, %p93
    %p95 = scmp.ne.s32.totalorder %s87, %s89
    %p96 = scmp.eq.s32.totalorder %s16, 1
    %p97 = por %p95, %p96
    %p98 = scmp.ne.s32.totalorder %s89, %s90
    %p99 = scmp.eq.s32.totalorder %s16, 0
    %p100 = por %p98, %p99
    %p101 = scmp.ne.s32.totalorder %s89, %s90
    %p102 = scmp.eq.s32.totalorder %s17, 1
    %p103 = por %p101, %p102
    %p105 = scmp.ne.s32.totalorder %s90, %s104
    %p106 = scmp.eq.s32.totalorder %s17, 0
    %p107 = por %p105, %p106
    %s109 = sadd.s32 %s108, 1
    %p112 = scmp.eq.s32.totalorder %s11, 1
    %p113 = scmp.ne.s32.totalorder %s108, %s110
    %p114 = scmp.eq.s32.totalorder %s11, 0
    %p115 = por %p113, %p114
    %p116 = scmp.ne.s32.totalorder %s108, %s110
    %p117 = scmp.eq.s32.totalorder %s16, 1
    %p118 = por %p116, %p117
    %p119 = scmp.ne.s32.totalorder %s110, %s111
    %p120 = scmp.eq.s32.totalorder %s16, 0
    %p121 = por %p119, %p120
    %p122 = scmp.ne.s32.totalorder %s110, %s111
    %p123 = scmp.eq.s32.totalorder %s17, 1
    %p124 = por %p122, %p123
    %p126 = scmp.ne.s32.totalorder %s111, %s125
    %p127 = scmp.eq.s32.totalorder %s17, 0
    %p128 = por %p126, %p127
    %s129 = ssub.s32 %s11, %s18
    %p130 = scmp.eq.s32.totalorder %s129, 0
    %s132 = sadd.s32 %s131, 1
    %s133 = scalar_select %p130, %s131, %s132
    %p136 = pneg %p130
    %p137 = scmp.eq.s32.totalorder %s11, 1
    %p138 = por %p136, %p137
    %p139 = scmp.ne.s32.totalorder %s131, %s134
    %p140 = scmp.eq.s32.totalorder %s11, 0
    %p141 = por %p139, %p140
    %p142 = scmp.ne.s32.totalorder %s131, %s134
    %p143 = scmp.eq.s32.totalorder %s16, 1
    %p144 = por %p142, %p143
    %p145 = scmp.ne.s32.totalorder %s134, %s135
    %p146 = scmp.eq.s32.totalorder %s16, 0
    %p147 = por %p145, %p146
    %p148 = scmp.ne.s32.totalorder %s134, %s135
    %p149 = scmp.eq.s32.totalorder %s17, 1
    %p150 = por %p148, %p149
    %p152 = scmp.ne.s32.totalorder %s135, %s151
    %p153 = scmp.eq.s32.totalorder %s17, 0
    %p154 = por %p152, %p153
    %p155 = scmp.le.s32.totalorder 1, %s11
    %p156 = scmp.lt.s32.totalorder %s11, 3
    %p157 = pnand %p155, %p156
    %p158 = pneg %p157
    // Predicated region
    $region9: #{fn.1} parent=5 // pred_check
      _
    $region10: #{fn.1} parent=5 // pred_check_branch
      %160 = sbr.rel (%p157) target = $region12
    $region11: #{fn.1} parent=5 // pred_region
      %s161 = ssub.s32 %s11, 1
      // Predicated region
      $region13: #{fn.1} parent=11 // pred_check
        %p162 = pneg %p58
      $region14: #{fn.1} parent=11 // pred_check_branch
        %164 = sbr.rel (%p162) target = $region16
      $region15: #{fn.1} parent=11 // pred_region
        _
      $region16: #{fn.1} parent=11 // pred_fallthru
        _
      // Predicated region
      $region17: #{fn.1} parent=11 // pred_check
        %p165 = pneg %p79
      $region18: #{fn.1} parent=11 // pred_check_branch
        %167 = sbr.rel (%p165) target = $region20
      $region19: #{fn.1} parent=11 // pred_region
        _
      $region20: #{fn.1} parent=11 // pred_fallthru
        _
      // Predicated region
      $region21: #{fn.1} parent=11 // pred_check
        %p168 = pneg %p100
      $region22: #{fn.1} parent=11 // pred_check_branch
        %170 = sbr.rel (%p168) target = $region24
      $region23: #{fn.1} parent=11 // pred_region
        _
      $region24: #{fn.1} parent=11 // pred_fallthru
        _
      // Predicated region
      $region25: #{fn.1} parent=11 // pred_check
        %p171 = pneg %p121
      $region26: #{fn.1} parent=11 // pred_check_branch
        %173 = sbr.rel (%p171) target = $region28
      $region27: #{fn.1} parent=11 // pred_region
        _
      $region28: #{fn.1} parent=11 // pred_fallthru
        _
    $region12: #{fn.1} parent=5 // pred_fallthru
      _
    %p174 = scmp.lt.s32.totalorder %s11, 2
    // Predicated region
    $region29: #{fn.1} parent=5 // pred_check
      %p175 = pneg %p174
    $region30: #{fn.1} parent=5 // pred_check_branch
      %177 = sbr.rel (%p175) target = $region32
    $region31: #{fn.1} parent=5 // pred_region
      // Predicated region
      $region33: #{fn.1} parent=31 // pred_check
        %p178 = pneg %p31
      $region34: #{fn.1} parent=31 // pred_check_branch
        %180 = sbr.rel (%p178) target = $region36
      $region35: #{fn.1} parent=31 // pred_region
        %s181 = smul.u32 24, %s11
        %p182 = scmp.lt.s32.totalorder %s181, 47
        %s183 = scalar_select %p182, %s181, 47
        %s184 = smul.addr %s183, 8
        %s185 = scalar_lea.vmem %s0, %s184
        %s186 = smul.u32 24, %s11
      $region36: #{fn.1} parent=31 // pred_fallthru
        _
    $region32: #{fn.1} parent=5 // pred_fallthru
      _
    %p187 = scmp.le.s32.totalorder 1, %s11
    %p188 = scmp.lt.s32.totalorder %s11, 3
    %p189 = pnand %p187, %p188
    %p190 = pneg %p189
    // Predicated region
    $region37: #{fn.1} parent=5 // pred_check
      _
    $region38: #{fn.1} parent=5 // pred_check_branch
      %192 = sbr.rel (%p189) target = $region40
    $region39: #{fn.1} parent=5 // pred_region
      %s193 = ssub.s32 %s11, 1
      %s194 = smul.u32 24, %s16
      %p195 = scmp.lt.s32.totalorder %s194, 47
      %s196 = scalar_select %p195, %s194, 47
      %s197 = smul.addr %s196, 8
      %s198 = scalar_lea.vmem %s0, %s197
      %p199 = pneg %p37
      %p200 = pneg %p34
      %p201 = pneg %p58
      %p202 = pneg %p55
      %p203 = pneg %p79
      %p204 = pneg %p76
      %p205 = pneg %p100
      %p206 = pneg %p97
      %p207 = pneg %p121
      %p208 = pneg %p118
      %p209 = pneg %p147
      %p210 = pneg %p144
      %s211 = smul.u32 24, %s16
      %p212 = scmp.lt.s32.totalorder %s211, 47
      %s213 = scalar_select %p212, %s211, 47
      %s214 = smul.addr %s213, 8
      %s215 = scalar_lea.vmem %s5, %s214
      %s216 = smul.u32 24, %s16
      %p217 = scmp.lt.s32.totalorder %s216, 47
      %s218 = scalar_select %p217, %s216, 47
      %s219 = smul.addr %s218, 8
      %s220 = scalar_lea.vmem %s0, %s219
      %s221 = smul.u32 24, %s16
      %s222 = smul.u32 24, %s16
      %p223 = scmp.lt.s32.totalorder %s222, 47
      %s224 = scalar_select %p223, %s222, 47
      %s225 = smul.addr %s224, 8
      %s226 = scalar_lea.vmem %s5, %s225
      %s227 = smul.u32 24, %s16
      %v228 = vld [vmem:[%s220] sm:$0xff]
      %v229 = vld [vmem:[%s220 + $0x8] sm:$0xff]
      %v230 = vld [vmem:[%s220 + $0x10] sm:$0xff]
      %v231 = vld [vmem:[%s220 + $0x18] sm:$0xff]
      %v232 = vld [vmem:[%s220 + $0x20] sm:$0xff]
      %v233 = vld [vmem:[%s220 + $0x28] sm:$0xff]
      %v234 = vld [vmem:[%s220 + $0x30] sm:$0xff]
      %v235 = vld [vmem:[%s220 + $0x38] sm:$0xff]
      %v236 = vld [vmem:[%s220 + $0x40] sm:$0xff]
      %v237 = vld [vmem:[%s220 + $0x48] sm:$0xff]
      %v238 = vld [vmem:[%s220 + $0x50] sm:$0xff]
      %v239 = vld [vmem:[%s220 + $0x58] sm:$0xff]
      %v240 = vld [vmem:[%s220 + $0x60] sm:$0xff]
      %v241 = vld [vmem:[%s220 + $0x68] sm:$0xff]
      %v242 = vld [vmem:[%s220 + $0x70] sm:$0xff]
      %v243 = vld [vmem:[%s220 + $0x78] sm:$0xff]
      %v244 = vld [vmem:[%s220 + $0x80] sm:$0xff]
      %v245 = vld [vmem:[%s220 + $0x88] sm:$0xff]
      %v246 = vld [vmem:[%s220 + $0x90] sm:$0xff]
      %v247 = vld [vmem:[%s220 + $0x98] sm:$0xff]
      %v248 = vld [vmem:[%s220 + $0xa0] sm:$0xff]
      %v249 = vld [vmem:[%s220 + $0xa8] sm:$0xff]
      %v250 = vld [vmem:[%s220 + $0xb0] sm:$0xff]
      %v251 = vld [vmem:[%s220 + $0xb8] sm:$0xff]
      %v252 = vpack.c.bf16 %v229, %v228
      %v253 = vpack.c.bf16 %v231, %v230
      %v254 = vpack.c.bf16 %v233, %v232
      %v255 = vpack.c.bf16 %v235, %v234
      %v256 = vpack.c.bf16 %v237, %v236
      %v257 = vpack.c.bf16 %v239, %v238
      %v258 = vpack.c.bf16 %v241, %v240
      %v259 = vpack.c.bf16 %v243, %v242
      %v260 = vpack.c.bf16 %v245, %v244
      %v261 = vpack.c.bf16 %v247, %v246
      %v262 = vpack.c.bf16 %v249, %v248
      %v263 = vpack.c.bf16 %v251, %v250
      %v264 = vld [vmem:[%s1] sm:$0xff]
      %v265 = vld [vmem:[%s1 + $0x8] sm:$0xff]
      %v266 = vld [vmem:[%s1 + $0x10] sm:$0xff]
      %v267 = vld [vmem:[%s1 + $0x18] sm:$0xff]
      %v268 = vld [vmem:[%s1 + $0x20] sm:$0xff]
      %v269 = vld [vmem:[%s1 + $0x28] sm:$0xff]
      %v270 = vld [vmem:[%s1 + $0x30] sm:$0xff]
      %v271 = vld [vmem:[%s1 + $0x38] sm:$0xff]
      %v272 = vld [vmem:[%s1 + $0x40] sm:$0xff]
      %v273 = vld [vmem:[%s1 + $0x48] sm:$0xff]
      %v274 = vld [vmem:[%s1 + $0x50] sm:$0xff]
      %v275 = vld [vmem:[%s1 + $0x58] sm:$0xff]
      %v276 = vld [vmem:[%s1 + $0x60] sm:$0xff]
      %v277 = vld [vmem:[%s1 + $0x68] sm:$0xff]
      %v278 = vld [vmem:[%s1 + $0x70] sm:$0xff]
      %v279 = vld [vmem:[%s1 + $0x78] sm:$0xff]
      %v280 = vld [vmem:[%s1 + $0x80] sm:$0xff]
      %v281 = vld [vmem:[%s1 + $0x88] sm:$0xff]
      %v282 = vld [vmem:[%s1 + $0x90] sm:$0xff]
      %v283 = vld [vmem:[%s1 + $0x98] sm:$0xff]
      %v284 = vld [vmem:[%s1 + $0xa0] sm:$0xff]
      %v285 = vld [vmem:[%s1 + $0xa8] sm:$0xff]
      %v286 = vld [vmem:[%s1 + $0xb0] sm:$0xff]
      %v287 = vld [vmem:[%s1 + $0xb8] sm:$0xff]
      %v288 = vld [vmem:[%s1 + $0xc0] sm:$0xff]
      %v289 = vld [vmem:[%s1 + $0xc8] sm:$0xff]
      %v290 = vld [vmem:[%s1 + $0xd0] sm:$0xff]
      %v291 = vld [vmem:[%s1 + $0xd8] sm:$0xff]
      %v292 = vld [vmem:[%s1 + $0xe0] sm:$0xff]
      %v293 = vld [vmem:[%s1 + $0xe8] sm:$0xff]
      %v294 = vld [vmem:[%s1 + $0xf0] sm:$0xff]
      %v295 = vld [vmem:[%s1 + $0xf8] sm:$0xff]
      %v296 = vld [vmem:[%s1 + $0x100] sm:$0xff]
      %v297 = vld [vmem:[%s1 + $0x108] sm:$0xff]
      %v298 = vld [vmem:[%s1 + $0x110] sm:$0xff]
      %v299 = vld [vmem:[%s1 + $0x118] sm:$0xff]
      %v300 = vld [vmem:[%s1 + $0x120] sm:$0xff]
      %v301 = vld [vmem:[%s1 + $0x128] sm:$0xff]
      %v302 = vld [vmem:[%s1 + $0x130] sm:$0xff]
      %v303 = vld [vmem:[%s1 + $0x138] sm:$0xff]
      %v304 = vld [vmem:[%s1 + $0x140] sm:$0xff]
      %v305 = vld [vmem:[%s1 + $0x148] sm:$0xff]
      %v306 = vld [vmem:[%s1 + $0x150] sm:$0xff]
      %v307 = vld [vmem:[%s1 + $0x158] sm:$0xff]
      %v308 = vld [vmem:[%s1 + $0x160] sm:$0xff]
      %v309 = vld [vmem:[%s1 + $0x168] sm:$0xff]
      %v310 = vld [vmem:[%s1 + $0x170] sm:$0xff]
      %v311 = vld [vmem:[%s1 + $0x178] sm:$0xff]
      %v312 = vld [vmem:[%s1 + $0x180] sm:$0xff]
      %v313 = vld [vmem:[%s1 + $0x188] sm:$0xff]
      %v314 = vld [vmem:[%s1 + $0x190] sm:$0xff]
      %v315 = vld [vmem:[%s1 + $0x198] sm:$0xff]
      %v316 = vld [vmem:[%s1 + $0x1a0] sm:$0xff]
      %v317 = vld [vmem:[%s1 + $0x1a8] sm:$0xff]
      %v318 = vld [vmem:[%s1 + $0x1b0] sm:$0xff]
      %v319 = vld [vmem:[%s1 + $0x1b8] sm:$0xff]
      %v320 = vld [vmem:[%s1 + $0x1c0] sm:$0xff]
      %v321 = vld [vmem:[%s1 + $0x1c8] sm:$0xff]
      %v322 = vld [vmem:[%s1 + $0x1d0] sm:$0xff]
      %v323 = vld [vmem:[%s1 + $0x1d8] sm:$0xff]
      %v324 = vld [vmem:[%s1 + $0x1e0] sm:$0xff]
      %v325 = vld [vmem:[%s1 + $0x1e8] sm:$0xff]
      %v326 = vld [vmem:[%s1 + $0x1f0] sm:$0xff]
      %v327 = vld [vmem:[%s1 + $0x1f8] sm:$0xff]
      %v328 = vld [vmem:[%s1 + $0x200] sm:$0xff]
      %v329 = vld [vmem:[%s1 + $0x208] sm:$0xff]
      %v330 = vld [vmem:[%s1 + $0x210] sm:$0xff]
      %v331 = vld [vmem:[%s1 + $0x218] sm:$0xff]
      %v332 = vld [vmem:[%s1 + $0x220] sm:$0xff]
      %v333 = vld [vmem:[%s1 + $0x228] sm:$0xff]
      %v334 = vld [vmem:[%s1 + $0x230] sm:$0xff]
      %v335 = vld [vmem:[%s1 + $0x238] sm:$0xff]
      %v336 = vld [vmem:[%s1 + $0x240] sm:$0xff]
      %v337 = vld [vmem:[%s1 + $0x248] sm:$0xff]
      %v338 = vld [vmem:[%s1 + $0x250] sm:$0xff]
      %v339 = vld [vmem:[%s1 + $0x258] sm:$0xff]
      %v340 = vld [vmem:[%s1 + $0x260] sm:$0xff]
      %v341 = vld [vmem:[%s1 + $0x268] sm:$0xff]
      %v342 = vld [vmem:[%s1 + $0x270] sm:$0xff]
      %v343 = vld [vmem:[%s1 + $0x278] sm:$0xff]
      %v344 = vld [vmem:[%s1 + $0x280] sm:$0xff]
      %v345 = vld [vmem:[%s1 + $0x288] sm:$0xff]
      %v346 = vld [vmem:[%s1 + $0x290] sm:$0xff]
      %v347 = vld [vmem:[%s1 + $0x298] sm:$0xff]
      %v348 = vld [vmem:[%s1 + $0x2a0] sm:$0xff]
      %v349 = vld [vmem:[%s1 + $0x2a8] sm:$0xff]
      %v350 = vld [vmem:[%s1 + $0x2b0] sm:$0xff]
      %v351 = vld [vmem:[%s1 + $0x2b8] sm:$0xff]
      %v352 = vld [vmem:[%s1 + $0x2c0] sm:$0xff]
      %v353 = vld [vmem:[%s1 + $0x2c8] sm:$0xff]
      %v354 = vld [vmem:[%s1 + $0x2d0] sm:$0xff]
      %v355 = vld [vmem:[%s1 + $0x2d8] sm:$0xff]
      %v356 = vld [vmem:[%s1 + $0x2e0] sm:$0xff]
      %v357 = vld [vmem:[%s1 + $0x2e8] sm:$0xff]
      %v358 = vld [vmem:[%s1 + $0x2f0] sm:$0xff]
      %v359 = vld [vmem:[%s1 + $0x2f8] sm:$0xff]
      %v360 = vld [vmem:[%s1 + $0x300] sm:$0xff]
      %v361 = vld [vmem:[%s1 + $0x308] sm:$0xff]
      %v362 = vld [vmem:[%s1 + $0x310] sm:$0xff]
      %v363 = vld [vmem:[%s1 + $0x318] sm:$0xff]
      %v364 = vld [vmem:[%s1 + $0x320] sm:$0xff]
      %v365 = vld [vmem:[%s1 + $0x328] sm:$0xff]
      %v366 = vld [vmem:[%s1 + $0x330] sm:$0xff]
      %v367 = vld [vmem:[%s1 + $0x338] sm:$0xff]
      %v368 = vld [vmem:[%s1 + $0x340] sm:$0xff]
      %v369 = vld [vmem:[%s1 + $0x348] sm:$0xff]
      %v370 = vld [vmem:[%s1 + $0x350] sm:$0xff]
      %v371 = vld [vmem:[%s1 + $0x358] sm:$0xff]
      %v372 = vld [vmem:[%s1 + $0x360] sm:$0xff]
      %v373 = vld [vmem:[%s1 + $0x368] sm:$0xff]
      %v374 = vld [vmem:[%s1 + $0x370] sm:$0xff]
      %v375 = vld [vmem:[%s1 + $0x378] sm:$0xff]
      %v376 = vld [vmem:[%s1 + $0x380] sm:$0xff]
      %v377 = vld [vmem:[%s1 + $0x388] sm:$0xff]
      %v378 = vld [vmem:[%s1 + $0x390] sm:$0xff]
      %v379 = vld [vmem:[%s1 + $0x398] sm:$0xff]
      %v380 = vld [vmem:[%s1 + $0x3a0] sm:$0xff]
      %v381 = vld [vmem:[%s1 + $0x3a8] sm:$0xff]
      %v382 = vld [vmem:[%s1 + $0x3b0] sm:$0xff]
      %v383 = vld [vmem:[%s1 + $0x3b8] sm:$0xff]
      %v384 = vld [vmem:[%s1 + $0x3c0] sm:$0xff]
      %v385 = vld [vmem:[%s1 + $0x3c8] sm:$0xff]
      %v386 = vld [vmem:[%s1 + $0x3d0] sm:$0xff]
      %v387 = vld [vmem:[%s1 + $0x3d8] sm:$0xff]
      %v388 = vld [vmem:[%s1 + $0x3e0] sm:$0xff]
      %v389 = vld [vmem:[%s1 + $0x3e8] sm:$0xff]
      %v390 = vld [vmem:[%s1 + $0x3f0] sm:$0xff]
      %v391 = vld [vmem:[%s1 + $0x3f8] sm:$0xff]
      %v392 = vld [vmem:[%s1 + $0x400] sm:$0xff]
      %v393 = vld [vmem:[%s1 + $0x408] sm:$0xff]
      %v394 = vld [vmem:[%s1 + $0x410] sm:$0xff]
      %v395 = vld [vmem:[%s1 + $0x418] sm:$0xff]
      %v396 = vld [vmem:[%s1 + $0x420] sm:$0xff]
      %v397 = vld [vmem:[%s1 + $0x428] sm:$0xff]
      %v398 = vld [vmem:[%s1 + $0x430] sm:$0xff]
      %v399 = vld [vmem:[%s1 + $0x438] sm:$0xff]
      %v400 = vld [vmem:[%s1 + $0x440] sm:$0xff]
      %v401 = vld [vmem:[%s1 + $0x448] sm:$0xff]
      %v402 = vld [vmem:[%s1 + $0x450] sm:$0xff]
      %v403 = vld [vmem:[%s1 + $0x458] sm:$0xff]
      %v404 = vld [vmem:[%s1 + $0x460] sm:$0xff]
      %v405 = vld [vmem:[%s1 + $0x468] sm:$0xff]
      %v406 = vld [vmem:[%s1 + $0x470] sm:$0xff]
      %v407 = vld [vmem:[%s1 + $0x478] sm:$0xff]
      %v408 = vld [vmem:[%s1 + $0x480] sm:$0xff]
      %v409 = vld [vmem:[%s1 + $0x488] sm:$0xff]
      %v410 = vld [vmem:[%s1 + $0x490] sm:$0xff]
      %v411 = vld [vmem:[%s1 + $0x498] sm:$0xff]
      %v412 = vld [vmem:[%s1 + $0x4a0] sm:$0xff]
      %v413 = vld [vmem:[%s1 + $0x4a8] sm:$0xff]
      %v414 = vld [vmem:[%s1 + $0x4b0] sm:$0xff]
      %v415 = vld [vmem:[%s1 + $0x4b8] sm:$0xff]
      %v416 = vld [vmem:[%s1 + $0x4c0] sm:$0xff]
      %v417 = vld [vmem:[%s1 + $0x4c8] sm:$0xff]
      %v418 = vld [vmem:[%s1 + $0x4d0] sm:$0xff]
      %v419 = vld [vmem:[%s1 + $0x4d8] sm:$0xff]
      %v420 = vld [vmem:[%s1 + $0x4e0] sm:$0xff]
      %v421 = vld [vmem:[%s1 + $0x4e8] sm:$0xff]
      %v422 = vld [vmem:[%s1 + $0x4f0] sm:$0xff]
      %v423 = vld [vmem:[%s1 + $0x4f8] sm:$0xff]
      %v424 = vld [vmem:[%s1 + $0x500] sm:$0xff]
      %v425 = vld [vmem:[%s1 + $0x508] sm:$0xff]
      %v426 = vld [vmem:[%s1 + $0x510] sm:$0xff]
      %v427 = vld [vmem:[%s1 + $0x518] sm:$0xff]
      %v428 = vld [vmem:[%s1 + $0x520] sm:$0xff]
      %v429 = vld [vmem:[%s1 + $0x528] sm:$0xff]
      %v430 = vld [vmem:[%s1 + $0x530] sm:$0xff]
      %v431 = vld [vmem:[%s1 + $0x538] sm:$0xff]
      %v432 = vld [vmem:[%s1 + $0x540] sm:$0xff]
      %v433 = vld [vmem:[%s1 + $0x548] sm:$0xff]
      %v434 = vld [vmem:[%s1 + $0x550] sm:$0xff]
      %v435 = vld [vmem:[%s1 + $0x558] sm:$0xff]
      %v436 = vld [vmem:[%s1 + $0x560] sm:$0xff]
      %v437 = vld [vmem:[%s1 + $0x568] sm:$0xff]
      %v438 = vld [vmem:[%s1 + $0x570] sm:$0xff]
      %v439 = vld [vmem:[%s1 + $0x578] sm:$0xff]
      %v440 = vld [vmem:[%s1 + $0x580] sm:$0xff]
      %v441 = vld [vmem:[%s1 + $0x588] sm:$0xff]
      %v442 = vld [vmem:[%s1 + $0x590] sm:$0xff]
      %v443 = vld [vmem:[%s1 + $0x598] sm:$0xff]
      %v444 = vld [vmem:[%s1 + $0x5a0] sm:$0xff]
      %v445 = vld [vmem:[%s1 + $0x5a8] sm:$0xff]
      %v446 = vld [vmem:[%s1 + $0x5b0] sm:$0xff]
      %v447 = vld [vmem:[%s1 + $0x5b8] sm:$0xff]
      %v448 = vld [vmem:[%s1 + $0x5c0] sm:$0xff]
      %v449 = vld [vmem:[%s1 + $0x5c8] sm:$0xff]
      %v450 = vld [vmem:[%s1 + $0x5d0] sm:$0xff]
      %v451 = vld [vmem:[%s1 + $0x5d8] sm:$0xff]
      %v452 = vld [vmem:[%s1 + $0x5e0] sm:$0xff]
      %v453 = vld [vmem:[%s1 + $0x5e8] sm:$0xff]
      %v454 = vld [vmem:[%s1 + $0x5f0] sm:$0xff]
      %v455 = vld [vmem:[%s1 + $0x5f8] sm:$0xff]
      %v456 = vld [vmem:[%s1 + $0x600] sm:$0xff]
      %v457 = vld [vmem:[%s1 + $0x608] sm:$0xff]
      %v458 = vld [vmem:[%s1 + $0x610] sm:$0xff]
      %v459 = vld [vmem:[%s1 + $0x618] sm:$0xff]
      %v460 = vld [vmem:[%s1 + $0x620] sm:$0xff]
      %v461 = vld [vmem:[%s1 + $0x628] sm:$0xff]
      %v462 = vld [vmem:[%s1 + $0x630] sm:$0xff]
      %v463 = vld [vmem:[%s1 + $0x638] sm:$0xff]
      %v464 = vld [vmem:[%s1 + $0x640] sm:$0xff]
      %v465 = vld [vmem:[%s1 + $0x648] sm:$0xff]
      %v466 = vld [vmem:[%s1 + $0x650] sm:$0xff]
      %v467 = vld [vmem:[%s1 + $0x658] sm:$0xff]
      %v468 = vld [vmem:[%s1 + $0x660] sm:$0xff]
      %v469 = vld [vmem:[%s1 + $0x668] sm:$0xff]
      %v470 = vld [vmem:[%s1 + $0x670] sm:$0xff]
      %v471 = vld [vmem:[%s1 + $0x678] sm:$0xff]
      %v472 = vld [vmem:[%s1 + $0x680] sm:$0xff]
      %v473 = vld [vmem:[%s1 + $0x688] sm:$0xff]
      %v474 = vld [vmem:[%s1 + $0x690] sm:$0xff]
      %v475 = vld [vmem:[%s1 + $0x698] sm:$0xff]
      %v476 = vld [vmem:[%s1 + $0x6a0] sm:$0xff]
      %v477 = vld [vmem:[%s1 + $0x6a8] sm:$0xff]
      %v478 = vld [vmem:[%s1 + $0x6b0] sm:$0xff]
      %v479 = vld [vmem:[%s1 + $0x6b8] sm:$0xff]
      %v480 = vld [vmem:[%s1 + $0x6c0] sm:$0xff]
      %v481 = vld [vmem:[%s1 + $0x6c8] sm:$0xff]
      %v482 = vld [vmem:[%s1 + $0x6d0] sm:$0xff]
      %v483 = vld [vmem:[%s1 + $0x6d8] sm:$0xff]
      %v484 = vld [vmem:[%s1 + $0x6e0] sm:$0xff]
      %v485 = vld [vmem:[%s1 + $0x6e8] sm:$0xff]
      %v486 = vld [vmem:[%s1 + $0x6f0] sm:$0xff]
      %v487 = vld [vmem:[%s1 + $0x6f8] sm:$0xff]
      %v488 = vld [vmem:[%s1 + $0x700] sm:$0xff]
      %v489 = vld [vmem:[%s1 + $0x708] sm:$0xff]
      %v490 = vld [vmem:[%s1 + $0x710] sm:$0xff]
      %v491 = vld [vmem:[%s1 + $0x718] sm:$0xff]
      %v492 = vld [vmem:[%s1 + $0x720] sm:$0xff]
      %v493 = vld [vmem:[%s1 + $0x728] sm:$0xff]
      %v494 = vld [vmem:[%s1 + $0x730] sm:$0xff]
      %v495 = vld [vmem:[%s1 + $0x738] sm:$0xff]
      %v496 = vld [vmem:[%s1 + $0x740] sm:$0xff]
      %v497 = vld [vmem:[%s1 + $0x748] sm:$0xff]
      %v498 = vld [vmem:[%s1 + $0x750] sm:$0xff]
      %v499 = vld [vmem:[%s1 + $0x758] sm:$0xff]
      %v500 = vld [vmem:[%s1 + $0x760] sm:$0xff]
      %v501 = vld [vmem:[%s1 + $0x768] sm:$0xff]
      %v502 = vld [vmem:[%s1 + $0x770] sm:$0xff]
      %v503 = vld [vmem:[%s1 + $0x778] sm:$0xff]
      %v504 = vld [vmem:[%s1 + $0x780] sm:$0xff]
      %v505 = vld [vmem:[%s1 + $0x788] sm:$0xff]
      %v506 = vld [vmem:[%s1 + $0x790] sm:$0xff]
      %v507 = vld [vmem:[%s1 + $0x798] sm:$0xff]
      %v508 = vld [vmem:[%s1 + $0x7a0] sm:$0xff]
      %v509 = vld [vmem:[%s1 + $0x7a8] sm:$0xff]
      %v510 = vld [vmem:[%s1 + $0x7b0] sm:$0xff]
      %v511 = vld [vmem:[%s1 + $0x7b8] sm:$0xff]
      %v512 = vld [vmem:[%s1 + $0x7c0] sm:$0xff]
      %v513 = vld [vmem:[%s1 + $0x7c8] sm:$0xff]
      %v514 = vld [vmem:[%s1 + $0x7d0] sm:$0xff]
      %v515 = vld [vmem:[%s1 + $0x7d8] sm:$0xff]
      %v516 = vld [vmem:[%s1 + $0x7e0] sm:$0xff]
      %v517 = vld [vmem:[%s1 + $0x7e8] sm:$0xff]
      %v518 = vld [vmem:[%s1 + $0x7f0] sm:$0xff]
      %v519 = vld [vmem:[%s1 + $0x7f8] sm:$0xff]
      %v520 = vld [vmem:[%s1 + $0x800] sm:$0xff]
      %v521 = vld [vmem:[%s1 + $0x808] sm:$0xff]
      %v522 = vld [vmem:[%s1 + $0x810] sm:$0xff]
      %v523 = vld [vmem:[%s1 + $0x818] sm:$0xff]
      %v524 = vld [vmem:[%s1 + $0x820] sm:$0xff]
      %v525 = vld [vmem:[%s1 + $0x828] sm:$0xff]
      %v526 = vld [vmem:[%s1 + $0x830] sm:$0xff]
      %v527 = vld [vmem:[%s1 + $0x838] sm:$0xff]
      %v528 = vld [vmem:[%s1 + $0x840] sm:$0xff]
      %v529 = vld [vmem:[%s1 + $0x848] sm:$0xff]
      %v530 = vld [vmem:[%s1 + $0x850] sm:$0xff]
      %v531 = vld [vmem:[%s1 + $0x858] sm:$0xff]
      %v532 = vld [vmem:[%s1 + $0x860] sm:$0xff]
      %v533 = vld [vmem:[%s1 + $0x868] sm:$0xff]
      %v534 = vld [vmem:[%s1 + $0x870] sm:$0xff]
      %v535 = vld [vmem:[%s1 + $0x878] sm:$0xff]
      %v536 = vld [vmem:[%s1 + $0x880] sm:$0xff]
      %v537 = vld [vmem:[%s1 + $0x888] sm:$0xff]
      %v538 = vld [vmem:[%s1 + $0x890] sm:$0xff]
      %v539 = vld [vmem:[%s1 + $0x898] sm:$0xff]
      %v540 = vld [vmem:[%s1 + $0x8a0] sm:$0xff]
      %v541 = vld [vmem:[%s1 + $0x8a8] sm:$0xff]
      %v542 = vld [vmem:[%s1 + $0x8b0] sm:$0xff]
      %v543 = vld [vmem:[%s1 + $0x8b8] sm:$0xff]
      %v544 = vld [vmem:[%s1 + $0x8c0] sm:$0xff]
      %v545 = vld [vmem:[%s1 + $0x8c8] sm:$0xff]
      %v546 = vld [vmem:[%s1 + $0x8d0] sm:$0xff]
      %v547 = vld [vmem:[%s1 + $0x8d8] sm:$0xff]
      %v548 = vld [vmem:[%s1 + $0x8e0] sm:$0xff]
      %v549 = vld [vmem:[%s1 + $0x8e8] sm:$0xff]
      %v550 = vld [vmem:[%s1 + $0x8f0] sm:$0xff]
      %v551 = vld [vmem:[%s1 + $0x8f8] sm:$0xff]
      %v840 = vunpack.c.l.b16 %v264
      %v841 = vunpack.c.h.b16 %v264
      %v842 = vunpack.c.l.b16 %v265
      %v843 = vunpack.c.h.b16 %v265
      %v844 = vunpack.c.l.b16 %v266
      %v845 = vunpack.c.h.b16 %v266
      %v846 = vunpack.c.l.b16 %v267
      %v847 = vunpack.c.h.b16 %v267
      %v848 = vunpack.c.l.b16 %v268
      %v849 = vunpack.c.h.b16 %v268
      %v850 = vunpack.c.l.b16 %v269
      %v851 = vunpack.c.h.b16 %v269
      %v852 = vunpack.c.l.b16 %v270
      %v853 = vunpack.c.h.b16 %v270
      %v854 = vunpack.c.l.b16 %v271
      %v855 = vunpack.c.h.b16 %v271
      %v856 = vunpack.c.l.b16 %v272
      %v857 = vunpack.c.h.b16 %v272
      %v858 = vunpack.c.l.b16 %v273
      %v859 = vunpack.c.h.b16 %v273
      %v860 = vunpack.c.l.b16 %v274
      %v861 = vunpack.c.h.b16 %v274
      %v862 = vunpack.c.l.b16 %v275
      %v863 = vunpack.c.h.b16 %v275
      %v864 = vunpack.c.l.b16 %v276
      %v865 = vunpack.c.h.b16 %v276
      %v866 = vunpack.c.l.b16 %v277
      %v867 = vunpack.c.h.b16 %v277
      %v868 = vunpack.c.l.b16 %v278
      %v869 = vunpack.c.h.b16 %v278
      %v870 = vunpack.c.l.b16 %v279
      %v871 = vunpack.c.h.b16 %v279
      %v872 = vunpack.c.l.b16 %v280
      %v873 = vunpack.c.h.b16 %v280
      %v874 = vunpack.c.l.b16 %v281
      %v875 = vunpack.c.h.b16 %v281
      %v876 = vunpack.c.l.b16 %v282
      %v877 = vunpack.c.h.b16 %v282
      %v878 = vunpack.c.l.b16 %v283
      %v879 = vunpack.c.h.b16 %v283
      %v880 = vunpack.c.l.b16 %v284
      %v881 = vunpack.c.h.b16 %v284
      %v882 = vunpack.c.l.b16 %v285
      %v883 = vunpack.c.h.b16 %v285
      %v884 = vunpack.c.l.b16 %v286
      %v885 = vunpack.c.h.b16 %v286
      %v886 = vunpack.c.l.b16 %v287
      %v887 = vunpack.c.h.b16 %v287
      %v888 = vunpack.c.l.b16 %v288
      %v889 = vunpack.c.h.b16 %v288
      %v890 = vunpack.c.l.b16 %v289
      %v891 = vunpack.c.h.b16 %v289
      %v892 = vunpack.c.l.b16 %v290
      %v893 = vunpack.c.h.b16 %v290
      %v894 = vunpack.c.l.b16 %v291
      %v895 = vunpack.c.h.b16 %v291
      %v896 = vunpack.c.l.b16 %v292
      %v897 = vunpack.c.h.b16 %v292
      %v898 = vunpack.c.l.b16 %v293
      %v899 = vunpack.c.h.b16 %v293
      %v900 = vunpack.c.l.b16 %v294
      %v901 = vunpack.c.h.b16 %v294
      %v902 = vunpack.c.l.b16 %v295
      %v903 = vunpack.c.h.b16 %v295
      %v904 = vunpack.c.l.b16 %v296
      %v905 = vunpack.c.h.b16 %v296
      %v906 = vunpack.c.l.b16 %v297
      %v907 = vunpack.c.h.b16 %v297
      %v908 = vunpack.c.l.b16 %v298
      %v909 = vunpack.c.h.b16 %v298
      %v910 = vunpack.c.l.b16 %v299
      %v911 = vunpack.c.h.b16 %v299
      %v912 = vunpack.c.l.b16 %v300
      %v913 = vunpack.c.h.b16 %v300
      %v914 = vunpack.c.l.b16 %v301
      %v915 = vunpack.c.h.b16 %v301
      %v916 = vunpack.c.l.b16 %v302
      %v917 = vunpack.c.h.b16 %v302
      %v918 = vunpack.c.l.b16 %v303
      %v919 = vunpack.c.h.b16 %v303
      %v920 = vunpack.c.l.b16 %v304
      %v921 = vunpack.c.h.b16 %v304
      %v922 = vunpack.c.l.b16 %v305
      %v923 = vunpack.c.h.b16 %v305
      %v924 = vunpack.c.l.b16 %v306
      %v925 = vunpack.c.h.b16 %v306
      %v926 = vunpack.c.l.b16 %v307
      %v927 = vunpack.c.h.b16 %v307
      %v928 = vunpack.c.l.b16 %v308
      %v929 = vunpack.c.h.b16 %v308
      %v930 = vunpack.c.l.b16 %v309
      %v931 = vunpack.c.h.b16 %v309
      %v932 = vunpack.c.l.b16 %v310
      %v933 = vunpack.c.h.b16 %v310
      %v934 = vunpack.c.l.b16 %v311
      %v935 = vunpack.c.h.b16 %v311
      %v936 = vunpack.c.l.b16 %v312
      %v937 = vunpack.c.h.b16 %v312
      %v938 = vunpack.c.l.b16 %v313
      %v939 = vunpack.c.h.b16 %v313
      %v940 = vunpack.c.l.b16 %v314
      %v941 = vunpack.c.h.b16 %v314
      %v942 = vunpack.c.l.b16 %v315
      %v943 = vunpack.c.h.b16 %v315
      %v944 = vunpack.c.l.b16 %v316
      %v945 = vunpack.c.h.b16 %v316
      %v946 = vunpack.c.l.b16 %v317
      %v947 = vunpack.c.h.b16 %v317
      %v948 = vunpack.c.l.b16 %v318
      %v949 = vunpack.c.h.b16 %v318
      %v950 = vunpack.c.l.b16 %v319
      %v951 = vunpack.c.h.b16 %v319
      %v952 = vunpack.c.l.b16 %v320
      %v953 = vunpack.c.h.b16 %v320
      %v954 = vunpack.c.l.b16 %v321
      %v955 = vunpack.c.h.b16 %v321
      %v956 = vunpack.c.l.b16 %v322
      %v957 = vunpack.c.h.b16 %v322
      %v958 = vunpack.c.l.b16 %v323
      %v959 = vunpack.c.h.b16 %v323
      %v960 = vunpack.c.l.b16 %v324
      %v961 = vunpack.c.h.b16 %v324
      %v962 = vunpack.c.l.b16 %v325
      %v963 = vunpack.c.h.b16 %v325
      %v964 = vunpack.c.l.b16 %v326
      %v965 = vunpack.c.h.b16 %v326
      %v966 = vunpack.c.l.b16 %v327
      %v967 = vunpack.c.h.b16 %v327
      %v968 = vunpack.c.l.b16 %v328
      %v969 = vunpack.c.h.b16 %v328
      %v970 = vunpack.c.l.b16 %v329
      %v971 = vunpack.c.h.b16 %v329
      %v972 = vunpack.c.l.b16 %v330
      %v973 = vunpack.c.h.b16 %v330
      %v974 = vunpack.c.l.b16 %v331
      %v975 = vunpack.c.h.b16 %v331
      %v976 = vunpack.c.l.b16 %v332
      %v977 = vunpack.c.h.b16 %v332
      %v978 = vunpack.c.l.b16 %v333
      %v979 = vunpack.c.h.b16 %v333
      %v980 = vunpack.c.l.b16 %v334
      %v981 = vunpack.c.h.b16 %v334
      %v982 = vunpack.c.l.b16 %v335
      %v983 = vunpack.c.h.b16 %v335
      %v984 = vunpack.c.l.b16 %v336
      %v985 = vunpack.c.h.b16 %v336
      %v986 = vunpack.c.l.b16 %v337
      %v987 = vunpack.c.h.b16 %v337
      %v988 = vunpack.c.l.b16 %v338
      %v989 = vunpack.c.h.b16 %v338
      %v990 = vunpack.c.l.b16 %v339
      %v991 = vunpack.c.h.b16 %v339
      %v992 = vunpack.c.l.b16 %v340
      %v993 = vunpack.c.h.b16 %v340
      %v994 = vunpack.c.l.b16 %v341
      %v995 = vunpack.c.h.b16 %v341
      %v996 = vunpack.c.l.b16 %v342
      %v997 = vunpack.c.h.b16 %v342
      %v998 = vunpack.c.l.b16 %v343
      %v999 = vunpack.c.h.b16 %v343
      %v1000 = vunpack.c.l.b16 %v344
      %v1001 = vunpack.c.h.b16 %v344
      %v1002 = vunpack.c.l.b16 %v345
      %v1003 = vunpack.c.h.b16 %v345
      %v1004 = vunpack.c.l.b16 %v346
      %v1005 = vunpack.c.h.b16 %v346
      %v1006 = vunpack.c.l.b16 %v347
      %v1007 = vunpack.c.h.b16 %v347
      %v1008 = vunpack.c.l.b16 %v348
      %v1009 = vunpack.c.h.b16 %v348
      %v1010 = vunpack.c.l.b16 %v349
      %v1011 = vunpack.c.h.b16 %v349
      %v1012 = vunpack.c.l.b16 %v350
      %v1013 = vunpack.c.h.b16 %v350
      %v1014 = vunpack.c.l.b16 %v351
      %v1015 = vunpack.c.h.b16 %v351
      %v1016 = vunpack.c.l.b16 %v352
      %v1017 = vunpack.c.h.b16 %v352
      %v1018 = vunpack.c.l.b16 %v353
      %v1019 = vunpack.c.h.b16 %v353
      %v1020 = vunpack.c.l.b16 %v354
      %v1021 = vunpack.c.h.b16 %v354
      %v1022 = vunpack.c.l.b16 %v355
      %v1023 = vunpack.c.h.b16 %v355
      %v1024 = vunpack.c.l.b16 %v356
      %v1025 = vunpack.c.h.b16 %v356
      %v1026 = vunpack.c.l.b16 %v357
      %v1027 = vunpack.c.h.b16 %v357
      %v1028 = vunpack.c.l.b16 %v358
      %v1029 = vunpack.c.h.b16 %v358
      %v1030 = vunpack.c.l.b16 %v359
      %v1031 = vunpack.c.h.b16 %v359
      %v1032 = vunpack.c.l.b16 %v360
      %v1033 = vunpack.c.h.b16 %v360
      %v1034 = vunpack.c.l.b16 %v361
      %v1035 = vunpack.c.h.b16 %v361
      %v1036 = vunpack.c.l.b16 %v362
      %v1037 = vunpack.c.h.b16 %v362
      %v1038 = vunpack.c.l.b16 %v363
      %v1039 = vunpack.c.h.b16 %v363
      %v1040 = vunpack.c.l.b16 %v364
      %v1041 = vunpack.c.h.b16 %v364
      %v1042 = vunpack.c.l.b16 %v365
      %v1043 = vunpack.c.h.b16 %v365
      %v1044 = vunpack.c.l.b16 %v366
      %v1045 = vunpack.c.h.b16 %v366
      %v1046 = vunpack.c.l.b16 %v367
      %v1047 = vunpack.c.h.b16 %v367
      %v1048 = vunpack.c.l.b16 %v368
      %v1049 = vunpack.c.h.b16 %v368
      %v1050 = vunpack.c.l.b16 %v369
      %v1051 = vunpack.c.h.b16 %v369
      %v1052 = vunpack.c.l.b16 %v370
      %v1053 = vunpack.c.h.b16 %v370
      %v1054 = vunpack.c.l.b16 %v371
      %v1055 = vunpack.c.h.b16 %v371
      %v1056 = vunpack.c.l.b16 %v372
      %v1057 = vunpack.c.h.b16 %v372
      %v1058 = vunpack.c.l.b16 %v373
      %v1059 = vunpack.c.h.b16 %v373
      %v1060 = vunpack.c.l.b16 %v374
      %v1061 = vunpack.c.h.b16 %v374
      %v1062 = vunpack.c.l.b16 %v375
      %v1063 = vunpack.c.h.b16 %v375
      %v1064 = vunpack.c.l.b16 %v376
      %v1065 = vunpack.c.h.b16 %v376
      %v1066 = vunpack.c.l.b16 %v377
      %v1067 = vunpack.c.h.b16 %v377
      %v1068 = vunpack.c.l.b16 %v378
      %v1069 = vunpack.c.h.b16 %v378
      %v1070 = vunpack.c.l.b16 %v379
      %v1071 = vunpack.c.h.b16 %v379
      %v1072 = vunpack.c.l.b16 %v380
      %v1073 = vunpack.c.h.b16 %v380
      %v1074 = vunpack.c.l.b16 %v381
      %v1075 = vunpack.c.h.b16 %v381
      %v1076 = vunpack.c.l.b16 %v382
      %v1077 = vunpack.c.h.b16 %v382
      %v1078 = vunpack.c.l.b16 %v383
      %v1079 = vunpack.c.h.b16 %v383
      %v1080 = vunpack.c.l.b16 %v384
      %v1081 = vunpack.c.h.b16 %v384
      %v1082 = vunpack.c.l.b16 %v385
      %v1083 = vunpack.c.h.b16 %v385
      %v1084 = vunpack.c.l.b16 %v386
      %v1085 = vunpack.c.h.b16 %v386
      %v1086 = vunpack.c.l.b16 %v387
      %v1087 = vunpack.c.h.b16 %v387
      %v1088 = vunpack.c.l.b16 %v388
      %v1089 = vunpack.c.h.b16 %v388
      %v1090 = vunpack.c.l.b16 %v389
      %v1091 = vunpack.c.h.b16 %v389
      %v1092 = vunpack.c.l.b16 %v390
      %v1093 = vunpack.c.h.b16 %v390
      %v1094 = vunpack.c.l.b16 %v391
      %v1095 = vunpack.c.h.b16 %v391
      %v1096 = vunpack.c.l.b16 %v392
      %v1097 = vunpack.c.h.b16 %v392
      %v1098 = vunpack.c.l.b16 %v393
      %v1099 = vunpack.c.h.b16 %v393
      %v1100 = vunpack.c.l.b16 %v394
      %v1101 = vunpack.c.h.b16 %v394
      %v1102 = vunpack.c.l.b16 %v395
      %v1103 = vunpack.c.h.b16 %v395
      %v1104 = vunpack.c.l.b16 %v396
      %v1105 = vunpack.c.h.b16 %v396
      %v1106 = vunpack.c.l.b16 %v397
      %v1107 = vunpack.c.h.b16 %v397
      %v1108 = vunpack.c.l.b16 %v398
      %v1109 = vunpack.c.h.b16 %v398
      %v1110 = vunpack.c.l.b16 %v399
      %v1111 = vunpack.c.h.b16 %v399
      %v1112 = vunpack.c.l.b16 %v400
      %v1113 = vunpack.c.h.b16 %v400
      %v1114 = vunpack.c.l.b16 %v401
      %v1115 = vunpack.c.h.b16 %v401
      %v1116 = vunpack.c.l.b16 %v402
      %v1117 = vunpack.c.h.b16 %v402
      %v1118 = vunpack.c.l.b16 %v403
      %v1119 = vunpack.c.h.b16 %v403
      %v1120 = vunpack.c.l.b16 %v404
      %v1121 = vunpack.c.h.b16 %v404
      %v1122 = vunpack.c.l.b16 %v405
      %v1123 = vunpack.c.h.b16 %v405
      %v1124 = vunpack.c.l.b16 %v406
      %v1125 = vunpack.c.h.b16 %v406
      %v1126 = vunpack.c.l.b16 %v407
      %v1127 = vunpack.c.h.b16 %v407
      %v1128 = vunpack.c.l.b16 %v408
      %v1129 = vunpack.c.h.b16 %v408
      %v1130 = vunpack.c.l.b16 %v409
      %v1131 = vunpack.c.h.b16 %v409
      %v1132 = vunpack.c.l.b16 %v410
      %v1133 = vunpack.c.h.b16 %v410
      %v1134 = vunpack.c.l.b16 %v411
      %v1135 = vunpack.c.h.b16 %v411
      %v1136 = vunpack.c.l.b16 %v412
      %v1137 = vunpack.c.h.b16 %v412
      %v1138 = vunpack.c.l.b16 %v413
      %v1139 = vunpack.c.h.b16 %v413
      %v1140 = vunpack.c.l.b16 %v414
      %v1141 = vunpack.c.h.b16 %v414
      %v1142 = vunpack.c.l.b16 %v415
      %v1143 = vunpack.c.h.b16 %v415
      %v1144 = vunpack.c.l.b16 %v416
      %v1145 = vunpack.c.h.b16 %v416
      %v1146 = vunpack.c.l.b16 %v417
      %v1147 = vunpack.c.h.b16 %v417
      %v1148 = vunpack.c.l.b16 %v418
      %v1149 = vunpack.c.h.b16 %v418
      %v1150 = vunpack.c.l.b16 %v419
      %v1151 = vunpack.c.h.b16 %v419
      %v1152 = vunpack.c.l.b16 %v420
      %v1153 = vunpack.c.h.b16 %v420
      %v1154 = vunpack.c.l.b16 %v421
      %v1155 = vunpack.c.h.b16 %v421
      %v1156 = vunpack.c.l.b16 %v422
      %v1157 = vunpack.c.h.b16 %v422
      %v1158 = vunpack.c.l.b16 %v423
      %v1159 = vunpack.c.h.b16 %v423
      %v1160 = vunpack.c.l.b16 %v424
      %v1161 = vunpack.c.h.b16 %v424
      %v1162 = vunpack.c.l.b16 %v425
      %v1163 = vunpack.c.h.b16 %v425
      %v1164 = vunpack.c.l.b16 %v426
      %v1165 = vunpack.c.h.b16 %v426
      %v1166 = vunpack.c.l.b16 %v427
      %v1167 = vunpack.c.h.b16 %v427
      %v1168 = vunpack.c.l.b16 %v428
      %v1169 = vunpack.c.h.b16 %v428
      %v1170 = vunpack.c.l.b16 %v429
      %v1171 = vunpack.c.h.b16 %v429
      %v1172 = vunpack.c.l.b16 %v430
      %v1173 = vunpack.c.h.b16 %v430
      %v1174 = vunpack.c.l.b16 %v431
      %v1175 = vunpack.c.h.b16 %v431
      %v1176 = vunpack.c.l.b16 %v432
      %v1177 = vunpack.c.h.b16 %v432
      %v1178 = vunpack.c.l.b16 %v433
      %v1179 = vunpack.c.h.b16 %v433
      %v1180 = vunpack.c.l.b16 %v434
      %v1181 = vunpack.c.h.b16 %v434
      %v1182 = vunpack.c.l.b16 %v435
      %v1183 = vunpack.c.h.b16 %v435
      %v1184 = vunpack.c.l.b16 %v436
      %v1185 = vunpack.c.h.b16 %v436
      %v1186 = vunpack.c.l.b16 %v437
      %v1187 = vunpack.c.h.b16 %v437
      %v1188 = vunpack.c.l.b16 %v438
      %v1189 = vunpack.c.h.b16 %v438
      %v1190 = vunpack.c.l.b16 %v439
      %v1191 = vunpack.c.h.b16 %v439
      %v1192 = vunpack.c.l.b16 %v440
      %v1193 = vunpack.c.h.b16 %v440
      %v1194 = vunpack.c.l.b16 %v441
      %v1195 = vunpack.c.h.b16 %v441
      %v1196 = vunpack.c.l.b16 %v442
      %v1197 = vunpack.c.h.b16 %v442
      %v1198 = vunpack.c.l.b16 %v443
      %v1199 = vunpack.c.h.b16 %v443
      %v1200 = vunpack.c.l.b16 %v444
      %v1201 = vunpack.c.h.b16 %v444
      %v1202 = vunpack.c.l.b16 %v445
      %v1203 = vunpack.c.h.b16 %v445
      %v1204 = vunpack.c.l.b16 %v446
      %v1205 = vunpack.c.h.b16 %v446
      %v1206 = vunpack.c.l.b16 %v447
      %v1207 = vunpack.c.h.b16 %v447
      %v1208 = vunpack.c.l.b16 %v448
      %v1209 = vunpack.c.h.b16 %v448
      %v1210 = vunpack.c.l.b16 %v449
      %v1211 = vunpack.c.h.b16 %v449
      %v1212 = vunpack.c.l.b16 %v450
      %v1213 = vunpack.c.h.b16 %v450
      %v1214 = vunpack.c.l.b16 %v451
      %v1215 = vunpack.c.h.b16 %v451
      %v1216 = vunpack.c.l.b16 %v452
      %v1217 = vunpack.c.h.b16 %v452
      %v1218 = vunpack.c.l.b16 %v453
      %v1219 = vunpack.c.h.b16 %v453
      %v1220 = vunpack.c.l.b16 %v454
      %v1221 = vunpack.c.h.b16 %v454
      %v1222 = vunpack.c.l.b16 %v455
      %v1223 = vunpack.c.h.b16 %v455
      %v1224 = vunpack.c.l.b16 %v456
      %v1225 = vunpack.c.h.b16 %v456
      %v1226 = vunpack.c.l.b16 %v457
      %v1227 = vunpack.c.h.b16 %v457
      %v1228 = vunpack.c.l.b16 %v458
      %v1229 = vunpack.c.h.b16 %v458
      %v1230 = vunpack.c.l.b16 %v459
      %v1231 = vunpack.c.h.b16 %v459
      %v1232 = vunpack.c.l.b16 %v460
      %v1233 = vunpack.c.h.b16 %v460
      %v1234 = vunpack.c.l.b16 %v461
      %v1235 = vunpack.c.h.b16 %v461
      %v1236 = vunpack.c.l.b16 %v462
      %v1237 = vunpack.c.h.b16 %v462
      %v1238 = vunpack.c.l.b16 %v463
      %v1239 = vunpack.c.h.b16 %v463
      %v1240 = vunpack.c.l.b16 %v464
      %v1241 = vunpack.c.h.b16 %v464
      %v1242 = vunpack.c.l.b16 %v465
      %v1243 = vunpack.c.h.b16 %v465
      %v1244 = vunpack.c.l.b16 %v466
      %v1245 = vunpack.c.h.b16 %v466
      %v1246 = vunpack.c.l.b16 %v467
      %v1247 = vunpack.c.h.b16 %v467
      %v1248 = vunpack.c.l.b16 %v468
      %v1249 = vunpack.c.h.b16 %v468
      %v1250 = vunpack.c.l.b16 %v469
      %v1251 = vunpack.c.h.b16 %v469
      %v1252 = vunpack.c.l.b16 %v470
      %v1253 = vunpack.c.h.b16 %v470
      %v1254 = vunpack.c.l.b16 %v471
      %v1255 = vunpack.c.h.b16 %v471
      %v1256 = vunpack.c.l.b16 %v472
      %v1257 = vunpack.c.h.b16 %v472
      %v1258 = vunpack.c.l.b16 %v473
      %v1259 = vunpack.c.h.b16 %v473
      %v1260 = vunpack.c.l.b16 %v474
      %v1261 = vunpack.c.h.b16 %v474
      %v1262 = vunpack.c.l.b16 %v475
      %v1263 = vunpack.c.h.b16 %v475
      %v1264 = vunpack.c.l.b16 %v476
      %v1265 = vunpack.c.h.b16 %v476
      %v1266 = vunpack.c.l.b16 %v477
      %v1267 = vunpack.c.h.b16 %v477
      %v1268 = vunpack.c.l.b16 %v478
      %v1269 = vunpack.c.h.b16 %v478
      %v1270 = vunpack.c.l.b16 %v479
      %v1271 = vunpack.c.h.b16 %v479
      %v1272 = vunpack.c.l.b16 %v480
      %v1273 = vunpack.c.h.b16 %v480
      %v1274 = vunpack.c.l.b16 %v481
      %v1275 = vunpack.c.h.b16 %v481
      %v1276 = vunpack.c.l.b16 %v482
      %v1277 = vunpack.c.h.b16 %v482
      %v1278 = vunpack.c.l.b16 %v483
      %v1279 = vunpack.c.h.b16 %v483
      %v1280 = vunpack.c.l.b16 %v484
      %v1281 = vunpack.c.h.b16 %v484
      %v1282 = vunpack.c.l.b16 %v485
      %v1283 = vunpack.c.h.b16 %v485
      %v1284 = vunpack.c.l.b16 %v486
      %v1285 = vunpack.c.h.b16 %v486
      %v1286 = vunpack.c.l.b16 %v487
      %v1287 = vunpack.c.h.b16 %v487
      %v1288 = vunpack.c.l.b16 %v488
      %v1289 = vunpack.c.h.b16 %v488
      %v1290 = vunpack.c.l.b16 %v489
      %v1291 = vunpack.c.h.b16 %v489
      %v1292 = vunpack.c.l.b16 %v490
      %v1293 = vunpack.c.h.b16 %v490
      %v1294 = vunpack.c.l.b16 %v491
      %v1295 = vunpack.c.h.b16 %v491
      %v1296 = vunpack.c.l.b16 %v492
      %v1297 = vunpack.c.h.b16 %v492
      %v1298 = vunpack.c.l.b16 %v493
      %v1299 = vunpack.c.h.b16 %v493
      %v1300 = vunpack.c.l.b16 %v494
      %v1301 = vunpack.c.h.b16 %v494
      %v1302 = vunpack.c.l.b16 %v495
      %v1303 = vunpack.c.h.b16 %v495
      %v1304 = vunpack.c.l.b16 %v496
      %v1305 = vunpack.c.h.b16 %v496
      %v1306 = vunpack.c.l.b16 %v497
      %v1307 = vunpack.c.h.b16 %v497
      %v1308 = vunpack.c.l.b16 %v498
      %v1309 = vunpack.c.h.b16 %v498
      %v1310 = vunpack.c.l.b16 %v499
      %v1311 = vunpack.c.h.b16 %v499
      %v1312 = vunpack.c.l.b16 %v500
      %v1313 = vunpack.c.h.b16 %v500
      %v1314 = vunpack.c.l.b16 %v501
      %v1315 = vunpack.c.h.b16 %v501
      %v1316 = vunpack.c.l.b16 %v502
      %v1317 = vunpack.c.h.b16 %v502
      %v1318 = vunpack.c.l.b16 %v503
      %v1319 = vunpack.c.h.b16 %v503
      %v1320 = vunpack.c.l.b16 %v504
      %v1321 = vunpack.c.h.b16 %v504
      %v1322 = vunpack.c.l.b16 %v505
      %v1323 = vunpack.c.h.b16 %v505
      %v1324 = vunpack.c.l.b16 %v506
      %v1325 = vunpack.c.h.b16 %v506
      %v1326 = vunpack.c.l.b16 %v507
      %v1327 = vunpack.c.h.b16 %v507
      %v1328 = vunpack.c.l.b16 %v508
      %v1329 = vunpack.c.h.b16 %v508
      %v1330 = vunpack.c.l.b16 %v509
      %v1331 = vunpack.c.h.b16 %v509
      %v1332 = vunpack.c.l.b16 %v510
      %v1333 = vunpack.c.h.b16 %v510
      %v1334 = vunpack.c.l.b16 %v511
      %v1335 = vunpack.c.h.b16 %v511
      %v1336 = vunpack.c.l.b16 %v512
      %v1337 = vunpack.c.h.b16 %v512
      %v1338 = vunpack.c.l.b16 %v513
      %v1339 = vunpack.c.h.b16 %v513
      %v1340 = vunpack.c.l.b16 %v514
      %v1341 = vunpack.c.h.b16 %v514
      %v1342 = vunpack.c.l.b16 %v515
      %v1343 = vunpack.c.h.b16 %v515
      %v1344 = vunpack.c.l.b16 %v516
      %v1345 = vunpack.c.h.b16 %v516
      %v1346 = vunpack.c.l.b16 %v517
      %v1347 = vunpack.c.h.b16 %v517
      %v1348 = vunpack.c.l.b16 %v518
      %v1349 = vunpack.c.h.b16 %v518
      %v1350 = vunpack.c.l.b16 %v519
      %v1351 = vunpack.c.h.b16 %v519
      %v1352 = vunpack.c.l.b16 %v520
      %v1353 = vunpack.c.h.b16 %v520
      %v1354 = vunpack.c.l.b16 %v521
      %v1355 = vunpack.c.h.b16 %v521
      %v1356 = vunpack.c.l.b16 %v522
      %v1357 = vunpack.c.h.b16 %v522
      %v1358 = vunpack.c.l.b16 %v523
      %v1359 = vunpack.c.h.b16 %v523
      %v1360 = vunpack.c.l.b16 %v524
      %v1361 = vunpack.c.h.b16 %v524
      %v1362 = vunpack.c.l.b16 %v525
      %v1363 = vunpack.c.h.b16 %v525
      %v1364 = vunpack.c.l.b16 %v526
      %v1365 = vunpack.c.h.b16 %v526
      %v1366 = vunpack.c.l.b16 %v527
      %v1367 = vunpack.c.h.b16 %v527
      %v1368 = vunpack.c.l.b16 %v528
      %v1369 = vunpack.c.h.b16 %v528
      %v1370 = vunpack.c.l.b16 %v529
      %v1371 = vunpack.c.h.b16 %v529
      %v1372 = vunpack.c.l.b16 %v530
      %v1373 = vunpack.c.h.b16 %v530
      %v1374 = vunpack.c.l.b16 %v531
      %v1375 = vunpack.c.h.b16 %v531
      %v1376 = vunpack.c.l.b16 %v532
      %v1377 = vunpack.c.h.b16 %v532
      %v1378 = vunpack.c.l.b16 %v533
      %v1379 = vunpack.c.h.b16 %v533
      %v1380 = vunpack.c.l.b16 %v534
      %v1381 = vunpack.c.h.b16 %v534
      %v1382 = vunpack.c.l.b16 %v535
      %v1383 = vunpack.c.h.b16 %v535
      %v1384 = vunpack.c.l.b16 %v536
      %v1385 = vunpack.c.h.b16 %v536
      %v1386 = vunpack.c.l.b16 %v537
      %v1387 = vunpack.c.h.b16 %v537
      %v1388 = vunpack.c.l.b16 %v538
      %v1389 = vunpack.c.h.b16 %v538
      %v1390 = vunpack.c.l.b16 %v539
      %v1391 = vunpack.c.h.b16 %v539
      %v1392 = vunpack.c.l.b16 %v540
      %v1393 = vunpack.c.h.b16 %v540
      %v1394 = vunpack.c.l.b16 %v541
      %v1395 = vunpack.c.h.b16 %v541
      %v1396 = vunpack.c.l.b16 %v542
      %v1397 = vunpack.c.h.b16 %v542
      %v1398 = vunpack.c.l.b16 %v543
      %v1399 = vunpack.c.h.b16 %v543
      %v1400 = vunpack.c.l.b16 %v544
      %v1401 = vunpack.c.h.b16 %v544
      %v1402 = vunpack.c.l.b16 %v545
      %v1403 = vunpack.c.h.b16 %v545
      %v1404 = vunpack.c.l.b16 %v546
      %v1405 = vunpack.c.h.b16 %v546
      %v1406 = vunpack.c.l.b16 %v547
      %v1407 = vunpack.c.h.b16 %v547
      %v1408 = vunpack.c.l.b16 %v548
      %v1409 = vunpack.c.h.b16 %v548
      %v1410 = vunpack.c.l.b16 %v549
      %v1411 = vunpack.c.h.b16 %v549
      %v1412 = vunpack.c.l.b16 %v550
      %v1413 = vunpack.c.h.b16 %v550
      %v1414 = vunpack.c.l.b16 %v551
      %v1415 = vunpack.c.h.b16 %v551
      %v1416 = vpack.c.b16 %v876, %v840
      %v1417 = vpack.c.b16 %v877, %v841
      %v1418 = vpack.c.b16 %v878, %v842
      %v1419 = vpack.c.b16 %v879, %v843
      %v1420 = vpack.c.b16 %v880, %v844
      %v1421 = vpack.c.b16 %v881, %v845
      %v1422 = vpack.c.b16 %v882, %v846
      %v1423 = vpack.c.b16 %v883, %v847
      %v1424 = vpack.c.b16 %v884, %v848
      %v1425 = vpack.c.b16 %v885, %v849
      %v1426 = vpack.c.b16 %v886, %v850
      %v1427 = vpack.c.b16 %v887, %v851
      %v1428 = vpack.c.b16 %v888, %v852
      %v1429 = vpack.c.b16 %v889, %v853
      %v1430 = vpack.c.b16 %v890, %v854
      %v1431 = vpack.c.b16 %v891, %v855
      %v1432 = vpack.c.b16 %v892, %v856
      %v1433 = vpack.c.b16 %v893, %v857
      %v1434 = vpack.c.b16 %v894, %v858
      %v1435 = vpack.c.b16 %v895, %v859
      %v1436 = vpack.c.b16 %v896, %v860
      %v1437 = vpack.c.b16 %v897, %v861
      %v1438 = vpack.c.b16 %v898, %v862
      %v1439 = vpack.c.b16 %v899, %v863
      %v1440 = vpack.c.b16 %v900, %v864
      %v1441 = vpack.c.b16 %v901, %v865
      %v1442 = vpack.c.b16 %v902, %v866
      %v1443 = vpack.c.b16 %v903, %v867
      %v1444 = vpack.c.b16 %v904, %v868
      %v1445 = vpack.c.b16 %v905, %v869
      %v1446 = vpack.c.b16 %v906, %v870
      %v1447 = vpack.c.b16 %v907, %v871
      %v1448 = vpack.c.b16 %v908, %v872
      %v1449 = vpack.c.b16 %v909, %v873
      %v1450 = vpack.c.b16 %v910, %v874
      %v1451 = vpack.c.b16 %v911, %v875
      %v1452 = vpack.c.b16 %v948, %v912
      %v1453 = vpack.c.b16 %v949, %v913
      %v1454 = vpack.c.b16 %v950, %v914
      %v1455 = vpack.c.b16 %v951, %v915
      %v1456 = vpack.c.b16 %v952, %v916
      %v1457 = vpack.c.b16 %v953, %v917
      %v1458 = vpack.c.b16 %v954, %v918
      %v1459 = vpack.c.b16 %v955, %v919
      %v1460 = vpack.c.b16 %v956, %v920
      %v1461 = vpack.c.b16 %v957, %v921
      %v1462 = vpack.c.b16 %v958, %v922
      %v1463 = vpack.c.b16 %v959, %v923
      %v1464 = vpack.c.b16 %v960, %v924
      %v1465 = vpack.c.b16 %v961, %v925
      %v1466 = vpack.c.b16 %v962, %v926
      %v1467 = vpack.c.b16 %v963, %v927
      %v1468 = vpack.c.b16 %v964, %v928
      %v1469 = vpack.c.b16 %v965, %v929
      %v1470 = vpack.c.b16 %v966, %v930
      %v1471 = vpack.c.b16 %v967, %v931
      %v1472 = vpack.c.b16 %v968, %v932
      %v1473 = vpack.c.b16 %v969, %v933
      %v1474 = vpack.c.b16 %v970, %v934
      %v1475 = vpack.c.b16 %v971, %v935
      %v1476 = vpack.c.b16 %v972, %v936
      %v1477 = vpack.c.b16 %v973, %v937
      %v1478 = vpack.c.b16 %v974, %v938
      %v1479 = vpack.c.b16 %v975, %v939
      %v1480 = vpack.c.b16 %v976, %v940
      %v1481 = vpack.c.b16 %v977, %v941
      %v1482 = vpack.c.b16 %v978, %v942
      %v1483 = vpack.c.b16 %v979, %v943
      %v1484 = vpack.c.b16 %v980, %v944
      %v1485 = vpack.c.b16 %v981, %v945
      %v1486 = vpack.c.b16 %v982, %v946
      %v1487 = vpack.c.b16 %v983, %v947
      %v1488 = vpack.c.b16 %v1020, %v984
      %v1489 = vpack.c.b16 %v1021, %v985
      %v1490 = vpack.c.b16 %v1022, %v986
      %v1491 = vpack.c.b16 %v1023, %v987
      %v1492 = vpack.c.b16 %v1024, %v988
      %v1493 = vpack.c.b16 %v1025, %v989
      %v1494 = vpack.c.b16 %v1026, %v990
      %v1495 = vpack.c.b16 %v1027, %v991
      %v1496 = vpack.c.b16 %v1028, %v992
      %v1497 = vpack.c.b16 %v1029, %v993
      %v1498 = vpack.c.b16 %v1030, %v994
      %v1499 = vpack.c.b16 %v1031, %v995
      %v1500 = vpack.c.b16 %v1032, %v996
      %v1501 = vpack.c.b16 %v1033, %v997
      %v1502 = vpack.c.b16 %v1034, %v998
      %v1503 = vpack.c.b16 %v1035, %v999
      %v1504 = vpack.c.b16 %v1036, %v1000
      %v1505 = vpack.c.b16 %v1037, %v1001
      %v1506 = vpack.c.b16 %v1038, %v1002
      %v1507 = vpack.c.b16 %v1039, %v1003
      %v1508 = vpack.c.b16 %v1040, %v1004
      %v1509 = vpack.c.b16 %v1041, %v1005
      %v1510 = vpack.c.b16 %v1042, %v1006
      %v1511 = vpack.c.b16 %v1043, %v1007
      %v1512 = vpack.c.b16 %v1044, %v1008
      %v1513 = vpack.c.b16 %v1045, %v1009
      %v1514 = vpack.c.b16 %v1046, %v1010
      %v1515 = vpack.c.b16 %v1047, %v1011
      %v1516 = vpack.c.b16 %v1048, %v1012
      %v1517 = vpack.c.b16 %v1049, %v1013
      %v1518 = vpack.c.b16 %v1050, %v1014
      %v1519 = vpack.c.b16 %v1051, %v1015
      %v1520 = vpack.c.b16 %v1052, %v1016
      %v1521 = vpack.c.b16 %v1053, %v1017
      %v1522 = vpack.c.b16 %v1054, %v1018
      %v1523 = vpack.c.b16 %v1055, %v1019
      %v1524 = vpack.c.b16 %v1092, %v1056
      %v1525 = vpack.c.b16 %v1093, %v1057
      %v1526 = vpack.c.b16 %v1094, %v1058
      %v1527 = vpack.c.b16 %v1095, %v1059
      %v1528 = vpack.c.b16 %v1096, %v1060
      %v1529 = vpack.c.b16 %v1097, %v1061
      %v1530 = vpack.c.b16 %v1098, %v1062
      %v1531 = vpack.c.b16 %v1099, %v1063
      %v1532 = vpack.c.b16 %v1100, %v1064
      %v1533 = vpack.c.b16 %v1101, %v1065
      %v1534 = vpack.c.b16 %v1102, %v1066
      %v1535 = vpack.c.b16 %v1103, %v1067
      %v1536 = vpack.c.b16 %v1104, %v1068
      %v1537 = vpack.c.b16 %v1105, %v1069
      %v1538 = vpack.c.b16 %v1106, %v1070
      %v1539 = vpack.c.b16 %v1107, %v1071
      %v1540 = vpack.c.b16 %v1108, %v1072
      %v1541 = vpack.c.b16 %v1109, %v1073
      %v1542 = vpack.c.b16 %v1110, %v1074
      %v1543 = vpack.c.b16 %v1111, %v1075
      %v1544 = vpack.c.b16 %v1112, %v1076
      %v1545 = vpack.c.b16 %v1113, %v1077
      %v1546 = vpack.c.b16 %v1114, %v1078
      %v1547 = vpack.c.b16 %v1115, %v1079
      %v1548 = vpack.c.b16 %v1116, %v1080
      %v1549 = vpack.c.b16 %v1117, %v1081
      %v1550 = vpack.c.b16 %v1118, %v1082
      %v1551 = vpack.c.b16 %v1119, %v1083
      %v1552 = vpack.c.b16 %v1120, %v1084
      %v1553 = vpack.c.b16 %v1121, %v1085
      %v1554 = vpack.c.b16 %v1122, %v1086
      %v1555 = vpack.c.b16 %v1123, %v1087
      %v1556 = vpack.c.b16 %v1124, %v1088
      %v1557 = vpack.c.b16 %v1125, %v1089
      %v1558 = vpack.c.b16 %v1126, %v1090
      %v1559 = vpack.c.b16 %v1127, %v1091
      %v1560 = vpack.c.b16 %v1164, %v1128
      %v1561 = vpack.c.b16 %v1165, %v1129
      %v1562 = vpack.c.b16 %v1166, %v1130
      %v1563 = vpack.c.b16 %v1167, %v1131
      %v1564 = vpack.c.b16 %v1168, %v1132
      %v1565 = vpack.c.b16 %v1169, %v1133
      %v1566 = vpack.c.b16 %v1170, %v1134
      %v1567 = vpack.c.b16 %v1171, %v1135
      %v1568 = vpack.c.b16 %v1172, %v1136
      %v1569 = vpack.c.b16 %v1173, %v1137
      %v1570 = vpack.c.b16 %v1174, %v1138
      %v1571 = vpack.c.b16 %v1175, %v1139
      %v1572 = vpack.c.b16 %v1176, %v1140
      %v1573 = vpack.c.b16 %v1177, %v1141
      %v1574 = vpack.c.b16 %v1178, %v1142
      %v1575 = vpack.c.b16 %v1179, %v1143
      %v1576 = vpack.c.b16 %v1180, %v1144
      %v1577 = vpack.c.b16 %v1181, %v1145
      %v1578 = vpack.c.b16 %v1182, %v1146
      %v1579 = vpack.c.b16 %v1183, %v1147
      %v1580 = vpack.c.b16 %v1184, %v1148
      %v1581 = vpack.c.b16 %v1185, %v1149
      %v1582 = vpack.c.b16 %v1186, %v1150
      %v1583 = vpack.c.b16 %v1187, %v1151
      %v1584 = vpack.c.b16 %v1188, %v1152
      %v1585 = vpack.c.b16 %v1189, %v1153
      %v1586 = vpack.c.b16 %v1190, %v1154
      %v1587 = vpack.c.b16 %v1191, %v1155
      %v1588 = vpack.c.b16 %v1192, %v1156
      %v1589 = vpack.c.b16 %v1193, %v1157
      %v1590 = vpack.c.b16 %v1194, %v1158
      %v1591 = vpack.c.b16 %v1195, %v1159
      %v1592 = vpack.c.b16 %v1196, %v1160
      %v1593 = vpack.c.b16 %v1197, %v1161
      %v1594 = vpack.c.b16 %v1198, %v1162
      %v1595 = vpack.c.b16 %v1199, %v1163
      %v1596 = vpack.c.b16 %v1236, %v1200
      %v1597 = vpack.c.b16 %v1237, %v1201
      %v1598 = vpack.c.b16 %v1238, %v1202
      %v1599 = vpack.c.b16 %v1239, %v1203
      %v1600 = vpack.c.b16 %v1240, %v1204
      %v1601 = vpack.c.b16 %v1241, %v1205
      %v1602 = vpack.c.b16 %v1242, %v1206
      %v1603 = vpack.c.b16 %v1243, %v1207
      %v1604 = vpack.c.b16 %v1244, %v1208
      %v1605 = vpack.c.b16 %v1245, %v1209
      %v1606 = vpack.c.b16 %v1246, %v1210
      %v1607 = vpack.c.b16 %v1247, %v1211
      %v1608 = vpack.c.b16 %v1248, %v1212
      %v1609 = vpack.c.b16 %v1249, %v1213
      %v1610 = vpack.c.b16 %v1250, %v1214
      %v1611 = vpack.c.b16 %v1251, %v1215
      %v1612 = vpack.c.b16 %v1252, %v1216
      %v1613 = vpack.c.b16 %v1253, %v1217
      %v1614 = vpack.c.b16 %v1254, %v1218
      %v1615 = vpack.c.b16 %v1255, %v1219
      %v1616 = vpack.c.b16 %v1256, %v1220
      %v1617 = vpack.c.b16 %v1257, %v1221
      %v1618 = vpack.c.b16 %v1258, %v1222
      %v1619 = vpack.c.b16 %v1259, %v1223
      %v1620 = vpack.c.b16 %v1260, %v1224
      %v1621 = vpack.c.b16 %v1261, %v1225
      %v1622 = vpack.c.b16 %v1262, %v1226
      %v1623 = vpack.c.b16 %v1263, %v1227
      %v1624 = vpack.c.b16 %v1264, %v1228
      %v1625 = vpack.c.b16 %v1265, %v1229
      %v1626 = vpack.c.b16 %v1266, %v1230
      %v1627 = vpack.c.b16 %v1267, %v1231
      %v1628 = vpack.c.b16 %v1268, %v1232
      %v1629 = vpack.c.b16 %v1269, %v1233
      %v1630 = vpack.c.b16 %v1270, %v1234
      %v1631 = vpack.c.b16 %v1271, %v1235
      %v1632 = vpack.c.b16 %v1308, %v1272
      %v1633 = vpack.c.b16 %v1309, %v1273
      %v1634 = vpack.c.b16 %v1310, %v1274
      %v1635 = vpack.c.b16 %v1311, %v1275
      %v1636 = vpack.c.b16 %v1312, %v1276
      %v1637 = vpack.c.b16 %v1313, %v1277
      %v1638 = vpack.c.b16 %v1314, %v1278
      %v1639 = vpack.c.b16 %v1315, %v1279
      %v1640 = vpack.c.b16 %v1316, %v1280
      %v1641 = vpack.c.b16 %v1317, %v1281
      %v1642 = vpack.c.b16 %v1318, %v1282
      %v1643 = vpack.c.b16 %v1319, %v1283
      %v1644 = vpack.c.b16 %v1320, %v1284
      %v1645 = vpack.c.b16 %v1321, %v1285
      %v1646 = vpack.c.b16 %v1322, %v1286
      %v1647 = vpack.c.b16 %v1323, %v1287
      %v1648 = vpack.c.b16 %v1324, %v1288
      %v1649 = vpack.c.b16 %v1325, %v1289
      %v1650 = vpack.c.b16 %v1326, %v1290
      %v1651 = vpack.c.b16 %v1327, %v1291
      %v1652 = vpack.c.b16 %v1328, %v1292
      %v1653 = vpack.c.b16 %v1329, %v1293
      %v1654 = vpack.c.b16 %v1330, %v1294
      %v1655 = vpack.c.b16 %v1331, %v1295
      %v1656 = vpack.c.b16 %v1332, %v1296
      %v1657 = vpack.c.b16 %v1333, %v1297
      %v1658 = vpack.c.b16 %v1334, %v1298
      %v1659 = vpack.c.b16 %v1335, %v1299
      %v1660 = vpack.c.b16 %v1336, %v1300
      %v1661 = vpack.c.b16 %v1337, %v1301
      %v1662 = vpack.c.b16 %v1338, %v1302
      %v1663 = vpack.c.b16 %v1339, %v1303
      %v1664 = vpack.c.b16 %v1340, %v1304
      %v1665 = vpack.c.b16 %v1341, %v1305
      %v1666 = vpack.c.b16 %v1342, %v1306
      %v1667 = vpack.c.b16 %v1343, %v1307
      %v1668 = vpack.c.b16 %v1380, %v1344
      %v1669 = vpack.c.b16 %v1381, %v1345
      %v1670 = vpack.c.b16 %v1382, %v1346
      %v1671 = vpack.c.b16 %v1383, %v1347
      %v1672 = vpack.c.b16 %v1384, %v1348
      %v1673 = vpack.c.b16 %v1385, %v1349
      %v1674 = vpack.c.b16 %v1386, %v1350
      %v1675 = vpack.c.b16 %v1387, %v1351
      %v1676 = vpack.c.b16 %v1388, %v1352
      %v1677 = vpack.c.b16 %v1389, %v1353
      %v1678 = vpack.c.b16 %v1390, %v1354
      %v1679 = vpack.c.b16 %v1391, %v1355
      %v1680 = vpack.c.b16 %v1392, %v1356
      %v1681 = vpack.c.b16 %v1393, %v1357
      %v1682 = vpack.c.b16 %v1394, %v1358
      %v1683 = vpack.c.b16 %v1395, %v1359
      %v1684 = vpack.c.b16 %v1396, %v1360
      %v1685 = vpack.c.b16 %v1397, %v1361
      %v1686 = vpack.c.b16 %v1398, %v1362
      %v1687 = vpack.c.b16 %v1399, %v1363
      %v1688 = vpack.c.b16 %v1400, %v1364
      %v1689 = vpack.c.b16 %v1401, %v1365
      %v1690 = vpack.c.b16 %v1402, %v1366
      %v1691 = vpack.c.b16 %v1403, %v1367
      %v1692 = vpack.c.b16 %v1404, %v1368
      %v1693 = vpack.c.b16 %v1405, %v1369
      %v1694 = vpack.c.b16 %v1406, %v1370
      %v1695 = vpack.c.b16 %v1407, %v1371
      %v1696 = vpack.c.b16 %v1408, %v1372
      %v1697 = vpack.c.b16 %v1409, %v1373
      %v1698 = vpack.c.b16 %v1410, %v1374
      %v1699 = vpack.c.b16 %v1411, %v1375
      %v1700 = vpack.c.b16 %v1412, %v1376
      %v1701 = vpack.c.b16 %v1413, %v1377
      %v1702 = vpack.c.b16 %v1414, %v1378
      %v1703 = vpack.c.b16 %v1415, %v1379
      %1992 = vmatpush.bf16.msra.mxu0 %v1668
      %1993 = vmatpush.bf16.msra.mxu0 %v1632
      %1994 = vmatpush.bf16.msra.mxu0 %v1596
      %1995 = vmatpush.bf16.msra.mxu0 %v1560
      %1996 = vmatpush.bf16.msra.mxu0 %v1524
      %1997 = vmatpush.bf16.msra.mxu0 %v1488
      %1998 = vmatpush.bf16.msra.mxu0 %v1452
      %1999 = vmatpush.bf16.msra.mxu0 %v1416
      %2000 = vmatmul.bf16.gmra.mxu0 %v252
      %v2001 = vpop.f32.mrf.mxu0
      %v2002 = vadd.f32 0.0, %v2001
      %v2003 = vpop.f32.mrf.mxu0
      %v2004 = vadd.f32 0.0, %v2003
      %2005 = vmatmul.bf16.gmra.mxu0 %v253
      %v2006 = vpop.f32.mrf.mxu0
      %v2007 = vadd.f32 0.0, %v2006
      %v2008 = vpop.f32.mrf.mxu0
      %v2009 = vadd.f32 0.0, %v2008
      %2010 = vmatmul.bf16.gmra.mxu0 %v254
      %v2011 = vpop.f32.mrf.mxu0
      %v2012 = vadd.f32 0.0, %v2011
      %v2013 = vpop.f32.mrf.mxu0
      %v2014 = vadd.f32 0.0, %v2013
      %2015 = vmatmul.bf16.gmra.mxu0 %v255
      %v2016 = vpop.f32.mrf.mxu0
      %v2017 = vadd.f32 0.0, %v2016
      %v2018 = vpop.f32.mrf.mxu0
      %v2019 = vadd.f32 0.0, %v2018
      %2020 = vmatmul.bf16.gmra.mxu0 %v256
      %v2021 = vpop.f32.mrf.mxu0
      %v2022 = vadd.f32 0.0, %v2021
      %v2023 = vpop.f32.mrf.mxu0
      %v2024 = vadd.f32 0.0, %v2023
      %2025 = vmatmul.bf16.gmra.mxu0 %v257
      %v2026 = vpop.f32.mrf.mxu0
      %v2027 = vadd.f32 0.0, %v2026
      %v2028 = vpop.f32.mrf.mxu0
      %v2029 = vadd.f32 0.0, %v2028
      %2030 = vmatmul.bf16.gmra.mxu0 %v258
      %v2031 = vpop.f32.mrf.mxu0
      %v2032 = vadd.f32 0.0, %v2031
      %v2033 = vpop.f32.mrf.mxu0
      %v2034 = vadd.f32 0.0, %v2033
      %2035 = vmatmul.bf16.gmra.mxu0 %v259
      %v2036 = vpop.f32.mrf.mxu0
      %v2037 = vadd.f32 0.0, %v2036
      %v2038 = vpop.f32.mrf.mxu0
      %v2039 = vadd.f32 0.0, %v2038
      %2040 = vmatmul.bf16.gmra.mxu0 %v260
      %v2041 = vpop.f32.mrf.mxu0
      %v2042 = vadd.f32 0.0, %v2041
      %v2043 = vpop.f32.mrf.mxu0
      %v2044 = vadd.f32 0.0, %v2043
      %2045 = vmatmul.bf16.gmra.mxu0 %v261
      %v2046 = vpop.f32.mrf.mxu0
      %v2047 = vadd.f32 0.0, %v2046
      %v2048 = vpop.f32.mrf.mxu0
      %v2049 = vadd.f32 0.0, %v2048
      %2050 = vmatmul.bf16.gmra.mxu0 %v262
      %v2051 = vpop.f32.mrf.mxu0
      %v2052 = vadd.f32 0.0, %v2051
      %v2053 = vpop.f32.mrf.mxu0
      %v2054 = vadd.f32 0.0, %v2053
      %2055 = vmatmul.bf16.gmra.mxu0 %v263
      %v2056 = vpop.f32.mrf.mxu0
      %v2057 = vadd.f32 0.0, %v2056
      %v2058 = vpop.f32.mrf.mxu0
      %v2059 = vadd.f32 0.0, %v2058
      %2060 = vdwg.mxu0
      %2061 = vmatpush.bf16.msra.mxu0 %v1669
      %2062 = vmatpush.bf16.msra.mxu0 %v1633
      %2063 = vmatpush.bf16.msra.mxu0 %v1597
      %2064 = vmatpush.bf16.msra.mxu0 %v1561
      %2065 = vmatpush.bf16.msra.mxu0 %v1525
      %2066 = vmatpush.bf16.msra.mxu0 %v1489
      %2067 = vmatpush.bf16.msra.mxu0 %v1453
      %2068 = vmatpush.bf16.msra.mxu0 %v1417
      %2069 = vmatmul.bf16.gmra.mxu0 %v252
      %v2070 = vpop.f32.mrf.mxu0
      %v2071 = vadd.f32 0.0, %v2070
      %v2072 = vpop.f32.mrf.mxu0
      %v2073 = vadd.f32 0.0, %v2072
      %2074 = vmatmul.bf16.gmra.mxu0 %v253
      %v2075 = vpop.f32.mrf.mxu0
      %v2076 = vadd.f32 0.0, %v2075
      %v2077 = vpop.f32.mrf.mxu0
      %v2078 = vadd.f32 0.0, %v2077
      %2079 = vmatmul.bf16.gmra.mxu0 %v254
      %v2080 = vpop.f32.mrf.mxu0
      %v2081 = vadd.f32 0.0, %v2080
      %v2082 = vpop.f32.mrf.mxu0
      %v2083 = vadd.f32 0.0, %v2082
      %2084 = vmatmul.bf16.gmra.mxu0 %v255
      %v2085 = vpop.f32.mrf.mxu0
      %v2086 = vadd.f32 0.0, %v2085
      %v2087 = vpop.f32.mrf.mxu0
      %v2088 = vadd.f32 0.0, %v2087
      %2089 = vmatmul.bf16.gmra.mxu0 %v256
      %v2090 = vpop.f32.mrf.mxu0
      %v2091 = vadd.f32 0.0, %v2090
      %v2092 = vpop.f32.mrf.mxu0
      %v2093 = vadd.f32 0.0, %v2092
      %2094 = vmatmul.bf16.gmra.mxu0 %v257
      %v2095 = vpop.f32.mrf.mxu0
      %v2096 = vadd.f32 0.0, %v2095
      %v2097 = vpop.f32.mrf.mxu0
      %v2098 = vadd.f32 0.0, %v2097
      %2099 = vmatmul.bf16.gmra.mxu0 %v258
      %v2100 = vpop.f32.mrf.mxu0
      %v2101 = vadd.f32 0.0, %v2100
      %v2102 = vpop.f32.mrf.mxu0
      %v2103 = vadd.f32 0.0, %v2102
      %2104 = vmatmul.bf16.gmra.mxu0 %v259
      %v2105 = vpop.f32.mrf.mxu0
      %v2106 = vadd.f32 0.0, %v2105
      %v2107 = vpop.f32.mrf.mxu0
      %v2108 = vadd.f32 0.0, %v2107
      %2109 = vmatmul.bf16.gmra.mxu0 %v260
      %v2110 = vpop.f32.mrf.mxu0
      %v2111 = vadd.f32 0.0, %v2110
      %v2112 = vpop.f32.mrf.mxu0
      %v2113 = vadd.f32 0.0, %v2112
      %2114 = vmatmul.bf16.gmra.mxu0 %v261
      %v2115 = vpop.f32.mrf.mxu0
      %v2116 = vadd.f32 0.0, %v2115
      %v2117 = vpop.f32.mrf.mxu0
      %v2118 = vadd.f32 0.0, %v2117
      %2119 = vmatmul.bf16.gmra.mxu0 %v262
      %v2120 = vpop.f32.mrf.mxu0
      %v2121 = vadd.f32 0.0, %v2120
      %v2122 = vpop.f32.mrf.mxu0
      %v2123 = vadd.f32 0.0, %v2122
      %2124 = vmatmul.bf16.gmra.mxu0 %v263
      %v2125 = vpop.f32.mrf.mxu0
      %v2126 = vadd.f32 0.0, %v2125
      %v2127 = vpop.f32.mrf.mxu0
      %v2128 = vadd.f32 0.0, %v2127
      %2129 = vdwg.mxu0
      %2130 = vmatpush.bf16.msra.mxu0 %v1670
      %2131 = vmatpush.bf16.msra.mxu0 %v1634
      %2132 = vmatpush.bf16.msra.mxu0 %v1598
      %2133 = vmatpush.bf16.msra.mxu0 %v1562
      %2134 = vmatpush.bf16.msra.mxu0 %v1526
      %2135 = vmatpush.bf16.msra.mxu0 %v1490
      %2136 = vmatpush.bf16.msra.mxu0 %v1454
      %2137 = vmatpush.bf16.msra.mxu0 %v1418
      %2138 = vmatmul.bf16.gmra.mxu0 %v252
      %v2139 = vpop.f32.mrf.mxu0
      %v2140 = vadd.f32 0.0, %v2139
      %v2141 = vpop.f32.mrf.mxu0
      %v2142 = vadd.f32 0.0, %v2141
      %2143 = vmatmul.bf16.gmra.mxu0 %v253
      %v2144 = vpop.f32.mrf.mxu0
      %v2145 = vadd.f32 0.0, %v2144
      %v2146 = vpop.f32.mrf.mxu0
      %v2147 = vadd.f32 0.0, %v2146
      %2148 = vmatmul.bf16.gmra.mxu0 %v254
      %v2149 = vpop.f32.mrf.mxu0
      %v2150 = vadd.f32 0.0, %v2149
      %v2151 = vpop.f32.mrf.mxu0
      %v2152 = vadd.f32 0.0, %v2151
      %2153 = vmatmul.bf16.gmra.mxu0 %v255
      %v2154 = vpop.f32.mrf.mxu0
      %v2155 = vadd.f32 0.0, %v2154
      %v2156 = vpop.f32.mrf.mxu0
      %v2157 = vadd.f32 0.0, %v2156
      %2158 = vmatmul.bf16.gmra.mxu0 %v256
      %v2159 = vpop.f32.mrf.mxu0
      %v2160 = vadd.f32 0.0, %v2159
      %v2161 = vpop.f32.mrf.mxu0
      %v2162 = vadd.f32 0.0, %v2161
      %2163 = vmatmul.bf16.gmra.mxu0 %v257
      %v2164 = vpop.f32.mrf.mxu0
      %v2165 = vadd.f32 0.0, %v2164
      %v2166 = vpop.f32.mrf.mxu0
      %v2167 = vadd.f32 0.0, %v2166
      %2168 = vmatmul.bf16.gmra.mxu0 %v258
      %v2169 = vpop.f32.mrf.mxu0
      %v2170 = vadd.f32 0.0, %v2169
      %v2171 = vpop.f32.mrf.mxu0
      %v2172 = vadd.f32 0.0, %v2171
      %2173 = vmatmul.bf16.gmra.mxu0 %v259
      %v2174 = vpop.f32.mrf.mxu0
      %v2175 = vadd.f32 0.0, %v2174
      %v2176 = vpop.f32.mrf.mxu0
      %v2177 = vadd.f32 0.0, %v2176
      %2178 = vmatmul.bf16.gmra.mxu0 %v260
      %v2179 = vpop.f32.mrf.mxu0
      %v2180 = vadd.f32 0.0, %v2179
      %v2181 = vpop.f32.mrf.mxu0
      %v2182 = vadd.f32 0.0, %v2181
      %2183 = vmatmul.bf16.gmra.mxu0 %v261
      %v2184 = vpop.f32.mrf.mxu0
      %v2185 = vadd.f32 0.0, %v2184
      %v2186 = vpop.f32.mrf.mxu0
      %v2187 = vadd.f32 0.0, %v2186
      %2188 = vmatmul.bf16.gmra.mxu0 %v262
      %v2189 = vpop.f32.mrf.mxu0
      %v2190 = vadd.f32 0.0, %v2189
      %v2191 = vpop.f32.mrf.mxu0
      %v2192 = vadd.f32 0.0, %v2191
      %2193 = vmatmul.bf16.gmra.mxu0 %v263
      %v2194 = vpop.f32.mrf.mxu0
      %v2195 = vadd.f32 0.0, %v2194
      %v2196 = vpop.f32.mrf.mxu0
      %v2197 = vadd.f32 0.0, %v2196
      %2198 = vdwg.mxu0
      %2199 = vmatpush.bf16.msra.mxu0 %v1671
      %2200 = vmatpush.bf16.msra.mxu0 %v1635
      %2201 = vmatpush.bf16.msra.mxu0 %v1599
      %2202 = vmatpush.bf16.msra.mxu0 %v1563
      %2203 = vmatpush.bf16.msra.mxu0 %v1527
      %2204 = vmatpush.bf16.msra.mxu0 %v1491
      %2205 = vmatpush.bf16.msra.mxu0 %v1455
      %2206 = vmatpush.bf16.msra.mxu0 %v1419
      %2207 = vmatmul.bf16.gmra.mxu0 %v252
      %v2208 = vpop.f32.mrf.mxu0
      %v2209 = vadd.f32 0.0, %v2208
      %v2210 = vpop.f32.mrf.mxu0
      %v2211 = vadd.f32 0.0, %v2210
      %2212 = vmatmul.bf16.gmra.mxu0 %v253
      %v2213 = vpop.f32.mrf.mxu0
      %v2214 = vadd.f32 0.0, %v2213
      %v2215 = vpop.f32.mrf.mxu0
      %v2216 = vadd.f32 0.0, %v2215
      %2217 = vmatmul.bf16.gmra.mxu0 %v254
      %v2218 = vpop.f32.mrf.mxu0
      %v2219 = vadd.f32 0.0, %v2218
      %v2220 = vpop.f32.mrf.mxu0
      %v2221 = vadd.f32 0.0, %v2220
      %2222 = vmatmul.bf16.gmra.mxu0 %v255
      %v2223 = vpop.f32.mrf.mxu0
      %v2224 = vadd.f32 0.0, %v2223
      %v2225 = vpop.f32.mrf.mxu0
      %v2226 = vadd.f32 0.0, %v2225
      %2227 = vmatmul.bf16.gmra.mxu0 %v256
      %v2228 = vpop.f32.mrf.mxu0
      %v2229 = vadd.f32 0.0, %v2228
      %v2230 = vpop.f32.mrf.mxu0
      %v2231 = vadd.f32 0.0, %v2230
      %2232 = vmatmul.bf16.gmra.mxu0 %v257
      %v2233 = vpop.f32.mrf.mxu0
      %v2234 = vadd.f32 0.0, %v2233
      %v2235 = vpop.f32.mrf.mxu0
      %v2236 = vadd.f32 0.0, %v2235
      %2237 = vmatmul.bf16.gmra.mxu0 %v258
      %v2238 = vpop.f32.mrf.mxu0
      %v2239 = vadd.f32 0.0, %v2238
      %v2240 = vpop.f32.mrf.mxu0
      %v2241 = vadd.f32 0.0, %v2240
      %2242 = vmatmul.bf16.gmra.mxu0 %v259
      %v2243 = vpop.f32.mrf.mxu0
      %v2244 = vadd.f32 0.0, %v2243
      %v2245 = vpop.f32.mrf.mxu0
      %v2246 = vadd.f32 0.0, %v2245
      %2247 = vmatmul.bf16.gmra.mxu0 %v260
      %v2248 = vpop.f32.mrf.mxu0
      %v2249 = vadd.f32 0.0, %v2248
      %v2250 = vpop.f32.mrf.mxu0
      %v2251 = vadd.f32 0.0, %v2250
      %2252 = vmatmul.bf16.gmra.mxu0 %v261
      %v2253 = vpop.f32.mrf.mxu0
      %v2254 = vadd.f32 0.0, %v2253
      %v2255 = vpop.f32.mrf.mxu0
      %v2256 = vadd.f32 0.0, %v2255
      %2257 = vmatmul.bf16.gmra.mxu0 %v262
      %v2258 = vpop.f32.mrf.mxu0
      %v2259 = vadd.f32 0.0, %v2258
      %v2260 = vpop.f32.mrf.mxu0
      %v2261 = vadd.f32 0.0, %v2260
      %2262 = vmatmul.bf16.gmra.mxu0 %v263
      %v2263 = vpop.f32.mrf.mxu0
      %v2264 = vadd.f32 0.0, %v2263
      %v2265 = vpop.f32.mrf.mxu0
      %v2266 = vadd.f32 0.0, %v2265
      %2267 = vdwg.mxu0
      %2268 = vmatpush.bf16.msra.mxu0 %v1672
      %2269 = vmatpush.bf16.msra.mxu0 %v1636
      %2270 = vmatpush.bf16.msra.mxu0 %v1600
      %2271 = vmatpush.bf16.msra.mxu0 %v1564
      %2272 = vmatpush.bf16.msra.mxu0 %v1528
      %2273 = vmatpush.bf16.msra.mxu0 %v1492
      %2274 = vmatpush.bf16.msra.mxu0 %v1456
      %2275 = vmatpush.bf16.msra.mxu0 %v1420
      %2276 = vmatmul.bf16.gmra.mxu0 %v252
      %v2277 = vpop.f32.mrf.mxu0
      %v2278 = vadd.f32 0.0, %v2277
      %v2279 = vpop.f32.mrf.mxu0
      %v2280 = vadd.f32 0.0, %v2279
      %2281 = vmatmul.bf16.gmra.mxu0 %v253
      %v2282 = vpop.f32.mrf.mxu0
      %v2283 = vadd.f32 0.0, %v2282
      %v2284 = vpop.f32.mrf.mxu0
      %v2285 = vadd.f32 0.0, %v2284
      %2286 = vmatmul.bf16.gmra.mxu0 %v254
      %v2287 = vpop.f32.mrf.mxu0
      %v2288 = vadd.f32 0.0, %v2287
      %v2289 = vpop.f32.mrf.mxu0
      %v2290 = vadd.f32 0.0, %v2289
      %2291 = vmatmul.bf16.gmra.mxu0 %v255
      %v2292 = vpop.f32.mrf.mxu0
      %v2293 = vadd.f32 0.0, %v2292
      %v2294 = vpop.f32.mrf.mxu0
      %v2295 = vadd.f32 0.0, %v2294
      %2296 = vmatmul.bf16.gmra.mxu0 %v256
      %v2297 = vpop.f32.mrf.mxu0
      %v2298 = vadd.f32 0.0, %v2297
      %v2299 = vpop.f32.mrf.mxu0
      %v2300 = vadd.f32 0.0, %v2299
      %2301 = vmatmul.bf16.gmra.mxu0 %v257
      %v2302 = vpop.f32.mrf.mxu0
      %v2303 = vadd.f32 0.0, %v2302
      %v2304 = vpop.f32.mrf.mxu0
      %v2305 = vadd.f32 0.0, %v2304
      %2306 = vmatmul.bf16.gmra.mxu0 %v258
      %v2307 = vpop.f32.mrf.mxu0
      %v2308 = vadd.f32 0.0, %v2307
      %v2309 = vpop.f32.mrf.mxu0
      %v2310 = vadd.f32 0.0, %v2309
      %2311 = vmatmul.bf16.gmra.mxu0 %v259
      %v2312 = vpop.f32.mrf.mxu0
      %v2313 = vadd.f32 0.0, %v2312
      %v2314 = vpop.f32.mrf.mxu0
      %v2315 = vadd.f32 0.0, %v2314
      %2316 = vmatmul.bf16.gmra.mxu0 %v260
      %v2317 = vpop.f32.mrf.mxu0
      %v2318 = vadd.f32 0.0, %v2317
      %v2319 = vpop.f32.mrf.mxu0
      %v2320 = vadd.f32 0.0, %v2319
      %2321 = vmatmul.bf16.gmra.mxu0 %v261
      %v2322 = vpop.f32.mrf.mxu0
      %v2323 = vadd.f32 0.0, %v2322
      %v2324 = vpop.f32.mrf.mxu0
      %v2325 = vadd.f32 0.0, %v2324
      %2326 = vmatmul.bf16.gmra.mxu0 %v262
      %v2327 = vpop.f32.mrf.mxu0
      %v2328 = vadd.f32 0.0, %v2327
      %v2329 = vpop.f32.mrf.mxu0
      %v2330 = vadd.f32 0.0, %v2329
      %2331 = vmatmul.bf16.gmra.mxu0 %v263
      %v2332 = vpop.f32.mrf.mxu0
      %v2333 = vadd.f32 0.0, %v2332
      %v2334 = vpop.f32.mrf.mxu0
      %v2335 = vadd.f32 0.0, %v2334
      %2336 = vdwg.mxu0
      %2337 = vmatpush.bf16.msra.mxu0 %v1673
      %2338 = vmatpush.bf16.msra.mxu0 %v1637
      %2339 = vmatpush.bf16.msra.mxu0 %v1601
      %2340 = vmatpush.bf16.msra.mxu0 %v1565
      %2341 = vmatpush.bf16.msra.mxu0 %v1529
      %2342 = vmatpush.bf16.msra.mxu0 %v1493
      %2343 = vmatpush.bf16.msra.mxu0 %v1457
      %2344 = vmatpush.bf16.msra.mxu0 %v1421
      %2345 = vmatmul.bf16.gmra.mxu0 %v252
      %v2346 = vpop.f32.mrf.mxu0
      %v2347 = vadd.f32 0.0, %v2346
      %v2348 = vpop.f32.mrf.mxu0
      %v2349 = vadd.f32 0.0, %v2348
      %2350 = vmatmul.bf16.gmra.mxu0 %v253
      %v2351 = vpop.f32.mrf.mxu0
      %v2352 = vadd.f32 0.0, %v2351
      %v2353 = vpop.f32.mrf.mxu0
      %v2354 = vadd.f32 0.0, %v2353
      %2355 = vmatmul.bf16.gmra.mxu0 %v254
      %v2356 = vpop.f32.mrf.mxu0
      %v2357 = vadd.f32 0.0, %v2356
      %v2358 = vpop.f32.mrf.mxu0
      %v2359 = vadd.f32 0.0, %v2358
      %2360 = vmatmul.bf16.gmra.mxu0 %v255
      %v2361 = vpop.f32.mrf.mxu0
      %v2362 = vadd.f32 0.0, %v2361
      %v2363 = vpop.f32.mrf.mxu0
      %v2364 = vadd.f32 0.0, %v2363
      %2365 = vmatmul.bf16.gmra.mxu0 %v256
      %v2366 = vpop.f32.mrf.mxu0
      %v2367 = vadd.f32 0.0, %v2366
      %v2368 = vpop.f32.mrf.mxu0
      %v2369 = vadd.f32 0.0, %v2368
      %2370 = vmatmul.bf16.gmra.mxu0 %v257
      %v2371 = vpop.f32.mrf.mxu0
      %v2372 = vadd.f32 0.0, %v2371
      %v2373 = vpop.f32.mrf.mxu0
      %v2374 = vadd.f32 0.0, %v2373
      %2375 = vmatmul.bf16.gmra.mxu0 %v258
      %v2376 = vpop.f32.mrf.mxu0
      %v2377 = vadd.f32 0.0, %v2376
      %v2378 = vpop.f32.mrf.mxu0
      %v2379 = vadd.f32 0.0, %v2378
      %2380 = vmatmul.bf16.gmra.mxu0 %v259
      %v2381 = vpop.f32.mrf.mxu0
      %v2382 = vadd.f32 0.0, %v2381
      %v2383 = vpop.f32.mrf.mxu0
      %v2384 = vadd.f32 0.0, %v2383
      %2385 = vmatmul.bf16.gmra.mxu0 %v260
      %v2386 = vpop.f32.mrf.mxu0
      %v2387 = vadd.f32 0.0, %v2386
      %v2388 = vpop.f32.mrf.mxu0
      %v2389 = vadd.f32 0.0, %v2388
      %2390 = vmatmul.bf16.gmra.mxu0 %v261
      %v2391 = vpop.f32.mrf.mxu0
      %v2392 = vadd.f32 0.0, %v2391
      %v2393 = vpop.f32.mrf.mxu0
      %v2394 = vadd.f32 0.0, %v2393
      %2395 = vmatmul.bf16.gmra.mxu0 %v262
      %v2396 = vpop.f32.mrf.mxu0
      %v2397 = vadd.f32 0.0, %v2396
      %v2398 = vpop.f32.mrf.mxu0
      %v2399 = vadd.f32 0.0, %v2398
      %2400 = vmatmul.bf16.gmra.mxu0 %v263
      %v2401 = vpop.f32.mrf.mxu0
      %v2402 = vadd.f32 0.0, %v2401
      %v2403 = vpop.f32.mrf.mxu0
      %v2404 = vadd.f32 0.0, %v2403
      %2405 = vdwg.mxu0
      %2406 = vmatpush.bf16.msra.mxu0 %v1674
      %2407 = vmatpush.bf16.msra.mxu0 %v1638
      %2408 = vmatpush.bf16.msra.mxu0 %v1602
      %2409 = vmatpush.bf16.msra.mxu0 %v1566
      %2410 = vmatpush.bf16.msra.mxu0 %v1530
      %2411 = vmatpush.bf16.msra.mxu0 %v1494
      %2412 = vmatpush.bf16.msra.mxu0 %v1458
      %2413 = vmatpush.bf16.msra.mxu0 %v1422
      %2414 = vmatmul.bf16.gmra.mxu0 %v252
      %v2415 = vpop.f32.mrf.mxu0
      %v2416 = vadd.f32 0.0, %v2415
      %v2417 = vpop.f32.mrf.mxu0
      %v2418 = vadd.f32 0.0, %v2417
      %2419 = vmatmul.bf16.gmra.mxu0 %v253
      %v2420 = vpop.f32.mrf.mxu0
      %v2421 = vadd.f32 0.0, %v2420
      %v2422 = vpop.f32.mrf.mxu0
      %v2423 = vadd.f32 0.0, %v2422
      %2424 = vmatmul.bf16.gmra.mxu0 %v254
      %v2425 = vpop.f32.mrf.mxu0
      %v2426 = vadd.f32 0.0, %v2425
      %v2427 = vpop.f32.mrf.mxu0
      %v2428 = vadd.f32 0.0, %v2427
      %2429 = vmatmul.bf16.gmra.mxu0 %v255
      %v2430 = vpop.f32.mrf.mxu0
      %v2431 = vadd.f32 0.0, %v2430
      %v2432 = vpop.f32.mrf.mxu0
      %v2433 = vadd.f32 0.0, %v2432
      %2434 = vmatmul.bf16.gmra.mxu0 %v256
      %v2435 = vpop.f32.mrf.mxu0
      %v2436 = vadd.f32 0.0, %v2435
      %v2437 = vpop.f32.mrf.mxu0
      %v2438 = vadd.f32 0.0, %v2437
      %2439 = vmatmul.bf16.gmra.mxu0 %v257
      %v2440 = vpop.f32.mrf.mxu0
      %v2441 = vadd.f32 0.0, %v2440
      %v2442 = vpop.f32.mrf.mxu0
      %v2443 = vadd.f32 0.0, %v2442
      %2444 = vmatmul.bf16.gmra.mxu0 %v258
      %v2445 = vpop.f32.mrf.mxu0
      %v2446 = vadd.f32 0.0, %v2445
      %v2447 = vpop.f32.mrf.mxu0
      %v2448 = vadd.f32 0.0, %v2447
      %2449 = vmatmul.bf16.gmra.mxu0 %v259
      %v2450 = vpop.f32.mrf.mxu0
      %v2451 = vadd.f32 0.0, %v2450
      %v2452 = vpop.f32.mrf.mxu0
      %v2453 = vadd.f32 0.0, %v2452
      %2454 = vmatmul.bf16.gmra.mxu0 %v260
      %v2455 = vpop.f32.mrf.mxu0
      %v2456 = vadd.f32 0.0, %v2455
      %v2457 = vpop.f32.mrf.mxu0
      %v2458 = vadd.f32 0.0, %v2457
      %2459 = vmatmul.bf16.gmra.mxu0 %v261
      %v2460 = vpop.f32.mrf.mxu0
      %v2461 = vadd.f32 0.0, %v2460
      %v2462 = vpop.f32.mrf.mxu0
      %v2463 = vadd.f32 0.0, %v2462
      %2464 = vmatmul.bf16.gmra.mxu0 %v262
      %v2465 = vpop.f32.mrf.mxu0
      %v2466 = vadd.f32 0.0, %v2465
      %v2467 = vpop.f32.mrf.mxu0
      %v2468 = vadd.f32 0.0, %v2467
      %2469 = vmatmul.bf16.gmra.mxu0 %v263
      %v2470 = vpop.f32.mrf.mxu0
      %v2471 = vadd.f32 0.0, %v2470
      %v2472 = vpop.f32.mrf.mxu0
      %v2473 = vadd.f32 0.0, %v2472
      %2474 = vdwg.mxu0
      %2475 = vmatpush.bf16.msra.mxu0 %v1675
      %2476 = vmatpush.bf16.msra.mxu0 %v1639
      %2477 = vmatpush.bf16.msra.mxu0 %v1603
      %2478 = vmatpush.bf16.msra.mxu0 %v1567
      %2479 = vmatpush.bf16.msra.mxu0 %v1531
      %2480 = vmatpush.bf16.msra.mxu0 %v1495
      %2481 = vmatpush.bf16.msra.mxu0 %v1459
      %2482 = vmatpush.bf16.msra.mxu0 %v1423
      %2483 = vmatmul.bf16.gmra.mxu0 %v252
      %v2484 = vpop.f32.mrf.mxu0
      %v2485 = vadd.f32 0.0, %v2484
      %v2486 = vpop.f32.mrf.mxu0
      %v2487 = vadd.f32 0.0, %v2486
      %2488 = vmatmul.bf16.gmra.mxu0 %v253
      %v2489 = vpop.f32.mrf.mxu0
      %v2490 = vadd.f32 0.0, %v2489
      %v2491 = vpop.f32.mrf.mxu0
      %v2492 = vadd.f32 0.0, %v2491
      %2493 = vmatmul.bf16.gmra.mxu0 %v254
      %v2494 = vpop.f32.mrf.mxu0
      %v2495 = vadd.f32 0.0, %v2494
      %v2496 = vpop.f32.mrf.mxu0
      %v2497 = vadd.f32 0.0, %v2496
      %2498 = vmatmul.bf16.gmra.mxu0 %v255
      %v2499 = vpop.f32.mrf.mxu0
      %v2500 = vadd.f32 0.0, %v2499
      %v2501 = vpop.f32.mrf.mxu0
      %v2502 = vadd.f32 0.0, %v2501
      %2503 = vmatmul.bf16.gmra.mxu0 %v256
      %v2504 = vpop.f32.mrf.mxu0
      %v2505 = vadd.f32 0.0, %v2504
      %v2506 = vpop.f32.mrf.mxu0
      %v2507 = vadd.f32 0.0, %v2506
      %2508 = vmatmul.bf16.gmra.mxu0 %v257
      %v2509 = vpop.f32.mrf.mxu0
      %v2510 = vadd.f32 0.0, %v2509
      %v2511 = vpop.f32.mrf.mxu0
      %v2512 = vadd.f32 0.0, %v2511
      %2513 = vmatmul.bf16.gmra.mxu0 %v258
      %v2514 = vpop.f32.mrf.mxu0
      %v2515 = vadd.f32 0.0, %v2514
      %v2516 = vpop.f32.mrf.mxu0
      %v2517 = vadd.f32 0.0, %v2516
      %2518 = vmatmul.bf16.gmra.mxu0 %v259
      %v2519 = vpop.f32.mrf.mxu0
      %v2520 = vadd.f32 0.0, %v2519
      %v2521 = vpop.f32.mrf.mxu0
      %v2522 = vadd.f32 0.0, %v2521
      %2523 = vmatmul.bf16.gmra.mxu0 %v260
      %v2524 = vpop.f32.mrf.mxu0
      %v2525 = vadd.f32 0.0, %v2524
      %v2526 = vpop.f32.mrf.mxu0
      %v2527 = vadd.f32 0.0, %v2526
      %2528 = vmatmul.bf16.gmra.mxu0 %v261
      %v2529 = vpop.f32.mrf.mxu0
      %v2530 = vadd.f32 0.0, %v2529
      %v2531 = vpop.f32.mrf.mxu0
      %v2532 = vadd.f32 0.0, %v2531
      %2533 = vmatmul.bf16.gmra.mxu0 %v262
      %v2534 = vpop.f32.mrf.mxu0
      %v2535 = vadd.f32 0.0, %v2534
      %v2536 = vpop.f32.mrf.mxu0
      %v2537 = vadd.f32 0.0, %v2536
      %2538 = vmatmul.bf16.gmra.mxu0 %v263
      %v2539 = vpop.f32.mrf.mxu0
      %v2540 = vadd.f32 0.0, %v2539
      %v2541 = vpop.f32.mrf.mxu0
      %v2542 = vadd.f32 0.0, %v2541
      %2543 = vdwg.mxu0
      %2544 = vmatpush.bf16.msra.mxu0 %v1676
      %2545 = vmatpush.bf16.msra.mxu0 %v1640
      %2546 = vmatpush.bf16.msra.mxu0 %v1604
      %2547 = vmatpush.bf16.msra.mxu0 %v1568
      %2548 = vmatpush.bf16.msra.mxu0 %v1532
      %2549 = vmatpush.bf16.msra.mxu0 %v1496
      %2550 = vmatpush.bf16.msra.mxu0 %v1460
      %2551 = vmatpush.bf16.msra.mxu0 %v1424
      %2552 = vmatmul.bf16.gmra.mxu0 %v252
      %v2553 = vpop.f32.mrf.mxu0
      %v2554 = vadd.f32 0.0, %v2553
      %v2555 = vpop.f32.mrf.mxu0
      %v2556 = vadd.f32 0.0, %v2555
      %2557 = vmatmul.bf16.gmra.mxu0 %v253
      %v2558 = vpop.f32.mrf.mxu0
      %v2559 = vadd.f32 0.0, %v2558
      %v2560 = vpop.f32.mrf.mxu0
      %v2561 = vadd.f32 0.0, %v2560
      %2562 = vmatmul.bf16.gmra.mxu0 %v254
      %v2563 = vpop.f32.mrf.mxu0
      %v2564 = vadd.f32 0.0, %v2563
      %v2565 = vpop.f32.mrf.mxu0
      %v2566 = vadd.f32 0.0, %v2565
      %2567 = vmatmul.bf16.gmra.mxu0 %v255
      %v2568 = vpop.f32.mrf.mxu0
      %v2569 = vadd.f32 0.0, %v2568
      %v2570 = vpop.f32.mrf.mxu0
      %v2571 = vadd.f32 0.0, %v2570
      %2572 = vmatmul.bf16.gmra.mxu0 %v256
      %v2573 = vpop.f32.mrf.mxu0
      %v2574 = vadd.f32 0.0, %v2573
      %v2575 = vpop.f32.mrf.mxu0
      %v2576 = vadd.f32 0.0, %v2575
      %2577 = vmatmul.bf16.gmra.mxu0 %v257
      %v2578 = vpop.f32.mrf.mxu0
      %v2579 = vadd.f32 0.0, %v2578
      %v2580 = vpop.f32.mrf.mxu0
      %v2581 = vadd.f32 0.0, %v2580
      %2582 = vmatmul.bf16.gmra.mxu0 %v258
      %v2583 = vpop.f32.mrf.mxu0
      %v2584 = vadd.f32 0.0, %v2583
      %v2585 = vpop.f32.mrf.mxu0
      %v2586 = vadd.f32 0.0, %v2585
      %2587 = vmatmul.bf16.gmra.mxu0 %v259
      %v2588 = vpop.f32.mrf.mxu0
      %v2589 = vadd.f32 0.0, %v2588
      %v2590 = vpop.f32.mrf.mxu0
      %v2591 = vadd.f32 0.0, %v2590
      %2592 = vmatmul.bf16.gmra.mxu0 %v260
      %v2593 = vpop.f32.mrf.mxu0
      %v2594 = vadd.f32 0.0, %v2593
      %v2595 = vpop.f32.mrf.mxu0
      %v2596 = vadd.f32 0.0, %v2595
      %2597 = vmatmul.bf16.gmra.mxu0 %v261
      %v2598 = vpop.f32.mrf.mxu0
      %v2599 = vadd.f32 0.0, %v2598
      %v2600 = vpop.f32.mrf.mxu0
      %v2601 = vadd.f32 0.0, %v2600
      %2602 = vmatmul.bf16.gmra.mxu0 %v262
      %v2603 = vpop.f32.mrf.mxu0
      %v2604 = vadd.f32 0.0, %v2603
      %v2605 = vpop.f32.mrf.mxu0
      %v2606 = vadd.f32 0.0, %v2605
      %2607 = vmatmul.bf16.gmra.mxu0 %v263
      %v2608 = vpop.f32.mrf.mxu0
      %v2609 = vadd.f32 0.0, %v2608
      %v2610 = vpop.f32.mrf.mxu0
      %v2611 = vadd.f32 0.0, %v2610
      %2612 = vdwg.mxu0
      %2613 = vmatpush.bf16.msra.mxu0 %v1677
      %2614 = vmatpush.bf16.msra.mxu0 %v1641
      %2615 = vmatpush.bf16.msra.mxu0 %v1605
      %2616 = vmatpush.bf16.msra.mxu0 %v1569
      %2617 = vmatpush.bf16.msra.mxu0 %v1533
      %2618 = vmatpush.bf16.msra.mxu0 %v1497
      %2619 = vmatpush.bf16.msra.mxu0 %v1461
      %2620 = vmatpush.bf16.msra.mxu0 %v1425
      %2621 = vmatmul.bf16.gmra.mxu0 %v252
      %v2622 = vpop.f32.mrf.mxu0
      %v2623 = vadd.f32 0.0, %v2622
      %v2624 = vpop.f32.mrf.mxu0
      %v2625 = vadd.f32 0.0, %v2624
      %2626 = vmatmul.bf16.gmra.mxu0 %v253
      %v2627 = vpop.f32.mrf.mxu0
      %v2628 = vadd.f32 0.0, %v2627
      %v2629 = vpop.f32.mrf.mxu0
      %v2630 = vadd.f32 0.0, %v2629
      %2631 = vmatmul.bf16.gmra.mxu0 %v254
      %v2632 = vpop.f32.mrf.mxu0
      %v2633 = vadd.f32 0.0, %v2632
      %v2634 = vpop.f32.mrf.mxu0
      %v2635 = vadd.f32 0.0, %v2634
      %2636 = vmatmul.bf16.gmra.mxu0 %v255
      %v2637 = vpop.f32.mrf.mxu0
      %v2638 = vadd.f32 0.0, %v2637
      %v2639 = vpop.f32.mrf.mxu0
      %v2640 = vadd.f32 0.0, %v2639
      %2641 = vmatmul.bf16.gmra.mxu0 %v256
      %v2642 = vpop.f32.mrf.mxu0
      %v2643 = vadd.f32 0.0, %v2642
      %v2644 = vpop.f32.mrf.mxu0
      %v2645 = vadd.f32 0.0, %v2644
      %2646 = vmatmul.bf16.gmra.mxu0 %v257
      %v2647 = vpop.f32.mrf.mxu0
      %v2648 = vadd.f32 0.0, %v2647
      %v2649 = vpop.f32.mrf.mxu0
      %v2650 = vadd.f32 0.0, %v2649
      %2651 = vmatmul.bf16.gmra.mxu0 %v258
      %v2652 = vpop.f32.mrf.mxu0
      %v2653 = vadd.f32 0.0, %v2652
      %v2654 = vpop.f32.mrf.mxu0
      %v2655 = vadd.f32 0.0, %v2654
      %2656 = vmatmul.bf16.gmra.mxu0 %v259
      %v2657 = vpop.f32.mrf.mxu0
      %v2658 = vadd.f32 0.0, %v2657
      %v2659 = vpop.f32.mrf.mxu0
      %v2660 = vadd.f32 0.0, %v2659
      %2661 = vmatmul.bf16.gmra.mxu0 %v260
      %v2662 = vpop.f32.mrf.mxu0
      %v2663 = vadd.f32 0.0, %v2662
      %v2664 = vpop.f32.mrf.mxu0
      %v2665 = vadd.f32 0.0, %v2664
      %2666 = vmatmul.bf16.gmra.mxu0 %v261
      %v2667 = vpop.f32.mrf.mxu0
      %v2668 = vadd.f32 0.0, %v2667
      %v2669 = vpop.f32.mrf.mxu0
      %v2670 = vadd.f32 0.0, %v2669
      %2671 = vmatmul.bf16.gmra.mxu0 %v262
      %v2672 = vpop.f32.mrf.mxu0
      %v2673 = vadd.f32 0.0, %v2672
      %v2674 = vpop.f32.mrf.mxu0
      %v2675 = vadd.f32 0.0, %v2674
      %2676 = vmatmul.bf16.gmra.mxu0 %v263
      %v2677 = vpop.f32.mrf.mxu0
      %v2678 = vadd.f32 0.0, %v2677
      %v2679 = vpop.f32.mrf.mxu0
      %v2680 = vadd.f32 0.0, %v2679
      %2681 = vdwg.mxu0
      %2682 = vmatpush.bf16.msra.mxu0 %v1678
      %2683 = vmatpush.bf16.msra.mxu0 %v1642
      %2684 = vmatpush.bf16.msra.mxu0 %v1606
      %2685 = vmatpush.bf16.msra.mxu0 %v1570
      %2686 = vmatpush.bf16.msra.mxu0 %v1534
      %2687 = vmatpush.bf16.msra.mxu0 %v1498
      %2688 = vmatpush.bf16.msra.mxu0 %v1462
      %2689 = vmatpush.bf16.msra.mxu0 %v1426
      %2690 = vmatmul.bf16.gmra.mxu0 %v252
      %v2691 = vpop.f32.mrf.mxu0
      %v2692 = vadd.f32 0.0, %v2691
      %v2693 = vpop.f32.mrf.mxu0
      %v2694 = vadd.f32 0.0, %v2693
      %2695 = vmatmul.bf16.gmra.mxu0 %v253
      %v2696 = vpop.f32.mrf.mxu0
      %v2697 = vadd.f32 0.0, %v2696
      %v2698 = vpop.f32.mrf.mxu0
      %v2699 = vadd.f32 0.0, %v2698
      %2700 = vmatmul.bf16.gmra.mxu0 %v254
      %v2701 = vpop.f32.mrf.mxu0
      %v2702 = vadd.f32 0.0, %v2701
      %v2703 = vpop.f32.mrf.mxu0
      %v2704 = vadd.f32 0.0, %v2703
      %2705 = vmatmul.bf16.gmra.mxu0 %v255
      %v2706 = vpop.f32.mrf.mxu0
      %v2707 = vadd.f32 0.0, %v2706
      %v2708 = vpop.f32.mrf.mxu0
      %v2709 = vadd.f32 0.0, %v2708
      %2710 = vmatmul.bf16.gmra.mxu0 %v256
      %v2711 = vpop.f32.mrf.mxu0
      %v2712 = vadd.f32 0.0, %v2711
      %v2713 = vpop.f32.mrf.mxu0
      %v2714 = vadd.f32 0.0, %v2713
      %2715 = vmatmul.bf16.gmra.mxu0 %v257
      %v2716 = vpop.f32.mrf.mxu0
      %v2717 = vadd.f32 0.0, %v2716
      %v2718 = vpop.f32.mrf.mxu0
      %v2719 = vadd.f32 0.0, %v2718
      %2720 = vmatmul.bf16.gmra.mxu0 %v258
      %v2721 = vpop.f32.mrf.mxu0
      %v2722 = vadd.f32 0.0, %v2721
      %v2723 = vpop.f32.mrf.mxu0
      %v2724 = vadd.f32 0.0, %v2723
      %2725 = vmatmul.bf16.gmra.mxu0 %v259
      %v2726 = vpop.f32.mrf.mxu0
      %v2727 = vadd.f32 0.0, %v2726
      %v2728 = vpop.f32.mrf.mxu0
      %v2729 = vadd.f32 0.0, %v2728
      %2730 = vmatmul.bf16.gmra.mxu0 %v260
      %v2731 = vpop.f32.mrf.mxu0
      %v2732 = vadd.f32 0.0, %v2731
      %v2733 = vpop.f32.mrf.mxu0
      %v2734 = vadd.f32 0.0, %v2733
      %2735 = vmatmul.bf16.gmra.mxu0 %v261
      %v2736 = vpop.f32.mrf.mxu0
      %v2737 = vadd.f32 0.0, %v2736
      %v2738 = vpop.f32.mrf.mxu0
      %v2739 = vadd.f32 0.0, %v2738
      %2740 = vmatmul.bf16.gmra.mxu0 %v262
      %v2741 = vpop.f32.mrf.mxu0
      %v2742 = vadd.f32 0.0, %v2741
      %v2743 = vpop.f32.mrf.mxu0
      %v2744 = vadd.f32 0.0, %v2743
      %2745 = vmatmul.bf16.gmra.mxu0 %v263
      %v2746 = vpop.f32.mrf.mxu0
      %v2747 = vadd.f32 0.0, %v2746
      %v2748 = vpop.f32.mrf.mxu0
      %v2749 = vadd.f32 0.0, %v2748
      %2750 = vdwg.mxu0
      %2751 = vmatpush.bf16.msra.mxu0 %v1679
      %2752 = vmatpush.bf16.msra.mxu0 %v1643
      %2753 = vmatpush.bf16.msra.mxu0 %v1607
      %2754 = vmatpush.bf16.msra.mxu0 %v1571
      %2755 = vmatpush.bf16.msra.mxu0 %v1535
      %2756 = vmatpush.bf16.msra.mxu0 %v1499
      %2757 = vmatpush.bf16.msra.mxu0 %v1463
      %2758 = vmatpush.bf16.msra.mxu0 %v1427
      %2759 = vmatmul.bf16.gmra.mxu0 %v252
      %v2760 = vpop.f32.mrf.mxu0
      %v2761 = vadd.f32 0.0, %v2760
      %v2762 = vpop.f32.mrf.mxu0
      %v2763 = vadd.f32 0.0, %v2762
      %2764 = vmatmul.bf16.gmra.mxu0 %v253
      %v2765 = vpop.f32.mrf.mxu0
      %v2766 = vadd.f32 0.0, %v2765
      %v2767 = vpop.f32.mrf.mxu0
      %v2768 = vadd.f32 0.0, %v2767
      %2769 = vmatmul.bf16.gmra.mxu0 %v254
      %v2770 = vpop.f32.mrf.mxu0
      %v2771 = vadd.f32 0.0, %v2770
      %v2772 = vpop.f32.mrf.mxu0
      %v2773 = vadd.f32 0.0, %v2772
      %2774 = vmatmul.bf16.gmra.mxu0 %v255
      %v2775 = vpop.f32.mrf.mxu0
      %v2776 = vadd.f32 0.0, %v2775
      %v2777 = vpop.f32.mrf.mxu0
      %v2778 = vadd.f32 0.0, %v2777
      %2779 = vmatmul.bf16.gmra.mxu0 %v256
      %v2780 = vpop.f32.mrf.mxu0
      %v2781 = vadd.f32 0.0, %v2780
      %v2782 = vpop.f32.mrf.mxu0
      %v2783 = vadd.f32 0.0, %v2782
      %2784 = vmatmul.bf16.gmra.mxu0 %v257
      %v2785 = vpop.f32.mrf.mxu0
      %v2786 = vadd.f32 0.0, %v2785
      %v2787 = vpop.f32.mrf.mxu0
      %v2788 = vadd.f32 0.0, %v2787
      %2789 = vmatmul.bf16.gmra.mxu0 %v258
      %v2790 = vpop.f32.mrf.mxu0
      %v2791 = vadd.f32 0.0, %v2790
      %v2792 = vpop.f32.mrf.mxu0
      %v2793 = vadd.f32 0.0, %v2792
      %2794 = vmatmul.bf16.gmra.mxu0 %v259
      %v2795 = vpop.f32.mrf.mxu0
      %v2796 = vadd.f32 0.0, %v2795
      %v2797 = vpop.f32.mrf.mxu0
      %v2798 = vadd.f32 0.0, %v2797
      %2799 = vmatmul.bf16.gmra.mxu0 %v260
      %v2800 = vpop.f32.mrf.mxu0
      %v2801 = vadd.f32 0.0, %v2800
      %v2802 = vpop.f32.mrf.mxu0
      %v2803 = vadd.f32 0.0, %v2802
      %2804 = vmatmul.bf16.gmra.mxu0 %v261
      %v2805 = vpop.f32.mrf.mxu0
      %v2806 = vadd.f32 0.0, %v2805
      %v2807 = vpop.f32.mrf.mxu0
      %v2808 = vadd.f32 0.0, %v2807
      %2809 = vmatmul.bf16.gmra.mxu0 %v262
      %v2810 = vpop.f32.mrf.mxu0
      %v2811 = vadd.f32 0.0, %v2810
      %v2812 = vpop.f32.mrf.mxu0
      %v2813 = vadd.f32 0.0, %v2812
      %2814 = vmatmul.bf16.gmra.mxu0 %v263
      %v2815 = vpop.f32.mrf.mxu0
      %v2816 = vadd.f32 0.0, %v2815
      %v2817 = vpop.f32.mrf.mxu0
      %v2818 = vadd.f32 0.0, %v2817
      %2819 = vdwg.mxu0
      %2820 = vmatpush.bf16.msra.mxu0 %v1680
      %2821 = vmatpush.bf16.msra.mxu0 %v1644
      %2822 = vmatpush.bf16.msra.mxu0 %v1608
      %2823 = vmatpush.bf16.msra.mxu0 %v1572
      %2824 = vmatpush.bf16.msra.mxu0 %v1536
      %2825 = vmatpush.bf16.msra.mxu0 %v1500
      %2826 = vmatpush.bf16.msra.mxu0 %v1464
      %2827 = vmatpush.bf16.msra.mxu0 %v1428
      %2828 = vmatmul.bf16.gmra.mxu0 %v252
      %v2829 = vpop.f32.mrf.mxu0
      %v2830 = vadd.f32 0.0, %v2829
      %v2831 = vpop.f32.mrf.mxu0
      %v2832 = vadd.f32 0.0, %v2831
      %2833 = vmatmul.bf16.gmra.mxu0 %v253
      %v2834 = vpop.f32.mrf.mxu0
      %v2835 = vadd.f32 0.0, %v2834
      %v2836 = vpop.f32.mrf.mxu0
      %v2837 = vadd.f32 0.0, %v2836
      %2838 = vmatmul.bf16.gmra.mxu0 %v254
      %v2839 = vpop.f32.mrf.mxu0
      %v2840 = vadd.f32 0.0, %v2839
      %v2841 = vpop.f32.mrf.mxu0
      %v2842 = vadd.f32 0.0, %v2841
      %2843 = vmatmul.bf16.gmra.mxu0 %v255
      %v2844 = vpop.f32.mrf.mxu0
      %v2845 = vadd.f32 0.0, %v2844
      %v2846 = vpop.f32.mrf.mxu0
      %v2847 = vadd.f32 0.0, %v2846
      %2848 = vmatmul.bf16.gmra.mxu0 %v256
      %v2849 = vpop.f32.mrf.mxu0
      %v2850 = vadd.f32 0.0, %v2849
      %v2851 = vpop.f32.mrf.mxu0
      %v2852 = vadd.f32 0.0, %v2851
      %2853 = vmatmul.bf16.gmra.mxu0 %v257
      %v2854 = vpop.f32.mrf.mxu0
      %v2855 = vadd.f32 0.0, %v2854
      %v2856 = vpop.f32.mrf.mxu0
      %v2857 = vadd.f32 0.0, %v2856
      %2858 = vmatmul.bf16.gmra.mxu0 %v258
      %v2859 = vpop.f32.mrf.mxu0
      %v2860 = vadd.f32 0.0, %v2859
      %v2861 = vpop.f32.mrf.mxu0
      %v2862 = vadd.f32 0.0, %v2861
      %2863 = vmatmul.bf16.gmra.mxu0 %v259
      %v2864 = vpop.f32.mrf.mxu0
      %v2865 = vadd.f32 0.0, %v2864
      %v2866 = vpop.f32.mrf.mxu0
      %v2867 = vadd.f32 0.0, %v2866
      %2868 = vmatmul.bf16.gmra.mxu0 %v260
      %v2869 = vpop.f32.mrf.mxu0
      %v2870 = vadd.f32 0.0, %v2869
      %v2871 = vpop.f32.mrf.mxu0
      %v2872 = vadd.f32 0.0, %v2871
      %2873 = vmatmul.bf16.gmra.mxu0 %v261
      %v2874 = vpop.f32.mrf.mxu0
      %v2875 = vadd.f32 0.0, %v2874
      %v2876 = vpop.f32.mrf.mxu0
      %v2877 = vadd.f32 0.0, %v2876
      %2878 = vmatmul.bf16.gmra.mxu0 %v262
      %v2879 = vpop.f32.mrf.mxu0
      %v2880 = vadd.f32 0.0, %v2879
      %v2881 = vpop.f32.mrf.mxu0
      %v2882 = vadd.f32 0.0, %v2881
      %2883 = vmatmul.bf16.gmra.mxu0 %v263
      %v2884 = vpop.f32.mrf.mxu0
      %v2885 = vadd.f32 0.0, %v2884
      %v2886 = vpop.f32.mrf.mxu0
      %v2887 = vadd.f32 0.0, %v2886
      %2888 = vdwg.mxu0
      %2889 = vmatpush.bf16.msra.mxu0 %v1681
      %2890 = vmatpush.bf16.msra.mxu0 %v1645
      %2891 = vmatpush.bf16.msra.mxu0 %v1609
      %2892 = vmatpush.bf16.msra.mxu0 %v1573
      %2893 = vmatpush.bf16.msra.mxu0 %v1537
      %2894 = vmatpush.bf16.msra.mxu0 %v1501
      %2895 = vmatpush.bf16.msra.mxu0 %v1465
      %2896 = vmatpush.bf16.msra.mxu0 %v1429
      %2897 = vmatmul.bf16.gmra.mxu0 %v252
      %v2898 = vpop.f32.mrf.mxu0
      %v2899 = vadd.f32 0.0, %v2898
      %v2900 = vpop.f32.mrf.mxu0
      %v2901 = vadd.f32 0.0, %v2900
      %2902 = vmatmul.bf16.gmra.mxu0 %v253
      %v2903 = vpop.f32.mrf.mxu0
      %v2904 = vadd.f32 0.0, %v2903
      %v2905 = vpop.f32.mrf.mxu0
      %v2906 = vadd.f32 0.0, %v2905
      %2907 = vmatmul.bf16.gmra.mxu0 %v254
      %v2908 = vpop.f32.mrf.mxu0
      %v2909 = vadd.f32 0.0, %v2908
      %v2910 = vpop.f32.mrf.mxu0
      %v2911 = vadd.f32 0.0, %v2910
      %2912 = vmatmul.bf16.gmra.mxu0 %v255
      %v2913 = vpop.f32.mrf.mxu0
      %v2914 = vadd.f32 0.0, %v2913
      %v2915 = vpop.f32.mrf.mxu0
      %v2916 = vadd.f32 0.0, %v2915
      %2917 = vmatmul.bf16.gmra.mxu0 %v256
      %v2918 = vpop.f32.mrf.mxu0
      %v2919 = vadd.f32 0.0, %v2918
      %v2920 = vpop.f32.mrf.mxu0
      %v2921 = vadd.f32 0.0, %v2920
      %2922 = vmatmul.bf16.gmra.mxu0 %v257
      %v2923 = vpop.f32.mrf.mxu0
      %v2924 = vadd.f32 0.0, %v2923
      %v2925 = vpop.f32.mrf.mxu0
      %v2926 = vadd.f32 0.0, %v2925
      %2927 = vmatmul.bf16.gmra.mxu0 %v258
      %v2928 = vpop.f32.mrf.mxu0
      %v2929 = vadd.f32 0.0, %v2928
      %v2930 = vpop.f32.mrf.mxu0
      %v2931 = vadd.f32 0.0, %v2930
      %2932 = vmatmul.bf16.gmra.mxu0 %v259
      %v2933 = vpop.f32.mrf.mxu0
      %v2934 = vadd.f32 0.0, %v2933
      %v2935 = vpop.f32.mrf.mxu0
      %v2936 = vadd.f32 0.0, %v2935
      %2937 = vmatmul.bf16.gmra.mxu0 %v260
      %v2938 = vpop.f32.mrf.mxu0
      %v2939 = vadd.f32 0.0, %v2938
      %v2940 = vpop.f32.mrf.mxu0
      %v2941 = vadd.f32 0.0, %v2940
      %2942 = vmatmul.bf16.gmra.mxu0 %v261
      %v2943 = vpop.f32.mrf.mxu0
      %v2944 = vadd.f32 0.0, %v2943
      %v2945 = vpop.f32.mrf.mxu0
      %v2946 = vadd.f32 0.0, %v2945
      %2947 = vmatmul.bf16.gmra.mxu0 %v262
      %v2948 = vpop.f32.mrf.mxu0
      %v2949 = vadd.f32 0.0, %v2948
      %v2950 = vpop.f32.mrf.mxu0
      %v2951 = vadd.f32 0.0, %v2950
      %2952 = vmatmul.bf16.gmra.mxu0 %v263
      %v2953 = vpop.f32.mrf.mxu0
      %v2954 = vadd.f32 0.0, %v2953
      %v2955 = vpop.f32.mrf.mxu0
      %v2956 = vadd.f32 0.0, %v2955
      %2957 = vdwg.mxu0
      %2958 = vmatpush.bf16.msra.mxu0 %v1682
      %2959 = vmatpush.bf16.msra.mxu0 %v1646
      %2960 = vmatpush.bf16.msra.mxu0 %v1610
      %2961 = vmatpush.bf16.msra.mxu0 %v1574
      %2962 = vmatpush.bf16.msra.mxu0 %v1538
      %2963 = vmatpush.bf16.msra.mxu0 %v1502
      %2964 = vmatpush.bf16.msra.mxu0 %v1466
      %2965 = vmatpush.bf16.msra.mxu0 %v1430
      %2966 = vmatmul.bf16.gmra.mxu0 %v252
      %v2967 = vpop.f32.mrf.mxu0
      %v2968 = vadd.f32 0.0, %v2967
      %v2969 = vpop.f32.mrf.mxu0
      %v2970 = vadd.f32 0.0, %v2969
      %2971 = vmatmul.bf16.gmra.mxu0 %v253
      %v2972 = vpop.f32.mrf.mxu0
      %v2973 = vadd.f32 0.0, %v2972
      %v2974 = vpop.f32.mrf.mxu0
      %v2975 = vadd.f32 0.0, %v2974
      %2976 = vmatmul.bf16.gmra.mxu0 %v254
      %v2977 = vpop.f32.mrf.mxu0
      %v2978 = vadd.f32 0.0, %v2977
      %v2979 = vpop.f32.mrf.mxu0
      %v2980 = vadd.f32 0.0, %v2979
      %2981 = vmatmul.bf16.gmra.mxu0 %v255
      %v2982 = vpop.f32.mrf.mxu0
      %v2983 = vadd.f32 0.0, %v2982
      %v2984 = vpop.f32.mrf.mxu0
      %v2985 = vadd.f32 0.0, %v2984
      %2986 = vmatmul.bf16.gmra.mxu0 %v256
      %v2987 = vpop.f32.mrf.mxu0
      %v2988 = vadd.f32 0.0, %v2987
      %v2989 = vpop.f32.mrf.mxu0
      %v2990 = vadd.f32 0.0, %v2989
      %2991 = vmatmul.bf16.gmra.mxu0 %v257
      %v2992 = vpop.f32.mrf.mxu0
      %v2993 = vadd.f32 0.0, %v2992
      %v2994 = vpop.f32.mrf.mxu0
      %v2995 = vadd.f32 0.0, %v2994
      %2996 = vmatmul.bf16.gmra.mxu0 %v258
      %v2997 = vpop.f32.mrf.mxu0
      %v2998 = vadd.f32 0.0, %v2997
      %v2999 = vpop.f32.mrf.mxu0
      %v3000 = vadd.f32 0.0, %v2999
      %3001 = vmatmul.bf16.gmra.mxu0 %v259
      %v3002 = vpop.f32.mrf.mxu0
      %v3003 = vadd.f32 0.0, %v3002
      %v3004 = vpop.f32.mrf.mxu0
      %v3005 = vadd.f32 0.0, %v3004
      %3006 = vmatmul.bf16.gmra.mxu0 %v260
      %v3007 = vpop.f32.mrf.mxu0
      %v3008 = vadd.f32 0.0, %v3007
      %v3009 = vpop.f32.mrf.mxu0
      %v3010 = vadd.f32 0.0, %v3009
      %3011 = vmatmul.bf16.gmra.mxu0 %v261
      %v3012 = vpop.f32.mrf.mxu0
      %v3013 = vadd.f32 0.0, %v3012
      %v3014 = vpop.f32.mrf.mxu0
      %v3015 = vadd.f32 0.0, %v3014
      %3016 = vmatmul.bf16.gmra.mxu0 %v262
      %v3017 = vpop.f32.mrf.mxu0
      %v3018 = vadd.f32 0.0, %v3017
      %v3019 = vpop.f32.mrf.mxu0
      %v3020 = vadd.f32 0.0, %v3019
      %3021 = vmatmul.bf16.gmra.mxu0 %v263
      %v3022 = vpop.f32.mrf.mxu0
      %v3023 = vadd.f32 0.0, %v3022
      %v3024 = vpop.f32.mrf.mxu0
      %v3025 = vadd.f32 0.0, %v3024
      %3026 = vdwg.mxu0
      %3027 = vmatpush.bf16.msra.mxu0 %v1683
      %3028 = vmatpush.bf16.msra.mxu0 %v1647
      %3029 = vmatpush.bf16.msra.mxu0 %v1611
      %3030 = vmatpush.bf16.msra.mxu0 %v1575
      %3031 = vmatpush.bf16.msra.mxu0 %v1539
      %3032 = vmatpush.bf16.msra.mxu0 %v1503
      %3033 = vmatpush.bf16.msra.mxu0 %v1467
      %3034 = vmatpush.bf16.msra.mxu0 %v1431
      %3035 = vmatmul.bf16.gmra.mxu0 %v252
      %v3036 = vpop.f32.mrf.mxu0
      %v3037 = vadd.f32 0.0, %v3036
      %v3038 = vpop.f32.mrf.mxu0
      %v3039 = vadd.f32 0.0, %v3038
      %3040 = vmatmul.bf16.gmra.mxu0 %v253
      %v3041 = vpop.f32.mrf.mxu0
      %v3042 = vadd.f32 0.0, %v3041
      %v3043 = vpop.f32.mrf.mxu0
      %v3044 = vadd.f32 0.0, %v3043
      %3045 = vmatmul.bf16.gmra.mxu0 %v254
      %v3046 = vpop.f32.mrf.mxu0
      %v3047 = vadd.f32 0.0, %v3046
      %v3048 = vpop.f32.mrf.mxu0
      %v3049 = vadd.f32 0.0, %v3048
      %3050 = vmatmul.bf16.gmra.mxu0 %v255
      %v3051 = vpop.f32.mrf.mxu0
      %v3052 = vadd.f32 0.0, %v3051
      %v3053 = vpop.f32.mrf.mxu0
      %v3054 = vadd.f32 0.0, %v3053
      %3055 = vmatmul.bf16.gmra.mxu0 %v256
      %v3056 = vpop.f32.mrf.mxu0
      %v3057 = vadd.f32 0.0, %v3056
      %v3058 = vpop.f32.mrf.mxu0
      %v3059 = vadd.f32 0.0, %v3058
      %3060 = vmatmul.bf16.gmra.mxu0 %v257
      %v3061 = vpop.f32.mrf.mxu0
      %v3062 = vadd.f32 0.0, %v3061
      %v3063 = vpop.f32.mrf.mxu0
      %v3064 = vadd.f32 0.0, %v3063
      %3065 = vmatmul.bf16.gmra.mxu0 %v258
      %v3066 = vpop.f32.mrf.mxu0
      %v3067 = vadd.f32 0.0, %v3066
      %v3068 = vpop.f32.mrf.mxu0
      %v3069 = vadd.f32 0.0, %v3068
      %3070 = vmatmul.bf16.gmra.mxu0 %v259
      %v3071 = vpop.f32.mrf.mxu0
      %v3072 = vadd.f32 0.0, %v3071
      %v3073 = vpop.f32.mrf.mxu0
      %v3074 = vadd.f32 0.0, %v3073
      %3075 = vmatmul.bf16.gmra.mxu0 %v260
      %v3076 = vpop.f32.mrf.mxu0
      %v3077 = vadd.f32 0.0, %v3076
      %v3078 = vpop.f32.mrf.mxu0
      %v3079 = vadd.f32 0.0, %v3078
      %3080 = vmatmul.bf16.gmra.mxu0 %v261
      %v3081 = vpop.f32.mrf.mxu0
      %v3082 = vadd.f32 0.0, %v3081
      %v3083 = vpop.f32.mrf.mxu0
      %v3084 = vadd.f32 0.0, %v3083
      %3085 = vmatmul.bf16.gmra.mxu0 %v262
      %v3086 = vpop.f32.mrf.mxu0
      %v3087 = vadd.f32 0.0, %v3086
      %v3088 = vpop.f32.mrf.mxu0
      %v3089 = vadd.f32 0.0, %v3088
      %3090 = vmatmul.bf16.gmra.mxu0 %v263
      %v3091 = vpop.f32.mrf.mxu0
      %v3092 = vadd.f32 0.0, %v3091
      %v3093 = vpop.f32.mrf.mxu0
      %v3094 = vadd.f32 0.0, %v3093
      %3095 = vdwg.mxu0
      %3096 = vmatpush.bf16.msra.mxu0 %v1684
      %3097 = vmatpush.bf16.msra.mxu0 %v1648
      %3098 = vmatpush.bf16.msra.mxu0 %v1612
      %3099 = vmatpush.bf16.msra.mxu0 %v1576
      %3100 = vmatpush.bf16.msra.mxu0 %v1540
      %3101 = vmatpush.bf16.msra.mxu0 %v1504
      %3102 = vmatpush.bf16.msra.mxu0 %v1468
      %3103 = vmatpush.bf16.msra.mxu0 %v1432
      %3104 = vmatmul.bf16.gmra.mxu0 %v252
      %v3105 = vpop.f32.mrf.mxu0
      %v3106 = vadd.f32 0.0, %v3105
      %v3107 = vpop.f32.mrf.mxu0
      %v3108 = vadd.f32 0.0, %v3107
      %3109 = vmatmul.bf16.gmra.mxu0 %v253
      %v3110 = vpop.f32.mrf.mxu0
      %v3111 = vadd.f32 0.0, %v3110
      %v3112 = vpop.f32.mrf.mxu0
      %v3113 = vadd.f32 0.0, %v3112
      %3114 = vmatmul.bf16.gmra.mxu0 %v254
      %v3115 = vpop.f32.mrf.mxu0
      %v3116 = vadd.f32 0.0, %v3115
      %v3117 = vpop.f32.mrf.mxu0
      %v3118 = vadd.f32 0.0, %v3117
      %3119 = vmatmul.bf16.gmra.mxu0 %v255
      %v3120 = vpop.f32.mrf.mxu0
      %v3121 = vadd.f32 0.0, %v3120
      %v3122 = vpop.f32.mrf.mxu0
      %v3123 = vadd.f32 0.0, %v3122
      %3124 = vmatmul.bf16.gmra.mxu0 %v256
      %v3125 = vpop.f32.mrf.mxu0
      %v3126 = vadd.f32 0.0, %v3125
      %v3127 = vpop.f32.mrf.mxu0
      %v3128 = vadd.f32 0.0, %v3127
      %3129 = vmatmul.bf16.gmra.mxu0 %v257
      %v3130 = vpop.f32.mrf.mxu0
      %v3131 = vadd.f32 0.0, %v3130
      %v3132 = vpop.f32.mrf.mxu0
      %v3133 = vadd.f32 0.0, %v3132
      %3134 = vmatmul.bf16.gmra.mxu0 %v258
      %v3135 = vpop.f32.mrf.mxu0
      %v3136 = vadd.f32 0.0, %v3135
      %v3137 = vpop.f32.mrf.mxu0
      %v3138 = vadd.f32 0.0, %v3137
      %3139 = vmatmul.bf16.gmra.mxu0 %v259
      %v3140 = vpop.f32.mrf.mxu0
      %v3141 = vadd.f32 0.0, %v3140
      %v3142 = vpop.f32.mrf.mxu0
      %v3143 = vadd.f32 0.0, %v3142
      %3144 = vmatmul.bf16.gmra.mxu0 %v260
      %v3145 = vpop.f32.mrf.mxu0
      %v3146 = vadd.f32 0.0, %v3145
      %v3147 = vpop.f32.mrf.mxu0
      %v3148 = vadd.f32 0.0, %v3147
      %3149 = vmatmul.bf16.gmra.mxu0 %v261
      %v3150 = vpop.f32.mrf.mxu0
      %v3151 = vadd.f32 0.0, %v3150
      %v3152 = vpop.f32.mrf.mxu0
      %v3153 = vadd.f32 0.0, %v3152
      %3154 = vmatmul.bf16.gmra.mxu0 %v262
      %v3155 = vpop.f32.mrf.mxu0
      %v3156 = vadd.f32 0.0, %v3155
      %v3157 = vpop.f32.mrf.mxu0
      %v3158 = vadd.f32 0.0, %v3157
      %3159 = vmatmul.bf16.gmra.mxu0 %v263
      %v3160 = vpop.f32.mrf.mxu0
      %v3161 = vadd.f32 0.0, %v3160
      %v3162 = vpop.f32.mrf.mxu0
      %v3163 = vadd.f32 0.0, %v3162
      %3164 = vdwg.mxu0
      %3165 = vmatpush.bf16.msra.mxu0 %v1685
      %3166 = vmatpush.bf16.msra.mxu0 %v1649
      %3167 = vmatpush.bf16.msra.mxu0 %v1613
      %3168 = vmatpush.bf16.msra.mxu0 %v1577
      %3169 = vmatpush.bf16.msra.mxu0 %v1541
      %3170 = vmatpush.bf16.msra.mxu0 %v1505
      %3171 = vmatpush.bf16.msra.mxu0 %v1469
      %3172 = vmatpush.bf16.msra.mxu0 %v1433
      %3173 = vmatmul.bf16.gmra.mxu0 %v252
      %v3174 = vpop.f32.mrf.mxu0
      %v3175 = vadd.f32 0.0, %v3174
      %v3176 = vpop.f32.mrf.mxu0
      %v3177 = vadd.f32 0.0, %v3176
      %3178 = vmatmul.bf16.gmra.mxu0 %v253
      %v3179 = vpop.f32.mrf.mxu0
      %v3180 = vadd.f32 0.0, %v3179
      %v3181 = vpop.f32.mrf.mxu0
      %v3182 = vadd.f32 0.0, %v3181
      %3183 = vmatmul.bf16.gmra.mxu0 %v254
      %v3184 = vpop.f32.mrf.mxu0
      %v3185 = vadd.f32 0.0, %v3184
      %v3186 = vpop.f32.mrf.mxu0
      %v3187 = vadd.f32 0.0, %v3186
      %3188 = vmatmul.bf16.gmra.mxu0 %v255
      %v3189 = vpop.f32.mrf.mxu0
      %v3190 = vadd.f32 0.0, %v3189
      %v3191 = vpop.f32.mrf.mxu0
      %v3192 = vadd.f32 0.0, %v3191
      %3193 = vmatmul.bf16.gmra.mxu0 %v256
      %v3194 = vpop.f32.mrf.mxu0
      %v3195 = vadd.f32 0.0, %v3194
      %v3196 = vpop.f32.mrf.mxu0
      %v3197 = vadd.f32 0.0, %v3196
      %3198 = vmatmul.bf16.gmra.mxu0 %v257
      %v3199 = vpop.f32.mrf.mxu0
      %v3200 = vadd.f32 0.0, %v3199
      %v3201 = vpop.f32.mrf.mxu0
      %v3202 = vadd.f32 0.0, %v3201
      %3203 = vmatmul.bf16.gmra.mxu0 %v258
      %v3204 = vpop.f32.mrf.mxu0
      %v3205 = vadd.f32 0.0, %v3204
      %v3206 = vpop.f32.mrf.mxu0
      %v3207 = vadd.f32 0.0, %v3206
      %3208 = vmatmul.bf16.gmra.mxu0 %v259
      %v3209 = vpop.f32.mrf.mxu0
      %v3210 = vadd.f32 0.0, %v3209
      %v3211 = vpop.f32.mrf.mxu0
      %v3212 = vadd.f32 0.0, %v3211
      %3213 = vmatmul.bf16.gmra.mxu0 %v260
      %v3214 = vpop.f32.mrf.mxu0
      %v3215 = vadd.f32 0.0, %v3214
      %v3216 = vpop.f32.mrf.mxu0
      %v3217 = vadd.f32 0.0, %v3216
      %3218 = vmatmul.bf16.gmra.mxu0 %v261
      %v3219 = vpop.f32.mrf.mxu0
      %v3220 = vadd.f32 0.0, %v3219
      %v3221 = vpop.f32.mrf.mxu0
      %v3222 = vadd.f32 0.0, %v3221
      %3223 = vmatmul.bf16.gmra.mxu0 %v262
      %v3224 = vpop.f32.mrf.mxu0
      %v3225 = vadd.f32 0.0, %v3224
      %v3226 = vpop.f32.mrf.mxu0
      %v3227 = vadd.f32 0.0, %v3226
      %3228 = vmatmul.bf16.gmra.mxu0 %v263
      %v3229 = vpop.f32.mrf.mxu0
      %v3230 = vadd.f32 0.0, %v3229
      %v3231 = vpop.f32.mrf.mxu0
      %v3232 = vadd.f32 0.0, %v3231
      %3233 = vdwg.mxu0
      %3234 = vmatpush.bf16.msra.mxu0 %v1686
      %3235 = vmatpush.bf16.msra.mxu0 %v1650
      %3236 = vmatpush.bf16.msra.mxu0 %v1614
      %3237 = vmatpush.bf16.msra.mxu0 %v1578
      %3238 = vmatpush.bf16.msra.mxu0 %v1542
      %3239 = vmatpush.bf16.msra.mxu0 %v1506
      %3240 = vmatpush.bf16.msra.mxu0 %v1470
      %3241 = vmatpush.bf16.msra.mxu0 %v1434
      %3242 = vmatmul.bf16.gmra.mxu0 %v252
      %v3243 = vpop.f32.mrf.mxu0
      %v3244 = vadd.f32 0.0, %v3243
      %v3245 = vpop.f32.mrf.mxu0
      %v3246 = vadd.f32 0.0, %v3245
      %3247 = vmatmul.bf16.gmra.mxu0 %v253
      %v3248 = vpop.f32.mrf.mxu0
      %v3249 = vadd.f32 0.0, %v3248
      %v3250 = vpop.f32.mrf.mxu0
      %v3251 = vadd.f32 0.0, %v3250
      %3252 = vmatmul.bf16.gmra.mxu0 %v254
      %v3253 = vpop.f32.mrf.mxu0
      %v3254 = vadd.f32 0.0, %v3253
      %v3255 = vpop.f32.mrf.mxu0
      %v3256 = vadd.f32 0.0, %v3255
      %3257 = vmatmul.bf16.gmra.mxu0 %v255
      %v3258 = vpop.f32.mrf.mxu0
      %v3259 = vadd.f32 0.0, %v3258
      %v3260 = vpop.f32.mrf.mxu0
      %v3261 = vadd.f32 0.0, %v3260
      %3262 = vmatmul.bf16.gmra.mxu0 %v256
      %v3263 = vpop.f32.mrf.mxu0
      %v3264 = vadd.f32 0.0, %v3263
      %v3265 = vpop.f32.mrf.mxu0
      %v3266 = vadd.f32 0.0, %v3265
      %3267 = vmatmul.bf16.gmra.mxu0 %v257
      %v3268 = vpop.f32.mrf.mxu0
      %v3269 = vadd.f32 0.0, %v3268
      %v3270 = vpop.f32.mrf.mxu0
      %v3271 = vadd.f32 0.0, %v3270
      %3272 = vmatmul.bf16.gmra.mxu0 %v258
      %v3273 = vpop.f32.mrf.mxu0
      %v3274 = vadd.f32 0.0, %v3273
      %v3275 = vpop.f32.mrf.mxu0
      %v3276 = vadd.f32 0.0, %v3275
      %3277 = vmatmul.bf16.gmra.mxu0 %v259
      %v3278 = vpop.f32.mrf.mxu0
      %v3279 = vadd.f32 0.0, %v3278
      %v3280 = vpop.f32.mrf.mxu0
      %v3281 = vadd.f32 0.0, %v3280
      %3282 = vmatmul.bf16.gmra.mxu0 %v260
      %v3283 = vpop.f32.mrf.mxu0
      %v3284 = vadd.f32 0.0, %v3283
      %v3285 = vpop.f32.mrf.mxu0
      %v3286 = vadd.f32 0.0, %v3285
      %3287 = vmatmul.bf16.gmra.mxu0 %v261
      %v3288 = vpop.f32.mrf.mxu0
      %v3289 = vadd.f32 0.0, %v3288
      %v3290 = vpop.f32.mrf.mxu0
      %v3291 = vadd.f32 0.0, %v3290
      %3292 = vmatmul.bf16.gmra.mxu0 %v262
      %v3293 = vpop.f32.mrf.mxu0
      %v3294 = vadd.f32 0.0, %v3293
      %v3295 = vpop.f32.mrf.mxu0
      %v3296 = vadd.f32 0.0, %v3295
      %3297 = vmatmul.bf16.gmra.mxu0 %v263
      %v3298 = vpop.f32.mrf.mxu0
      %v3299 = vadd.f32 0.0, %v3298
      %v3300 = vpop.f32.mrf.mxu0
      %v3301 = vadd.f32 0.0, %v3300
      %3302 = vdwg.mxu0
      %3303 = vmatpush.bf16.msra.mxu0 %v1687
      %3304 = vmatpush.bf16.msra.mxu0 %v1651
      %3305 = vmatpush.bf16.msra.mxu0 %v1615
      %3306 = vmatpush.bf16.msra.mxu0 %v1579
      %3307 = vmatpush.bf16.msra.mxu0 %v1543
      %3308 = vmatpush.bf16.msra.mxu0 %v1507
      %3309 = vmatpush.bf16.msra.mxu0 %v1471
      %3310 = vmatpush.bf16.msra.mxu0 %v1435
      %3311 = vmatmul.bf16.gmra.mxu0 %v252
      %v3312 = vpop.f32.mrf.mxu0
      %v3313 = vadd.f32 0.0, %v3312
      %v3314 = vpop.f32.mrf.mxu0
      %v3315 = vadd.f32 0.0, %v3314
      %3316 = vmatmul.bf16.gmra.mxu0 %v253
      %v3317 = vpop.f32.mrf.mxu0
      %v3318 = vadd.f32 0.0, %v3317
      %v3319 = vpop.f32.mrf.mxu0
      %v3320 = vadd.f32 0.0, %v3319
      %3321 = vmatmul.bf16.gmra.mxu0 %v254
      %v3322 = vpop.f32.mrf.mxu0
      %v3323 = vadd.f32 0.0, %v3322
      %v3324 = vpop.f32.mrf.mxu0
      %v3325 = vadd.f32 0.0, %v3324
      %3326 = vmatmul.bf16.gmra.mxu0 %v255
      %v3327 = vpop.f32.mrf.mxu0
      %v3328 = vadd.f32 0.0, %v3327
      %v3329 = vpop.f32.mrf.mxu0
      %v3330 = vadd.f32 0.0, %v3329
      %3331 = vmatmul.bf16.gmra.mxu0 %v256
      %v3332 = vpop.f32.mrf.mxu0
      %v3333 = vadd.f32 0.0, %v3332
      %v3334 = vpop.f32.mrf.mxu0
      %v3335 = vadd.f32 0.0, %v3334
      %3336 = vmatmul.bf16.gmra.mxu0 %v257
      %v3337 = vpop.f32.mrf.mxu0
      %v3338 = vadd.f32 0.0, %v3337
      %v3339 = vpop.f32.mrf.mxu0
      %v3340 = vadd.f32 0.0, %v3339
      %3341 = vmatmul.bf16.gmra.mxu0 %v258
      %v3342 = vpop.f32.mrf.mxu0
      %v3343 = vadd.f32 0.0, %v3342
      %v3344 = vpop.f32.mrf.mxu0
      %v3345 = vadd.f32 0.0, %v3344
      %3346 = vmatmul.bf16.gmra.mxu0 %v259
      %v3347 = vpop.f32.mrf.mxu0
      %v3348 = vadd.f32 0.0, %v3347
      %v3349 = vpop.f32.mrf.mxu0
      %v3350 = vadd.f32 0.0, %v3349
      %3351 = vmatmul.bf16.gmra.mxu0 %v260
      %v3352 = vpop.f32.mrf.mxu0
      %v3353 = vadd.f32 0.0, %v3352
      %v3354 = vpop.f32.mrf.mxu0
      %v3355 = vadd.f32 0.0, %v3354
      %3356 = vmatmul.bf16.gmra.mxu0 %v261
      %v3357 = vpop.f32.mrf.mxu0
      %v3358 = vadd.f32 0.0, %v3357
      %v3359 = vpop.f32.mrf.mxu0
      %v3360 = vadd.f32 0.0, %v3359
      %3361 = vmatmul.bf16.gmra.mxu0 %v262
      %v3362 = vpop.f32.mrf.mxu0
      %v3363 = vadd.f32 0.0, %v3362
      %v3364 = vpop.f32.mrf.mxu0
      %v3365 = vadd.f32 0.0, %v3364
      %3366 = vmatmul.bf16.gmra.mxu0 %v263
      %v3367 = vpop.f32.mrf.mxu0
      %v3368 = vadd.f32 0.0, %v3367
      %v3369 = vpop.f32.mrf.mxu0
      %v3370 = vadd.f32 0.0, %v3369
      %3371 = vdwg.mxu0
      %3372 = vmatpush.bf16.msra.mxu0 %v1688
      %3373 = vmatpush.bf16.msra.mxu0 %v1652
      %3374 = vmatpush.bf16.msra.mxu0 %v1616
      %3375 = vmatpush.bf16.msra.mxu0 %v1580
      %3376 = vmatpush.bf16.msra.mxu0 %v1544
      %3377 = vmatpush.bf16.msra.mxu0 %v1508
      %3378 = vmatpush.bf16.msra.mxu0 %v1472
      %3379 = vmatpush.bf16.msra.mxu0 %v1436
      %3380 = vmatmul.bf16.gmra.mxu0 %v252
      %v3381 = vpop.f32.mrf.mxu0
      %v3382 = vadd.f32 0.0, %v3381
      %v3383 = vpop.f32.mrf.mxu0
      %v3384 = vadd.f32 0.0, %v3383
      %3385 = vmatmul.bf16.gmra.mxu0 %v253
      %v3386 = vpop.f32.mrf.mxu0
      %v3387 = vadd.f32 0.0, %v3386
      %v3388 = vpop.f32.mrf.mxu0
      %v3389 = vadd.f32 0.0, %v3388
      %3390 = vmatmul.bf16.gmra.mxu0 %v254
      %v3391 = vpop.f32.mrf.mxu0
      %v3392 = vadd.f32 0.0, %v3391
      %v3393 = vpop.f32.mrf.mxu0
      %v3394 = vadd.f32 0.0, %v3393
      %3395 = vmatmul.bf16.gmra.mxu0 %v255
      %v3396 = vpop.f32.mrf.mxu0
      %v3397 = vadd.f32 0.0, %v3396
      %v3398 = vpop.f32.mrf.mxu0
      %v3399 = vadd.f32 0.0, %v3398
      %3400 = vmatmul.bf16.gmra.mxu0 %v256
      %v3401 = vpop.f32.mrf.mxu0
      %v3402 = vadd.f32 0.0, %v3401
      %v3403 = vpop.f32.mrf.mxu0
      %v3404 = vadd.f32 0.0, %v3403
      %3405 = vmatmul.bf16.gmra.mxu0 %v257
      %v3406 = vpop.f32.mrf.mxu0
      %v3407 = vadd.f32 0.0, %v3406
      %v3408 = vpop.f32.mrf.mxu0
      %v3409 = vadd.f32 0.0, %v3408
      %3410 = vmatmul.bf16.gmra.mxu0 %v258
      %v3411 = vpop.f32.mrf.mxu0
      %v3412 = vadd.f32 0.0, %v3411
      %v3413 = vpop.f32.mrf.mxu0
      %v3414 = vadd.f32 0.0, %v3413
      %3415 = vmatmul.bf16.gmra.mxu0 %v259
      %v3416 = vpop.f32.mrf.mxu0
      %v3417 = vadd.f32 0.0, %v3416
      %v3418 = vpop.f32.mrf.mxu0
      %v3419 = vadd.f32 0.0, %v3418
      %3420 = vmatmul.bf16.gmra.mxu0 %v260
      %v3421 = vpop.f32.mrf.mxu0
      %v3422 = vadd.f32 0.0, %v3421
      %v3423 = vpop.f32.mrf.mxu0
      %v3424 = vadd.f32 0.0, %v3423
      %3425 = vmatmul.bf16.gmra.mxu0 %v261
      %v3426 = vpop.f32.mrf.mxu0
      %v3427 = vadd.f32 0.0, %v3426
      %v3428 = vpop.f32.mrf.mxu0
      %v3429 = vadd.f32 0.0, %v3428
      %3430 = vmatmul.bf16.gmra.mxu0 %v262
      %v3431 = vpop.f32.mrf.mxu0
      %v3432 = vadd.f32 0.0, %v3431
      %v3433 = vpop.f32.mrf.mxu0
      %v3434 = vadd.f32 0.0, %v3433
      %3435 = vmatmul.bf16.gmra.mxu0 %v263
      %v3436 = vpop.f32.mrf.mxu0
      %v3437 = vadd.f32 0.0, %v3436
      %v3438 = vpop.f32.mrf.mxu0
      %v3439 = vadd.f32 0.0, %v3438
      %3440 = vdwg.mxu0
      %3441 = vmatpush.bf16.msra.mxu0 %v1689
      %3442 = vmatpush.bf16.msra.mxu0 %v1653
      %3443 = vmatpush.bf16.msra.mxu0 %v1617
      %3444 = vmatpush.bf16.msra.mxu0 %v1581
      %3445 = vmatpush.bf16.msra.mxu0 %v1545
      %3446 = vmatpush.bf16.msra.mxu0 %v1509
      %3447 = vmatpush.bf16.msra.mxu0 %v1473
      %3448 = vmatpush.bf16.msra.mxu0 %v1437
      %3449 = vmatmul.bf16.gmra.mxu0 %v252
      %v3450 = vpop.f32.mrf.mxu0
      %v3451 = vadd.f32 0.0, %v3450
      %v3452 = vpop.f32.mrf.mxu0
      %v3453 = vadd.f32 0.0, %v3452
      %3454 = vmatmul.bf16.gmra.mxu0 %v253
      %v3455 = vpop.f32.mrf.mxu0
      %v3456 = vadd.f32 0.0, %v3455
      %v3457 = vpop.f32.mrf.mxu0
      %v3458 = vadd.f32 0.0, %v3457
      %3459 = vmatmul.bf16.gmra.mxu0 %v254
      %v3460 = vpop.f32.mrf.mxu0
      %v3461 = vadd.f32 0.0, %v3460
      %v3462 = vpop.f32.mrf.mxu0
      %v3463 = vadd.f32 0.0, %v3462
      %3464 = vmatmul.bf16.gmra.mxu0 %v255
      %v3465 = vpop.f32.mrf.mxu0
      %v3466 = vadd.f32 0.0, %v3465
      %v3467 = vpop.f32.mrf.mxu0
      %v3468 = vadd.f32 0.0, %v3467
      %3469 = vmatmul.bf16.gmra.mxu0 %v256
      %v3470 = vpop.f32.mrf.mxu0
      %v3471 = vadd.f32 0.0, %v3470
      %v3472 = vpop.f32.mrf.mxu0
      %v3473 = vadd.f32 0.0, %v3472
      %3474 = vmatmul.bf16.gmra.mxu0 %v257
      %v3475 = vpop.f32.mrf.mxu0
      %v3476 = vadd.f32 0.0, %v3475
      %v3477 = vpop.f32.mrf.mxu0
      %v3478 = vadd.f32 0.0, %v3477
      %3479 = vmatmul.bf16.gmra.mxu0 %v258
      %v3480 = vpop.f32.mrf.mxu0
      %v3481 = vadd.f32 0.0, %v3480
      %v3482 = vpop.f32.mrf.mxu0
      %v3483 = vadd.f32 0.0, %v3482
      %3484 = vmatmul.bf16.gmra.mxu0 %v259
      %v3485 = vpop.f32.mrf.mxu0
      %v3486 = vadd.f32 0.0, %v3485
      %v3487 = vpop.f32.mrf.mxu0
      %v3488 = vadd.f32 0.0, %v3487
      %3489 = vmatmul.bf16.gmra.mxu0 %v260
      %v3490 = vpop.f32.mrf.mxu0
      %v3491 = vadd.f32 0.0, %v3490
      %v3492 = vpop.f32.mrf.mxu0
      %v3493 = vadd.f32 0.0, %v3492
      %3494 = vmatmul.bf16.gmra.mxu0 %v261
      %v3495 = vpop.f32.mrf.mxu0
      %v3496 = vadd.f32 0.0, %v3495
      %v3497 = vpop.f32.mrf.mxu0
      %v3498 = vadd.f32 0.0, %v3497
      %3499 = vmatmul.bf16.gmra.mxu0 %v262
      %v3500 = vpop.f32.mrf.mxu0
      %v3501 = vadd.f32 0.0, %v3500
      %v3502 = vpop.f32.mrf.mxu0
      %v3503 = vadd.f32 0.0, %v3502
      %3504 = vmatmul.bf16.gmra.mxu0 %v263
      %v3505 = vpop.f32.mrf.mxu0
      %v3506 = vadd.f32 0.0, %v3505
      %v3507 = vpop.f32.mrf.mxu0
      %v3508 = vadd.f32 0.0, %v3507
      %3509 = vdwg.mxu0
      %3510 = vmatpush.bf16.msra.mxu0 %v1690
      %3511 = vmatpush.bf16.msra.mxu0 %v1654
      %3512 = vmatpush.bf16.msra.mxu0 %v1618
      %3513 = vmatpush.bf16.msra.mxu0 %v1582
      %3514 = vmatpush.bf16.msra.mxu0 %v1546
      %3515 = vmatpush.bf16.msra.mxu0 %v1510
      %3516 = vmatpush.bf16.msra.mxu0 %v1474
      %3517 = vmatpush.bf16.msra.mxu0 %v1438
      %3518 = vmatmul.bf16.gmra.mxu0 %v252
      %v3519 = vpop.f32.mrf.mxu0
      %v3520 = vadd.f32 0.0, %v3519
      %v3521 = vpop.f32.mrf.mxu0
      %v3522 = vadd.f32 0.0, %v3521
      %3523 = vmatmul.bf16.gmra.mxu0 %v253
      %v3524 = vpop.f32.mrf.mxu0
      %v3525 = vadd.f32 0.0, %v3524
      %v3526 = vpop.f32.mrf.mxu0
      %v3527 = vadd.f32 0.0, %v3526
      %3528 = vmatmul.bf16.gmra.mxu0 %v254
      %v3529 = vpop.f32.mrf.mxu0
      %v3530 = vadd.f32 0.0, %v3529
      %v3531 = vpop.f32.mrf.mxu0
      %v3532 = vadd.f32 0.0, %v3531
      %3533 = vmatmul.bf16.gmra.mxu0 %v255
      %v3534 = vpop.f32.mrf.mxu0
      %v3535 = vadd.f32 0.0, %v3534
      %v3536 = vpop.f32.mrf.mxu0
      %v3537 = vadd.f32 0.0, %v3536
      %3538 = vmatmul.bf16.gmra.mxu0 %v256
      %v3539 = vpop.f32.mrf.mxu0
      %v3540 = vadd.f32 0.0, %v3539
      %v3541 = vpop.f32.mrf.mxu0
      %v3542 = vadd.f32 0.0, %v3541
      %3543 = vmatmul.bf16.gmra.mxu0 %v257
      %v3544 = vpop.f32.mrf.mxu0
      %v3545 = vadd.f32 0.0, %v3544
      %v3546 = vpop.f32.mrf.mxu0
      %v3547 = vadd.f32 0.0, %v3546
      %3548 = vmatmul.bf16.gmra.mxu0 %v258
      %v3549 = vpop.f32.mrf.mxu0
      %v3550 = vadd.f32 0.0, %v3549
      %v3551 = vpop.f32.mrf.mxu0
      %v3552 = vadd.f32 0.0, %v3551
      %3553 = vmatmul.bf16.gmra.mxu0 %v259
      %v3554 = vpop.f32.mrf.mxu0
      %v3555 = vadd.f32 0.0, %v3554
      %v3556 = vpop.f32.mrf.mxu0
      %v3557 = vadd.f32 0.0, %v3556
      %3558 = vmatmul.bf16.gmra.mxu0 %v260
      %v3559 = vpop.f32.mrf.mxu0
      %v3560 = vadd.f32 0.0, %v3559
      %v3561 = vpop.f32.mrf.mxu0
      %v3562 = vadd.f32 0.0, %v3561
      %3563 = vmatmul.bf16.gmra.mxu0 %v261
      %v3564 = vpop.f32.mrf.mxu0
      %v3565 = vadd.f32 0.0, %v3564
      %v3566 = vpop.f32.mrf.mxu0
      %v3567 = vadd.f32 0.0, %v3566
      %3568 = vmatmul.bf16.gmra.mxu0 %v262
      %v3569 = vpop.f32.mrf.mxu0
      %v3570 = vadd.f32 0.0, %v3569
      %v3571 = vpop.f32.mrf.mxu0
      %v3572 = vadd.f32 0.0, %v3571
      %3573 = vmatmul.bf16.gmra.mxu0 %v263
      %v3574 = vpop.f32.mrf.mxu0
      %v3575 = vadd.f32 0.0, %v3574
      %v3576 = vpop.f32.mrf.mxu0
      %v3577 = vadd.f32 0.0, %v3576
      %3578 = vdwg.mxu0
      %3579 = vmatpush.bf16.msra.mxu0 %v1691
      %3580 = vmatpush.bf16.msra.mxu0 %v1655
      %3581 = vmatpush.bf16.msra.mxu0 %v1619
      %3582 = vmatpush.bf16.msra.mxu0 %v1583
      %3583 = vmatpush.bf16.msra.mxu0 %v1547
      %3584 = vmatpush.bf16.msra.mxu0 %v1511
      %3585 = vmatpush.bf16.msra.mxu0 %v1475
      %3586 = vmatpush.bf16.msra.mxu0 %v1439
      %3587 = vmatmul.bf16.gmra.mxu0 %v252
      %v3588 = vpop.f32.mrf.mxu0
      %v3589 = vadd.f32 0.0, %v3588
      %v3590 = vpop.f32.mrf.mxu0
      %v3591 = vadd.f32 0.0, %v3590
      %3592 = vmatmul.bf16.gmra.mxu0 %v253
      %v3593 = vpop.f32.mrf.mxu0
      %v3594 = vadd.f32 0.0, %v3593
      %v3595 = vpop.f32.mrf.mxu0
      %v3596 = vadd.f32 0.0, %v3595
      %3597 = vmatmul.bf16.gmra.mxu0 %v254
      %v3598 = vpop.f32.mrf.mxu0
      %v3599 = vadd.f32 0.0, %v3598
      %v3600 = vpop.f32.mrf.mxu0
      %v3601 = vadd.f32 0.0, %v3600
      %3602 = vmatmul.bf16.gmra.mxu0 %v255
      %v3603 = vpop.f32.mrf.mxu0
      %v3604 = vadd.f32 0.0, %v3603
      %v3605 = vpop.f32.mrf.mxu0
      %v3606 = vadd.f32 0.0, %v3605
      %3607 = vmatmul.bf16.gmra.mxu0 %v256
      %v3608 = vpop.f32.mrf.mxu0
      %v3609 = vadd.f32 0.0, %v3608
      %v3610 = vpop.f32.mrf.mxu0
      %v3611 = vadd.f32 0.0, %v3610
      %3612 = vmatmul.bf16.gmra.mxu0 %v257
      %v3613 = vpop.f32.mrf.mxu0
      %v3614 = vadd.f32 0.0, %v3613
      %v3615 = vpop.f32.mrf.mxu0
      %v3616 = vadd.f32 0.0, %v3615
      %3617 = vmatmul.bf16.gmra.mxu0 %v258
      %v3618 = vpop.f32.mrf.mxu0
      %v3619 = vadd.f32 0.0, %v3618
      %v3620 = vpop.f32.mrf.mxu0
      %v3621 = vadd.f32 0.0, %v3620
      %3622 = vmatmul.bf16.gmra.mxu0 %v259
      %v3623 = vpop.f32.mrf.mxu0
      %v3624 = vadd.f32 0.0, %v3623
      %v3625 = vpop.f32.mrf.mxu0
      %v3626 = vadd.f32 0.0, %v3625
      %3627 = vmatmul.bf16.gmra.mxu0 %v260
      %v3628 = vpop.f32.mrf.mxu0
      %v3629 = vadd.f32 0.0, %v3628
      %v3630 = vpop.f32.mrf.mxu0
      %v3631 = vadd.f32 0.0, %v3630
      %3632 = vmatmul.bf16.gmra.mxu0 %v261
      %v3633 = vpop.f32.mrf.mxu0
      %v3634 = vadd.f32 0.0, %v3633
      %v3635 = vpop.f32.mrf.mxu0
      %v3636 = vadd.f32 0.0, %v3635
      %3637 = vmatmul.bf16.gmra.mxu0 %v262
      %v3638 = vpop.f32.mrf.mxu0
      %v3639 = vadd.f32 0.0, %v3638
      %v3640 = vpop.f32.mrf.mxu0
      %v3641 = vadd.f32 0.0, %v3640
      %3642 = vmatmul.bf16.gmra.mxu0 %v263
      %v3643 = vpop.f32.mrf.mxu0
      %v3644 = vadd.f32 0.0, %v3643
      %v3645 = vpop.f32.mrf.mxu0
      %v3646 = vadd.f32 0.0, %v3645
      %3647 = vdwg.mxu0
      %3648 = vmatpush.bf16.msra.mxu0 %v1692
      %3649 = vmatpush.bf16.msra.mxu0 %v1656
      %3650 = vmatpush.bf16.msra.mxu0 %v1620
      %3651 = vmatpush.bf16.msra.mxu0 %v1584
      %3652 = vmatpush.bf16.msra.mxu0 %v1548
      %3653 = vmatpush.bf16.msra.mxu0 %v1512
      %3654 = vmatpush.bf16.msra.mxu0 %v1476
      %3655 = vmatpush.bf16.msra.mxu0 %v1440
      %3656 = vmatmul.bf16.gmra.mxu0 %v252
      %v3657 = vpop.f32.mrf.mxu0
      %v3658 = vadd.f32 0.0, %v3657
      %v3659 = vpop.f32.mrf.mxu0
      %v3660 = vadd.f32 0.0, %v3659
      %3661 = vmatmul.bf16.gmra.mxu0 %v253
      %v3662 = vpop.f32.mrf.mxu0
      %v3663 = vadd.f32 0.0, %v3662
      %v3664 = vpop.f32.mrf.mxu0
      %v3665 = vadd.f32 0.0, %v3664
      %3666 = vmatmul.bf16.gmra.mxu0 %v254
      %v3667 = vpop.f32.mrf.mxu0
      %v3668 = vadd.f32 0.0, %v3667
      %v3669 = vpop.f32.mrf.mxu0
      %v3670 = vadd.f32 0.0, %v3669
      %3671 = vmatmul.bf16.gmra.mxu0 %v255
      %v3672 = vpop.f32.mrf.mxu0
      %v3673 = vadd.f32 0.0, %v3672
      %v3674 = vpop.f32.mrf.mxu0
      %v3675 = vadd.f32 0.0, %v3674
      %3676 = vmatmul.bf16.gmra.mxu0 %v256
      %v3677 = vpop.f32.mrf.mxu0
      %v3678 = vadd.f32 0.0, %v3677
      %v3679 = vpop.f32.mrf.mxu0
      %v3680 = vadd.f32 0.0, %v3679
      %3681 = vmatmul.bf16.gmra.mxu0 %v257
      %v3682 = vpop.f32.mrf.mxu0
      %v3683 = vadd.f32 0.0, %v3682
      %v3684 = vpop.f32.mrf.mxu0
      %v3685 = vadd.f32 0.0, %v3684
      %3686 = vmatmul.bf16.gmra.mxu0 %v258
      %v3687 = vpop.f32.mrf.mxu0
      %v3688 = vadd.f32 0.0, %v3687
      %v3689 = vpop.f32.mrf.mxu0
      %v3690 = vadd.f32 0.0, %v3689
      %3691 = vmatmul.bf16.gmra.mxu0 %v259
      %v3692 = vpop.f32.mrf.mxu0
      %v3693 = vadd.f32 0.0, %v3692
      %v3694 = vpop.f32.mrf.mxu0
      %v3695 = vadd.f32 0.0, %v3694
      %3696 = vmatmul.bf16.gmra.mxu0 %v260
      %v3697 = vpop.f32.mrf.mxu0
      %v3698 = vadd.f32 0.0, %v3697
      %v3699 = vpop.f32.mrf.mxu0
      %v3700 = vadd.f32 0.0, %v3699
      %3701 = vmatmul.bf16.gmra.mxu0 %v261
      %v3702 = vpop.f32.mrf.mxu0
      %v3703 = vadd.f32 0.0, %v3702
      %v3704 = vpop.f32.mrf.mxu0
      %v3705 = vadd.f32 0.0, %v3704
      %3706 = vmatmul.bf16.gmra.mxu0 %v262
      %v3707 = vpop.f32.mrf.mxu0
      %v3708 = vadd.f32 0.0, %v3707
      %v3709 = vpop.f32.mrf.mxu0
      %v3710 = vadd.f32 0.0, %v3709
      %3711 = vmatmul.bf16.gmra.mxu0 %v263
      %v3712 = vpop.f32.mrf.mxu0
      %v3713 = vadd.f32 0.0, %v3712
      %v3714 = vpop.f32.mrf.mxu0
      %v3715 = vadd.f32 0.0, %v3714
      %3716 = vdwg.mxu0
      %3717 = vmatpush.bf16.msra.mxu0 %v1693
      %3718 = vmatpush.bf16.msra.mxu0 %v1657
      %3719 = vmatpush.bf16.msra.mxu0 %v1621
      %3720 = vmatpush.bf16.msra.mxu0 %v1585
      %3721 = vmatpush.bf16.msra.mxu0 %v1549
      %3722 = vmatpush.bf16.msra.mxu0 %v1513
      %3723 = vmatpush.bf16.msra.mxu0 %v1477
      %3724 = vmatpush.bf16.msra.mxu0 %v1441
      %3725 = vmatmul.bf16.gmra.mxu0 %v252
      %v3726 = vpop.f32.mrf.mxu0
      %v3727 = vadd.f32 0.0, %v3726
      %v3728 = vpop.f32.mrf.mxu0
      %v3729 = vadd.f32 0.0, %v3728
      %3730 = vmatmul.bf16.gmra.mxu0 %v253
      %v3731 = vpop.f32.mrf.mxu0
      %v3732 = vadd.f32 0.0, %v3731
      %v3733 = vpop.f32.mrf.mxu0
      %v3734 = vadd.f32 0.0, %v3733
      %3735 = vmatmul.bf16.gmra.mxu0 %v254
      %v3736 = vpop.f32.mrf.mxu0
      %v3737 = vadd.f32 0.0, %v3736
      %v3738 = vpop.f32.mrf.mxu0
      %v3739 = vadd.f32 0.0, %v3738
      %3740 = vmatmul.bf16.gmra.mxu0 %v255
      %v3741 = vpop.f32.mrf.mxu0
      %v3742 = vadd.f32 0.0, %v3741
      %v3743 = vpop.f32.mrf.mxu0
      %v3744 = vadd.f32 0.0, %v3743
      %3745 = vmatmul.bf16.gmra.mxu0 %v256
      %v3746 = vpop.f32.mrf.mxu0
      %v3747 = vadd.f32 0.0, %v3746
      %v3748 = vpop.f32.mrf.mxu0
      %v3749 = vadd.f32 0.0, %v3748
      %3750 = vmatmul.bf16.gmra.mxu0 %v257
      %v3751 = vpop.f32.mrf.mxu0
      %v3752 = vadd.f32 0.0, %v3751
      %v3753 = vpop.f32.mrf.mxu0
      %v3754 = vadd.f32 0.0, %v3753
      %3755 = vmatmul.bf16.gmra.mxu0 %v258
      %v3756 = vpop.f32.mrf.mxu0
      %v3757 = vadd.f32 0.0, %v3756
      %v3758 = vpop.f32.mrf.mxu0
      %v3759 = vadd.f32 0.0, %v3758
      %3760 = vmatmul.bf16.gmra.mxu0 %v259
      %v3761 = vpop.f32.mrf.mxu0
      %v3762 = vadd.f32 0.0, %v3761
      %v3763 = vpop.f32.mrf.mxu0
      %v3764 = vadd.f32 0.0, %v3763
      %3765 = vmatmul.bf16.gmra.mxu0 %v260
      %v3766 = vpop.f32.mrf.mxu0
      %v3767 = vadd.f32 0.0, %v3766
      %v3768 = vpop.f32.mrf.mxu0
      %v3769 = vadd.f32 0.0, %v3768
      %3770 = vmatmul.bf16.gmra.mxu0 %v261
      %v3771 = vpop.f32.mrf.mxu0
      %v3772 = vadd.f32 0.0, %v3771
      %v3773 = vpop.f32.mrf.mxu0
      %v3774 = vadd.f32 0.0, %v3773
      %3775 = vmatmul.bf16.gmra.mxu0 %v262
      %v3776 = vpop.f32.mrf.mxu0
      %v3777 = vadd.f32 0.0, %v3776
      %v3778 = vpop.f32.mrf.mxu0
      %v3779 = vadd.f32 0.0, %v3778
      %3780 = vmatmul.bf16.gmra.mxu0 %v263
      %v3781 = vpop.f32.mrf.mxu0
      %v3782 = vadd.f32 0.0, %v3781
      %v3783 = vpop.f32.mrf.mxu0
      %v3784 = vadd.f32 0.0, %v3783
      %3785 = vdwg.mxu0
      %3786 = vmatpush.bf16.msra.mxu0 %v1694
      %3787 = vmatpush.bf16.msra.mxu0 %v1658
      %3788 = vmatpush.bf16.msra.mxu0 %v1622
      %3789 = vmatpush.bf16.msra.mxu0 %v1586
      %3790 = vmatpush.bf16.msra.mxu0 %v1550
      %3791 = vmatpush.bf16.msra.mxu0 %v1514
      %3792 = vmatpush.bf16.msra.mxu0 %v1478
      %3793 = vmatpush.bf16.msra.mxu0 %v1442
      %3794 = vmatmul.bf16.gmra.mxu0 %v252
      %v3795 = vpop.f32.mrf.mxu0
      %v3796 = vadd.f32 0.0, %v3795
      %v3797 = vpop.f32.mrf.mxu0
      %v3798 = vadd.f32 0.0, %v3797
      %3799 = vmatmul.bf16.gmra.mxu0 %v253
      %v3800 = vpop.f32.mrf.mxu0
      %v3801 = vadd.f32 0.0, %v3800
      %v3802 = vpop.f32.mrf.mxu0
      %v3803 = vadd.f32 0.0, %v3802
      %3804 = vmatmul.bf16.gmra.mxu0 %v254
      %v3805 = vpop.f32.mrf.mxu0
      %v3806 = vadd.f32 0.0, %v3805
      %v3807 = vpop.f32.mrf.mxu0
      %v3808 = vadd.f32 0.0, %v3807
      %3809 = vmatmul.bf16.gmra.mxu0 %v255
      %v3810 = vpop.f32.mrf.mxu0
      %v3811 = vadd.f32 0.0, %v3810
      %v3812 = vpop.f32.mrf.mxu0
      %v3813 = vadd.f32 0.0, %v3812
      %3814 = vmatmul.bf16.gmra.mxu0 %v256
      %v3815 = vpop.f32.mrf.mxu0
      %v3816 = vadd.f32 0.0, %v3815
      %v3817 = vpop.f32.mrf.mxu0
      %v3818 = vadd.f32 0.0, %v3817
      %3819 = vmatmul.bf16.gmra.mxu0 %v257
      %v3820 = vpop.f32.mrf.mxu0
      %v3821 = vadd.f32 0.0, %v3820
      %v3822 = vpop.f32.mrf.mxu0
      %v3823 = vadd.f32 0.0, %v3822
      %3824 = vmatmul.bf16.gmra.mxu0 %v258
      %v3825 = vpop.f32.mrf.mxu0
      %v3826 = vadd.f32 0.0, %v3825
      %v3827 = vpop.f32.mrf.mxu0
      %v3828 = vadd.f32 0.0, %v3827
      %3829 = vmatmul.bf16.gmra.mxu0 %v259
      %v3830 = vpop.f32.mrf.mxu0
      %v3831 = vadd.f32 0.0, %v3830
      %v3832 = vpop.f32.mrf.mxu0
      %v3833 = vadd.f32 0.0, %v3832
      %3834 = vmatmul.bf16.gmra.mxu0 %v260
      %v3835 = vpop.f32.mrf.mxu0
      %v3836 = vadd.f32 0.0, %v3835
      %v3837 = vpop.f32.mrf.mxu0
      %v3838 = vadd.f32 0.0, %v3837
      %3839 = vmatmul.bf16.gmra.mxu0 %v261
      %v3840 = vpop.f32.mrf.mxu0
      %v3841 = vadd.f32 0.0, %v3840
      %v3842 = vpop.f32.mrf.mxu0
      %v3843 = vadd.f32 0.0, %v3842
      %3844 = vmatmul.bf16.gmra.mxu0 %v262
      %v3845 = vpop.f32.mrf.mxu0
      %v3846 = vadd.f32 0.0, %v3845
      %v3847 = vpop.f32.mrf.mxu0
      %v3848 = vadd.f32 0.0, %v3847
      %3849 = vmatmul.bf16.gmra.mxu0 %v263
      %v3850 = vpop.f32.mrf.mxu0
      %v3851 = vadd.f32 0.0, %v3850
      %v3852 = vpop.f32.mrf.mxu0
      %v3853 = vadd.f32 0.0, %v3852
      %3854 = vdwg.mxu0
      %3855 = vmatpush.bf16.msra.mxu0 %v1695
      %3856 = vmatpush.bf16.msra.mxu0 %v1659
      %3857 = vmatpush.bf16.msra.mxu0 %v1623
      %3858 = vmatpush.bf16.msra.mxu0 %v1587
      %3859 = vmatpush.bf16.msra.mxu0 %v1551
      %3860 = vmatpush.bf16.msra.mxu0 %v1515
      %3861 = vmatpush.bf16.msra.mxu0 %v1479
      %3862 = vmatpush.bf16.msra.mxu0 %v1443
      %3863 = vmatmul.bf16.gmra.mxu0 %v252
      %v3864 = vpop.f32.mrf.mxu0
      %v3865 = vadd.f32 0.0, %v3864
      %v3866 = vpop.f32.mrf.mxu0
      %v3867 = vadd.f32 0.0, %v3866
      %3868 = vmatmul.bf16.gmra.mxu0 %v253
      %v3869 = vpop.f32.mrf.mxu0
      %v3870 = vadd.f32 0.0, %v3869
      %v3871 = vpop.f32.mrf.mxu0
      %v3872 = vadd.f32 0.0, %v3871
      %3873 = vmatmul.bf16.gmra.mxu0 %v254
      %v3874 = vpop.f32.mrf.mxu0
      %v3875 = vadd.f32 0.0, %v3874
      %v3876 = vpop.f32.mrf.mxu0
      %v3877 = vadd.f32 0.0, %v3876
      %3878 = vmatmul.bf16.gmra.mxu0 %v255
      %v3879 = vpop.f32.mrf.mxu0
      %v3880 = vadd.f32 0.0, %v3879
      %v3881 = vpop.f32.mrf.mxu0
      %v3882 = vadd.f32 0.0, %v3881
      %3883 = vmatmul.bf16.gmra.mxu0 %v256
      %v3884 = vpop.f32.mrf.mxu0
      %v3885 = vadd.f32 0.0, %v3884
      %v3886 = vpop.f32.mrf.mxu0
      %v3887 = vadd.f32 0.0, %v3886
      %3888 = vmatmul.bf16.gmra.mxu0 %v257
      %v3889 = vpop.f32.mrf.mxu0
      %v3890 = vadd.f32 0.0, %v3889
      %v3891 = vpop.f32.mrf.mxu0
      %v3892 = vadd.f32 0.0, %v3891
      %3893 = vmatmul.bf16.gmra.mxu0 %v258
      %v3894 = vpop.f32.mrf.mxu0
      %v3895 = vadd.f32 0.0, %v3894
      %v3896 = vpop.f32.mrf.mxu0
      %v3897 = vadd.f32 0.0, %v3896
      %3898 = vmatmul.bf16.gmra.mxu0 %v259
      %v3899 = vpop.f32.mrf.mxu0
      %v3900 = vadd.f32 0.0, %v3899
      %v3901 = vpop.f32.mrf.mxu0
      %v3902 = vadd.f32 0.0, %v3901
      %3903 = vmatmul.bf16.gmra.mxu0 %v260
      %v3904 = vpop.f32.mrf.mxu0
      %v3905 = vadd.f32 0.0, %v3904
      %v3906 = vpop.f32.mrf.mxu0
      %v3907 = vadd.f32 0.0, %v3906
      %3908 = vmatmul.bf16.gmra.mxu0 %v261
      %v3909 = vpop.f32.mrf.mxu0
      %v3910 = vadd.f32 0.0, %v3909
      %v3911 = vpop.f32.mrf.mxu0
      %v3912 = vadd.f32 0.0, %v3911
      %3913 = vmatmul.bf16.gmra.mxu0 %v262
      %v3914 = vpop.f32.mrf.mxu0
      %v3915 = vadd.f32 0.0, %v3914
      %v3916 = vpop.f32.mrf.mxu0
      %v3917 = vadd.f32 0.0, %v3916
      %3918 = vmatmul.bf16.gmra.mxu0 %v263
      %v3919 = vpop.f32.mrf.mxu0
      %v3920 = vadd.f32 0.0, %v3919
      %v3921 = vpop.f32.mrf.mxu0
      %v3922 = vadd.f32 0.0, %v3921
      %3923 = vdwg.mxu0
      %3924 = vmatpush.bf16.msra.mxu0 %v1696
      %3925 = vmatpush.bf16.msra.mxu0 %v1660
      %3926 = vmatpush.bf16.msra.mxu0 %v1624
      %3927 = vmatpush.bf16.msra.mxu0 %v1588
      %3928 = vmatpush.bf16.msra.mxu0 %v1552
      %3929 = vmatpush.bf16.msra.mxu0 %v1516
      %3930 = vmatpush.bf16.msra.mxu0 %v1480
      %3931 = vmatpush.bf16.msra.mxu0 %v1444
      %3932 = vmatmul.bf16.gmra.mxu0 %v252
      %v3933 = vpop.f32.mrf.mxu0
      %v3934 = vadd.f32 0.0, %v3933
      %v3935 = vpop.f32.mrf.mxu0
      %v3936 = vadd.f32 0.0, %v3935
      %3937 = vmatmul.bf16.gmra.mxu0 %v253
      %v3938 = vpop.f32.mrf.mxu0
      %v3939 = vadd.f32 0.0, %v3938
      %v3940 = vpop.f32.mrf.mxu0
      %v3941 = vadd.f32 0.0, %v3940
      %3942 = vmatmul.bf16.gmra.mxu0 %v254
      %v3943 = vpop.f32.mrf.mxu0
      %v3944 = vadd.f32 0.0, %v3943
      %v3945 = vpop.f32.mrf.mxu0
      %v3946 = vadd.f32 0.0, %v3945
      %3947 = vmatmul.bf16.gmra.mxu0 %v255
      %v3948 = vpop.f32.mrf.mxu0
      %v3949 = vadd.f32 0.0, %v3948
      %v3950 = vpop.f32.mrf.mxu0
      %v3951 = vadd.f32 0.0, %v3950
      %3952 = vmatmul.bf16.gmra.mxu0 %v256
      %v3953 = vpop.f32.mrf.mxu0
      %v3954 = vadd.f32 0.0, %v3953
      %v3955 = vpop.f32.mrf.mxu0
      %v3956 = vadd.f32 0.0, %v3955
      %3957 = vmatmul.bf16.gmra.mxu0 %v257
      %v3958 = vpop.f32.mrf.mxu0
      %v3959 = vadd.f32 0.0, %v3958
      %v3960 = vpop.f32.mrf.mxu0
      %v3961 = vadd.f32 0.0, %v3960
      %3962 = vmatmul.bf16.gmra.mxu0 %v258
      %v3963 = vpop.f32.mrf.mxu0
      %v3964 = vadd.f32 0.0, %v3963
      %v3965 = vpop.f32.mrf.mxu0
      %v3966 = vadd.f32 0.0, %v3965
      %3967 = vmatmul.bf16.gmra.mxu0 %v259
      %v3968 = vpop.f32.mrf.mxu0
      %v3969 = vadd.f32 0.0, %v3968
      %v3970 = vpop.f32.mrf.mxu0
      %v3971 = vadd.f32 0.0, %v3970
      %3972 = vmatmul.bf16.gmra.mxu0 %v260
      %v3973 = vpop.f32.mrf.mxu0
      %v3974 = vadd.f32 0.0, %v3973
      %v3975 = vpop.f32.mrf.mxu0
      %v3976 = vadd.f32 0.0, %v3975
      %3977 = vmatmul.bf16.gmra.mxu0 %v261
      %v3978 = vpop.f32.mrf.mxu0
      %v3979 = vadd.f32 0.0, %v3978
      %v3980 = vpop.f32.mrf.mxu0
      %v3981 = vadd.f32 0.0, %v3980
      %3982 = vmatmul.bf16.gmra.mxu0 %v262
      %v3983 = vpop.f32.mrf.mxu0
      %v3984 = vadd.f32 0.0, %v3983
      %v3985 = vpop.f32.mrf.mxu0
      %v3986 = vadd.f32 0.0, %v3985
      %3987 = vmatmul.bf16.gmra.mxu0 %v263
      %v3988 = vpop.f32.mrf.mxu0
      %v3989 = vadd.f32 0.0, %v3988
      %v3990 = vpop.f32.mrf.mxu0
      %v3991 = vadd.f32 0.0, %v3990
      %3992 = vdwg.mxu0
      %3993 = vmatpush.bf16.msra.mxu0 %v1697
      %3994 = vmatpush.bf16.msra.mxu0 %v1661
      %3995 = vmatpush.bf16.msra.mxu0 %v1625
      %3996 = vmatpush.bf16.msra.mxu0 %v1589
      %3997 = vmatpush.bf16.msra.mxu0 %v1553
      %3998 = vmatpush.bf16.msra.mxu0 %v1517
      %3999 = vmatpush.bf16.msra.mxu0 %v1481
      %4000 = vmatpush.bf16.msra.mxu0 %v1445
      %4001 = vmatmul.bf16.gmra.mxu0 %v252
      %v4002 = vpop.f32.mrf.mxu0
      %v4003 = vadd.f32 0.0, %v4002
      %v4004 = vpop.f32.mrf.mxu0
      %v4005 = vadd.f32 0.0, %v4004
      %4006 = vmatmul.bf16.gmra.mxu0 %v253
      %v4007 = vpop.f32.mrf.mxu0
      %v4008 = vadd.f32 0.0, %v4007
      %v4009 = vpop.f32.mrf.mxu0
      %v4010 = vadd.f32 0.0, %v4009
      %4011 = vmatmul.bf16.gmra.mxu0 %v254
      %v4012 = vpop.f32.mrf.mxu0
      %v4013 = vadd.f32 0.0, %v4012
      %v4014 = vpop.f32.mrf.mxu0
      %v4015 = vadd.f32 0.0, %v4014
      %4016 = vmatmul.bf16.gmra.mxu0 %v255
      %v4017 = vpop.f32.mrf.mxu0
      %v4018 = vadd.f32 0.0, %v4017
      %v4019 = vpop.f32.mrf.mxu0
      %v4020 = vadd.f32 0.0, %v4019
      %4021 = vmatmul.bf16.gmra.mxu0 %v256
      %v4022 = vpop.f32.mrf.mxu0
      %v4023 = vadd.f32 0.0, %v4022
      %v4024 = vpop.f32.mrf.mxu0
      %v4025 = vadd.f32 0.0, %v4024
      %4026 = vmatmul.bf16.gmra.mxu0 %v257
      %v4027 = vpop.f32.mrf.mxu0
      %v4028 = vadd.f32 0.0, %v4027
      %v4029 = vpop.f32.mrf.mxu0
      %v4030 = vadd.f32 0.0, %v4029
      %4031 = vmatmul.bf16.gmra.mxu0 %v258
      %v4032 = vpop.f32.mrf.mxu0
      %v4033 = vadd.f32 0.0, %v4032
      %v4034 = vpop.f32.mrf.mxu0
      %v4035 = vadd.f32 0.0, %v4034
      %4036 = vmatmul.bf16.gmra.mxu0 %v259
      %v4037 = vpop.f32.mrf.mxu0
      %v4038 = vadd.f32 0.0, %v4037
      %v4039 = vpop.f32.mrf.mxu0
      %v4040 = vadd.f32 0.0, %v4039
      %4041 = vmatmul.bf16.gmra.mxu0 %v260
      %v4042 = vpop.f32.mrf.mxu0
      %v4043 = vadd.f32 0.0, %v4042
      %v4044 = vpop.f32.mrf.mxu0
      %v4045 = vadd.f32 0.0, %v4044
      %4046 = vmatmul.bf16.gmra.mxu0 %v261
      %v4047 = vpop.f32.mrf.mxu0
      %v4048 = vadd.f32 0.0, %v4047
      %v4049 = vpop.f32.mrf.mxu0
      %v4050 = vadd.f32 0.0, %v4049
      %4051 = vmatmul.bf16.gmra.mxu0 %v262
      %v4052 = vpop.f32.mrf.mxu0
      %v4053 = vadd.f32 0.0, %v4052
      %v4054 = vpop.f32.mrf.mxu0
      %v4055 = vadd.f32 0.0, %v4054
      %4056 = vmatmul.bf16.gmra.mxu0 %v263
      %v4057 = vpop.f32.mrf.mxu0
      %v4058 = vadd.f32 0.0, %v4057
      %v4059 = vpop.f32.mrf.mxu0
      %v4060 = vadd.f32 0.0, %v4059
      %4061 = vdwg.mxu0
      %4062 = vmatpush.bf16.msra.mxu0 %v1698
      %4063 = vmatpush.bf16.msra.mxu0 %v1662
      %4064 = vmatpush.bf16.msra.mxu0 %v1626
      %4065 = vmatpush.bf16.msra.mxu0 %v1590
      %4066 = vmatpush.bf16.msra.mxu0 %v1554
      %4067 = vmatpush.bf16.msra.mxu0 %v1518
      %4068 = vmatpush.bf16.msra.mxu0 %v1482
      %4069 = vmatpush.bf16.msra.mxu0 %v1446
      %4070 = vmatmul.bf16.gmra.mxu0 %v252
      %v4071 = vpop.f32.mrf.mxu0
      %v4072 = vadd.f32 0.0, %v4071
      %v4073 = vpop.f32.mrf.mxu0
      %v4074 = vadd.f32 0.0, %v4073
      %4075 = vmatmul.bf16.gmra.mxu0 %v253
      %v4076 = vpop.f32.mrf.mxu0
      %v4077 = vadd.f32 0.0, %v4076
      %v4078 = vpop.f32.mrf.mxu0
      %v4079 = vadd.f32 0.0, %v4078
      %4080 = vmatmul.bf16.gmra.mxu0 %v254
      %v4081 = vpop.f32.mrf.mxu0
      %v4082 = vadd.f32 0.0, %v4081
      %v4083 = vpop.f32.mrf.mxu0
      %v4084 = vadd.f32 0.0, %v4083
      %4085 = vmatmul.bf16.gmra.mxu0 %v255
      %v4086 = vpop.f32.mrf.mxu0
      %v4087 = vadd.f32 0.0, %v4086
      %v4088 = vpop.f32.mrf.mxu0
      %v4089 = vadd.f32 0.0, %v4088
      %4090 = vmatmul.bf16.gmra.mxu0 %v256
      %v4091 = vpop.f32.mrf.mxu0
      %v4092 = vadd.f32 0.0, %v4091
      %v4093 = vpop.f32.mrf.mxu0
      %v4094 = vadd.f32 0.0, %v4093
      %4095 = vmatmul.bf16.gmra.mxu0 %v257
      %v4096 = vpop.f32.mrf.mxu0
      %v4097 = vadd.f32 0.0, %v4096
      %v4098 = vpop.f32.mrf.mxu0
      %v4099 = vadd.f32 0.0, %v4098
      %4100 = vmatmul.bf16.gmra.mxu0 %v258
      %v4101 = vpop.f32.mrf.mxu0
      %v4102 = vadd.f32 0.0, %v4101
      %v4103 = vpop.f32.mrf.mxu0
      %v4104 = vadd.f32 0.0, %v4103
      %4105 = vmatmul.bf16.gmra.mxu0 %v259
      %v4106 = vpop.f32.mrf.mxu0
      %v4107 = vadd.f32 0.0, %v4106
      %v4108 = vpop.f32.mrf.mxu0
      %v4109 = vadd.f32 0.0, %v4108
      %4110 = vmatmul.bf16.gmra.mxu0 %v260
      %v4111 = vpop.f32.mrf.mxu0
      %v4112 = vadd.f32 0.0, %v4111
      %v4113 = vpop.f32.mrf.mxu0
      %v4114 = vadd.f32 0.0, %v4113
      %4115 = vmatmul.bf16.gmra.mxu0 %v261
      %v4116 = vpop.f32.mrf.mxu0
      %v4117 = vadd.f32 0.0, %v4116
      %v4118 = vpop.f32.mrf.mxu0
      %v4119 = vadd.f32 0.0, %v4118
      %4120 = vmatmul.bf16.gmra.mxu0 %v262
      %v4121 = vpop.f32.mrf.mxu0
      %v4122 = vadd.f32 0.0, %v4121
      %v4123 = vpop.f32.mrf.mxu0
      %v4124 = vadd.f32 0.0, %v4123
      %4125 = vmatmul.bf16.gmra.mxu0 %v263
      %v4126 = vpop.f32.mrf.mxu0
      %v4127 = vadd.f32 0.0, %v4126
      %v4128 = vpop.f32.mrf.mxu0
      %v4129 = vadd.f32 0.0, %v4128
      %4130 = vdwg.mxu0
      %4131 = vmatpush.bf16.msra.mxu0 %v1699
      %4132 = vmatpush.bf16.msra.mxu0 %v1663
      %4133 = vmatpush.bf16.msra.mxu0 %v1627
      %4134 = vmatpush.bf16.msra.mxu0 %v1591
      %4135 = vmatpush.bf16.msra.mxu0 %v1555
      %4136 = vmatpush.bf16.msra.mxu0 %v1519
      %4137 = vmatpush.bf16.msra.mxu0 %v1483
      %4138 = vmatpush.bf16.msra.mxu0 %v1447
      %4139 = vmatmul.bf16.gmra.mxu0 %v252
      %v4140 = vpop.f32.mrf.mxu0
      %v4141 = vadd.f32 0.0, %v4140
      %v4142 = vpop.f32.mrf.mxu0
      %v4143 = vadd.f32 0.0, %v4142
      %4144 = vmatmul.bf16.gmra.mxu0 %v253
      %v4145 = vpop.f32.mrf.mxu0
      %v4146 = vadd.f32 0.0, %v4145
      %v4147 = vpop.f32.mrf.mxu0
      %v4148 = vadd.f32 0.0, %v4147
      %4149 = vmatmul.bf16.gmra.mxu0 %v254
      %v4150 = vpop.f32.mrf.mxu0
      %v4151 = vadd.f32 0.0, %v4150
      %v4152 = vpop.f32.mrf.mxu0
      %v4153 = vadd.f32 0.0, %v4152
      %4154 = vmatmul.bf16.gmra.mxu0 %v255
      %v4155 = vpop.f32.mrf.mxu0
      %v4156 = vadd.f32 0.0, %v4155
      %v4157 = vpop.f32.mrf.mxu0
      %v4158 = vadd.f32 0.0, %v4157
      %4159 = vmatmul.bf16.gmra.mxu0 %v256
      %v4160 = vpop.f32.mrf.mxu0
      %v4161 = vadd.f32 0.0, %v4160
      %v4162 = vpop.f32.mrf.mxu0
      %v4163 = vadd.f32 0.0, %v4162
      %4164 = vmatmul.bf16.gmra.mxu0 %v257
      %v4165 = vpop.f32.mrf.mxu0
      %v4166 = vadd.f32 0.0, %v4165
      %v4167 = vpop.f32.mrf.mxu0
      %v4168 = vadd.f32 0.0, %v4167
      %4169 = vmatmul.bf16.gmra.mxu0 %v258
      %v4170 = vpop.f32.mrf.mxu0
      %v4171 = vadd.f32 0.0, %v4170
      %v4172 = vpop.f32.mrf.mxu0
      %v4173 = vadd.f32 0.0, %v4172
      %4174 = vmatmul.bf16.gmra.mxu0 %v259
      %v4175 = vpop.f32.mrf.mxu0
      %v4176 = vadd.f32 0.0, %v4175
      %v4177 = vpop.f32.mrf.mxu0
      %v4178 = vadd.f32 0.0, %v4177
      %4179 = vmatmul.bf16.gmra.mxu0 %v260
      %v4180 = vpop.f32.mrf.mxu0
      %v4181 = vadd.f32 0.0, %v4180
      %v4182 = vpop.f32.mrf.mxu0
      %v4183 = vadd.f32 0.0, %v4182
      %4184 = vmatmul.bf16.gmra.mxu0 %v261
      %v4185 = vpop.f32.mrf.mxu0
      %v4186 = vadd.f32 0.0, %v4185
      %v4187 = vpop.f32.mrf.mxu0
      %v4188 = vadd.f32 0.0, %v4187
      %4189 = vmatmul.bf16.gmra.mxu0 %v262
      %v4190 = vpop.f32.mrf.mxu0
      %v4191 = vadd.f32 0.0, %v4190
      %v4192 = vpop.f32.mrf.mxu0
      %v4193 = vadd.f32 0.0, %v4192
      %4194 = vmatmul.bf16.gmra.mxu0 %v263
      %v4195 = vpop.f32.mrf.mxu0
      %v4196 = vadd.f32 0.0, %v4195
      %v4197 = vpop.f32.mrf.mxu0
      %v4198 = vadd.f32 0.0, %v4197
      %4199 = vdwg.mxu0
      %4200 = vmatpush.bf16.msra.mxu0 %v1700
      %4201 = vmatpush.bf16.msra.mxu0 %v1664
      %4202 = vmatpush.bf16.msra.mxu0 %v1628
      %4203 = vmatpush.bf16.msra.mxu0 %v1592
      %4204 = vmatpush.bf16.msra.mxu0 %v1556
      %4205 = vmatpush.bf16.msra.mxu0 %v1520
      %4206 = vmatpush.bf16.msra.mxu0 %v1484
      %4207 = vmatpush.bf16.msra.mxu0 %v1448
      %4208 = vmatmul.bf16.gmra.mxu0 %v252
      %v4209 = vpop.f32.mrf.mxu0
      %v4210 = vadd.f32 0.0, %v4209
      %v4211 = vpop.f32.mrf.mxu0
      %v4212 = vadd.f32 0.0, %v4211
      %4213 = vmatmul.bf16.gmra.mxu0 %v253
      %v4214 = vpop.f32.mrf.mxu0
      %v4215 = vadd.f32 0.0, %v4214
      %v4216 = vpop.f32.mrf.mxu0
      %v4217 = vadd.f32 0.0, %v4216
      %4218 = vmatmul.bf16.gmra.mxu0 %v254
      %v4219 = vpop.f32.mrf.mxu0
      %v4220 = vadd.f32 0.0, %v4219
      %v4221 = vpop.f32.mrf.mxu0
      %v4222 = vadd.f32 0.0, %v4221
      %4223 = vmatmul.bf16.gmra.mxu0 %v255
      %v4224 = vpop.f32.mrf.mxu0
      %v4225 = vadd.f32 0.0, %v4224
      %v4226 = vpop.f32.mrf.mxu0
      %v4227 = vadd.f32 0.0, %v4226
      %4228 = vmatmul.bf16.gmra.mxu0 %v256
      %v4229 = vpop.f32.mrf.mxu0
      %v4230 = vadd.f32 0.0, %v4229
      %v4231 = vpop.f32.mrf.mxu0
      %v4232 = vadd.f32 0.0, %v4231
      %4233 = vmatmul.bf16.gmra.mxu0 %v257
      %v4234 = vpop.f32.mrf.mxu0
      %v4235 = vadd.f32 0.0, %v4234
      %v4236 = vpop.f32.mrf.mxu0
      %v4237 = vadd.f32 0.0, %v4236
      %4238 = vmatmul.bf16.gmra.mxu0 %v258
      %v4239 = vpop.f32.mrf.mxu0
      %v4240 = vadd.f32 0.0, %v4239
      %v4241 = vpop.f32.mrf.mxu0
      %v4242 = vadd.f32 0.0, %v4241
      %4243 = vmatmul.bf16.gmra.mxu0 %v259
      %v4244 = vpop.f32.mrf.mxu0
      %v4245 = vadd.f32 0.0, %v4244
      %v4246 = vpop.f32.mrf.mxu0
      %v4247 = vadd.f32 0.0, %v4246
      %4248 = vmatmul.bf16.gmra.mxu0 %v260
      %v4249 = vpop.f32.mrf.mxu0
      %v4250 = vadd.f32 0.0, %v4249
      %v4251 = vpop.f32.mrf.mxu0
      %v4252 = vadd.f32 0.0, %v4251
      %4253 = vmatmul.bf16.gmra.mxu0 %v261
      %v4254 = vpop.f32.mrf.mxu0
      %v4255 = vadd.f32 0.0, %v4254
      %v4256 = vpop.f32.mrf.mxu0
      %v4257 = vadd.f32 0.0, %v4256
      %4258 = vmatmul.bf16.gmra.mxu0 %v262
      %v4259 = vpop.f32.mrf.mxu0
      %v4260 = vadd.f32 0.0, %v4259
      %v4261 = vpop.f32.mrf.mxu0
      %v4262 = vadd.f32 0.0, %v4261
      %4263 = vmatmul.bf16.gmra.mxu0 %v263
      %v4264 = vpop.f32.mrf.mxu0
      %v4265 = vadd.f32 0.0, %v4264
      %v4266 = vpop.f32.mrf.mxu0
      %v4267 = vadd.f32 0.0, %v4266
      %4268 = vdwg.mxu0
      %4269 = vmatpush.bf16.msra.mxu0 %v1701
      %4270 = vmatpush.bf16.msra.mxu0 %v1665
      %4271 = vmatpush.bf16.msra.mxu0 %v1629
      %4272 = vmatpush.bf16.msra.mxu0 %v1593
      %4273 = vmatpush.bf16.msra.mxu0 %v1557
      %4274 = vmatpush.bf16.msra.mxu0 %v1521
      %4275 = vmatpush.bf16.msra.mxu0 %v1485
      %4276 = vmatpush.bf16.msra.mxu0 %v1449
      %4277 = vmatmul.bf16.gmra.mxu0 %v252
      %v4278 = vpop.f32.mrf.mxu0
      %v4279 = vadd.f32 0.0, %v4278
      %v4280 = vpop.f32.mrf.mxu0
      %v4281 = vadd.f32 0.0, %v4280
      %4282 = vmatmul.bf16.gmra.mxu0 %v253
      %v4283 = vpop.f32.mrf.mxu0
      %v4284 = vadd.f32 0.0, %v4283
      %v4285 = vpop.f32.mrf.mxu0
      %v4286 = vadd.f32 0.0, %v4285
      %4287 = vmatmul.bf16.gmra.mxu0 %v254
      %v4288 = vpop.f32.mrf.mxu0
      %v4289 = vadd.f32 0.0, %v4288
      %v4290 = vpop.f32.mrf.mxu0
      %v4291 = vadd.f32 0.0, %v4290
      %4292 = vmatmul.bf16.gmra.mxu0 %v255
      %v4293 = vpop.f32.mrf.mxu0
      %v4294 = vadd.f32 0.0, %v4293
      %v4295 = vpop.f32.mrf.mxu0
      %v4296 = vadd.f32 0.0, %v4295
      %4297 = vmatmul.bf16.gmra.mxu0 %v256
      %v4298 = vpop.f32.mrf.mxu0
      %v4299 = vadd.f32 0.0, %v4298
      %v4300 = vpop.f32.mrf.mxu0
      %v4301 = vadd.f32 0.0, %v4300
      %4302 = vmatmul.bf16.gmra.mxu0 %v257
      %v4303 = vpop.f32.mrf.mxu0
      %v4304 = vadd.f32 0.0, %v4303
      %v4305 = vpop.f32.mrf.mxu0
      %v4306 = vadd.f32 0.0, %v4305
      %4307 = vmatmul.bf16.gmra.mxu0 %v258
      %v4308 = vpop.f32.mrf.mxu0
      %v4309 = vadd.f32 0.0, %v4308
      %v4310 = vpop.f32.mrf.mxu0
      %v4311 = vadd.f32 0.0, %v4310
      %4312 = vmatmul.bf16.gmra.mxu0 %v259
      %v4313 = vpop.f32.mrf.mxu0
      %v4314 = vadd.f32 0.0, %v4313
      %v4315 = vpop.f32.mrf.mxu0
      %v4316 = vadd.f32 0.0, %v4315
      %4317 = vmatmul.bf16.gmra.mxu0 %v260
      %v4318 = vpop.f32.mrf.mxu0
      %v4319 = vadd.f32 0.0, %v4318
      %v4320 = vpop.f32.mrf.mxu0
      %v4321 = vadd.f32 0.0, %v4320
      %4322 = vmatmul.bf16.gmra.mxu0 %v261
      %v4323 = vpop.f32.mrf.mxu0
      %v4324 = vadd.f32 0.0, %v4323
      %v4325 = vpop.f32.mrf.mxu0
      %v4326 = vadd.f32 0.0, %v4325
      %4327 = vmatmul.bf16.gmra.mxu0 %v262
      %v4328 = vpop.f32.mrf.mxu0
      %v4329 = vadd.f32 0.0, %v4328
      %v4330 = vpop.f32.mrf.mxu0
      %v4331 = vadd.f32 0.0, %v4330
      %4332 = vmatmul.bf16.gmra.mxu0 %v263
      %v4333 = vpop.f32.mrf.mxu0
      %v4334 = vadd.f32 0.0, %v4333
      %v4335 = vpop.f32.mrf.mxu0
      %v4336 = vadd.f32 0.0, %v4335
      %4337 = vdwg.mxu0
      %4338 = vmatpush.bf16.msra.mxu0 %v1702
      %4339 = vmatpush.bf16.msra.mxu0 %v1666
      %4340 = vmatpush.bf16.msra.mxu0 %v1630
      %4341 = vmatpush.bf16.msra.mxu0 %v1594
      %4342 = vmatpush.bf16.msra.mxu0 %v1558
      %4343 = vmatpush.bf16.msra.mxu0 %v1522
      %4344 = vmatpush.bf16.msra.mxu0 %v1486
      %4345 = vmatpush.bf16.msra.mxu0 %v1450
      %4346 = vmatmul.bf16.gmra.mxu0 %v252
      %v4347 = vpop.f32.mrf.mxu0
      %v4348 = vadd.f32 0.0, %v4347
      %v4349 = vpop.f32.mrf.mxu0
      %v4350 = vadd.f32 0.0, %v4349
      %4351 = vmatmul.bf16.gmra.mxu0 %v253
      %v4352 = vpop.f32.mrf.mxu0
      %v4353 = vadd.f32 0.0, %v4352
      %v4354 = vpop.f32.mrf.mxu0
      %v4355 = vadd.f32 0.0, %v4354
      %4356 = vmatmul.bf16.gmra.mxu0 %v254
      %v4357 = vpop.f32.mrf.mxu0
      %v4358 = vadd.f32 0.0, %v4357
      %v4359 = vpop.f32.mrf.mxu0
      %v4360 = vadd.f32 0.0, %v4359
      %4361 = vmatmul.bf16.gmra.mxu0 %v255
      %v4362 = vpop.f32.mrf.mxu0
      %v4363 = vadd.f32 0.0, %v4362
      %v4364 = vpop.f32.mrf.mxu0
      %v4365 = vadd.f32 0.0, %v4364
      %4366 = vmatmul.bf16.gmra.mxu0 %v256
      %v4367 = vpop.f32.mrf.mxu0
      %v4368 = vadd.f32 0.0, %v4367
      %v4369 = vpop.f32.mrf.mxu0
      %v4370 = vadd.f32 0.0, %v4369
      %4371 = vmatmul.bf16.gmra.mxu0 %v257
      %v4372 = vpop.f32.mrf.mxu0
      %v4373 = vadd.f32 0.0, %v4372
      %v4374 = vpop.f32.mrf.mxu0
      %v4375 = vadd.f32 0.0, %v4374
      %4376 = vmatmul.bf16.gmra.mxu0 %v258
      %v4377 = vpop.f32.mrf.mxu0
      %v4378 = vadd.f32 0.0, %v4377
      %v4379 = vpop.f32.mrf.mxu0
      %v4380 = vadd.f32 0.0, %v4379
      %4381 = vmatmul.bf16.gmra.mxu0 %v259
      %v4382 = vpop.f32.mrf.mxu0
      %v4383 = vadd.f32 0.0, %v4382
      %v4384 = vpop.f32.mrf.mxu0
      %v4385 = vadd.f32 0.0, %v4384
      %4386 = vmatmul.bf16.gmra.mxu0 %v260
      %v4387 = vpop.f32.mrf.mxu0
      %v4388 = vadd.f32 0.0, %v4387
      %v4389 = vpop.f32.mrf.mxu0
      %v4390 = vadd.f32 0.0, %v4389
      %4391 = vmatmul.bf16.gmra.mxu0 %v261
      %v4392 = vpop.f32.mrf.mxu0
      %v4393 = vadd.f32 0.0, %v4392
      %v4394 = vpop.f32.mrf.mxu0
      %v4395 = vadd.f32 0.0, %v4394
      %4396 = vmatmul.bf16.gmra.mxu0 %v262
      %v4397 = vpop.f32.mrf.mxu0
      %v4398 = vadd.f32 0.0, %v4397
      %v4399 = vpop.f32.mrf.mxu0
      %v4400 = vadd.f32 0.0, %v4399
      %4401 = vmatmul.bf16.gmra.mxu0 %v263
      %v4402 = vpop.f32.mrf.mxu0
      %v4403 = vadd.f32 0.0, %v4402
      %v4404 = vpop.f32.mrf.mxu0
      %v4405 = vadd.f32 0.0, %v4404
      %4406 = vdwg.mxu0
      %4407 = vmatpush.bf16.msra.mxu0 %v1703
      %4408 = vmatpush.bf16.msra.mxu0 %v1667
      %4409 = vmatpush.bf16.msra.mxu0 %v1631
      %4410 = vmatpush.bf16.msra.mxu0 %v1595
      %4411 = vmatpush.bf16.msra.mxu0 %v1559
      %4412 = vmatpush.bf16.msra.mxu0 %v1523
      %4413 = vmatpush.bf16.msra.mxu0 %v1487
      %4414 = vmatpush.bf16.msra.mxu0 %v1451
      %4415 = vmatmul.bf16.gmra.mxu0 %v252
      %v4416 = vpop.f32.mrf.mxu0
      %v4417 = vadd.f32 0.0, %v4416
      %v4418 = vpop.f32.mrf.mxu0
      %v4419 = vadd.f32 0.0, %v4418
      %4420 = vmatmul.bf16.gmra.mxu0 %v253
      %v4421 = vpop.f32.mrf.mxu0
      %v4422 = vadd.f32 0.0, %v4421
      %v4423 = vpop.f32.mrf.mxu0
      %v4424 = vadd.f32 0.0, %v4423
      %4425 = vmatmul.bf16.gmra.mxu0 %v254
      %v4426 = vpop.f32.mrf.mxu0
      %v4427 = vadd.f32 0.0, %v4426
      %v4428 = vpop.f32.mrf.mxu0
      %v4429 = vadd.f32 0.0, %v4428
      %4430 = vmatmul.bf16.gmra.mxu0 %v255
      %v4431 = vpop.f32.mrf.mxu0
      %v4432 = vadd.f32 0.0, %v4431
      %v4433 = vpop.f32.mrf.mxu0
      %v4434 = vadd.f32 0.0, %v4433
      %4435 = vmatmul.bf16.gmra.mxu0 %v256
      %v4436 = vpop.f32.mrf.mxu0
      %v4437 = vadd.f32 0.0, %v4436
      %v4438 = vpop.f32.mrf.mxu0
      %v4439 = vadd.f32 0.0, %v4438
      %4440 = vmatmul.bf16.gmra.mxu0 %v257
      %v4441 = vpop.f32.mrf.mxu0
      %v4442 = vadd.f32 0.0, %v4441
      %v4443 = vpop.f32.mrf.mxu0
      %v4444 = vadd.f32 0.0, %v4443
      %4445 = vmatmul.bf16.gmra.mxu0 %v258
      %v4446 = vpop.f32.mrf.mxu0
      %v4447 = vadd.f32 0.0, %v4446
      %v4448 = vpop.f32.mrf.mxu0
      %v4449 = vadd.f32 0.0, %v4448
      %4450 = vmatmul.bf16.gmra.mxu0 %v259
      %v4451 = vpop.f32.mrf.mxu0
      %v4452 = vadd.f32 0.0, %v4451
      %v4453 = vpop.f32.mrf.mxu0
      %v4454 = vadd.f32 0.0, %v4453
      %4455 = vmatmul.bf16.gmra.mxu0 %v260
      %v4456 = vpop.f32.mrf.mxu0
      %v4457 = vadd.f32 0.0, %v4456
      %v4458 = vpop.f32.mrf.mxu0
      %v4459 = vadd.f32 0.0, %v4458
      %4460 = vmatmul.bf16.gmra.mxu0 %v261
      %v4461 = vpop.f32.mrf.mxu0
      %v4462 = vadd.f32 0.0, %v4461
      %v4463 = vpop.f32.mrf.mxu0
      %v4464 = vadd.f32 0.0, %v4463
      %4465 = vmatmul.bf16.gmra.mxu0 %v262
      %v4466 = vpop.f32.mrf.mxu0
      %v4467 = vadd.f32 0.0, %v4466
      %v4468 = vpop.f32.mrf.mxu0
      %v4469 = vadd.f32 0.0, %v4468
      %4470 = vmatmul.bf16.gmra.mxu0 %v263
      %v4471 = vpop.f32.mrf.mxu0
      %v4472 = vadd.f32 0.0, %v4471
      %v4473 = vpop.f32.mrf.mxu0
      %v4474 = vadd.f32 0.0, %v4473
      %4475 = vdwg.mxu0
      %v4476 = vpack.c.bf16 %v2071, %v2002
      %v4477 = vpack.c.bf16 %v2209, %v2140
      %v4478 = vpack.c.bf16 %v2347, %v2278
      %v4479 = vpack.c.bf16 %v2485, %v2416
      %v4480 = vpack.c.bf16 %v2623, %v2554
      %v4481 = vpack.c.bf16 %v2761, %v2692
      %v4482 = vpack.c.bf16 %v2899, %v2830
      %v4483 = vpack.c.bf16 %v3037, %v2968
      %v4484 = vpack.c.bf16 %v3175, %v3106
      %v4485 = vpack.c.bf16 %v3313, %v3244
      %v4486 = vpack.c.bf16 %v3451, %v3382
      %v4487 = vpack.c.bf16 %v3589, %v3520
      %v4488 = vpack.c.bf16 %v3727, %v3658
      %v4489 = vpack.c.bf16 %v3865, %v3796
      %v4490 = vpack.c.bf16 %v4003, %v3934
      %v4491 = vpack.c.bf16 %v4141, %v4072
      %v4492 = vpack.c.bf16 %v4279, %v4210
      %v4493 = vpack.c.bf16 %v4417, %v4348
      %v4494 = vpack.c.bf16 %v2073, %v2004
      %v4495 = vpack.c.bf16 %v2211, %v2142
      %v4496 = vpack.c.bf16 %v2349, %v2280
      %v4497 = vpack.c.bf16 %v2487, %v2418
      %v4498 = vpack.c.bf16 %v2625, %v2556
      %v4499 = vpack.c.bf16 %v2763, %v2694
      %v4500 = vpack.c.bf16 %v2901, %v2832
      %v4501 = vpack.c.bf16 %v3039, %v2970
      %v4502 = vpack.c.bf16 %v3177, %v3108
      %v4503 = vpack.c.bf16 %v3315, %v3246
      %v4504 = vpack.c.bf16 %v3453, %v3384
      %v4505 = vpack.c.bf16 %v3591, %v3522
      %v4506 = vpack.c.bf16 %v3729, %v3660
      %v4507 = vpack.c.bf16 %v3867, %v3798
      %v4508 = vpack.c.bf16 %v4005, %v3936
      %v4509 = vpack.c.bf16 %v4143, %v4074
      %v4510 = vpack.c.bf16 %v4281, %v4212
      %v4511 = vpack.c.bf16 %v4419, %v4350
      %v4512 = vpack.c.bf16 %v2076, %v2007
      %v4513 = vpack.c.bf16 %v2214, %v2145
      %v4514 = vpack.c.bf16 %v2352, %v2283
      %v4515 = vpack.c.bf16 %v2490, %v2421
      %v4516 = vpack.c.bf16 %v2628, %v2559
      %v4517 = vpack.c.bf16 %v2766, %v2697
      %v4518 = vpack.c.bf16 %v2904, %v2835
      %v4519 = vpack.c.bf16 %v3042, %v2973
      %v4520 = vpack.c.bf16 %v3180, %v3111
      %v4521 = vpack.c.bf16 %v3318, %v3249
      %v4522 = vpack.c.bf16 %v3456, %v3387
      %v4523 = vpack.c.bf16 %v3594, %v3525
      %v4524 = vpack.c.bf16 %v3732, %v3663
      %v4525 = vpack.c.bf16 %v3870, %v3801
      %v4526 = vpack.c.bf16 %v4008, %v3939
      %v4527 = vpack.c.bf16 %v4146, %v4077
      %v4528 = vpack.c.bf16 %v4284, %v4215
      %v4529 = vpack.c.bf16 %v4422, %v4353
      %v4530 = vpack.c.bf16 %v2078, %v2009
      %v4531 = vpack.c.bf16 %v2216, %v2147
      %v4532 = vpack.c.bf16 %v2354, %v2285
      %v4533 = vpack.c.bf16 %v2492, %v2423
      %v4534 = vpack.c.bf16 %v2630, %v2561
      %v4535 = vpack.c.bf16 %v2768, %v2699
      %v4536 = vpack.c.bf16 %v2906, %v2837
      %v4537 = vpack.c.bf16 %v3044, %v2975
      %v4538 = vpack.c.bf16 %v3182, %v3113
      %v4539 = vpack.c.bf16 %v3320, %v3251
      %v4540 = vpack.c.bf16 %v3458, %v3389
      %v4541 = vpack.c.bf16 %v3596, %v3527
      %v4542 = vpack.c.bf16 %v3734, %v3665
      %v4543 = vpack.c.bf16 %v3872, %v3803
      %v4544 = vpack.c.bf16 %v4010, %v3941
      %v4545 = vpack.c.bf16 %v4148, %v4079
      %v4546 = vpack.c.bf16 %v4286, %v4217
      %v4547 = vpack.c.bf16 %v4424, %v4355
      %v4548 = vpack.c.bf16 %v2081, %v2012
      %v4549 = vpack.c.bf16 %v2219, %v2150
      %v4550 = vpack.c.bf16 %v2357, %v2288
      %v4551 = vpack.c.bf16 %v2495, %v2426
      %v4552 = vpack.c.bf16 %v2633, %v2564
      %v4553 = vpack.c.bf16 %v2771, %v2702
      %v4554 = vpack.c.bf16 %v2909, %v2840
      %v4555 = vpack.c.bf16 %v3047, %v2978
      %v4556 = vpack.c.bf16 %v3185, %v3116
      %v4557 = vpack.c.bf16 %v3323, %v3254
      %v4558 = vpack.c.bf16 %v3461, %v3392
      %v4559 = vpack.c.bf16 %v3599, %v3530
      %v4560 = vpack.c.bf16 %v3737, %v3668
      %v4561 = vpack.c.bf16 %v3875, %v3806
      %v4562 = vpack.c.bf16 %v4013, %v3944
      %v4563 = vpack.c.bf16 %v4151, %v4082
      %v4564 = vpack.c.bf16 %v4289, %v4220
      %v4565 = vpack.c.bf16 %v4427, %v4358
      %v4566 = vpack.c.bf16 %v2083, %v2014
      %v4567 = vpack.c.bf16 %v2221, %v2152
      %v4568 = vpack.c.bf16 %v2359, %v2290
      %v4569 = vpack.c.bf16 %v2497, %v2428
      %v4570 = vpack.c.bf16 %v2635, %v2566
      %v4571 = vpack.c.bf16 %v2773, %v2704
      %v4572 = vpack.c.bf16 %v2911, %v2842
      %v4573 = vpack.c.bf16 %v3049, %v2980
      %v4574 = vpack.c.bf16 %v3187, %v3118
      %v4575 = vpack.c.bf16 %v3325, %v3256
      %v4576 = vpack.c.bf16 %v3463, %v3394
      %v4577 = vpack.c.bf16 %v3601, %v3532
      %v4578 = vpack.c.bf16 %v3739, %v3670
      %v4579 = vpack.c.bf16 %v3877, %v3808
      %v4580 = vpack.c.bf16 %v4015, %v3946
      %v4581 = vpack.c.bf16 %v4153, %v4084
      %v4582 = vpack.c.bf16 %v4291, %v4222
      %v4583 = vpack.c.bf16 %v4429, %v4360
      %v4584 = vpack.c.bf16 %v2086, %v2017
      %v4585 = vpack.c.bf16 %v2224, %v2155
      %v4586 = vpack.c.bf16 %v2362, %v2293
      %v4587 = vpack.c.bf16 %v2500, %v2431
      %v4588 = vpack.c.bf16 %v2638, %v2569
      %v4589 = vpack.c.bf16 %v2776, %v2707
      %v4590 = vpack.c.bf16 %v2914, %v2845
      %v4591 = vpack.c.bf16 %v3052, %v2983
      %v4592 = vpack.c.bf16 %v3190, %v3121
      %v4593 = vpack.c.bf16 %v3328, %v3259
      %v4594 = vpack.c.bf16 %v3466, %v3397
      %v4595 = vpack.c.bf16 %v3604, %v3535
      %v4596 = vpack.c.bf16 %v3742, %v3673
      %v4597 = vpack.c.bf16 %v3880, %v3811
      %v4598 = vpack.c.bf16 %v4018, %v3949
      %v4599 = vpack.c.bf16 %v4156, %v4087
      %v4600 = vpack.c.bf16 %v4294, %v4225
      %v4601 = vpack.c.bf16 %v4432, %v4363
      %v4602 = vpack.c.bf16 %v2088, %v2019
      %v4603 = vpack.c.bf16 %v2226, %v2157
      %v4604 = vpack.c.bf16 %v2364, %v2295
      %v4605 = vpack.c.bf16 %v2502, %v2433
      %v4606 = vpack.c.bf16 %v2640, %v2571
      %v4607 = vpack.c.bf16 %v2778, %v2709
      %v4608 = vpack.c.bf16 %v2916, %v2847
      %v4609 = vpack.c.bf16 %v3054, %v2985
      %v4610 = vpack.c.bf16 %v3192, %v3123
      %v4611 = vpack.c.bf16 %v3330, %v3261
      %v4612 = vpack.c.bf16 %v3468, %v3399
      %v4613 = vpack.c.bf16 %v3606, %v3537
      %v4614 = vpack.c.bf16 %v3744, %v3675
      %v4615 = vpack.c.bf16 %v3882, %v3813
      %v4616 = vpack.c.bf16 %v4020, %v3951
      %v4617 = vpack.c.bf16 %v4158, %v4089
      %v4618 = vpack.c.bf16 %v4296, %v4227
      %v4619 = vpack.c.bf16 %v4434, %v4365
      %v4620 = vpack.c.bf16 %v2091, %v2022
      %v4621 = vpack.c.bf16 %v2229, %v2160
      %v4622 = vpack.c.bf16 %v2367, %v2298
      %v4623 = vpack.c.bf16 %v2505, %v2436
      %v4624 = vpack.c.bf16 %v2643, %v2574
      %v4625 = vpack.c.bf16 %v2781, %v2712
      %v4626 = vpack.c.bf16 %v2919, %v2850
      %v4627 = vpack.c.bf16 %v3057, %v2988
      %v4628 = vpack.c.bf16 %v3195, %v3126
      %v4629 = vpack.c.bf16 %v3333, %v3264
      %v4630 = vpack.c.bf16 %v3471, %v3402
      %v4631 = vpack.c.bf16 %v3609, %v3540
      %v4632 = vpack.c.bf16 %v3747, %v3678
      %v4633 = vpack.c.bf16 %v3885, %v3816
      %v4634 = vpack.c.bf16 %v4023, %v3954
      %v4635 = vpack.c.bf16 %v4161, %v4092
      %v4636 = vpack.c.bf16 %v4299, %v4230
      %v4637 = vpack.c.bf16 %v4437, %v4368
      %v4638 = vpack.c.bf16 %v2093, %v2024
      %v4639 = vpack.c.bf16 %v2231, %v2162
      %v4640 = vpack.c.bf16 %v2369, %v2300
      %v4641 = vpack.c.bf16 %v2507, %v2438
      %v4642 = vpack.c.bf16 %v2645, %v2576
      %v4643 = vpack.c.bf16 %v2783, %v2714
      %v4644 = vpack.c.bf16 %v2921, %v2852
      %v4645 = vpack.c.bf16 %v3059, %v2990
      %v4646 = vpack.c.bf16 %v3197, %v3128
      %v4647 = vpack.c.bf16 %v3335, %v3266
      %v4648 = vpack.c.bf16 %v3473, %v3404
      %v4649 = vpack.c.bf16 %v3611, %v3542
      %v4650 = vpack.c.bf16 %v3749, %v3680
      %v4651 = vpack.c.bf16 %v3887, %v3818
      %v4652 = vpack.c.bf16 %v4025, %v3956
      %v4653 = vpack.c.bf16 %v4163, %v4094
      %v4654 = vpack.c.bf16 %v4301, %v4232
      %v4655 = vpack.c.bf16 %v4439, %v4370
      %v4656 = vpack.c.bf16 %v2096, %v2027
      %v4657 = vpack.c.bf16 %v2234, %v2165
      %v4658 = vpack.c.bf16 %v2372, %v2303
      %v4659 = vpack.c.bf16 %v2510, %v2441
      %v4660 = vpack.c.bf16 %v2648, %v2579
      %v4661 = vpack.c.bf16 %v2786, %v2717
      %v4662 = vpack.c.bf16 %v2924, %v2855
      %v4663 = vpack.c.bf16 %v3062, %v2993
      %v4664 = vpack.c.bf16 %v3200, %v3131
      %v4665 = vpack.c.bf16 %v3338, %v3269
      %v4666 = vpack.c.bf16 %v3476, %v3407
      %v4667 = vpack.c.bf16 %v3614, %v3545
      %v4668 = vpack.c.bf16 %v3752, %v3683
      %v4669 = vpack.c.bf16 %v3890, %v3821
      %v4670 = vpack.c.bf16 %v4028, %v3959
      %v4671 = vpack.c.bf16 %v4166, %v4097
      %v4672 = vpack.c.bf16 %v4304, %v4235
      %v4673 = vpack.c.bf16 %v4442, %v4373
      %v4674 = vpack.c.bf16 %v2098, %v2029
      %v4675 = vpack.c.bf16 %v2236, %v2167
      %v4676 = vpack.c.bf16 %v2374, %v2305
      %v4677 = vpack.c.bf16 %v2512, %v2443
      %v4678 = vpack.c.bf16 %v2650, %v2581
      %v4679 = vpack.c.bf16 %v2788, %v2719
      %v4680 = vpack.c.bf16 %v2926, %v2857
      %v4681 = vpack.c.bf16 %v3064, %v2995
      %v4682 = vpack.c.bf16 %v3202, %v3133
      %v4683 = vpack.c.bf16 %v3340, %v3271
      %v4684 = vpack.c.bf16 %v3478, %v3409
      %v4685 = vpack.c.bf16 %v3616, %v3547
      %v4686 = vpack.c.bf16 %v3754, %v3685
      %v4687 = vpack.c.bf16 %v3892, %v3823
      %v4688 = vpack.c.bf16 %v4030, %v3961
      %v4689 = vpack.c.bf16 %v4168, %v4099
      %v4690 = vpack.c.bf16 %v4306, %v4237
      %v4691 = vpack.c.bf16 %v4444, %v4375
      %v4692 = vpack.c.bf16 %v2101, %v2032
      %v4693 = vpack.c.bf16 %v2239, %v2170
      %v4694 = vpack.c.bf16 %v2377, %v2308
      %v4695 = vpack.c.bf16 %v2515, %v2446
      %v4696 = vpack.c.bf16 %v2653, %v2584
      %v4697 = vpack.c.bf16 %v2791, %v2722
      %v4698 = vpack.c.bf16 %v2929, %v2860
      %v4699 = vpack.c.bf16 %v3067, %v2998
      %v4700 = vpack.c.bf16 %v3205, %v3136
      %v4701 = vpack.c.bf16 %v3343, %v3274
      %v4702 = vpack.c.bf16 %v3481, %v3412
      %v4703 = vpack.c.bf16 %v3619, %v3550
      %v4704 = vpack.c.bf16 %v3757, %v3688
      %v4705 = vpack.c.bf16 %v3895, %v3826
      %v4706 = vpack.c.bf16 %v4033, %v3964
      %v4707 = vpack.c.bf16 %v4171, %v4102
      %v4708 = vpack.c.bf16 %v4309, %v4240
      %v4709 = vpack.c.bf16 %v4447, %v4378
      %v4710 = vpack.c.bf16 %v2103, %v2034
      %v4711 = vpack.c.bf16 %v2241, %v2172
      %v4712 = vpack.c.bf16 %v2379, %v2310
      %v4713 = vpack.c.bf16 %v2517, %v2448
      %v4714 = vpack.c.bf16 %v2655, %v2586
      %v4715 = vpack.c.bf16 %v2793, %v2724
      %v4716 = vpack.c.bf16 %v2931, %v2862
      %v4717 = vpack.c.bf16 %v3069, %v3000
      %v4718 = vpack.c.bf16 %v3207, %v3138
      %v4719 = vpack.c.bf16 %v3345, %v3276
      %v4720 = vpack.c.bf16 %v3483, %v3414
      %v4721 = vpack.c.bf16 %v3621, %v3552
      %v4722 = vpack.c.bf16 %v3759, %v3690
      %v4723 = vpack.c.bf16 %v3897, %v3828
      %v4724 = vpack.c.bf16 %v4035, %v3966
      %v4725 = vpack.c.bf16 %v4173, %v4104
      %v4726 = vpack.c.bf16 %v4311, %v4242
      %v4727 = vpack.c.bf16 %v4449, %v4380
      %v4728 = vpack.c.bf16 %v2106, %v2037
      %v4729 = vpack.c.bf16 %v2244, %v2175
      %v4730 = vpack.c.bf16 %v2382, %v2313
      %v4731 = vpack.c.bf16 %v2520, %v2451
      %v4732 = vpack.c.bf16 %v2658, %v2589
      %v4733 = vpack.c.bf16 %v2796, %v2727
      %v4734 = vpack.c.bf16 %v2934, %v2865
      %v4735 = vpack.c.bf16 %v3072, %v3003
      %v4736 = vpack.c.bf16 %v3210, %v3141
      %v4737 = vpack.c.bf16 %v3348, %v3279
      %v4738 = vpack.c.bf16 %v3486, %v3417
      %v4739 = vpack.c.bf16 %v3624, %v3555
      %v4740 = vpack.c.bf16 %v3762, %v3693
      %v4741 = vpack.c.bf16 %v3900, %v3831
      %v4742 = vpack.c.bf16 %v4038, %v3969
      %v4743 = vpack.c.bf16 %v4176, %v4107
      %v4744 = vpack.c.bf16 %v4314, %v4245
      %v4745 = vpack.c.bf16 %v4452, %v4383
      %v4746 = vpack.c.bf16 %v2108, %v2039
      %v4747 = vpack.c.bf16 %v2246, %v2177
      %v4748 = vpack.c.bf16 %v2384, %v2315
      %v4749 = vpack.c.bf16 %v2522, %v2453
      %v4750 = vpack.c.bf16 %v2660, %v2591
      %v4751 = vpack.c.bf16 %v2798, %v2729
      %v4752 = vpack.c.bf16 %v2936, %v2867
      %v4753 = vpack.c.bf16 %v3074, %v3005
      %v4754 = vpack.c.bf16 %v3212, %v3143
      %v4755 = vpack.c.bf16 %v3350, %v3281
      %v4756 = vpack.c.bf16 %v3488, %v3419
      %v4757 = vpack.c.bf16 %v3626, %v3557
      %v4758 = vpack.c.bf16 %v3764, %v3695
      %v4759 = vpack.c.bf16 %v3902, %v3833
      %v4760 = vpack.c.bf16 %v4040, %v3971
      %v4761 = vpack.c.bf16 %v4178, %v4109
      %v4762 = vpack.c.bf16 %v4316, %v4247
      %v4763 = vpack.c.bf16 %v4454, %v4385
      %v4764 = vpack.c.bf16 %v2111, %v2042
      %v4765 = vpack.c.bf16 %v2249, %v2180
      %v4766 = vpack.c.bf16 %v2387, %v2318
      %v4767 = vpack.c.bf16 %v2525, %v2456
      %v4768 = vpack.c.bf16 %v2663, %v2594
      %v4769 = vpack.c.bf16 %v2801, %v2732
      %v4770 = vpack.c.bf16 %v2939, %v2870
      %v4771 = vpack.c.bf16 %v3077, %v3008
      %v4772 = vpack.c.bf16 %v3215, %v3146
      %v4773 = vpack.c.bf16 %v3353, %v3284
      %v4774 = vpack.c.bf16 %v3491, %v3422
      %v4775 = vpack.c.bf16 %v3629, %v3560
      %v4776 = vpack.c.bf16 %v3767, %v3698
      %v4777 = vpack.c.bf16 %v3905, %v3836
      %v4778 = vpack.c.bf16 %v4043, %v3974
      %v4779 = vpack.c.bf16 %v4181, %v4112
      %v4780 = vpack.c.bf16 %v4319, %v4250
      %v4781 = vpack.c.bf16 %v4457, %v4388
      %v4782 = vpack.c.bf16 %v2113, %v2044
      %v4783 = vpack.c.bf16 %v2251, %v2182
      %v4784 = vpack.c.bf16 %v2389, %v2320
      %v4785 = vpack.c.bf16 %v2527, %v2458
      %v4786 = vpack.c.bf16 %v2665, %v2596
      %v4787 = vpack.c.bf16 %v2803, %v2734
      %v4788 = vpack.c.bf16 %v2941, %v2872
      %v4789 = vpack.c.bf16 %v3079, %v3010
      %v4790 = vpack.c.bf16 %v3217, %v3148
      %v4791 = vpack.c.bf16 %v3355, %v3286
      %v4792 = vpack.c.bf16 %v3493, %v3424
      %v4793 = vpack.c.bf16 %v3631, %v3562
      %v4794 = vpack.c.bf16 %v3769, %v3700
      %v4795 = vpack.c.bf16 %v3907, %v3838
      %v4796 = vpack.c.bf16 %v4045, %v3976
      %v4797 = vpack.c.bf16 %v4183, %v4114
      %v4798 = vpack.c.bf16 %v4321, %v4252
      %v4799 = vpack.c.bf16 %v4459, %v4390
      %v4800 = vpack.c.bf16 %v2116, %v2047
      %v4801 = vpack.c.bf16 %v2254, %v2185
      %v4802 = vpack.c.bf16 %v2392, %v2323
      %v4803 = vpack.c.bf16 %v2530, %v2461
      %v4804 = vpack.c.bf16 %v2668, %v2599
      %v4805 = vpack.c.bf16 %v2806, %v2737
      %v4806 = vpack.c.bf16 %v2944, %v2875
      %v4807 = vpack.c.bf16 %v3082, %v3013
      %v4808 = vpack.c.bf16 %v3220, %v3151
      %v4809 = vpack.c.bf16 %v3358, %v3289
      %v4810 = vpack.c.bf16 %v3496, %v3427
      %v4811 = vpack.c.bf16 %v3634, %v3565
      %v4812 = vpack.c.bf16 %v3772, %v3703
      %v4813 = vpack.c.bf16 %v3910, %v3841
      %v4814 = vpack.c.bf16 %v4048, %v3979
      %v4815 = vpack.c.bf16 %v4186, %v4117
      %v4816 = vpack.c.bf16 %v4324, %v4255
      %v4817 = vpack.c.bf16 %v4462, %v4393
      %v4818 = vpack.c.bf16 %v2118, %v2049
      %v4819 = vpack.c.bf16 %v2256, %v2187
      %v4820 = vpack.c.bf16 %v2394, %v2325
      %v4821 = vpack.c.bf16 %v2532, %v2463
      %v4822 = vpack.c.bf16 %v2670, %v2601
      %v4823 = vpack.c.bf16 %v2808, %v2739
      %v4824 = vpack.c.bf16 %v2946, %v2877
      %v4825 = vpack.c.bf16 %v3084, %v3015
      %v4826 = vpack.c.bf16 %v3222, %v3153
      %v4827 = vpack.c.bf16 %v3360, %v3291
      %v4828 = vpack.c.bf16 %v3498, %v3429
      %v4829 = vpack.c.bf16 %v3636, %v3567
      %v4830 = vpack.c.bf16 %v3774, %v3705
      %v4831 = vpack.c.bf16 %v3912, %v3843
      %v4832 = vpack.c.bf16 %v4050, %v3981
      %v4833 = vpack.c.bf16 %v4188, %v4119
      %v4834 = vpack.c.bf16 %v4326, %v4257
      %v4835 = vpack.c.bf16 %v4464, %v4395
      %v4836 = vpack.c.bf16 %v2121, %v2052
      %v4837 = vpack.c.bf16 %v2259, %v2190
      %v4838 = vpack.c.bf16 %v2397, %v2328
      %v4839 = vpack.c.bf16 %v2535, %v2466
      %v4840 = vpack.c.bf16 %v2673, %v2604
      %v4841 = vpack.c.bf16 %v2811, %v2742
      %v4842 = vpack.c.bf16 %v2949, %v2880
      %v4843 = vpack.c.bf16 %v3087, %v3018
      %v4844 = vpack.c.bf16 %v3225, %v3156
      %v4845 = vpack.c.bf16 %v3363, %v3294
      %v4846 = vpack.c.bf16 %v3501, %v3432
      %v4847 = vpack.c.bf16 %v3639, %v3570
      %v4848 = vpack.c.bf16 %v3777, %v3708
      %v4849 = vpack.c.bf16 %v3915, %v3846
      %v4850 = vpack.c.bf16 %v4053, %v3984
      %v4851 = vpack.c.bf16 %v4191, %v4122
      %v4852 = vpack.c.bf16 %v4329, %v4260
      %v4853 = vpack.c.bf16 %v4467, %v4398
      %v4854 = vpack.c.bf16 %v2123, %v2054
      %v4855 = vpack.c.bf16 %v2261, %v2192
      %v4856 = vpack.c.bf16 %v2399, %v2330
      %v4857 = vpack.c.bf16 %v2537, %v2468
      %v4858 = vpack.c.bf16 %v2675, %v2606
      %v4859 = vpack.c.bf16 %v2813, %v2744
      %v4860 = vpack.c.bf16 %v2951, %v2882
      %v4861 = vpack.c.bf16 %v3089, %v3020
      %v4862 = vpack.c.bf16 %v3227, %v3158
      %v4863 = vpack.c.bf16 %v3365, %v3296
      %v4864 = vpack.c.bf16 %v3503, %v3434
      %v4865 = vpack.c.bf16 %v3641, %v3572
      %v4866 = vpack.c.bf16 %v3779, %v3710
      %v4867 = vpack.c.bf16 %v3917, %v3848
      %v4868 = vpack.c.bf16 %v4055, %v3986
      %v4869 = vpack.c.bf16 %v4193, %v4124
      %v4870 = vpack.c.bf16 %v4331, %v4262
      %v4871 = vpack.c.bf16 %v4469, %v4400
      %v4872 = vpack.c.bf16 %v2126, %v2057
      %v4873 = vpack.c.bf16 %v2264, %v2195
      %v4874 = vpack.c.bf16 %v2402, %v2333
      %v4875 = vpack.c.bf16 %v2540, %v2471
      %v4876 = vpack.c.bf16 %v2678, %v2609
      %v4877 = vpack.c.bf16 %v2816, %v2747
      %v4878 = vpack.c.bf16 %v2954, %v2885
      %v4879 = vpack.c.bf16 %v3092, %v3023
      %v4880 = vpack.c.bf16 %v3230, %v3161
      %v4881 = vpack.c.bf16 %v3368, %v3299
      %v4882 = vpack.c.bf16 %v3506, %v3437
      %v4883 = vpack.c.bf16 %v3644, %v3575
      %v4884 = vpack.c.bf16 %v3782, %v3713
      %v4885 = vpack.c.bf16 %v3920, %v3851
      %v4886 = vpack.c.bf16 %v4058, %v3989
      %v4887 = vpack.c.bf16 %v4196, %v4127
      %v4888 = vpack.c.bf16 %v4334, %v4265
      %v4889 = vpack.c.bf16 %v4472, %v4403
      %v4890 = vpack.c.bf16 %v2128, %v2059
      %v4891 = vpack.c.bf16 %v2266, %v2197
      %v4892 = vpack.c.bf16 %v2404, %v2335
      %v4893 = vpack.c.bf16 %v2542, %v2473
      %v4894 = vpack.c.bf16 %v2680, %v2611
      %v4895 = vpack.c.bf16 %v2818, %v2749
      %v4896 = vpack.c.bf16 %v2956, %v2887
      %v4897 = vpack.c.bf16 %v3094, %v3025
      %v4898 = vpack.c.bf16 %v3232, %v3163
      %v4899 = vpack.c.bf16 %v3370, %v3301
      %v4900 = vpack.c.bf16 %v3508, %v3439
      %v4901 = vpack.c.bf16 %v3646, %v3577
      %v4902 = vpack.c.bf16 %v3784, %v3715
      %v4903 = vpack.c.bf16 %v3922, %v3853
      %v4904 = vpack.c.bf16 %v4060, %v3991
      %v4905 = vpack.c.bf16 %v4198, %v4129
      %v4906 = vpack.c.bf16 %v4336, %v4267
      %v4907 = vpack.c.bf16 %v4474, %v4405
      %v4908 = vunpack.c.l.bf16 %v4476
      %v4909 = vunpack.c.l.bf16 %v4494
      %v4910 = vunpack.c.l.bf16 %v4512
      %v4911 = vunpack.c.l.bf16 %v4530
      %v4912 = vunpack.c.l.bf16 %v4548
      %v4913 = vunpack.c.l.bf16 %v4566
      %v4914 = vunpack.c.l.bf16 %v4584
      %v4915 = vunpack.c.l.bf16 %v4602
      %v4916 = vunpack.c.l.bf16 %v4620
      %v4917 = vunpack.c.l.bf16 %v4638
      %v4918 = vunpack.c.l.bf16 %v4656
      %v4919 = vunpack.c.l.bf16 %v4674
      %v4920 = vunpack.c.l.bf16 %v4692
      %v4921 = vunpack.c.l.bf16 %v4710
      %v4922 = vunpack.c.l.bf16 %v4728
      %v4923 = vunpack.c.l.bf16 %v4746
      %v4924 = vunpack.c.l.bf16 %v4764
      %v4925 = vunpack.c.l.bf16 %v4782
      %v4926 = vunpack.c.l.bf16 %v4800
      %v4927 = vunpack.c.l.bf16 %v4818
      %v4928 = vunpack.c.l.bf16 %v4836
      %v4929 = vunpack.c.l.bf16 %v4854
      %v4930 = vunpack.c.l.bf16 %v4872
      %v4931 = vunpack.c.l.bf16 %v4890
      %v4932 = vunpack.c.l.bf16 %v4484
      %v4933 = vunpack.c.l.bf16 %v4502
      %v4934 = vunpack.c.l.bf16 %v4520
      %v4935 = vunpack.c.l.bf16 %v4538
      %v4936 = vunpack.c.l.bf16 %v4556
      %v4937 = vunpack.c.l.bf16 %v4574
      %v4938 = vunpack.c.l.bf16 %v4592
      %v4939 = vunpack.c.l.bf16 %v4610
      %v4940 = vunpack.c.l.bf16 %v4628
      %v4941 = vunpack.c.l.bf16 %v4646
      %v4942 = vunpack.c.l.bf16 %v4664
      %v4943 = vunpack.c.l.bf16 %v4682
      %v4944 = vunpack.c.l.bf16 %v4700
      %v4945 = vunpack.c.l.bf16 %v4718
      %v4946 = vunpack.c.l.bf16 %v4736
      %v4947 = vunpack.c.l.bf16 %v4754
      %v4948 = vunpack.c.l.bf16 %v4772
      %v4949 = vunpack.c.l.bf16 %v4790
      %v4950 = vunpack.c.l.bf16 %v4808
      %v4951 = vunpack.c.l.bf16 %v4826
      %v4952 = vunpack.c.l.bf16 %v4844
      %v4953 = vunpack.c.l.bf16 %v4862
      %v4954 = vunpack.c.l.bf16 %v4880
      %v4955 = vunpack.c.l.bf16 %v4898
      %v4956 = vmul.f32 %v4908, %v4932
      %v4957 = vmul.f32 %v4909, %v4933
      %v4958 = vmul.f32 %v4910, %v4934
      %v4959 = vmul.f32 %v4911, %v4935
      %v4960 = vmul.f32 %v4912, %v4936
      %v4961 = vmul.f32 %v4913, %v4937
      %v4962 = vmul.f32 %v4914, %v4938
      %v4963 = vmul.f32 %v4915, %v4939
      %v4964 = vmul.f32 %v4916, %v4940
      %v4965 = vmul.f32 %v4917, %v4941
      %v4966 = vmul.f32 %v4918, %v4942
      %v4967 = vmul.f32 %v4919, %v4943
      %v4968 = vmul.f32 %v4920, %v4944
      %v4969 = vmul.f32 %v4921, %v4945
      %v4970 = vmul.f32 %v4922, %v4946
      %v4971 = vmul.f32 %v4923, %v4947
      %v4972 = vmul.f32 %v4924, %v4948
      %v4973 = vmul.f32 %v4925, %v4949
      %v4974 = vmul.f32 %v4926, %v4950
      %v4975 = vmul.f32 %v4927, %v4951
      %v4976 = vmul.f32 %v4928, %v4952
      %v4977 = vmul.f32 %v4929, %v4953
      %v4978 = vmul.f32 %v4930, %v4954
      %v4979 = vmul.f32 %v4931, %v4955
      %v5004 = vrot.slane %v4476, 4
      %v5005 = vrot.slane %v4494, 4
      %v5006 = vrot.slane %v4512, 4
      %v5007 = vrot.slane %v4530, 4
      %v5008 = vrot.slane %v4548, 4
      %v5009 = vrot.slane %v4566, 4
      %v5010 = vrot.slane %v4584, 4
      %v5011 = vrot.slane %v4602, 4
      %v5012 = vrot.slane %v4620, 4
      %v5013 = vrot.slane %v4638, 4
      %v5014 = vrot.slane %v4656, 4
      %v5015 = vrot.slane %v4674, 4
      %v5016 = vrot.slane %v4692, 4
      %v5017 = vrot.slane %v4710, 4
      %v5018 = vrot.slane %v4728, 4
      %v5019 = vrot.slane %v4746, 4
      %v5020 = vrot.slane %v4764, 4
      %v5021 = vrot.slane %v4782, 4
      %v5022 = vrot.slane %v4800, 4
      %v5023 = vrot.slane %v4818, 4
      %v5024 = vrot.slane %v4836, 4
      %v5025 = vrot.slane %v4854, 4
      %v5026 = vrot.slane %v4872, 4
      %v5027 = vrot.slane %v4890, 4
      %v5052 = vunpack.c.l.bf16 %v5004
      %v5053 = vunpack.c.l.bf16 %v5005
      %v5054 = vunpack.c.l.bf16 %v5006
      %v5055 = vunpack.c.l.bf16 %v5007
      %v5056 = vunpack.c.l.bf16 %v5008
      %v5057 = vunpack.c.l.bf16 %v5009
      %v5058 = vunpack.c.l.bf16 %v5010
      %v5059 = vunpack.c.l.bf16 %v5011
      %v5060 = vunpack.c.l.bf16 %v5012
      %v5061 = vunpack.c.l.bf16 %v5013
      %v5062 = vunpack.c.l.bf16 %v5014
      %v5063 = vunpack.c.l.bf16 %v5015
      %v5064 = vunpack.c.l.bf16 %v5016
      %v5065 = vunpack.c.l.bf16 %v5017
      %v5066 = vunpack.c.l.bf16 %v5018
      %v5067 = vunpack.c.l.bf16 %v5019
      %v5068 = vunpack.c.l.bf16 %v5020
      %v5069 = vunpack.c.l.bf16 %v5021
      %v5070 = vunpack.c.l.bf16 %v5022
      %v5071 = vunpack.c.l.bf16 %v5023
      %v5072 = vunpack.c.l.bf16 %v5024
      %v5073 = vunpack.c.l.bf16 %v5025
      %v5074 = vunpack.c.l.bf16 %v5026
      %v5075 = vunpack.c.l.bf16 %v5027
      %v5100 = vrot.slane %v4484, 4
      %v5101 = vrot.slane %v4502, 4
      %v5102 = vrot.slane %v4520, 4
      %v5103 = vrot.slane %v4538, 4
      %v5104 = vrot.slane %v4556, 4
      %v5105 = vrot.slane %v4574, 4
      %v5106 = vrot.slane %v4592, 4
      %v5107 = vrot.slane %v4610, 4
      %v5108 = vrot.slane %v4628, 4
      %v5109 = vrot.slane %v4646, 4
      %v5110 = vrot.slane %v4664, 4
      %v5111 = vrot.slane %v4682, 4
      %v5112 = vrot.slane %v4700, 4
      %v5113 = vrot.slane %v4718, 4
      %v5114 = vrot.slane %v4736, 4
      %v5115 = vrot.slane %v4754, 4
      %v5116 = vrot.slane %v4772, 4
      %v5117 = vrot.slane %v4790, 4
      %v5118 = vrot.slane %v4808, 4
      %v5119 = vrot.slane %v4826, 4
      %v5120 = vrot.slane %v4844, 4
      %v5121 = vrot.slane %v4862, 4
      %v5122 = vrot.slane %v4880, 4
      %v5123 = vrot.slane %v4898, 4
      %v5148 = vunpack.c.l.bf16 %v5100
      %v5149 = vunpack.c.l.bf16 %v5101
      %v5150 = vunpack.c.l.bf16 %v5102
      %v5151 = vunpack.c.l.bf16 %v5103
      %v5152 = vunpack.c.l.bf16 %v5104
      %v5153 = vunpack.c.l.bf16 %v5105
      %v5154 = vunpack.c.l.bf16 %v5106
      %v5155 = vunpack.c.l.bf16 %v5107
      %v5156 = vunpack.c.l.bf16 %v5108
      %v5157 = vunpack.c.l.bf16 %v5109
      %v5158 = vunpack.c.l.bf16 %v5110
      %v5159 = vunpack.c.l.bf16 %v5111
      %v5160 = vunpack.c.l.bf16 %v5112
      %v5161 = vunpack.c.l.bf16 %v5113
      %v5162 = vunpack.c.l.bf16 %v5114
      %v5163 = vunpack.c.l.bf16 %v5115
      %v5164 = vunpack.c.l.bf16 %v5116
      %v5165 = vunpack.c.l.bf16 %v5117
      %v5166 = vunpack.c.l.bf16 %v5118
      %v5167 = vunpack.c.l.bf16 %v5119
      %v5168 = vunpack.c.l.bf16 %v5120
      %v5169 = vunpack.c.l.bf16 %v5121
      %v5170 = vunpack.c.l.bf16 %v5122
      %v5171 = vunpack.c.l.bf16 %v5123
      %v5172 = vmul.f32 %v5052, %v5148
      %v5173 = vmul.f32 %v5053, %v5149
      %v5174 = vmul.f32 %v5054, %v5150
      %v5175 = vmul.f32 %v5055, %v5151
      %v5176 = vmul.f32 %v5056, %v5152
      %v5177 = vmul.f32 %v5057, %v5153
      %v5178 = vmul.f32 %v5058, %v5154
      %v5179 = vmul.f32 %v5059, %v5155
      %v5180 = vmul.f32 %v5060, %v5156
      %v5181 = vmul.f32 %v5061, %v5157
      %v5182 = vmul.f32 %v5062, %v5158
      %v5183 = vmul.f32 %v5063, %v5159
      %v5184 = vmul.f32 %v5064, %v5160
      %v5185 = vmul.f32 %v5065, %v5161
      %v5186 = vmul.f32 %v5066, %v5162
      %v5187 = vmul.f32 %v5067, %v5163
      %v5188 = vmul.f32 %v5068, %v5164
      %v5189 = vmul.f32 %v5069, %v5165
      %v5190 = vmul.f32 %v5070, %v5166
      %v5191 = vmul.f32 %v5071, %v5167
      %v5192 = vmul.f32 %v5072, %v5168
      %v5193 = vmul.f32 %v5073, %v5169
      %v5194 = vmul.f32 %v5074, %v5170
      %v5195 = vmul.f32 %v5075, %v5171
      %v5196 = vadd.f32 %v4956, %v5172
      %v5197 = vadd.f32 %v4957, %v5173
      %v5198 = vadd.f32 %v4958, %v5174
      %v5199 = vadd.f32 %v4959, %v5175
      %v5200 = vadd.f32 %v4960, %v5176
      %v5201 = vadd.f32 %v4961, %v5177
      %v5202 = vadd.f32 %v4962, %v5178
      %v5203 = vadd.f32 %v4963, %v5179
      %v5204 = vadd.f32 %v4964, %v5180
      %v5205 = vadd.f32 %v4965, %v5181
      %v5206 = vadd.f32 %v4966, %v5182
      %v5207 = vadd.f32 %v4967, %v5183
      %v5208 = vadd.f32 %v4968, %v5184
      %v5209 = vadd.f32 %v4969, %v5185
      %v5210 = vadd.f32 %v4970, %v5186
      %v5211 = vadd.f32 %v4971, %v5187
      %v5212 = vadd.f32 %v4972, %v5188
      %v5213 = vadd.f32 %v4973, %v5189
      %v5214 = vadd.f32 %v4974, %v5190
      %v5215 = vadd.f32 %v4975, %v5191
      %v5216 = vadd.f32 %v4976, %v5192
      %v5217 = vadd.f32 %v4977, %v5193
      %v5218 = vadd.f32 %v4978, %v5194
      %v5219 = vadd.f32 %v4979, %v5195
      %v5220 = vunpack.c.l.bf16 %v4477
      %v5221 = vunpack.c.l.bf16 %v4495
      %v5222 = vunpack.c.l.bf16 %v4513
      %v5223 = vunpack.c.l.bf16 %v4531
      %v5224 = vunpack.c.l.bf16 %v4549
      %v5225 = vunpack.c.l.bf16 %v4567
      %v5226 = vunpack.c.l.bf16 %v4585
      %v5227 = vunpack.c.l.bf16 %v4603
      %v5228 = vunpack.c.l.bf16 %v4621
      %v5229 = vunpack.c.l.bf16 %v4639
      %v5230 = vunpack.c.l.bf16 %v4657
      %v5231 = vunpack.c.l.bf16 %v4675
      %v5232 = vunpack.c.l.bf16 %v4693
      %v5233 = vunpack.c.l.bf16 %v4711
      %v5234 = vunpack.c.l.bf16 %v4729
      %v5235 = vunpack.c.l.bf16 %v4747
      %v5236 = vunpack.c.l.bf16 %v4765
      %v5237 = vunpack.c.l.bf16 %v4783
      %v5238 = vunpack.c.l.bf16 %v4801
      %v5239 = vunpack.c.l.bf16 %v4819
      %v5240 = vunpack.c.l.bf16 %v4837
      %v5241 = vunpack.c.l.bf16 %v4855
      %v5242 = vunpack.c.l.bf16 %v4873
      %v5243 = vunpack.c.l.bf16 %v4891
      %v5244 = vunpack.c.l.bf16 %v4485
      %v5245 = vunpack.c.l.bf16 %v4503
      %v5246 = vunpack.c.l.bf16 %v4521
      %v5247 = vunpack.c.l.bf16 %v4539
      %v5248 = vunpack.c.l.bf16 %v4557
      %v5249 = vunpack.c.l.bf16 %v4575
      %v5250 = vunpack.c.l.bf16 %v4593
      %v5251 = vunpack.c.l.bf16 %v4611
      %v5252 = vunpack.c.l.bf16 %v4629
      %v5253 = vunpack.c.l.bf16 %v4647
      %v5254 = vunpack.c.l.bf16 %v4665
      %v5255 = vunpack.c.l.bf16 %v4683
      %v5256 = vunpack.c.l.bf16 %v4701
      %v5257 = vunpack.c.l.bf16 %v4719
      %v5258 = vunpack.c.l.bf16 %v4737
      %v5259 = vunpack.c.l.bf16 %v4755
      %v5260 = vunpack.c.l.bf16 %v4773
      %v5261 = vunpack.c.l.bf16 %v4791
      %v5262 = vunpack.c.l.bf16 %v4809
      %v5263 = vunpack.c.l.bf16 %v4827
      %v5264 = vunpack.c.l.bf16 %v4845
      %v5265 = vunpack.c.l.bf16 %v4863
      %v5266 = vunpack.c.l.bf16 %v4881
      %v5267 = vunpack.c.l.bf16 %v4899
      %v5268 = vmul.f32 %v5220, %v5244
      %v5269 = vmul.f32 %v5221, %v5245
      %v5270 = vmul.f32 %v5222, %v5246
      %v5271 = vmul.f32 %v5223, %v5247
      %v5272 = vmul.f32 %v5224, %v5248
      %v5273 = vmul.f32 %v5225, %v5249
      %v5274 = vmul.f32 %v5226, %v5250
      %v5275 = vmul.f32 %v5227, %v5251
      %v5276 = vmul.f32 %v5228, %v5252
      %v5277 = vmul.f32 %v5229, %v5253
      %v5278 = vmul.f32 %v5230, %v5254
      %v5279 = vmul.f32 %v5231, %v5255
      %v5280 = vmul.f32 %v5232, %v5256
      %v5281 = vmul.f32 %v5233, %v5257
      %v5282 = vmul.f32 %v5234, %v5258
      %v5283 = vmul.f32 %v5235, %v5259
      %v5284 = vmul.f32 %v5236, %v5260
      %v5285 = vmul.f32 %v5237, %v5261
      %v5286 = vmul.f32 %v5238, %v5262
      %v5287 = vmul.f32 %v5239, %v5263
      %v5288 = vmul.f32 %v5240, %v5264
      %v5289 = vmul.f32 %v5241, %v5265
      %v5290 = vmul.f32 %v5242, %v5266
      %v5291 = vmul.f32 %v5243, %v5267
      %v5292 = vadd.f32 %v5196, %v5268
      %v5293 = vadd.f32 %v5197, %v5269
      %v5294 = vadd.f32 %v5198, %v5270
      %v5295 = vadd.f32 %v5199, %v5271
      %v5296 = vadd.f32 %v5200, %v5272
      %v5297 = vadd.f32 %v5201, %v5273
      %v5298 = vadd.f32 %v5202, %v5274
      %v5299 = vadd.f32 %v5203, %v5275
      %v5300 = vadd.f32 %v5204, %v5276
      %v5301 = vadd.f32 %v5205, %v5277
      %v5302 = vadd.f32 %v5206, %v5278
      %v5303 = vadd.f32 %v5207, %v5279
      %v5304 = vadd.f32 %v5208, %v5280
      %v5305 = vadd.f32 %v5209, %v5281
      %v5306 = vadd.f32 %v5210, %v5282
      %v5307 = vadd.f32 %v5211, %v5283
      %v5308 = vadd.f32 %v5212, %v5284
      %v5309 = vadd.f32 %v5213, %v5285
      %v5310 = vadd.f32 %v5214, %v5286
      %v5311 = vadd.f32 %v5215, %v5287
      %v5312 = vadd.f32 %v5216, %v5288
      %v5313 = vadd.f32 %v5217, %v5289
      %v5314 = vadd.f32 %v5218, %v5290
      %v5315 = vadd.f32 %v5219, %v5291
      %v5340 = vrot.slane %v4477, 4
      %v5341 = vrot.slane %v4495, 4
      %v5342 = vrot.slane %v4513, 4
      %v5343 = vrot.slane %v4531, 4
      %v5344 = vrot.slane %v4549, 4
      %v5345 = vrot.slane %v4567, 4
      %v5346 = vrot.slane %v4585, 4
      %v5347 = vrot.slane %v4603, 4
      %v5348 = vrot.slane %v4621, 4
      %v5349 = vrot.slane %v4639, 4
      %v5350 = vrot.slane %v4657, 4
      %v5351 = vrot.slane %v4675, 4
      %v5352 = vrot.slane %v4693, 4
      %v5353 = vrot.slane %v4711, 4
      %v5354 = vrot.slane %v4729, 4
      %v5355 = vrot.slane %v4747, 4
      %v5356 = vrot.slane %v4765, 4
      %v5357 = vrot.slane %v4783, 4
      %v5358 = vrot.slane %v4801, 4
      %v5359 = vrot.slane %v4819, 4
      %v5360 = vrot.slane %v4837, 4
      %v5361 = vrot.slane %v4855, 4
      %v5362 = vrot.slane %v4873, 4
      %v5363 = vrot.slane %v4891, 4
      %v5388 = vunpack.c.l.bf16 %v5340
      %v5389 = vunpack.c.l.bf16 %v5341
      %v5390 = vunpack.c.l.bf16 %v5342
      %v5391 = vunpack.c.l.bf16 %v5343
      %v5392 = vunpack.c.l.bf16 %v5344
      %v5393 = vunpack.c.l.bf16 %v5345
      %v5394 = vunpack.c.l.bf16 %v5346
      %v5395 = vunpack.c.l.bf16 %v5347
      %v5396 = vunpack.c.l.bf16 %v5348
      %v5397 = vunpack.c.l.bf16 %v5349
      %v5398 = vunpack.c.l.bf16 %v5350
      %v5399 = vunpack.c.l.bf16 %v5351
      %v5400 = vunpack.c.l.bf16 %v5352
      %v5401 = vunpack.c.l.bf16 %v5353
      %v5402 = vunpack.c.l.bf16 %v5354
      %v5403 = vunpack.c.l.bf16 %v5355
      %v5404 = vunpack.c.l.bf16 %v5356
      %v5405 = vunpack.c.l.bf16 %v5357
      %v5406 = vunpack.c.l.bf16 %v5358
      %v5407 = vunpack.c.l.bf16 %v5359
      %v5408 = vunpack.c.l.bf16 %v5360
      %v5409 = vunpack.c.l.bf16 %v5361
      %v5410 = vunpack.c.l.bf16 %v5362
      %v5411 = vunpack.c.l.bf16 %v5363
      %v5436 = vrot.slane %v4485, 4
      %v5437 = vrot.slane %v4503, 4
      %v5438 = vrot.slane %v4521, 4
      %v5439 = vrot.slane %v4539, 4
      %v5440 = vrot.slane %v4557, 4
      %v5441 = vrot.slane %v4575, 4
      %v5442 = vrot.slane %v4593, 4
      %v5443 = vrot.slane %v4611, 4
      %v5444 = vrot.slane %v4629, 4
      %v5445 = vrot.slane %v4647, 4
      %v5446 = vrot.slane %v4665, 4
      %v5447 = vrot.slane %v4683, 4
      %v5448 = vrot.slane %v4701, 4
      %v5449 = vrot.slane %v4719, 4
      %v5450 = vrot.slane %v4737, 4
      %v5451 = vrot.slane %v4755, 4
      %v5452 = vrot.slane %v4773, 4
      %v5453 = vrot.slane %v4791, 4
      %v5454 = vrot.slane %v4809, 4
      %v5455 = vrot.slane %v4827, 4
      %v5456 = vrot.slane %v4845, 4
      %v5457 = vrot.slane %v4863, 4
      %v5458 = vrot.slane %v4881, 4
      %v5459 = vrot.slane %v4899, 4
      %v5484 = vunpack.c.l.bf16 %v5436
      %v5485 = vunpack.c.l.bf16 %v5437
      %v5486 = vunpack.c.l.bf16 %v5438
      %v5487 = vunpack.c.l.bf16 %v5439
      %v5488 = vunpack.c.l.bf16 %v5440
      %v5489 = vunpack.c.l.bf16 %v5441
      %v5490 = vunpack.c.l.bf16 %v5442
      %v5491 = vunpack.c.l.bf16 %v5443
      %v5492 = vunpack.c.l.bf16 %v5444
      %v5493 = vunpack.c.l.bf16 %v5445
      %v5494 = vunpack.c.l.bf16 %v5446
      %v5495 = vunpack.c.l.bf16 %v5447
      %v5496 = vunpack.c.l.bf16 %v5448
      %v5497 = vunpack.c.l.bf16 %v5449
      %v5498 = vunpack.c.l.bf16 %v5450
      %v5499 = vunpack.c.l.bf16 %v5451
      %v5500 = vunpack.c.l.bf16 %v5452
      %v5501 = vunpack.c.l.bf16 %v5453
      %v5502 = vunpack.c.l.bf16 %v5454
      %v5503 = vunpack.c.l.bf16 %v5455
      %v5504 = vunpack.c.l.bf16 %v5456
      %v5505 = vunpack.c.l.bf16 %v5457
      %v5506 = vunpack.c.l.bf16 %v5458
      %v5507 = vunpack.c.l.bf16 %v5459
      %v5508 = vmul.f32 %v5388, %v5484
      %v5509 = vmul.f32 %v5389, %v5485
      %v5510 = vmul.f32 %v5390, %v5486
      %v5511 = vmul.f32 %v5391, %v5487
      %v5512 = vmul.f32 %v5392, %v5488
      %v5513 = vmul.f32 %v5393, %v5489
      %v5514 = vmul.f32 %v5394, %v5490
      %v5515 = vmul.f32 %v5395, %v5491
      %v5516 = vmul.f32 %v5396, %v5492
      %v5517 = vmul.f32 %v5397, %v5493
      %v5518 = vmul.f32 %v5398, %v5494
      %v5519 = vmul.f32 %v5399, %v5495
      %v5520 = vmul.f32 %v5400, %v5496
      %v5521 = vmul.f32 %v5401, %v5497
      %v5522 = vmul.f32 %v5402, %v5498
      %v5523 = vmul.f32 %v5403, %v5499
      %v5524 = vmul.f32 %v5404, %v5500
      %v5525 = vmul.f32 %v5405, %v5501
      %v5526 = vmul.f32 %v5406, %v5502
      %v5527 = vmul.f32 %v5407, %v5503
      %v5528 = vmul.f32 %v5408, %v5504
      %v5529 = vmul.f32 %v5409, %v5505
      %v5530 = vmul.f32 %v5410, %v5506
      %v5531 = vmul.f32 %v5411, %v5507
      %v5532 = vadd.f32 %v5292, %v5508
      %v5533 = vadd.f32 %v5293, %v5509
      %v5534 = vadd.f32 %v5294, %v5510
      %v5535 = vadd.f32 %v5295, %v5511
      %v5536 = vadd.f32 %v5296, %v5512
      %v5537 = vadd.f32 %v5297, %v5513
      %v5538 = vadd.f32 %v5298, %v5514
      %v5539 = vadd.f32 %v5299, %v5515
      %v5540 = vadd.f32 %v5300, %v5516
      %v5541 = vadd.f32 %v5301, %v5517
      %v5542 = vadd.f32 %v5302, %v5518
      %v5543 = vadd.f32 %v5303, %v5519
      %v5544 = vadd.f32 %v5304, %v5520
      %v5545 = vadd.f32 %v5305, %v5521
      %v5546 = vadd.f32 %v5306, %v5522
      %v5547 = vadd.f32 %v5307, %v5523
      %v5548 = vadd.f32 %v5308, %v5524
      %v5549 = vadd.f32 %v5309, %v5525
      %v5550 = vadd.f32 %v5310, %v5526
      %v5551 = vadd.f32 %v5311, %v5527
      %v5552 = vadd.f32 %v5312, %v5528
      %v5553 = vadd.f32 %v5313, %v5529
      %v5554 = vadd.f32 %v5314, %v5530
      %v5555 = vadd.f32 %v5315, %v5531
      %v5556 = vunpack.c.l.bf16 %v4478
      %v5557 = vunpack.c.l.bf16 %v4496
      %v5558 = vunpack.c.l.bf16 %v4514
      %v5559 = vunpack.c.l.bf16 %v4532
      %v5560 = vunpack.c.l.bf16 %v4550
      %v5561 = vunpack.c.l.bf16 %v4568
      %v5562 = vunpack.c.l.bf16 %v4586
      %v5563 = vunpack.c.l.bf16 %v4604
      %v5564 = vunpack.c.l.bf16 %v4622
      %v5565 = vunpack.c.l.bf16 %v4640
      %v5566 = vunpack.c.l.bf16 %v4658
      %v5567 = vunpack.c.l.bf16 %v4676
      %v5568 = vunpack.c.l.bf16 %v4694
      %v5569 = vunpack.c.l.bf16 %v4712
      %v5570 = vunpack.c.l.bf16 %v4730
      %v5571 = vunpack.c.l.bf16 %v4748
      %v5572 = vunpack.c.l.bf16 %v4766
      %v5573 = vunpack.c.l.bf16 %v4784
      %v5574 = vunpack.c.l.bf16 %v4802
      %v5575 = vunpack.c.l.bf16 %v4820
      %v5576 = vunpack.c.l.bf16 %v4838
      %v5577 = vunpack.c.l.bf16 %v4856
      %v5578 = vunpack.c.l.bf16 %v4874
      %v5579 = vunpack.c.l.bf16 %v4892
      %v5580 = vunpack.c.l.bf16 %v4486
      %v5581 = vunpack.c.l.bf16 %v4504
      %v5582 = vunpack.c.l.bf16 %v4522
      %v5583 = vunpack.c.l.bf16 %v4540
      %v5584 = vunpack.c.l.bf16 %v4558
      %v5585 = vunpack.c.l.bf16 %v4576
      %v5586 = vunpack.c.l.bf16 %v4594
      %v5587 = vunpack.c.l.bf16 %v4612
      %v5588 = vunpack.c.l.bf16 %v4630
      %v5589 = vunpack.c.l.bf16 %v4648
      %v5590 = vunpack.c.l.bf16 %v4666
      %v5591 = vunpack.c.l.bf16 %v4684
      %v5592 = vunpack.c.l.bf16 %v4702
      %v5593 = vunpack.c.l.bf16 %v4720
      %v5594 = vunpack.c.l.bf16 %v4738
      %v5595 = vunpack.c.l.bf16 %v4756
      %v5596 = vunpack.c.l.bf16 %v4774
      %v5597 = vunpack.c.l.bf16 %v4792
      %v5598 = vunpack.c.l.bf16 %v4810
      %v5599 = vunpack.c.l.bf16 %v4828
      %v5600 = vunpack.c.l.bf16 %v4846
      %v5601 = vunpack.c.l.bf16 %v4864
      %v5602 = vunpack.c.l.bf16 %v4882
      %v5603 = vunpack.c.l.bf16 %v4900
      %v5604 = vmul.f32 %v5556, %v5580
      %v5605 = vmul.f32 %v5557, %v5581
      %v5606 = vmul.f32 %v5558, %v5582
      %v5607 = vmul.f32 %v5559, %v5583
      %v5608 = vmul.f32 %v5560, %v5584
      %v5609 = vmul.f32 %v5561, %v5585
      %v5610 = vmul.f32 %v5562, %v5586
      %v5611 = vmul.f32 %v5563, %v5587
      %v5612 = vmul.f32 %v5564, %v5588
      %v5613 = vmul.f32 %v5565, %v5589
      %v5614 = vmul.f32 %v5566, %v5590
      %v5615 = vmul.f32 %v5567, %v5591
      %v5616 = vmul.f32 %v5568, %v5592
      %v5617 = vmul.f32 %v5569, %v5593
      %v5618 = vmul.f32 %v5570, %v5594
      %v5619 = vmul.f32 %v5571, %v5595
      %v5620 = vmul.f32 %v5572, %v5596
      %v5621 = vmul.f32 %v5573, %v5597
      %v5622 = vmul.f32 %v5574, %v5598
      %v5623 = vmul.f32 %v5575, %v5599
      %v5624 = vmul.f32 %v5576, %v5600
      %v5625 = vmul.f32 %v5577, %v5601
      %v5626 = vmul.f32 %v5578, %v5602
      %v5627 = vmul.f32 %v5579, %v5603
      %v5628 = vadd.f32 %v5532, %v5604
      %v5629 = vadd.f32 %v5533, %v5605
      %v5630 = vadd.f32 %v5534, %v5606
      %v5631 = vadd.f32 %v5535, %v5607
      %v5632 = vadd.f32 %v5536, %v5608
      %v5633 = vadd.f32 %v5537, %v5609
      %v5634 = vadd.f32 %v5538, %v5610
      %v5635 = vadd.f32 %v5539, %v5611
      %v5636 = vadd.f32 %v5540, %v5612
      %v5637 = vadd.f32 %v5541, %v5613
      %v5638 = vadd.f32 %v5542, %v5614
      %v5639 = vadd.f32 %v5543, %v5615
      %v5640 = vadd.f32 %v5544, %v5616
      %v5641 = vadd.f32 %v5545, %v5617
      %v5642 = vadd.f32 %v5546, %v5618
      %v5643 = vadd.f32 %v5547, %v5619
      %v5644 = vadd.f32 %v5548, %v5620
      %v5645 = vadd.f32 %v5549, %v5621
      %v5646 = vadd.f32 %v5550, %v5622
      %v5647 = vadd.f32 %v5551, %v5623
      %v5648 = vadd.f32 %v5552, %v5624
      %v5649 = vadd.f32 %v5553, %v5625
      %v5650 = vadd.f32 %v5554, %v5626
      %v5651 = vadd.f32 %v5555, %v5627
      %v5676 = vrot.slane %v4478, 4
      %v5677 = vrot.slane %v4496, 4
      %v5678 = vrot.slane %v4514, 4
      %v5679 = vrot.slane %v4532, 4
      %v5680 = vrot.slane %v4550, 4
      %v5681 = vrot.slane %v4568, 4
      %v5682 = vrot.slane %v4586, 4
      %v5683 = vrot.slane %v4604, 4
      %v5684 = vrot.slane %v4622, 4
      %v5685 = vrot.slane %v4640, 4
      %v5686 = vrot.slane %v4658, 4
      %v5687 = vrot.slane %v4676, 4
      %v5688 = vrot.slane %v4694, 4
      %v5689 = vrot.slane %v4712, 4
      %v5690 = vrot.slane %v4730, 4
      %v5691 = vrot.slane %v4748, 4
      %v5692 = vrot.slane %v4766, 4
      %v5693 = vrot.slane %v4784, 4
      %v5694 = vrot.slane %v4802, 4
      %v5695 = vrot.slane %v4820, 4
      %v5696 = vrot.slane %v4838, 4
      %v5697 = vrot.slane %v4856, 4
      %v5698 = vrot.slane %v4874, 4
      %v5699 = vrot.slane %v4892, 4
      %v5724 = vunpack.c.l.bf16 %v5676
      %v5725 = vunpack.c.l.bf16 %v5677
      %v5726 = vunpack.c.l.bf16 %v5678
      %v5727 = vunpack.c.l.bf16 %v5679
      %v5728 = vunpack.c.l.bf16 %v5680
      %v5729 = vunpack.c.l.bf16 %v5681
      %v5730 = vunpack.c.l.bf16 %v5682
      %v5731 = vunpack.c.l.bf16 %v5683
      %v5732 = vunpack.c.l.bf16 %v5684
      %v5733 = vunpack.c.l.bf16 %v5685
      %v5734 = vunpack.c.l.bf16 %v5686
      %v5735 = vunpack.c.l.bf16 %v5687
      %v5736 = vunpack.c.l.bf16 %v5688
      %v5737 = vunpack.c.l.bf16 %v5689
      %v5738 = vunpack.c.l.bf16 %v5690
      %v5739 = vunpack.c.l.bf16 %v5691
      %v5740 = vunpack.c.l.bf16 %v5692
      %v5741 = vunpack.c.l.bf16 %v5693
      %v5742 = vunpack.c.l.bf16 %v5694
      %v5743 = vunpack.c.l.bf16 %v5695
      %v5744 = vunpack.c.l.bf16 %v5696
      %v5745 = vunpack.c.l.bf16 %v5697
      %v5746 = vunpack.c.l.bf16 %v5698
      %v5747 = vunpack.c.l.bf16 %v5699
      %v5772 = vrot.slane %v4486, 4
      %v5773 = vrot.slane %v4504, 4
      %v5774 = vrot.slane %v4522, 4
      %v5775 = vrot.slane %v4540, 4
      %v5776 = vrot.slane %v4558, 4
      %v5777 = vrot.slane %v4576, 4
      %v5778 = vrot.slane %v4594, 4
      %v5779 = vrot.slane %v4612, 4
      %v5780 = vrot.slane %v4630, 4
      %v5781 = vrot.slane %v4648, 4
      %v5782 = vrot.slane %v4666, 4
      %v5783 = vrot.slane %v4684, 4
      %v5784 = vrot.slane %v4702, 4
      %v5785 = vrot.slane %v4720, 4
      %v5786 = vrot.slane %v4738, 4
      %v5787 = vrot.slane %v4756, 4
      %v5788 = vrot.slane %v4774, 4
      %v5789 = vrot.slane %v4792, 4
      %v5790 = vrot.slane %v4810, 4
      %v5791 = vrot.slane %v4828, 4
      %v5792 = vrot.slane %v4846, 4
      %v5793 = vrot.slane %v4864, 4
      %v5794 = vrot.slane %v4882, 4
      %v5795 = vrot.slane %v4900, 4
      %v5820 = vunpack.c.l.bf16 %v5772
      %v5821 = vunpack.c.l.bf16 %v5773
      %v5822 = vunpack.c.l.bf16 %v5774
      %v5823 = vunpack.c.l.bf16 %v5775
      %v5824 = vunpack.c.l.bf16 %v5776
      %v5825 = vunpack.c.l.bf16 %v5777
      %v5826 = vunpack.c.l.bf16 %v5778
      %v5827 = vunpack.c.l.bf16 %v5779
      %v5828 = vunpack.c.l.bf16 %v5780
      %v5829 = vunpack.c.l.bf16 %v5781
      %v5830 = vunpack.c.l.bf16 %v5782
      %v5831 = vunpack.c.l.bf16 %v5783
      %v5832 = vunpack.c.l.bf16 %v5784
      %v5833 = vunpack.c.l.bf16 %v5785
      %v5834 = vunpack.c.l.bf16 %v5786
      %v5835 = vunpack.c.l.bf16 %v5787
      %v5836 = vunpack.c.l.bf16 %v5788
      %v5837 = vunpack.c.l.bf16 %v5789
      %v5838 = vunpack.c.l.bf16 %v5790
      %v5839 = vunpack.c.l.bf16 %v5791
      %v5840 = vunpack.c.l.bf16 %v5792
      %v5841 = vunpack.c.l.bf16 %v5793
      %v5842 = vunpack.c.l.bf16 %v5794
      %v5843 = vunpack.c.l.bf16 %v5795
      %v5844 = vmul.f32 %v5724, %v5820
      %v5845 = vmul.f32 %v5725, %v5821
      %v5846 = vmul.f32 %v5726, %v5822
      %v5847 = vmul.f32 %v5727, %v5823
      %v5848 = vmul.f32 %v5728, %v5824
      %v5849 = vmul.f32 %v5729, %v5825
      %v5850 = vmul.f32 %v5730, %v5826
      %v5851 = vmul.f32 %v5731, %v5827
      %v5852 = vmul.f32 %v5732, %v5828
      %v5853 = vmul.f32 %v5733, %v5829
      %v5854 = vmul.f32 %v5734, %v5830
      %v5855 = vmul.f32 %v5735, %v5831
      %v5856 = vmul.f32 %v5736, %v5832
      %v5857 = vmul.f32 %v5737, %v5833
      %v5858 = vmul.f32 %v5738, %v5834
      %v5859 = vmul.f32 %v5739, %v5835
      %v5860 = vmul.f32 %v5740, %v5836
      %v5861 = vmul.f32 %v5741, %v5837
      %v5862 = vmul.f32 %v5742, %v5838
      %v5863 = vmul.f32 %v5743, %v5839
      %v5864 = vmul.f32 %v5744, %v5840
      %v5865 = vmul.f32 %v5745, %v5841
      %v5866 = vmul.f32 %v5746, %v5842
      %v5867 = vmul.f32 %v5747, %v5843
      %v5868 = vadd.f32 %v5628, %v5844
      %v5869 = vadd.f32 %v5629, %v5845
      %v5870 = vadd.f32 %v5630, %v5846
      %v5871 = vadd.f32 %v5631, %v5847
      %v5872 = vadd.f32 %v5632, %v5848
      %v5873 = vadd.f32 %v5633, %v5849
      %v5874 = vadd.f32 %v5634, %v5850
      %v5875 = vadd.f32 %v5635, %v5851
      %v5876 = vadd.f32 %v5636, %v5852
      %v5877 = vadd.f32 %v5637, %v5853
      %v5878 = vadd.f32 %v5638, %v5854
      %v5879 = vadd.f32 %v5639, %v5855
      %v5880 = vadd.f32 %v5640, %v5856
      %v5881 = vadd.f32 %v5641, %v5857
      %v5882 = vadd.f32 %v5642, %v5858
      %v5883 = vadd.f32 %v5643, %v5859
      %v5884 = vadd.f32 %v5644, %v5860
      %v5885 = vadd.f32 %v5645, %v5861
      %v5886 = vadd.f32 %v5646, %v5862
      %v5887 = vadd.f32 %v5647, %v5863
      %v5888 = vadd.f32 %v5648, %v5864
      %v5889 = vadd.f32 %v5649, %v5865
      %v5890 = vadd.f32 %v5650, %v5866
      %v5891 = vadd.f32 %v5651, %v5867
      %v5892 = vunpack.c.l.bf16 %v4479
      %v5893 = vunpack.c.l.bf16 %v4497
      %v5894 = vunpack.c.l.bf16 %v4515
      %v5895 = vunpack.c.l.bf16 %v4533
      %v5896 = vunpack.c.l.bf16 %v4551
      %v5897 = vunpack.c.l.bf16 %v4569
      %v5898 = vunpack.c.l.bf16 %v4587
      %v5899 = vunpack.c.l.bf16 %v4605
      %v5900 = vunpack.c.l.bf16 %v4623
      %v5901 = vunpack.c.l.bf16 %v4641
      %v5902 = vunpack.c.l.bf16 %v4659
      %v5903 = vunpack.c.l.bf16 %v4677
      %v5904 = vunpack.c.l.bf16 %v4695
      %v5905 = vunpack.c.l.bf16 %v4713
      %v5906 = vunpack.c.l.bf16 %v4731
      %v5907 = vunpack.c.l.bf16 %v4749
      %v5908 = vunpack.c.l.bf16 %v4767
      %v5909 = vunpack.c.l.bf16 %v4785
      %v5910 = vunpack.c.l.bf16 %v4803
      %v5911 = vunpack.c.l.bf16 %v4821
      %v5912 = vunpack.c.l.bf16 %v4839
      %v5913 = vunpack.c.l.bf16 %v4857
      %v5914 = vunpack.c.l.bf16 %v4875
      %v5915 = vunpack.c.l.bf16 %v4893
      %v5916 = vunpack.c.l.bf16 %v4487
      %v5917 = vunpack.c.l.bf16 %v4505
      %v5918 = vunpack.c.l.bf16 %v4523
      %v5919 = vunpack.c.l.bf16 %v4541
      %v5920 = vunpack.c.l.bf16 %v4559
      %v5921 = vunpack.c.l.bf16 %v4577
      %v5922 = vunpack.c.l.bf16 %v4595
      %v5923 = vunpack.c.l.bf16 %v4613
      %v5924 = vunpack.c.l.bf16 %v4631
      %v5925 = vunpack.c.l.bf16 %v4649
      %v5926 = vunpack.c.l.bf16 %v4667
      %v5927 = vunpack.c.l.bf16 %v4685
      %v5928 = vunpack.c.l.bf16 %v4703
      %v5929 = vunpack.c.l.bf16 %v4721
      %v5930 = vunpack.c.l.bf16 %v4739
      %v5931 = vunpack.c.l.bf16 %v4757
      %v5932 = vunpack.c.l.bf16 %v4775
      %v5933 = vunpack.c.l.bf16 %v4793
      %v5934 = vunpack.c.l.bf16 %v4811
      %v5935 = vunpack.c.l.bf16 %v4829
      %v5936 = vunpack.c.l.bf16 %v4847
      %v5937 = vunpack.c.l.bf16 %v4865
      %v5938 = vunpack.c.l.bf16 %v4883
      %v5939 = vunpack.c.l.bf16 %v4901
      %v5940 = vmul.f32 %v5892, %v5916
      %v5941 = vmul.f32 %v5893, %v5917
      %v5942 = vmul.f32 %v5894, %v5918
      %v5943 = vmul.f32 %v5895, %v5919
      %v5944 = vmul.f32 %v5896, %v5920
      %v5945 = vmul.f32 %v5897, %v5921
      %v5946 = vmul.f32 %v5898, %v5922
      %v5947 = vmul.f32 %v5899, %v5923
      %v5948 = vmul.f32 %v5900, %v5924
      %v5949 = vmul.f32 %v5901, %v5925
      %v5950 = vmul.f32 %v5902, %v5926
      %v5951 = vmul.f32 %v5903, %v5927
      %v5952 = vmul.f32 %v5904, %v5928
      %v5953 = vmul.f32 %v5905, %v5929
      %v5954 = vmul.f32 %v5906, %v5930
      %v5955 = vmul.f32 %v5907, %v5931
      %v5956 = vmul.f32 %v5908, %v5932
      %v5957 = vmul.f32 %v5909, %v5933
      %v5958 = vmul.f32 %v5910, %v5934
      %v5959 = vmul.f32 %v5911, %v5935
      %v5960 = vmul.f32 %v5912, %v5936
      %v5961 = vmul.f32 %v5913, %v5937
      %v5962 = vmul.f32 %v5914, %v5938
      %v5963 = vmul.f32 %v5915, %v5939
      %v5964 = vadd.f32 %v5868, %v5940
      %v5965 = vadd.f32 %v5869, %v5941
      %v5966 = vadd.f32 %v5870, %v5942
      %v5967 = vadd.f32 %v5871, %v5943
      %v5968 = vadd.f32 %v5872, %v5944
      %v5969 = vadd.f32 %v5873, %v5945
      %v5970 = vadd.f32 %v5874, %v5946
      %v5971 = vadd.f32 %v5875, %v5947
      %v5972 = vadd.f32 %v5876, %v5948
      %v5973 = vadd.f32 %v5877, %v5949
      %v5974 = vadd.f32 %v5878, %v5950
      %v5975 = vadd.f32 %v5879, %v5951
      %v5976 = vadd.f32 %v5880, %v5952
      %v5977 = vadd.f32 %v5881, %v5953
      %v5978 = vadd.f32 %v5882, %v5954
      %v5979 = vadd.f32 %v5883, %v5955
      %v5980 = vadd.f32 %v5884, %v5956
      %v5981 = vadd.f32 %v5885, %v5957
      %v5982 = vadd.f32 %v5886, %v5958
      %v5983 = vadd.f32 %v5887, %v5959
      %v5984 = vadd.f32 %v5888, %v5960
      %v5985 = vadd.f32 %v5889, %v5961
      %v5986 = vadd.f32 %v5890, %v5962
      %v5987 = vadd.f32 %v5891, %v5963
      %v6012 = vrot.slane %v4479, 4
      %v6013 = vrot.slane %v4497, 4
      %v6014 = vrot.slane %v4515, 4
      %v6015 = vrot.slane %v4533, 4
      %v6016 = vrot.slane %v4551, 4
      %v6017 = vrot.slane %v4569, 4
      %v6018 = vrot.slane %v4587, 4
      %v6019 = vrot.slane %v4605, 4
      %v6020 = vrot.slane %v4623, 4
      %v6021 = vrot.slane %v4641, 4
      %v6022 = vrot.slane %v4659, 4
      %v6023 = vrot.slane %v4677, 4
      %v6024 = vrot.slane %v4695, 4
      %v6025 = vrot.slane %v4713, 4
      %v6026 = vrot.slane %v4731, 4
      %v6027 = vrot.slane %v4749, 4
      %v6028 = vrot.slane %v4767, 4
      %v6029 = vrot.slane %v4785, 4
      %v6030 = vrot.slane %v4803, 4
      %v6031 = vrot.slane %v4821, 4
      %v6032 = vrot.slane %v4839, 4
      %v6033 = vrot.slane %v4857, 4
      %v6034 = vrot.slane %v4875, 4
      %v6035 = vrot.slane %v4893, 4
      %v6060 = vunpack.c.l.bf16 %v6012
      %v6061 = vunpack.c.l.bf16 %v6013
      %v6062 = vunpack.c.l.bf16 %v6014
      %v6063 = vunpack.c.l.bf16 %v6015
      %v6064 = vunpack.c.l.bf16 %v6016
      %v6065 = vunpack.c.l.bf16 %v6017
      %v6066 = vunpack.c.l.bf16 %v6018
      %v6067 = vunpack.c.l.bf16 %v6019
      %v6068 = vunpack.c.l.bf16 %v6020
      %v6069 = vunpack.c.l.bf16 %v6021
      %v6070 = vunpack.c.l.bf16 %v6022
      %v6071 = vunpack.c.l.bf16 %v6023
      %v6072 = vunpack.c.l.bf16 %v6024
      %v6073 = vunpack.c.l.bf16 %v6025
      %v6074 = vunpack.c.l.bf16 %v6026
      %v6075 = vunpack.c.l.bf16 %v6027
      %v6076 = vunpack.c.l.bf16 %v6028
      %v6077 = vunpack.c.l.bf16 %v6029
      %v6078 = vunpack.c.l.bf16 %v6030
      %v6079 = vunpack.c.l.bf16 %v6031
      %v6080 = vunpack.c.l.bf16 %v6032
      %v6081 = vunpack.c.l.bf16 %v6033
      %v6082 = vunpack.c.l.bf16 %v6034
      %v6083 = vunpack.c.l.bf16 %v6035
      %v6108 = vrot.slane %v4487, 4
      %v6109 = vrot.slane %v4505, 4
      %v6110 = vrot.slane %v4523, 4
      %v6111 = vrot.slane %v4541, 4
      %v6112 = vrot.slane %v4559, 4
      %v6113 = vrot.slane %v4577, 4
      %v6114 = vrot.slane %v4595, 4
      %v6115 = vrot.slane %v4613, 4
      %v6116 = vrot.slane %v4631, 4
      %v6117 = vrot.slane %v4649, 4
      %v6118 = vrot.slane %v4667, 4
      %v6119 = vrot.slane %v4685, 4
      %v6120 = vrot.slane %v4703, 4
      %v6121 = vrot.slane %v4721, 4
      %v6122 = vrot.slane %v4739, 4
      %v6123 = vrot.slane %v4757, 4
      %v6124 = vrot.slane %v4775, 4
      %v6125 = vrot.slane %v4793, 4
      %v6126 = vrot.slane %v4811, 4
      %v6127 = vrot.slane %v4829, 4
      %v6128 = vrot.slane %v4847, 4
      %v6129 = vrot.slane %v4865, 4
      %v6130 = vrot.slane %v4883, 4
      %v6131 = vrot.slane %v4901, 4
      %v6156 = vunpack.c.l.bf16 %v6108
      %v6157 = vunpack.c.l.bf16 %v6109
      %v6158 = vunpack.c.l.bf16 %v6110
      %v6159 = vunpack.c.l.bf16 %v6111
      %v6160 = vunpack.c.l.bf16 %v6112
      %v6161 = vunpack.c.l.bf16 %v6113
      %v6162 = vunpack.c.l.bf16 %v6114
      %v6163 = vunpack.c.l.bf16 %v6115
      %v6164 = vunpack.c.l.bf16 %v6116
      %v6165 = vunpack.c.l.bf16 %v6117
      %v6166 = vunpack.c.l.bf16 %v6118
      %v6167 = vunpack.c.l.bf16 %v6119
      %v6168 = vunpack.c.l.bf16 %v6120
      %v6169 = vunpack.c.l.bf16 %v6121
      %v6170 = vunpack.c.l.bf16 %v6122
      %v6171 = vunpack.c.l.bf16 %v6123
      %v6172 = vunpack.c.l.bf16 %v6124
      %v6173 = vunpack.c.l.bf16 %v6125
      %v6174 = vunpack.c.l.bf16 %v6126
      %v6175 = vunpack.c.l.bf16 %v6127
      %v6176 = vunpack.c.l.bf16 %v6128
      %v6177 = vunpack.c.l.bf16 %v6129
      %v6178 = vunpack.c.l.bf16 %v6130
      %v6179 = vunpack.c.l.bf16 %v6131
      %v6180 = vmul.f32 %v6060, %v6156
      %v6181 = vmul.f32 %v6061, %v6157
      %v6182 = vmul.f32 %v6062, %v6158
      %v6183 = vmul.f32 %v6063, %v6159
      %v6184 = vmul.f32 %v6064, %v6160
      %v6185 = vmul.f32 %v6065, %v6161
      %v6186 = vmul.f32 %v6066, %v6162
      %v6187 = vmul.f32 %v6067, %v6163
      %v6188 = vmul.f32 %v6068, %v6164
      %v6189 = vmul.f32 %v6069, %v6165
      %v6190 = vmul.f32 %v6070, %v6166
      %v6191 = vmul.f32 %v6071, %v6167
      %v6192 = vmul.f32 %v6072, %v6168
      %v6193 = vmul.f32 %v6073, %v6169
      %v6194 = vmul.f32 %v6074, %v6170
      %v6195 = vmul.f32 %v6075, %v6171
      %v6196 = vmul.f32 %v6076, %v6172
      %v6197 = vmul.f32 %v6077, %v6173
      %v6198 = vmul.f32 %v6078, %v6174
      %v6199 = vmul.f32 %v6079, %v6175
      %v6200 = vmul.f32 %v6080, %v6176
      %v6201 = vmul.f32 %v6081, %v6177
      %v6202 = vmul.f32 %v6082, %v6178
      %v6203 = vmul.f32 %v6083, %v6179
      %v6204 = vadd.f32 %v5964, %v6180
      %v6205 = vadd.f32 %v5965, %v6181
      %v6206 = vadd.f32 %v5966, %v6182
      %v6207 = vadd.f32 %v5967, %v6183
      %v6208 = vadd.f32 %v5968, %v6184
      %v6209 = vadd.f32 %v5969, %v6185
      %v6210 = vadd.f32 %v5970, %v6186
      %v6211 = vadd.f32 %v5971, %v6187
      %v6212 = vadd.f32 %v5972, %v6188
      %v6213 = vadd.f32 %v5973, %v6189
      %v6214 = vadd.f32 %v5974, %v6190
      %v6215 = vadd.f32 %v5975, %v6191
      %v6216 = vadd.f32 %v5976, %v6192
      %v6217 = vadd.f32 %v5977, %v6193
      %v6218 = vadd.f32 %v5978, %v6194
      %v6219 = vadd.f32 %v5979, %v6195
      %v6220 = vadd.f32 %v5980, %v6196
      %v6221 = vadd.f32 %v5981, %v6197
      %v6222 = vadd.f32 %v5982, %v6198
      %v6223 = vadd.f32 %v5983, %v6199
      %v6224 = vadd.f32 %v5984, %v6200
      %v6225 = vadd.f32 %v5985, %v6201
      %v6226 = vadd.f32 %v5986, %v6202
      %v6227 = vadd.f32 %v5987, %v6203
      %v6228 = vunpack.c.l.bf16 %v4480
      %v6229 = vunpack.c.l.bf16 %v4498
      %v6230 = vunpack.c.l.bf16 %v4516
      %v6231 = vunpack.c.l.bf16 %v4534
      %v6232 = vunpack.c.l.bf16 %v4552
      %v6233 = vunpack.c.l.bf16 %v4570
      %v6234 = vunpack.c.l.bf16 %v4588
      %v6235 = vunpack.c.l.bf16 %v4606
      %v6236 = vunpack.c.l.bf16 %v4624
      %v6237 = vunpack.c.l.bf16 %v4642
      %v6238 = vunpack.c.l.bf16 %v4660
      %v6239 = vunpack.c.l.bf16 %v4678
      %v6240 = vunpack.c.l.bf16 %v4696
      %v6241 = vunpack.c.l.bf16 %v4714
      %v6242 = vunpack.c.l.bf16 %v4732
      %v6243 = vunpack.c.l.bf16 %v4750
      %v6244 = vunpack.c.l.bf16 %v4768
      %v6245 = vunpack.c.l.bf16 %v4786
      %v6246 = vunpack.c.l.bf16 %v4804
      %v6247 = vunpack.c.l.bf16 %v4822
      %v6248 = vunpack.c.l.bf16 %v4840
      %v6249 = vunpack.c.l.bf16 %v4858
      %v6250 = vunpack.c.l.bf16 %v4876
      %v6251 = vunpack.c.l.bf16 %v4894
      %v6252 = vunpack.c.l.bf16 %v4488
      %v6253 = vunpack.c.l.bf16 %v4506
      %v6254 = vunpack.c.l.bf16 %v4524
      %v6255 = vunpack.c.l.bf16 %v4542
      %v6256 = vunpack.c.l.bf16 %v4560
      %v6257 = vunpack.c.l.bf16 %v4578
      %v6258 = vunpack.c.l.bf16 %v4596
      %v6259 = vunpack.c.l.bf16 %v4614
      %v6260 = vunpack.c.l.bf16 %v4632
      %v6261 = vunpack.c.l.bf16 %v4650
      %v6262 = vunpack.c.l.bf16 %v4668
      %v6263 = vunpack.c.l.bf16 %v4686
      %v6264 = vunpack.c.l.bf16 %v4704
      %v6265 = vunpack.c.l.bf16 %v4722
      %v6266 = vunpack.c.l.bf16 %v4740
      %v6267 = vunpack.c.l.bf16 %v4758
      %v6268 = vunpack.c.l.bf16 %v4776
      %v6269 = vunpack.c.l.bf16 %v4794
      %v6270 = vunpack.c.l.bf16 %v4812
      %v6271 = vunpack.c.l.bf16 %v4830
      %v6272 = vunpack.c.l.bf16 %v4848
      %v6273 = vunpack.c.l.bf16 %v4866
      %v6274 = vunpack.c.l.bf16 %v4884
      %v6275 = vunpack.c.l.bf16 %v4902
      %v6276 = vmul.f32 %v6228, %v6252
      %v6277 = vmul.f32 %v6229, %v6253
      %v6278 = vmul.f32 %v6230, %v6254
      %v6279 = vmul.f32 %v6231, %v6255
      %v6280 = vmul.f32 %v6232, %v6256
      %v6281 = vmul.f32 %v6233, %v6257
      %v6282 = vmul.f32 %v6234, %v6258
      %v6283 = vmul.f32 %v6235, %v6259
      %v6284 = vmul.f32 %v6236, %v6260
      %v6285 = vmul.f32 %v6237, %v6261
      %v6286 = vmul.f32 %v6238, %v6262
      %v6287 = vmul.f32 %v6239, %v6263
      %v6288 = vmul.f32 %v6240, %v6264
      %v6289 = vmul.f32 %v6241, %v6265
      %v6290 = vmul.f32 %v6242, %v6266
      %v6291 = vmul.f32 %v6243, %v6267
      %v6292 = vmul.f32 %v6244, %v6268
      %v6293 = vmul.f32 %v6245, %v6269
      %v6294 = vmul.f32 %v6246, %v6270
      %v6295 = vmul.f32 %v6247, %v6271
      %v6296 = vmul.f32 %v6248, %v6272
      %v6297 = vmul.f32 %v6249, %v6273
      %v6298 = vmul.f32 %v6250, %v6274
      %v6299 = vmul.f32 %v6251, %v6275
      %v6300 = vadd.f32 %v6204, %v6276
      %v6301 = vadd.f32 %v6205, %v6277
      %v6302 = vadd.f32 %v6206, %v6278
      %v6303 = vadd.f32 %v6207, %v6279
      %v6304 = vadd.f32 %v6208, %v6280
      %v6305 = vadd.f32 %v6209, %v6281
      %v6306 = vadd.f32 %v6210, %v6282
      %v6307 = vadd.f32 %v6211, %v6283
      %v6308 = vadd.f32 %v6212, %v6284
      %v6309 = vadd.f32 %v6213, %v6285
      %v6310 = vadd.f32 %v6214, %v6286
      %v6311 = vadd.f32 %v6215, %v6287
      %v6312 = vadd.f32 %v6216, %v6288
      %v6313 = vadd.f32 %v6217, %v6289
      %v6314 = vadd.f32 %v6218, %v6290
      %v6315 = vadd.f32 %v6219, %v6291
      %v6316 = vadd.f32 %v6220, %v6292
      %v6317 = vadd.f32 %v6221, %v6293
      %v6318 = vadd.f32 %v6222, %v6294
      %v6319 = vadd.f32 %v6223, %v6295
      %v6320 = vadd.f32 %v6224, %v6296
      %v6321 = vadd.f32 %v6225, %v6297
      %v6322 = vadd.f32 %v6226, %v6298
      %v6323 = vadd.f32 %v6227, %v6299
      %v6348 = vrot.slane %v4480, 4
      %v6349 = vrot.slane %v4498, 4
      %v6350 = vrot.slane %v4516, 4
      %v6351 = vrot.slane %v4534, 4
      %v6352 = vrot.slane %v4552, 4
      %v6353 = vrot.slane %v4570, 4
      %v6354 = vrot.slane %v4588, 4
      %v6355 = vrot.slane %v4606, 4
      %v6356 = vrot.slane %v4624, 4
      %v6357 = vrot.slane %v4642, 4
      %v6358 = vrot.slane %v4660, 4
      %v6359 = vrot.slane %v4678, 4
      %v6360 = vrot.slane %v4696, 4
      %v6361 = vrot.slane %v4714, 4
      %v6362 = vrot.slane %v4732, 4
      %v6363 = vrot.slane %v4750, 4
      %v6364 = vrot.slane %v4768, 4
      %v6365 = vrot.slane %v4786, 4
      %v6366 = vrot.slane %v4804, 4
      %v6367 = vrot.slane %v4822, 4
      %v6368 = vrot.slane %v4840, 4
      %v6369 = vrot.slane %v4858, 4
      %v6370 = vrot.slane %v4876, 4
      %v6371 = vrot.slane %v4894, 4
      %v6396 = vunpack.c.l.bf16 %v6348
      %v6397 = vunpack.c.l.bf16 %v6349
      %v6398 = vunpack.c.l.bf16 %v6350
      %v6399 = vunpack.c.l.bf16 %v6351
      %v6400 = vunpack.c.l.bf16 %v6352
      %v6401 = vunpack.c.l.bf16 %v6353
      %v6402 = vunpack.c.l.bf16 %v6354
      %v6403 = vunpack.c.l.bf16 %v6355
      %v6404 = vunpack.c.l.bf16 %v6356
      %v6405 = vunpack.c.l.bf16 %v6357
      %v6406 = vunpack.c.l.bf16 %v6358
      %v6407 = vunpack.c.l.bf16 %v6359
      %v6408 = vunpack.c.l.bf16 %v6360
      %v6409 = vunpack.c.l.bf16 %v6361
      %v6410 = vunpack.c.l.bf16 %v6362
      %v6411 = vunpack.c.l.bf16 %v6363
      %v6412 = vunpack.c.l.bf16 %v6364
      %v6413 = vunpack.c.l.bf16 %v6365
      %v6414 = vunpack.c.l.bf16 %v6366
      %v6415 = vunpack.c.l.bf16 %v6367
      %v6416 = vunpack.c.l.bf16 %v6368
      %v6417 = vunpack.c.l.bf16 %v6369
      %v6418 = vunpack.c.l.bf16 %v6370
      %v6419 = vunpack.c.l.bf16 %v6371
      %v6444 = vrot.slane %v4488, 4
      %v6445 = vrot.slane %v4506, 4
      %v6446 = vrot.slane %v4524, 4
      %v6447 = vrot.slane %v4542, 4
      %v6448 = vrot.slane %v4560, 4
      %v6449 = vrot.slane %v4578, 4
      %v6450 = vrot.slane %v4596, 4
      %v6451 = vrot.slane %v4614, 4
      %v6452 = vrot.slane %v4632, 4
      %v6453 = vrot.slane %v4650, 4
      %v6454 = vrot.slane %v4668, 4
      %v6455 = vrot.slane %v4686, 4
      %v6456 = vrot.slane %v4704, 4
      %v6457 = vrot.slane %v4722, 4
      %v6458 = vrot.slane %v4740, 4
      %v6459 = vrot.slane %v4758, 4
      %v6460 = vrot.slane %v4776, 4
      %v6461 = vrot.slane %v4794, 4
      %v6462 = vrot.slane %v4812, 4
      %v6463 = vrot.slane %v4830, 4
      %v6464 = vrot.slane %v4848, 4
      %v6465 = vrot.slane %v4866, 4
      %v6466 = vrot.slane %v4884, 4
      %v6467 = vrot.slane %v4902, 4
      %v6492 = vunpack.c.l.bf16 %v6444
      %v6493 = vunpack.c.l.bf16 %v6445
      %v6494 = vunpack.c.l.bf16 %v6446
      %v6495 = vunpack.c.l.bf16 %v6447
      %v6496 = vunpack.c.l.bf16 %v6448
      %v6497 = vunpack.c.l.bf16 %v6449
      %v6498 = vunpack.c.l.bf16 %v6450
      %v6499 = vunpack.c.l.bf16 %v6451
      %v6500 = vunpack.c.l.bf16 %v6452
      %v6501 = vunpack.c.l.bf16 %v6453
      %v6502 = vunpack.c.l.bf16 %v6454
      %v6503 = vunpack.c.l.bf16 %v6455
      %v6504 = vunpack.c.l.bf16 %v6456
      %v6505 = vunpack.c.l.bf16 %v6457
      %v6506 = vunpack.c.l.bf16 %v6458
      %v6507 = vunpack.c.l.bf16 %v6459
      %v6508 = vunpack.c.l.bf16 %v6460
      %v6509 = vunpack.c.l.bf16 %v6461
      %v6510 = vunpack.c.l.bf16 %v6462
      %v6511 = vunpack.c.l.bf16 %v6463
      %v6512 = vunpack.c.l.bf16 %v6464
      %v6513 = vunpack.c.l.bf16 %v6465
      %v6514 = vunpack.c.l.bf16 %v6466
      %v6515 = vunpack.c.l.bf16 %v6467
      %v6516 = vmul.f32 %v6396, %v6492
      %v6517 = vmul.f32 %v6397, %v6493
      %v6518 = vmul.f32 %v6398, %v6494
      %v6519 = vmul.f32 %v6399, %v6495
      %v6520 = vmul.f32 %v6400, %v6496
      %v6521 = vmul.f32 %v6401, %v6497
      %v6522 = vmul.f32 %v6402, %v6498
      %v6523 = vmul.f32 %v6403, %v6499
      %v6524 = vmul.f32 %v6404, %v6500
      %v6525 = vmul.f32 %v6405, %v6501
      %v6526 = vmul.f32 %v6406, %v6502
      %v6527 = vmul.f32 %v6407, %v6503
      %v6528 = vmul.f32 %v6408, %v6504
      %v6529 = vmul.f32 %v6409, %v6505
      %v6530 = vmul.f32 %v6410, %v6506
      %v6531 = vmul.f32 %v6411, %v6507
      %v6532 = vmul.f32 %v6412, %v6508
      %v6533 = vmul.f32 %v6413, %v6509
      %v6534 = vmul.f32 %v6414, %v6510
      %v6535 = vmul.f32 %v6415, %v6511
      %v6536 = vmul.f32 %v6416, %v6512
      %v6537 = vmul.f32 %v6417, %v6513
      %v6538 = vmul.f32 %v6418, %v6514
      %v6539 = vmul.f32 %v6419, %v6515
      %v6540 = vadd.f32 %v6300, %v6516
      %v6541 = vadd.f32 %v6301, %v6517
      %v6542 = vadd.f32 %v6302, %v6518
      %v6543 = vadd.f32 %v6303, %v6519
      %v6544 = vadd.f32 %v6304, %v6520
      %v6545 = vadd.f32 %v6305, %v6521
      %v6546 = vadd.f32 %v6306, %v6522
      %v6547 = vadd.f32 %v6307, %v6523
      %v6548 = vadd.f32 %v6308, %v6524
      %v6549 = vadd.f32 %v6309, %v6525
      %v6550 = vadd.f32 %v6310, %v6526
      %v6551 = vadd.f32 %v6311, %v6527
      %v6552 = vadd.f32 %v6312, %v6528
      %v6553 = vadd.f32 %v6313, %v6529
      %v6554 = vadd.f32 %v6314, %v6530
      %v6555 = vadd.f32 %v6315, %v6531
      %v6556 = vadd.f32 %v6316, %v6532
      %v6557 = vadd.f32 %v6317, %v6533
      %v6558 = vadd.f32 %v6318, %v6534
      %v6559 = vadd.f32 %v6319, %v6535
      %v6560 = vadd.f32 %v6320, %v6536
      %v6561 = vadd.f32 %v6321, %v6537
      %v6562 = vadd.f32 %v6322, %v6538
      %v6563 = vadd.f32 %v6323, %v6539
      %v6564 = vunpack.c.l.bf16 %v4481
      %v6565 = vunpack.c.l.bf16 %v4499
      %v6566 = vunpack.c.l.bf16 %v4517
      %v6567 = vunpack.c.l.bf16 %v4535
      %v6568 = vunpack.c.l.bf16 %v4553
      %v6569 = vunpack.c.l.bf16 %v4571
      %v6570 = vunpack.c.l.bf16 %v4589
      %v6571 = vunpack.c.l.bf16 %v4607
      %v6572 = vunpack.c.l.bf16 %v4625
      %v6573 = vunpack.c.l.bf16 %v4643
      %v6574 = vunpack.c.l.bf16 %v4661
      %v6575 = vunpack.c.l.bf16 %v4679
      %v6576 = vunpack.c.l.bf16 %v4697
      %v6577 = vunpack.c.l.bf16 %v4715
      %v6578 = vunpack.c.l.bf16 %v4733
      %v6579 = vunpack.c.l.bf16 %v4751
      %v6580 = vunpack.c.l.bf16 %v4769
      %v6581 = vunpack.c.l.bf16 %v4787
      %v6582 = vunpack.c.l.bf16 %v4805
      %v6583 = vunpack.c.l.bf16 %v4823
      %v6584 = vunpack.c.l.bf16 %v4841
      %v6585 = vunpack.c.l.bf16 %v4859
      %v6586 = vunpack.c.l.bf16 %v4877
      %v6587 = vunpack.c.l.bf16 %v4895
      %v6588 = vunpack.c.l.bf16 %v4489
      %v6589 = vunpack.c.l.bf16 %v4507
      %v6590 = vunpack.c.l.bf16 %v4525
      %v6591 = vunpack.c.l.bf16 %v4543
      %v6592 = vunpack.c.l.bf16 %v4561
      %v6593 = vunpack.c.l.bf16 %v4579
      %v6594 = vunpack.c.l.bf16 %v4597
      %v6595 = vunpack.c.l.bf16 %v4615
      %v6596 = vunpack.c.l.bf16 %v4633
      %v6597 = vunpack.c.l.bf16 %v4651
      %v6598 = vunpack.c.l.bf16 %v4669
      %v6599 = vunpack.c.l.bf16 %v4687
      %v6600 = vunpack.c.l.bf16 %v4705
      %v6601 = vunpack.c.l.bf16 %v4723
      %v6602 = vunpack.c.l.bf16 %v4741
      %v6603 = vunpack.c.l.bf16 %v4759
      %v6604 = vunpack.c.l.bf16 %v4777
      %v6605 = vunpack.c.l.bf16 %v4795
      %v6606 = vunpack.c.l.bf16 %v4813
      %v6607 = vunpack.c.l.bf16 %v4831
      %v6608 = vunpack.c.l.bf16 %v4849
      %v6609 = vunpack.c.l.bf16 %v4867
      %v6610 = vunpack.c.l.bf16 %v4885
      %v6611 = vunpack.c.l.bf16 %v4903
      %v6612 = vmul.f32 %v6564, %v6588
      %v6613 = vmul.f32 %v6565, %v6589
      %v6614 = vmul.f32 %v6566, %v6590
      %v6615 = vmul.f32 %v6567, %v6591
      %v6616 = vmul.f32 %v6568, %v6592
      %v6617 = vmul.f32 %v6569, %v6593
      %v6618 = vmul.f32 %v6570, %v6594
      %v6619 = vmul.f32 %v6571, %v6595
      %v6620 = vmul.f32 %v6572, %v6596
      %v6621 = vmul.f32 %v6573, %v6597
      %v6622 = vmul.f32 %v6574, %v6598
      %v6623 = vmul.f32 %v6575, %v6599
      %v6624 = vmul.f32 %v6576, %v6600
      %v6625 = vmul.f32 %v6577, %v6601
      %v6626 = vmul.f32 %v6578, %v6602
      %v6627 = vmul.f32 %v6579, %v6603
      %v6628 = vmul.f32 %v6580, %v6604
      %v6629 = vmul.f32 %v6581, %v6605
      %v6630 = vmul.f32 %v6582, %v6606
      %v6631 = vmul.f32 %v6583, %v6607
      %v6632 = vmul.f32 %v6584, %v6608
      %v6633 = vmul.f32 %v6585, %v6609
      %v6634 = vmul.f32 %v6586, %v6610
      %v6635 = vmul.f32 %v6587, %v6611
      %v6636 = vadd.f32 %v6540, %v6612
      %v6637 = vadd.f32 %v6541, %v6613
      %v6638 = vadd.f32 %v6542, %v6614
      %v6639 = vadd.f32 %v6543, %v6615
      %v6640 = vadd.f32 %v6544, %v6616
      %v6641 = vadd.f32 %v6545, %v6617
      %v6642 = vadd.f32 %v6546, %v6618
      %v6643 = vadd.f32 %v6547, %v6619
      %v6644 = vadd.f32 %v6548, %v6620
      %v6645 = vadd.f32 %v6549, %v6621
      %v6646 = vadd.f32 %v6550, %v6622
      %v6647 = vadd.f32 %v6551, %v6623
      %v6648 = vadd.f32 %v6552, %v6624
      %v6649 = vadd.f32 %v6553, %v6625
      %v6650 = vadd.f32 %v6554, %v6626
      %v6651 = vadd.f32 %v6555, %v6627
      %v6652 = vadd.f32 %v6556, %v6628
      %v6653 = vadd.f32 %v6557, %v6629
      %v6654 = vadd.f32 %v6558, %v6630
      %v6655 = vadd.f32 %v6559, %v6631
      %v6656 = vadd.f32 %v6560, %v6632
      %v6657 = vadd.f32 %v6561, %v6633
      %v6658 = vadd.f32 %v6562, %v6634
      %v6659 = vadd.f32 %v6563, %v6635
      %v6684 = vrot.slane %v4481, 4
      %v6685 = vrot.slane %v4499, 4
      %v6686 = vrot.slane %v4517, 4
      %v6687 = vrot.slane %v4535, 4
      %v6688 = vrot.slane %v4553, 4
      %v6689 = vrot.slane %v4571, 4
      %v6690 = vrot.slane %v4589, 4
      %v6691 = vrot.slane %v4607, 4
      %v6692 = vrot.slane %v4625, 4
      %v6693 = vrot.slane %v4643, 4
      %v6694 = vrot.slane %v4661, 4
      %v6695 = vrot.slane %v4679, 4
      %v6696 = vrot.slane %v4697, 4
      %v6697 = vrot.slane %v4715, 4
      %v6698 = vrot.slane %v4733, 4
      %v6699 = vrot.slane %v4751, 4
      %v6700 = vrot.slane %v4769, 4
      %v6701 = vrot.slane %v4787, 4
      %v6702 = vrot.slane %v4805, 4
      %v6703 = vrot.slane %v4823, 4
      %v6704 = vrot.slane %v4841, 4
      %v6705 = vrot.slane %v4859, 4
      %v6706 = vrot.slane %v4877, 4
      %v6707 = vrot.slane %v4895, 4
      %v6732 = vunpack.c.l.bf16 %v6684
      %v6733 = vunpack.c.l.bf16 %v6685
      %v6734 = vunpack.c.l.bf16 %v6686
      %v6735 = vunpack.c.l.bf16 %v6687
      %v6736 = vunpack.c.l.bf16 %v6688
      %v6737 = vunpack.c.l.bf16 %v6689
      %v6738 = vunpack.c.l.bf16 %v6690
      %v6739 = vunpack.c.l.bf16 %v6691
      %v6740 = vunpack.c.l.bf16 %v6692
      %v6741 = vunpack.c.l.bf16 %v6693
      %v6742 = vunpack.c.l.bf16 %v6694
      %v6743 = vunpack.c.l.bf16 %v6695
      %v6744 = vunpack.c.l.bf16 %v6696
      %v6745 = vunpack.c.l.bf16 %v6697
      %v6746 = vunpack.c.l.bf16 %v6698
      %v6747 = vunpack.c.l.bf16 %v6699
      %v6748 = vunpack.c.l.bf16 %v6700
      %v6749 = vunpack.c.l.bf16 %v6701
      %v6750 = vunpack.c.l.bf16 %v6702
      %v6751 = vunpack.c.l.bf16 %v6703
      %v6752 = vunpack.c.l.bf16 %v6704
      %v6753 = vunpack.c.l.bf16 %v6705
      %v6754 = vunpack.c.l.bf16 %v6706
      %v6755 = vunpack.c.l.bf16 %v6707
      %v6780 = vrot.slane %v4489, 4
      %v6781 = vrot.slane %v4507, 4
      %v6782 = vrot.slane %v4525, 4
      %v6783 = vrot.slane %v4543, 4
      %v6784 = vrot.slane %v4561, 4
      %v6785 = vrot.slane %v4579, 4
      %v6786 = vrot.slane %v4597, 4
      %v6787 = vrot.slane %v4615, 4
      %v6788 = vrot.slane %v4633, 4
      %v6789 = vrot.slane %v4651, 4
      %v6790 = vrot.slane %v4669, 4
      %v6791 = vrot.slane %v4687, 4
      %v6792 = vrot.slane %v4705, 4
      %v6793 = vrot.slane %v4723, 4
      %v6794 = vrot.slane %v4741, 4
      %v6795 = vrot.slane %v4759, 4
      %v6796 = vrot.slane %v4777, 4
      %v6797 = vrot.slane %v4795, 4
      %v6798 = vrot.slane %v4813, 4
      %v6799 = vrot.slane %v4831, 4
      %v6800 = vrot.slane %v4849, 4
      %v6801 = vrot.slane %v4867, 4
      %v6802 = vrot.slane %v4885, 4
      %v6803 = vrot.slane %v4903, 4
      %v6828 = vunpack.c.l.bf16 %v6780
      %v6829 = vunpack.c.l.bf16 %v6781
      %v6830 = vunpack.c.l.bf16 %v6782
      %v6831 = vunpack.c.l.bf16 %v6783
      %v6832 = vunpack.c.l.bf16 %v6784
      %v6833 = vunpack.c.l.bf16 %v6785
      %v6834 = vunpack.c.l.bf16 %v6786
      %v6835 = vunpack.c.l.bf16 %v6787
      %v6836 = vunpack.c.l.bf16 %v6788
      %v6837 = vunpack.c.l.bf16 %v6789
      %v6838 = vunpack.c.l.bf16 %v6790
      %v6839 = vunpack.c.l.bf16 %v6791
      %v6840 = vunpack.c.l.bf16 %v6792
      %v6841 = vunpack.c.l.bf16 %v6793
      %v6842 = vunpack.c.l.bf16 %v6794
      %v6843 = vunpack.c.l.bf16 %v6795
      %v6844 = vunpack.c.l.bf16 %v6796
      %v6845 = vunpack.c.l.bf16 %v6797
      %v6846 = vunpack.c.l.bf16 %v6798
      %v6847 = vunpack.c.l.bf16 %v6799
      %v6848 = vunpack.c.l.bf16 %v6800
      %v6849 = vunpack.c.l.bf16 %v6801
      %v6850 = vunpack.c.l.bf16 %v6802
      %v6851 = vunpack.c.l.bf16 %v6803
      %v6852 = vmul.f32 %v6732, %v6828
      %v6853 = vmul.f32 %v6733, %v6829
      %v6854 = vmul.f32 %v6734, %v6830
      %v6855 = vmul.f32 %v6735, %v6831
      %v6856 = vmul.f32 %v6736, %v6832
      %v6857 = vmul.f32 %v6737, %v6833
      %v6858 = vmul.f32 %v6738, %v6834
      %v6859 = vmul.f32 %v6739, %v6835
      %v6860 = vmul.f32 %v6740, %v6836
      %v6861 = vmul.f32 %v6741, %v6837
      %v6862 = vmul.f32 %v6742, %v6838
      %v6863 = vmul.f32 %v6743, %v6839
      %v6864 = vmul.f32 %v6744, %v6840
      %v6865 = vmul.f32 %v6745, %v6841
      %v6866 = vmul.f32 %v6746, %v6842
      %v6867 = vmul.f32 %v6747, %v6843
      %v6868 = vmul.f32 %v6748, %v6844
      %v6869 = vmul.f32 %v6749, %v6845
      %v6870 = vmul.f32 %v6750, %v6846
      %v6871 = vmul.f32 %v6751, %v6847
      %v6872 = vmul.f32 %v6752, %v6848
      %v6873 = vmul.f32 %v6753, %v6849
      %v6874 = vmul.f32 %v6754, %v6850
      %v6875 = vmul.f32 %v6755, %v6851
      %v6876 = vadd.f32 %v6636, %v6852
      %v6877 = vadd.f32 %v6637, %v6853
      %v6878 = vadd.f32 %v6638, %v6854
      %v6879 = vadd.f32 %v6639, %v6855
      %v6880 = vadd.f32 %v6640, %v6856
      %v6881 = vadd.f32 %v6641, %v6857
      %v6882 = vadd.f32 %v6642, %v6858
      %v6883 = vadd.f32 %v6643, %v6859
      %v6884 = vadd.f32 %v6644, %v6860
      %v6885 = vadd.f32 %v6645, %v6861
      %v6886 = vadd.f32 %v6646, %v6862
      %v6887 = vadd.f32 %v6647, %v6863
      %v6888 = vadd.f32 %v6648, %v6864
      %v6889 = vadd.f32 %v6649, %v6865
      %v6890 = vadd.f32 %v6650, %v6866
      %v6891 = vadd.f32 %v6651, %v6867
      %v6892 = vadd.f32 %v6652, %v6868
      %v6893 = vadd.f32 %v6653, %v6869
      %v6894 = vadd.f32 %v6654, %v6870
      %v6895 = vadd.f32 %v6655, %v6871
      %v6896 = vadd.f32 %v6656, %v6872
      %v6897 = vadd.f32 %v6657, %v6873
      %v6898 = vadd.f32 %v6658, %v6874
      %v6899 = vadd.f32 %v6659, %v6875
      %v6900 = vunpack.c.l.bf16 %v4482
      %v6901 = vunpack.c.l.bf16 %v4500
      %v6902 = vunpack.c.l.bf16 %v4518
      %v6903 = vunpack.c.l.bf16 %v4536
      %v6904 = vunpack.c.l.bf16 %v4554
      %v6905 = vunpack.c.l.bf16 %v4572
      %v6906 = vunpack.c.l.bf16 %v4590
      %v6907 = vunpack.c.l.bf16 %v4608
      %v6908 = vunpack.c.l.bf16 %v4626
      %v6909 = vunpack.c.l.bf16 %v4644
      %v6910 = vunpack.c.l.bf16 %v4662
      %v6911 = vunpack.c.l.bf16 %v4680
      %v6912 = vunpack.c.l.bf16 %v4698
      %v6913 = vunpack.c.l.bf16 %v4716
      %v6914 = vunpack.c.l.bf16 %v4734
      %v6915 = vunpack.c.l.bf16 %v4752
      %v6916 = vunpack.c.l.bf16 %v4770
      %v6917 = vunpack.c.l.bf16 %v4788
      %v6918 = vunpack.c.l.bf16 %v4806
      %v6919 = vunpack.c.l.bf16 %v4824
      %v6920 = vunpack.c.l.bf16 %v4842
      %v6921 = vunpack.c.l.bf16 %v4860
      %v6922 = vunpack.c.l.bf16 %v4878
      %v6923 = vunpack.c.l.bf16 %v4896
      %v6924 = vunpack.c.l.bf16 %v4490
      %v6925 = vunpack.c.l.bf16 %v4508
      %v6926 = vunpack.c.l.bf16 %v4526
      %v6927 = vunpack.c.l.bf16 %v4544
      %v6928 = vunpack.c.l.bf16 %v4562
      %v6929 = vunpack.c.l.bf16 %v4580
      %v6930 = vunpack.c.l.bf16 %v4598
      %v6931 = vunpack.c.l.bf16 %v4616
      %v6932 = vunpack.c.l.bf16 %v4634
      %v6933 = vunpack.c.l.bf16 %v4652
      %v6934 = vunpack.c.l.bf16 %v4670
      %v6935 = vunpack.c.l.bf16 %v4688
      %v6936 = vunpack.c.l.bf16 %v4706
      %v6937 = vunpack.c.l.bf16 %v4724
      %v6938 = vunpack.c.l.bf16 %v4742
      %v6939 = vunpack.c.l.bf16 %v4760
      %v6940 = vunpack.c.l.bf16 %v4778
      %v6941 = vunpack.c.l.bf16 %v4796
      %v6942 = vunpack.c.l.bf16 %v4814
      %v6943 = vunpack.c.l.bf16 %v4832
      %v6944 = vunpack.c.l.bf16 %v4850
      %v6945 = vunpack.c.l.bf16 %v4868
      %v6946 = vunpack.c.l.bf16 %v4886
      %v6947 = vunpack.c.l.bf16 %v4904
      %v6948 = vmul.f32 %v6900, %v6924
      %v6949 = vmul.f32 %v6901, %v6925
      %v6950 = vmul.f32 %v6902, %v6926
      %v6951 = vmul.f32 %v6903, %v6927
      %v6952 = vmul.f32 %v6904, %v6928
      %v6953 = vmul.f32 %v6905, %v6929
      %v6954 = vmul.f32 %v6906, %v6930
      %v6955 = vmul.f32 %v6907, %v6931
      %v6956 = vmul.f32 %v6908, %v6932
      %v6957 = vmul.f32 %v6909, %v6933
      %v6958 = vmul.f32 %v6910, %v6934
      %v6959 = vmul.f32 %v6911, %v6935
      %v6960 = vmul.f32 %v6912, %v6936
      %v6961 = vmul.f32 %v6913, %v6937
      %v6962 = vmul.f32 %v6914, %v6938
      %v6963 = vmul.f32 %v6915, %v6939
      %v6964 = vmul.f32 %v6916, %v6940
      %v6965 = vmul.f32 %v6917, %v6941
      %v6966 = vmul.f32 %v6918, %v6942
      %v6967 = vmul.f32 %v6919, %v6943
      %v6968 = vmul.f32 %v6920, %v6944
      %v6969 = vmul.f32 %v6921, %v6945
      %v6970 = vmul.f32 %v6922, %v6946
      %v6971 = vmul.f32 %v6923, %v6947
      %v6972 = vadd.f32 %v6876, %v6948
      %v6973 = vadd.f32 %v6877, %v6949
      %v6974 = vadd.f32 %v6878, %v6950
      %v6975 = vadd.f32 %v6879, %v6951
      %v6976 = vadd.f32 %v6880, %v6952
      %v6977 = vadd.f32 %v6881, %v6953
      %v6978 = vadd.f32 %v6882, %v6954
      %v6979 = vadd.f32 %v6883, %v6955
      %v6980 = vadd.f32 %v6884, %v6956
      %v6981 = vadd.f32 %v6885, %v6957
      %v6982 = vadd.f32 %v6886, %v6958
      %v6983 = vadd.f32 %v6887, %v6959
      %v6984 = vadd.f32 %v6888, %v6960
      %v6985 = vadd.f32 %v6889, %v6961
      %v6986 = vadd.f32 %v6890, %v6962
      %v6987 = vadd.f32 %v6891, %v6963
      %v6988 = vadd.f32 %v6892, %v6964
      %v6989 = vadd.f32 %v6893, %v6965
      %v6990 = vadd.f32 %v6894, %v6966
      %v6991 = vadd.f32 %v6895, %v6967
      %v6992 = vadd.f32 %v6896, %v6968
      %v6993 = vadd.f32 %v6897, %v6969
      %v6994 = vadd.f32 %v6898, %v6970
      %v6995 = vadd.f32 %v6899, %v6971
      %v7020 = vrot.slane %v4482, 4
      %v7021 = vrot.slane %v4500, 4
      %v7022 = vrot.slane %v4518, 4
      %v7023 = vrot.slane %v4536, 4
      %v7024 = vrot.slane %v4554, 4
      %v7025 = vrot.slane %v4572, 4
      %v7026 = vrot.slane %v4590, 4
      %v7027 = vrot.slane %v4608, 4
      %v7028 = vrot.slane %v4626, 4
      %v7029 = vrot.slane %v4644, 4
      %v7030 = vrot.slane %v4662, 4
      %v7031 = vrot.slane %v4680, 4
      %v7032 = vrot.slane %v4698, 4
      %v7033 = vrot.slane %v4716, 4
      %v7034 = vrot.slane %v4734, 4
      %v7035 = vrot.slane %v4752, 4
      %v7036 = vrot.slane %v4770, 4
      %v7037 = vrot.slane %v4788, 4
      %v7038 = vrot.slane %v4806, 4
      %v7039 = vrot.slane %v4824, 4
      %v7040 = vrot.slane %v4842, 4
      %v7041 = vrot.slane %v4860, 4
      %v7042 = vrot.slane %v4878, 4
      %v7043 = vrot.slane %v4896, 4
      %v7068 = vunpack.c.l.bf16 %v7020
      %v7069 = vunpack.c.l.bf16 %v7021
      %v7070 = vunpack.c.l.bf16 %v7022
      %v7071 = vunpack.c.l.bf16 %v7023
      %v7072 = vunpack.c.l.bf16 %v7024
      %v7073 = vunpack.c.l.bf16 %v7025
      %v7074 = vunpack.c.l.bf16 %v7026
      %v7075 = vunpack.c.l.bf16 %v7027
      %v7076 = vunpack.c.l.bf16 %v7028
      %v7077 = vunpack.c.l.bf16 %v7029
      %v7078 = vunpack.c.l.bf16 %v7030
      %v7079 = vunpack.c.l.bf16 %v7031
      %v7080 = vunpack.c.l.bf16 %v7032
      %v7081 = vunpack.c.l.bf16 %v7033
      %v7082 = vunpack.c.l.bf16 %v7034
      %v7083 = vunpack.c.l.bf16 %v7035
      %v7084 = vunpack.c.l.bf16 %v7036
      %v7085 = vunpack.c.l.bf16 %v7037
      %v7086 = vunpack.c.l.bf16 %v7038
      %v7087 = vunpack.c.l.bf16 %v7039
      %v7088 = vunpack.c.l.bf16 %v7040
      %v7089 = vunpack.c.l.bf16 %v7041
      %v7090 = vunpack.c.l.bf16 %v7042
      %v7091 = vunpack.c.l.bf16 %v7043
      %v7116 = vrot.slane %v4490, 4
      %v7117 = vrot.slane %v4508, 4
      %v7118 = vrot.slane %v4526, 4
      %v7119 = vrot.slane %v4544, 4
      %v7120 = vrot.slane %v4562, 4
      %v7121 = vrot.slane %v4580, 4
      %v7122 = vrot.slane %v4598, 4
      %v7123 = vrot.slane %v4616, 4
      %v7124 = vrot.slane %v4634, 4
      %v7125 = vrot.slane %v4652, 4
      %v7126 = vrot.slane %v4670, 4
      %v7127 = vrot.slane %v4688, 4
      %v7128 = vrot.slane %v4706, 4
      %v7129 = vrot.slane %v4724, 4
      %v7130 = vrot.slane %v4742, 4
      %v7131 = vrot.slane %v4760, 4
      %v7132 = vrot.slane %v4778, 4
      %v7133 = vrot.slane %v4796, 4
      %v7134 = vrot.slane %v4814, 4
      %v7135 = vrot.slane %v4832, 4
      %v7136 = vrot.slane %v4850, 4
      %v7137 = vrot.slane %v4868, 4
      %v7138 = vrot.slane %v4886, 4
      %v7139 = vrot.slane %v4904, 4
      %v7164 = vunpack.c.l.bf16 %v7116
      %v7165 = vunpack.c.l.bf16 %v7117
      %v7166 = vunpack.c.l.bf16 %v7118
      %v7167 = vunpack.c.l.bf16 %v7119
      %v7168 = vunpack.c.l.bf16 %v7120
      %v7169 = vunpack.c.l.bf16 %v7121
      %v7170 = vunpack.c.l.bf16 %v7122
      %v7171 = vunpack.c.l.bf16 %v7123
      %v7172 = vunpack.c.l.bf16 %v7124
      %v7173 = vunpack.c.l.bf16 %v7125
      %v7174 = vunpack.c.l.bf16 %v7126
      %v7175 = vunpack.c.l.bf16 %v7127
      %v7176 = vunpack.c.l.bf16 %v7128
      %v7177 = vunpack.c.l.bf16 %v7129
      %v7178 = vunpack.c.l.bf16 %v7130
      %v7179 = vunpack.c.l.bf16 %v7131
      %v7180 = vunpack.c.l.bf16 %v7132
      %v7181 = vunpack.c.l.bf16 %v7133
      %v7182 = vunpack.c.l.bf16 %v7134
      %v7183 = vunpack.c.l.bf16 %v7135
      %v7184 = vunpack.c.l.bf16 %v7136
      %v7185 = vunpack.c.l.bf16 %v7137
      %v7186 = vunpack.c.l.bf16 %v7138
      %v7187 = vunpack.c.l.bf16 %v7139
      %v7188 = vmul.f32 %v7068, %v7164
      %v7189 = vmul.f32 %v7069, %v7165
      %v7190 = vmul.f32 %v7070, %v7166
      %v7191 = vmul.f32 %v7071, %v7167
      %v7192 = vmul.f32 %v7072, %v7168
      %v7193 = vmul.f32 %v7073, %v7169
      %v7194 = vmul.f32 %v7074, %v7170
      %v7195 = vmul.f32 %v7075, %v7171
      %v7196 = vmul.f32 %v7076, %v7172
      %v7197 = vmul.f32 %v7077, %v7173
      %v7198 = vmul.f32 %v7078, %v7174
      %v7199 = vmul.f32 %v7079, %v7175
      %v7200 = vmul.f32 %v7080, %v7176
      %v7201 = vmul.f32 %v7081, %v7177
      %v7202 = vmul.f32 %v7082, %v7178
      %v7203 = vmul.f32 %v7083, %v7179
      %v7204 = vmul.f32 %v7084, %v7180
      %v7205 = vmul.f32 %v7085, %v7181
      %v7206 = vmul.f32 %v7086, %v7182
      %v7207 = vmul.f32 %v7087, %v7183
      %v7208 = vmul.f32 %v7088, %v7184
      %v7209 = vmul.f32 %v7089, %v7185
      %v7210 = vmul.f32 %v7090, %v7186
      %v7211 = vmul.f32 %v7091, %v7187
      %v7212 = vadd.f32 %v6972, %v7188
      %v7213 = vadd.f32 %v6973, %v7189
      %v7214 = vadd.f32 %v6974, %v7190
      %v7215 = vadd.f32 %v6975, %v7191
      %v7216 = vadd.f32 %v6976, %v7192
      %v7217 = vadd.f32 %v6977, %v7193
      %v7218 = vadd.f32 %v6978, %v7194
      %v7219 = vadd.f32 %v6979, %v7195
      %v7220 = vadd.f32 %v6980, %v7196
      %v7221 = vadd.f32 %v6981, %v7197
      %v7222 = vadd.f32 %v6982, %v7198
      %v7223 = vadd.f32 %v6983, %v7199
      %v7224 = vadd.f32 %v6984, %v7200
      %v7225 = vadd.f32 %v6985, %v7201
      %v7226 = vadd.f32 %v6986, %v7202
      %v7227 = vadd.f32 %v6987, %v7203
      %v7228 = vadd.f32 %v6988, %v7204
      %v7229 = vadd.f32 %v6989, %v7205
      %v7230 = vadd.f32 %v6990, %v7206
      %v7231 = vadd.f32 %v6991, %v7207
      %v7232 = vadd.f32 %v6992, %v7208
      %v7233 = vadd.f32 %v6993, %v7209
      %v7234 = vadd.f32 %v6994, %v7210
      %v7235 = vadd.f32 %v6995, %v7211
      %v7236 = vunpack.c.l.bf16 %v4483
      %v7237 = vunpack.c.l.bf16 %v4501
      %v7238 = vunpack.c.l.bf16 %v4519
      %v7239 = vunpack.c.l.bf16 %v4537
      %v7240 = vunpack.c.l.bf16 %v4555
      %v7241 = vunpack.c.l.bf16 %v4573
      %v7242 = vunpack.c.l.bf16 %v4591
      %v7243 = vunpack.c.l.bf16 %v4609
      %v7244 = vunpack.c.l.bf16 %v4627
      %v7245 = vunpack.c.l.bf16 %v4645
      %v7246 = vunpack.c.l.bf16 %v4663
      %v7247 = vunpack.c.l.bf16 %v4681
      %v7248 = vunpack.c.l.bf16 %v4699
      %v7249 = vunpack.c.l.bf16 %v4717
      %v7250 = vunpack.c.l.bf16 %v4735
      %v7251 = vunpack.c.l.bf16 %v4753
      %v7252 = vunpack.c.l.bf16 %v4771
      %v7253 = vunpack.c.l.bf16 %v4789
      %v7254 = vunpack.c.l.bf16 %v4807
      %v7255 = vunpack.c.l.bf16 %v4825
      %v7256 = vunpack.c.l.bf16 %v4843
      %v7257 = vunpack.c.l.bf16 %v4861
      %v7258 = vunpack.c.l.bf16 %v4879
      %v7259 = vunpack.c.l.bf16 %v4897
      %v7260 = vunpack.c.l.bf16 %v4491
      %v7261 = vunpack.c.l.bf16 %v4509
      %v7262 = vunpack.c.l.bf16 %v4527
      %v7263 = vunpack.c.l.bf16 %v4545
      %v7264 = vunpack.c.l.bf16 %v4563
      %v7265 = vunpack.c.l.bf16 %v4581
      %v7266 = vunpack.c.l.bf16 %v4599
      %v7267 = vunpack.c.l.bf16 %v4617
      %v7268 = vunpack.c.l.bf16 %v4635
      %v7269 = vunpack.c.l.bf16 %v4653
      %v7270 = vunpack.c.l.bf16 %v4671
      %v7271 = vunpack.c.l.bf16 %v4689
      %v7272 = vunpack.c.l.bf16 %v4707
      %v7273 = vunpack.c.l.bf16 %v4725
      %v7274 = vunpack.c.l.bf16 %v4743
      %v7275 = vunpack.c.l.bf16 %v4761
      %v7276 = vunpack.c.l.bf16 %v4779
      %v7277 = vunpack.c.l.bf16 %v4797
      %v7278 = vunpack.c.l.bf16 %v4815
      %v7279 = vunpack.c.l.bf16 %v4833
      %v7280 = vunpack.c.l.bf16 %v4851
      %v7281 = vunpack.c.l.bf16 %v4869
      %v7282 = vunpack.c.l.bf16 %v4887
      %v7283 = vunpack.c.l.bf16 %v4905
      %v7284 = vmul.f32 %v7236, %v7260
      %v7285 = vmul.f32 %v7237, %v7261
      %v7286 = vmul.f32 %v7238, %v7262
      %v7287 = vmul.f32 %v7239, %v7263
      %v7288 = vmul.f32 %v7240, %v7264
      %v7289 = vmul.f32 %v7241, %v7265
      %v7290 = vmul.f32 %v7242, %v7266
      %v7291 = vmul.f32 %v7243, %v7267
      %v7292 = vmul.f32 %v7244, %v7268
      %v7293 = vmul.f32 %v7245, %v7269
      %v7294 = vmul.f32 %v7246, %v7270
      %v7295 = vmul.f32 %v7247, %v7271
      %v7296 = vmul.f32 %v7248, %v7272
      %v7297 = vmul.f32 %v7249, %v7273
      %v7298 = vmul.f32 %v7250, %v7274
      %v7299 = vmul.f32 %v7251, %v7275
      %v7300 = vmul.f32 %v7252, %v7276
      %v7301 = vmul.f32 %v7253, %v7277
      %v7302 = vmul.f32 %v7254, %v7278
      %v7303 = vmul.f32 %v7255, %v7279
      %v7304 = vmul.f32 %v7256, %v7280
      %v7305 = vmul.f32 %v7257, %v7281
      %v7306 = vmul.f32 %v7258, %v7282
      %v7307 = vmul.f32 %v7259, %v7283
      %v7308 = vadd.f32 %v7212, %v7284
      %v7309 = vadd.f32 %v7213, %v7285
      %v7310 = vadd.f32 %v7214, %v7286
      %v7311 = vadd.f32 %v7215, %v7287
      %v7312 = vadd.f32 %v7216, %v7288
      %v7313 = vadd.f32 %v7217, %v7289
      %v7314 = vadd.f32 %v7218, %v7290
      %v7315 = vadd.f32 %v7219, %v7291
      %v7316 = vadd.f32 %v7220, %v7292
      %v7317 = vadd.f32 %v7221, %v7293
      %v7318 = vadd.f32 %v7222, %v7294
      %v7319 = vadd.f32 %v7223, %v7295
      %v7320 = vadd.f32 %v7224, %v7296
      %v7321 = vadd.f32 %v7225, %v7297
      %v7322 = vadd.f32 %v7226, %v7298
      %v7323 = vadd.f32 %v7227, %v7299
      %v7324 = vadd.f32 %v7228, %v7300
      %v7325 = vadd.f32 %v7229, %v7301
      %v7326 = vadd.f32 %v7230, %v7302
      %v7327 = vadd.f32 %v7231, %v7303
      %v7328 = vadd.f32 %v7232, %v7304
      %v7329 = vadd.f32 %v7233, %v7305
      %v7330 = vadd.f32 %v7234, %v7306
      %v7331 = vadd.f32 %v7235, %v7307
      %v7356 = vrot.slane %v4483, 4
      %v7357 = vrot.slane %v4501, 4
      %v7358 = vrot.slane %v4519, 4
      %v7359 = vrot.slane %v4537, 4
      %v7360 = vrot.slane %v4555, 4
      %v7361 = vrot.slane %v4573, 4
      %v7362 = vrot.slane %v4591, 4
      %v7363 = vrot.slane %v4609, 4
      %v7364 = vrot.slane %v4627, 4
      %v7365 = vrot.slane %v4645, 4
      %v7366 = vrot.slane %v4663, 4
      %v7367 = vrot.slane %v4681, 4
      %v7368 = vrot.slane %v4699, 4
      %v7369 = vrot.slane %v4717, 4
      %v7370 = vrot.slane %v4735, 4
      %v7371 = vrot.slane %v4753, 4
      %v7372 = vrot.slane %v4771, 4
      %v7373 = vrot.slane %v4789, 4
      %v7374 = vrot.slane %v4807, 4
      %v7375 = vrot.slane %v4825, 4
      %v7376 = vrot.slane %v4843, 4
      %v7377 = vrot.slane %v4861, 4
      %v7378 = vrot.slane %v4879, 4
      %v7379 = vrot.slane %v4897, 4
      %v7404 = vunpack.c.l.bf16 %v7356
      %v7405 = vunpack.c.l.bf16 %v7357
      %v7406 = vunpack.c.l.bf16 %v7358
      %v7407 = vunpack.c.l.bf16 %v7359
      %v7408 = vunpack.c.l.bf16 %v7360
      %v7409 = vunpack.c.l.bf16 %v7361
      %v7410 = vunpack.c.l.bf16 %v7362
      %v7411 = vunpack.c.l.bf16 %v7363
      %v7412 = vunpack.c.l.bf16 %v7364
      %v7413 = vunpack.c.l.bf16 %v7365
      %v7414 = vunpack.c.l.bf16 %v7366
      %v7415 = vunpack.c.l.bf16 %v7367
      %v7416 = vunpack.c.l.bf16 %v7368
      %v7417 = vunpack.c.l.bf16 %v7369
      %v7418 = vunpack.c.l.bf16 %v7370
      %v7419 = vunpack.c.l.bf16 %v7371
      %v7420 = vunpack.c.l.bf16 %v7372
      %v7421 = vunpack.c.l.bf16 %v7373
      %v7422 = vunpack.c.l.bf16 %v7374
      %v7423 = vunpack.c.l.bf16 %v7375
      %v7424 = vunpack.c.l.bf16 %v7376
      %v7425 = vunpack.c.l.bf16 %v7377
      %v7426 = vunpack.c.l.bf16 %v7378
      %v7427 = vunpack.c.l.bf16 %v7379
      %v7452 = vrot.slane %v4491, 4
      %v7453 = vrot.slane %v4509, 4
      %v7454 = vrot.slane %v4527, 4
      %v7455 = vrot.slane %v4545, 4
      %v7456 = vrot.slane %v4563, 4
      %v7457 = vrot.slane %v4581, 4
      %v7458 = vrot.slane %v4599, 4
      %v7459 = vrot.slane %v4617, 4
      %v7460 = vrot.slane %v4635, 4
      %v7461 = vrot.slane %v4653, 4
      %v7462 = vrot.slane %v4671, 4
      %v7463 = vrot.slane %v4689, 4
      %v7464 = vrot.slane %v4707, 4
      %v7465 = vrot.slane %v4725, 4
      %v7466 = vrot.slane %v4743, 4
      %v7467 = vrot.slane %v4761, 4
      %v7468 = vrot.slane %v4779, 4
      %v7469 = vrot.slane %v4797, 4
      %v7470 = vrot.slane %v4815, 4
      %v7471 = vrot.slane %v4833, 4
      %v7472 = vrot.slane %v4851, 4
      %v7473 = vrot.slane %v4869, 4
      %v7474 = vrot.slane %v4887, 4
      %v7475 = vrot.slane %v4905, 4
      %v7500 = vunpack.c.l.bf16 %v7452
      %v7501 = vunpack.c.l.bf16 %v7453
      %v7502 = vunpack.c.l.bf16 %v7454
      %v7503 = vunpack.c.l.bf16 %v7455
      %v7504 = vunpack.c.l.bf16 %v7456
      %v7505 = vunpack.c.l.bf16 %v7457
      %v7506 = vunpack.c.l.bf16 %v7458
      %v7507 = vunpack.c.l.bf16 %v7459
      %v7508 = vunpack.c.l.bf16 %v7460
      %v7509 = vunpack.c.l.bf16 %v7461
      %v7510 = vunpack.c.l.bf16 %v7462
      %v7511 = vunpack.c.l.bf16 %v7463
      %v7512 = vunpack.c.l.bf16 %v7464
      %v7513 = vunpack.c.l.bf16 %v7465
      %v7514 = vunpack.c.l.bf16 %v7466
      %v7515 = vunpack.c.l.bf16 %v7467
      %v7516 = vunpack.c.l.bf16 %v7468
      %v7517 = vunpack.c.l.bf16 %v7469
      %v7518 = vunpack.c.l.bf16 %v7470
      %v7519 = vunpack.c.l.bf16 %v7471
      %v7520 = vunpack.c.l.bf16 %v7472
      %v7521 = vunpack.c.l.bf16 %v7473
      %v7522 = vunpack.c.l.bf16 %v7474
      %v7523 = vunpack.c.l.bf16 %v7475
      %v7524 = vmul.f32 %v7404, %v7500
      %v7525 = vmul.f32 %v7405, %v7501
      %v7526 = vmul.f32 %v7406, %v7502
      %v7527 = vmul.f32 %v7407, %v7503
      %v7528 = vmul.f32 %v7408, %v7504
      %v7529 = vmul.f32 %v7409, %v7505
      %v7530 = vmul.f32 %v7410, %v7506
      %v7531 = vmul.f32 %v7411, %v7507
      %v7532 = vmul.f32 %v7412, %v7508
      %v7533 = vmul.f32 %v7413, %v7509
      %v7534 = vmul.f32 %v7414, %v7510
      %v7535 = vmul.f32 %v7415, %v7511
      %v7536 = vmul.f32 %v7416, %v7512
      %v7537 = vmul.f32 %v7417, %v7513
      %v7538 = vmul.f32 %v7418, %v7514
      %v7539 = vmul.f32 %v7419, %v7515
      %v7540 = vmul.f32 %v7420, %v7516
      %v7541 = vmul.f32 %v7421, %v7517
      %v7542 = vmul.f32 %v7422, %v7518
      %v7543 = vmul.f32 %v7423, %v7519
      %v7544 = vmul.f32 %v7424, %v7520
      %v7545 = vmul.f32 %v7425, %v7521
      %v7546 = vmul.f32 %v7426, %v7522
      %v7547 = vmul.f32 %v7427, %v7523
      %v7548 = vadd.f32 %v7308, %v7524
      %v7549 = vadd.f32 %v7309, %v7525
      %v7550 = vadd.f32 %v7310, %v7526
      %v7551 = vadd.f32 %v7311, %v7527
      %v7552 = vadd.f32 %v7312, %v7528
      %v7553 = vadd.f32 %v7313, %v7529
      %v7554 = vadd.f32 %v7314, %v7530
      %v7555 = vadd.f32 %v7315, %v7531
      %v7556 = vadd.f32 %v7316, %v7532
      %v7557 = vadd.f32 %v7317, %v7533
      %v7558 = vadd.f32 %v7318, %v7534
      %v7559 = vadd.f32 %v7319, %v7535
      %v7560 = vadd.f32 %v7320, %v7536
      %v7561 = vadd.f32 %v7321, %v7537
      %v7562 = vadd.f32 %v7322, %v7538
      %v7563 = vadd.f32 %v7323, %v7539
      %v7564 = vadd.f32 %v7324, %v7540
      %v7565 = vadd.f32 %v7325, %v7541
      %v7566 = vadd.f32 %v7326, %v7542
      %v7567 = vadd.f32 %v7327, %v7543
      %v7568 = vadd.f32 %v7328, %v7544
      %v7569 = vadd.f32 %v7329, %v7545
      %v7570 = vadd.f32 %v7330, %v7546
      %v7571 = vadd.f32 %v7331, %v7547
      %v7572 = vld [vmem:[%s4] sm:$0x1]
      %v7573 = vld [vmem:[%s4 + $0x1] sm:$0x1]
      %v7574 = vperm.slane %v7573, 0
      %7576 = vset.pattern.permute.xlu0 69
      %7577 = vperm.xlu0 %7576, %v228
      %v7578 = vpop.permute.xlu0 %7577
      %7581 = vset.pattern.permute.xlu0 69
      %7582 = vperm.xlu0 %7581, %v229
      %v7583 = vpop.permute.xlu0 %7582
      %7586 = vset.pattern.permute.xlu0 69
      %7587 = vperm.xlu0 %7586, %v230
      %v7588 = vpop.permute.xlu0 %7587
      %7591 = vset.pattern.permute.xlu0 69
      %7592 = vperm.xlu0 %7591, %v231
      %v7593 = vpop.permute.xlu0 %7592
      %7596 = vset.pattern.permute.xlu0 69
      %7597 = vperm.xlu0 %7596, %v232
      %v7598 = vpop.permute.xlu0 %7597
      %7601 = vset.pattern.permute.xlu0 69
      %7602 = vperm.xlu0 %7601, %v233
      %v7603 = vpop.permute.xlu0 %7602
      %7606 = vset.pattern.permute.xlu0 69
      %7607 = vperm.xlu0 %7606, %v234
      %v7608 = vpop.permute.xlu0 %7607
      %7611 = vset.pattern.permute.xlu0 69
      %7612 = vperm.xlu0 %7611, %v235
      %v7613 = vpop.permute.xlu0 %7612
      %7616 = vset.pattern.permute.xlu0 69
      %7617 = vperm.xlu0 %7616, %v236
      %v7618 = vpop.permute.xlu0 %7617
      %7621 = vset.pattern.permute.xlu0 69
      %7622 = vperm.xlu0 %7621, %v237
      %v7623 = vpop.permute.xlu0 %7622
      %7626 = vset.pattern.permute.xlu0 69
      %7627 = vperm.xlu0 %7626, %v238
      %v7628 = vpop.permute.xlu0 %7627
      %7631 = vset.pattern.permute.xlu0 69
      %7632 = vperm.xlu0 %7631, %v239
      %v7633 = vpop.permute.xlu0 %7632
      %7636 = vset.pattern.permute.xlu0 69
      %7637 = vperm.xlu0 %7636, %v240
      %v7638 = vpop.permute.xlu0 %7637
      %7641 = vset.pattern.permute.xlu0 69
      %7642 = vperm.xlu0 %7641, %v241
      %v7643 = vpop.permute.xlu0 %7642
      %7646 = vset.pattern.permute.xlu0 69
      %7647 = vperm.xlu0 %7646, %v242
      %v7648 = vpop.permute.xlu0 %7647
      %7651 = vset.pattern.permute.xlu0 69
      %7652 = vperm.xlu0 %7651, %v243
      %v7653 = vpop.permute.xlu0 %7652
      %7656 = vset.pattern.permute.xlu0 69
      %7657 = vperm.xlu0 %7656, %v244
      %v7658 = vpop.permute.xlu0 %7657
      %7661 = vset.pattern.permute.xlu0 69
      %7662 = vperm.xlu0 %7661, %v245
      %v7663 = vpop.permute.xlu0 %7662
      %7666 = vset.pattern.permute.xlu0 69
      %7667 = vperm.xlu0 %7666, %v246
      %v7668 = vpop.permute.xlu0 %7667
      %7671 = vset.pattern.permute.xlu0 69
      %7672 = vperm.xlu0 %7671, %v247
      %v7673 = vpop.permute.xlu0 %7672
      %7676 = vset.pattern.permute.xlu0 69
      %7677 = vperm.xlu0 %7676, %v248
      %v7678 = vpop.permute.xlu0 %7677
      %7681 = vset.pattern.permute.xlu0 69
      %7682 = vperm.xlu0 %7681, %v249
      %v7683 = vpop.permute.xlu0 %7682
      %7686 = vset.pattern.permute.xlu0 69
      %7687 = vperm.xlu0 %7686, %v250
      %v7688 = vpop.permute.xlu0 %7687
      %7691 = vset.pattern.permute.xlu0 69
      %7692 = vperm.xlu0 %7691, %v251
      %v7693 = vpop.permute.xlu0 %7692
      %v7695 = vmul.f32 %v7574, %v7578
      %v7696 = vmul.f32 %v7574, %v7583
      %v7697 = vmul.f32 %v7574, %v7588
      %v7698 = vmul.f32 %v7574, %v7593
      %v7699 = vmul.f32 %v7574, %v7598
      %v7700 = vmul.f32 %v7574, %v7603
      %v7701 = vmul.f32 %v7574, %v7608
      %v7702 = vmul.f32 %v7574, %v7613
      %v7703 = vmul.f32 %v7574, %v7618
      %v7704 = vmul.f32 %v7574, %v7623
      %v7705 = vmul.f32 %v7574, %v7628
      %v7706 = vmul.f32 %v7574, %v7633
      %v7707 = vmul.f32 %v7574, %v7638
      %v7708 = vmul.f32 %v7574, %v7643
      %v7709 = vmul.f32 %v7574, %v7648
      %v7710 = vmul.f32 %v7574, %v7653
      %v7711 = vmul.f32 %v7574, %v7658
      %v7712 = vmul.f32 %v7574, %v7663
      %v7713 = vmul.f32 %v7574, %v7668
      %v7714 = vmul.f32 %v7574, %v7673
      %v7715 = vmul.f32 %v7574, %v7678
      %v7716 = vmul.f32 %v7574, %v7683
      %v7717 = vmul.f32 %v7574, %v7688
      %v7718 = vmul.f32 %v7574, %v7693
      %v7719 = vperm.slane %v7572, 0
      %v7720 = vadd.f32 %v7719, %v7695
      %v7721 = vadd.f32 %v7719, %v7696
      %v7722 = vadd.f32 %v7719, %v7697
      %v7723 = vadd.f32 %v7719, %v7698
      %v7724 = vadd.f32 %v7719, %v7699
      %v7725 = vadd.f32 %v7719, %v7700
      %v7726 = vadd.f32 %v7719, %v7701
      %v7727 = vadd.f32 %v7719, %v7702
      %v7728 = vadd.f32 %v7719, %v7703
      %v7729 = vadd.f32 %v7719, %v7704
      %v7730 = vadd.f32 %v7719, %v7705
      %v7731 = vadd.f32 %v7719, %v7706
      %v7732 = vadd.f32 %v7719, %v7707
      %v7733 = vadd.f32 %v7719, %v7708
      %v7734 = vadd.f32 %v7719, %v7709
      %v7735 = vadd.f32 %v7719, %v7710
      %v7736 = vadd.f32 %v7719, %v7711
      %v7737 = vadd.f32 %v7719, %v7712
      %v7738 = vadd.f32 %v7719, %v7713
      %v7739 = vadd.f32 %v7719, %v7714
      %v7740 = vadd.f32 %v7719, %v7715
      %v7741 = vadd.f32 %v7719, %v7716
      %v7742 = vadd.f32 %v7719, %v7717
      %v7743 = vadd.f32 %v7719, %v7718
      %v7744 = vmul.f32 %v7548, %v7720
      %v7745 = vmul.f32 %v7549, %v7721
      %v7746 = vmul.f32 %v7550, %v7722
      %v7747 = vmul.f32 %v7551, %v7723
      %v7748 = vmul.f32 %v7552, %v7724
      %v7749 = vmul.f32 %v7553, %v7725
      %v7750 = vmul.f32 %v7554, %v7726
      %v7751 = vmul.f32 %v7555, %v7727
      %v7752 = vmul.f32 %v7556, %v7728
      %v7753 = vmul.f32 %v7557, %v7729
      %v7754 = vmul.f32 %v7558, %v7730
      %v7755 = vmul.f32 %v7559, %v7731
      %v7756 = vmul.f32 %v7560, %v7732
      %v7757 = vmul.f32 %v7561, %v7733
      %v7758 = vmul.f32 %v7562, %v7734
      %v7759 = vmul.f32 %v7563, %v7735
      %v7760 = vmul.f32 %v7564, %v7736
      %v7761 = vmul.f32 %v7565, %v7737
      %v7762 = vmul.f32 %v7566, %v7738
      %v7763 = vmul.f32 %v7567, %v7739
      %v7764 = vmul.f32 %v7568, %v7740
      %v7765 = vmul.f32 %v7569, %v7741
      %v7766 = vmul.f32 %v7570, %v7742
      %v7767 = vmul.f32 %v7571, %v7743
      %v7768 = vpack.c.bf16 %v7745, %v7744
      %v7769 = vpack.c.bf16 %v7747, %v7746
      %v7770 = vpack.c.bf16 %v7749, %v7748
      %v7771 = vpack.c.bf16 %v7751, %v7750
      %v7772 = vpack.c.bf16 %v7753, %v7752
      %v7773 = vpack.c.bf16 %v7755, %v7754
      %v7774 = vpack.c.bf16 %v7757, %v7756
      %v7775 = vpack.c.bf16 %v7759, %v7758
      %v7776 = vpack.c.bf16 %v7761, %v7760
      %v7777 = vpack.c.bf16 %v7763, %v7762
      %v7778 = vpack.c.bf16 %v7765, %v7764
      %v7779 = vpack.c.bf16 %v7767, %v7766
      %v7780 = vld [vmem:[%s2] sm:$0xff]
      %v7781 = vld [vmem:[%s2 + $0x8] sm:$0xff]
      %v7782 = vld [vmem:[%s2 + $0x10] sm:$0xff]
      %v7783 = vld [vmem:[%s2 + $0x18] sm:$0xff]
      %v7784 = vld [vmem:[%s2 + $0x20] sm:$0xff]
      %v7785 = vld [vmem:[%s2 + $0x28] sm:$0xff]
      %v7786 = vld [vmem:[%s2 + $0x30] sm:$0xff]
      %v7787 = vld [vmem:[%s2 + $0x38] sm:$0xff]
      %v7788 = vld [vmem:[%s2 + $0x40] sm:$0xff]
      %v7789 = vld [vmem:[%s2 + $0x48] sm:$0xff]
      %v7790 = vld [vmem:[%s2 + $0x50] sm:$0xff]
      %v7791 = vld [vmem:[%s2 + $0x58] sm:$0xff]
      %v7792 = vld [vmem:[%s2 + $0x60] sm:$0xff]
      %v7793 = vld [vmem:[%s2 + $0x68] sm:$0xff]
      %v7794 = vld [vmem:[%s2 + $0x70] sm:$0xff]
      %v7795 = vld [vmem:[%s2 + $0x78] sm:$0xff]
      %v7796 = vld [vmem:[%s2 + $0x80] sm:$0xff]
      %v7797 = vld [vmem:[%s2 + $0x88] sm:$0xff]
      %v7798 = vld [vmem:[%s2 + $0x90] sm:$0xff]
      %v7799 = vld [vmem:[%s2 + $0x98] sm:$0xff]
      %v7800 = vld [vmem:[%s2 + $0xa0] sm:$0xff]
      %v7801 = vld [vmem:[%s2 + $0xa8] sm:$0xff]
      %v7802 = vld [vmem:[%s2 + $0xb0] sm:$0xff]
      %v7803 = vld [vmem:[%s2 + $0xb8] sm:$0xff]
      %v7804 = vld [vmem:[%s2 + $0xc0] sm:$0xff]
      %v7805 = vld [vmem:[%s2 + $0xc8] sm:$0xff]
      %v7806 = vld [vmem:[%s2 + $0xd0] sm:$0xff]
      %v7807 = vld [vmem:[%s2 + $0xd8] sm:$0xff]
      %v7808 = vld [vmem:[%s2 + $0xe0] sm:$0xff]
      %v7809 = vld [vmem:[%s2 + $0xe8] sm:$0xff]
      %v7810 = vld [vmem:[%s2 + $0xf0] sm:$0xff]
      %v7811 = vld [vmem:[%s2 + $0xf8] sm:$0xff]
      %v7812 = vunpack.c.l.bf16 %v4492
      %v7813 = vunpack.c.h.bf16 %v4492
      %v7814 = vunpack.c.l.bf16 %v4493
      %v7815 = vunpack.c.h.bf16 %v4493
      %v7816 = vunpack.c.l.bf16 %v4510
      %v7817 = vunpack.c.h.bf16 %v4510
      %v7818 = vunpack.c.l.bf16 %v4511
      %v7819 = vunpack.c.h.bf16 %v4511
      %v7820 = vunpack.c.l.bf16 %v4528
      %v7821 = vunpack.c.h.bf16 %v4528
      %v7822 = vunpack.c.l.bf16 %v4529
      %v7823 = vunpack.c.h.bf16 %v4529
      %v7824 = vunpack.c.l.bf16 %v4546
      %v7825 = vunpack.c.h.bf16 %v4546
      %v7826 = vunpack.c.l.bf16 %v4547
      %v7827 = vunpack.c.h.bf16 %v4547
      %v7828 = vunpack.c.l.bf16 %v4564
      %v7829 = vunpack.c.h.bf16 %v4564
      %v7830 = vunpack.c.l.bf16 %v4565
      %v7831 = vunpack.c.h.bf16 %v4565
      %v7832 = vunpack.c.l.bf16 %v4582
      %v7833 = vunpack.c.h.bf16 %v4582
      %v7834 = vunpack.c.l.bf16 %v4583
      %v7835 = vunpack.c.h.bf16 %v4583
      %v7836 = vunpack.c.l.bf16 %v4600
      %v7837 = vunpack.c.h.bf16 %v4600
      %v7838 = vunpack.c.l.bf16 %v4601
      %v7839 = vunpack.c.h.bf16 %v4601
      %v7840 = vunpack.c.l.bf16 %v4618
      %v7841 = vunpack.c.h.bf16 %v4618
      %v7842 = vunpack.c.l.bf16 %v4619
      %v7843 = vunpack.c.h.bf16 %v4619
      %v7844 = vunpack.c.l.bf16 %v4636
      %v7845 = vunpack.c.h.bf16 %v4636
      %v7846 = vunpack.c.l.bf16 %v4637
      %v7847 = vunpack.c.h.bf16 %v4637
      %v7848 = vunpack.c.l.bf16 %v4654
      %v7849 = vunpack.c.h.bf16 %v4654
      %v7850 = vunpack.c.l.bf16 %v4655
      %v7851 = vunpack.c.h.bf16 %v4655
      %v7852 = vunpack.c.l.bf16 %v4672
      %v7853 = vunpack.c.h.bf16 %v4672
      %v7854 = vunpack.c.l.bf16 %v4673
      %v7855 = vunpack.c.h.bf16 %v4673
      %v7856 = vunpack.c.l.bf16 %v4690
      %v7857 = vunpack.c.h.bf16 %v4690
      %v7858 = vunpack.c.l.bf16 %v4691
      %v7859 = vunpack.c.h.bf16 %v4691
      %v7860 = vunpack.c.l.bf16 %v4708
      %v7861 = vunpack.c.h.bf16 %v4708
      %v7862 = vunpack.c.l.bf16 %v4709
      %v7863 = vunpack.c.h.bf16 %v4709
      %v7864 = vunpack.c.l.bf16 %v4726
      %v7865 = vunpack.c.h.bf16 %v4726
      %v7866 = vunpack.c.l.bf16 %v4727
      %v7867 = vunpack.c.h.bf16 %v4727
      %v7868 = vunpack.c.l.bf16 %v4744
      %v7869 = vunpack.c.h.bf16 %v4744
      %v7870 = vunpack.c.l.bf16 %v4745
      %v7871 = vunpack.c.h.bf16 %v4745
      %v7872 = vunpack.c.l.bf16 %v4762
      %v7873 = vunpack.c.h.bf16 %v4762
      %v7874 = vunpack.c.l.bf16 %v4763
      %v7875 = vunpack.c.h.bf16 %v4763
      %v7876 = vunpack.c.l.bf16 %v4780
      %v7877 = vunpack.c.h.bf16 %v4780
      %v7878 = vunpack.c.l.bf16 %v4781
      %v7879 = vunpack.c.h.bf16 %v4781
      %v7880 = vunpack.c.l.bf16 %v4798
      %v7881 = vunpack.c.h.bf16 %v4798
      %v7882 = vunpack.c.l.bf16 %v4799
      %v7883 = vunpack.c.h.bf16 %v4799
      %v7884 = vunpack.c.l.bf16 %v4816
      %v7885 = vunpack.c.h.bf16 %v4816
      %v7886 = vunpack.c.l.bf16 %v4817
      %v7887 = vunpack.c.h.bf16 %v4817
      %v7888 = vunpack.c.l.bf16 %v4834
      %v7889 = vunpack.c.h.bf16 %v4834
      %v7890 = vunpack.c.l.bf16 %v4835
      %v7891 = vunpack.c.h.bf16 %v4835
      %v7892 = vunpack.c.l.bf16 %v4852
      %v7893 = vunpack.c.h.bf16 %v4852
      %v7894 = vunpack.c.l.bf16 %v4853
      %v7895 = vunpack.c.h.bf16 %v4853
      %v7896 = vunpack.c.l.bf16 %v4870
      %v7897 = vunpack.c.h.bf16 %v4870
      %v7898 = vunpack.c.l.bf16 %v4871
      %v7899 = vunpack.c.h.bf16 %v4871
      %v7900 = vunpack.c.l.bf16 %v4888
      %v7901 = vunpack.c.h.bf16 %v4888
      %v7902 = vunpack.c.l.bf16 %v4889
      %v7903 = vunpack.c.h.bf16 %v4889
      %v7904 = vunpack.c.l.bf16 %v4906
      %v7905 = vunpack.c.h.bf16 %v4906
      %v7906 = vunpack.c.l.bf16 %v4907
      %v7907 = vunpack.c.h.bf16 %v4907
      %v7940 = vunpack.c.l.b16 %v7780
      %v7941 = vunpack.c.h.b16 %v7780
      %v7942 = vunpack.c.l.b16 %v7781
      %v7943 = vunpack.c.h.b16 %v7781
      %v7944 = vunpack.c.l.b16 %v7782
      %v7945 = vunpack.c.h.b16 %v7782
      %v7946 = vunpack.c.l.b16 %v7783
      %v7947 = vunpack.c.h.b16 %v7783
      %v7948 = vunpack.c.l.b16 %v7784
      %v7949 = vunpack.c.h.b16 %v7784
      %v7950 = vunpack.c.l.b16 %v7785
      %v7951 = vunpack.c.h.b16 %v7785
      %v7952 = vunpack.c.l.b16 %v7786
      %v7953 = vunpack.c.h.b16 %v7786
      %v7954 = vunpack.c.l.b16 %v7787
      %v7955 = vunpack.c.h.b16 %v7787
      %v7956 = vunpack.c.l.b16 %v7788
      %v7957 = vunpack.c.h.b16 %v7788
      %v7958 = vunpack.c.l.b16 %v7789
      %v7959 = vunpack.c.h.b16 %v7789
      %v7960 = vunpack.c.l.b16 %v7790
      %v7961 = vunpack.c.h.b16 %v7790
      %v7962 = vunpack.c.l.b16 %v7791
      %v7963 = vunpack.c.h.b16 %v7791
      %v7964 = vunpack.c.l.b16 %v7792
      %v7965 = vunpack.c.h.b16 %v7792
      %v7966 = vunpack.c.l.b16 %v7793
      %v7967 = vunpack.c.h.b16 %v7793
      %v7968 = vunpack.c.l.b16 %v7794
      %v7969 = vunpack.c.h.b16 %v7794
      %v7970 = vunpack.c.l.b16 %v7795
      %v7971 = vunpack.c.h.b16 %v7795
      %v7972 = vunpack.c.l.b16 %v7796
      %v7973 = vunpack.c.h.b16 %v7796
      %v7974 = vunpack.c.l.b16 %v7797
      %v7975 = vunpack.c.h.b16 %v7797
      %v7976 = vunpack.c.l.b16 %v7798
      %v7977 = vunpack.c.h.b16 %v7798
      %v7978 = vunpack.c.l.b16 %v7799
      %v7979 = vunpack.c.h.b16 %v7799
      %v7980 = vunpack.c.l.b16 %v7800
      %v7981 = vunpack.c.h.b16 %v7800
      %v7982 = vunpack.c.l.b16 %v7801
      %v7983 = vunpack.c.h.b16 %v7801
      %v7984 = vunpack.c.l.b16 %v7802
      %v7985 = vunpack.c.h.b16 %v7802
      %v7986 = vunpack.c.l.b16 %v7803
      %v7987 = vunpack.c.h.b16 %v7803
      %v7988 = vunpack.c.l.b16 %v7804
      %v7989 = vunpack.c.h.b16 %v7804
      %v7990 = vunpack.c.l.b16 %v7805
      %v7991 = vunpack.c.h.b16 %v7805
      %v7992 = vunpack.c.l.b16 %v7806
      %v7993 = vunpack.c.h.b16 %v7806
      %v7994 = vunpack.c.l.b16 %v7807
      %v7995 = vunpack.c.h.b16 %v7807
      %v7996 = vunpack.c.l.b16 %v7808
      %v7997 = vunpack.c.h.b16 %v7808
      %v7998 = vunpack.c.l.b16 %v7809
      %v7999 = vunpack.c.h.b16 %v7809
      %v8000 = vunpack.c.l.b16 %v7810
      %v8001 = vunpack.c.h.b16 %v7810
      %v8002 = vunpack.c.l.b16 %v7811
      %v8003 = vunpack.c.h.b16 %v7811
      %v8004 = vpack.c.b16 %v7944, %v7940
      %v8005 = vpack.c.b16 %v7945, %v7941
      %v8006 = vpack.c.b16 %v7946, %v7942
      %v8007 = vpack.c.b16 %v7947, %v7943
      %v8008 = vpack.c.b16 %v7952, %v7948
      %v8009 = vpack.c.b16 %v7953, %v7949
      %v8010 = vpack.c.b16 %v7954, %v7950
      %v8011 = vpack.c.b16 %v7955, %v7951
      %v8012 = vpack.c.b16 %v7960, %v7956
      %v8013 = vpack.c.b16 %v7961, %v7957
      %v8014 = vpack.c.b16 %v7962, %v7958
      %v8015 = vpack.c.b16 %v7963, %v7959
      %v8016 = vpack.c.b16 %v7968, %v7964
      %v8017 = vpack.c.b16 %v7969, %v7965
      %v8018 = vpack.c.b16 %v7970, %v7966
      %v8019 = vpack.c.b16 %v7971, %v7967
      %v8020 = vpack.c.b16 %v7976, %v7972
      %v8021 = vpack.c.b16 %v7977, %v7973
      %v8022 = vpack.c.b16 %v7978, %v7974
      %v8023 = vpack.c.b16 %v7979, %v7975
      %v8024 = vpack.c.b16 %v7984, %v7980
      %v8025 = vpack.c.b16 %v7985, %v7981
      %v8026 = vpack.c.b16 %v7986, %v7982
      %v8027 = vpack.c.b16 %v7987, %v7983
      %v8028 = vpack.c.b16 %v7992, %v7988
      %v8029 = vpack.c.b16 %v7993, %v7989
      %v8030 = vpack.c.b16 %v7994, %v7990
      %v8031 = vpack.c.b16 %v7995, %v7991
      %v8032 = vpack.c.b16 %v8000, %v7996
      %v8033 = vpack.c.b16 %v8001, %v7997
      %v8034 = vpack.c.b16 %v8002, %v7998
      %v8035 = vpack.c.b16 %v8003, %v7999
      %8068 = vmatpush.bf16.msra.mxu0 %v8032
      %8069 = vmatpush.bf16.msra.mxu0 %v8028
      %8070 = vmatpush.bf16.msra.mxu0 %v8024
      %8071 = vmatpush.bf16.msra.mxu0 %v8020
      %8072 = vmatpush.bf16.msra.mxu0 %v8016
      %8073 = vmatpush.bf16.msra.mxu0 %v8012
      %8074 = vmatpush.bf16.msra.mxu0 %v8008
      %8075 = vmatpush.bf16.msra.mxu0 %v8004
      %8076 = vmatmul.bf16.gmra.mxu0 %v7768
      %v8077 = vpop.f32.mrf.mxu0
      %v8078 = vadd.f32 %v7812, %v8077
      %v8079 = vpop.f32.mrf.mxu0
      %v8080 = vadd.f32 %v7816, %v8079
      %8081 = vmatmul.bf16.gmra.mxu0 %v7769
      %v8082 = vpop.f32.mrf.mxu0
      %v8083 = vadd.f32 %v7820, %v8082
      %v8084 = vpop.f32.mrf.mxu0
      %v8085 = vadd.f32 %v7824, %v8084
      %8086 = vmatmul.bf16.gmra.mxu0 %v7770
      %v8087 = vpop.f32.mrf.mxu0
      %v8088 = vadd.f32 %v7828, %v8087
      %v8089 = vpop.f32.mrf.mxu0
      %v8090 = vadd.f32 %v7832, %v8089
      %8091 = vmatmul.bf16.gmra.mxu0 %v7771
      %v8092 = vpop.f32.mrf.mxu0
      %v8093 = vadd.f32 %v7836, %v8092
      %v8094 = vpop.f32.mrf.mxu0
      %v8095 = vadd.f32 %v7840, %v8094
      %8096 = vmatmul.bf16.gmra.mxu0 %v7772
      %v8097 = vpop.f32.mrf.mxu0
      %v8098 = vadd.f32 %v7844, %v8097
      %v8099 = vpop.f32.mrf.mxu0
      %v8100 = vadd.f32 %v7848, %v8099
      %8101 = vmatmul.bf16.gmra.mxu0 %v7773
      %v8102 = vpop.f32.mrf.mxu0
      %v8103 = vadd.f32 %v7852, %v8102
      %v8104 = vpop.f32.mrf.mxu0
      %v8105 = vadd.f32 %v7856, %v8104
      %8106 = vmatmul.bf16.gmra.mxu0 %v7774
      %v8107 = vpop.f32.mrf.mxu0
      %v8108 = vadd.f32 %v7860, %v8107
      %v8109 = vpop.f32.mrf.mxu0
      %v8110 = vadd.f32 %v7864, %v8109
      %8111 = vmatmul.bf16.gmra.mxu0 %v7775
      %v8112 = vpop.f32.mrf.mxu0
      %v8113 = vadd.f32 %v7868, %v8112
      %v8114 = vpop.f32.mrf.mxu0
      %v8115 = vadd.f32 %v7872, %v8114
      %8116 = vmatmul.bf16.gmra.mxu0 %v7776
      %v8117 = vpop.f32.mrf.mxu0
      %v8118 = vadd.f32 %v7876, %v8117
      %v8119 = vpop.f32.mrf.mxu0
      %v8120 = vadd.f32 %v7880, %v8119
      %8121 = vmatmul.bf16.gmra.mxu0 %v7777
      %v8122 = vpop.f32.mrf.mxu0
      %v8123 = vadd.f32 %v7884, %v8122
      %v8124 = vpop.f32.mrf.mxu0
      %v8125 = vadd.f32 %v7888, %v8124
      %8126 = vmatmul.bf16.gmra.mxu0 %v7778
      %v8127 = vpop.f32.mrf.mxu0
      %v8128 = vadd.f32 %v7892, %v8127
      %v8129 = vpop.f32.mrf.mxu0
      %v8130 = vadd.f32 %v7896, %v8129
      %8131 = vmatmul.bf16.gmra.mxu0 %v7779
      %v8132 = vpop.f32.mrf.mxu0
      %v8133 = vadd.f32 %v7900, %v8132
      %v8134 = vpop.f32.mrf.mxu0
      %v8135 = vadd.f32 %v7904, %v8134
      %8136 = vdwg.mxu0
      %8137 = vmatpush.bf16.msra.mxu0 %v8033
      %8138 = vmatpush.bf16.msra.mxu0 %v8029
      %8139 = vmatpush.bf16.msra.mxu0 %v8025
      %8140 = vmatpush.bf16.msra.mxu0 %v8021
      %8141 = vmatpush.bf16.msra.mxu0 %v8017
      %8142 = vmatpush.bf16.msra.mxu0 %v8013
      %8143 = vmatpush.bf16.msra.mxu0 %v8009
      %8144 = vmatpush.bf16.msra.mxu0 %v8005
      %8145 = vmatmul.bf16.gmra.mxu0 %v7768
      %v8146 = vpop.f32.mrf.mxu0
      %v8147 = vadd.f32 %v7813, %v8146
      %v8148 = vpop.f32.mrf.mxu0
      %v8149 = vadd.f32 %v7817, %v8148
      %8150 = vmatmul.bf16.gmra.mxu0 %v7769
      %v8151 = vpop.f32.mrf.mxu0
      %v8152 = vadd.f32 %v7821, %v8151
      %v8153 = vpop.f32.mrf.mxu0
      %v8154 = vadd.f32 %v7825, %v8153
      %8155 = vmatmul.bf16.gmra.mxu0 %v7770
      %v8156 = vpop.f32.mrf.mxu0
      %v8157 = vadd.f32 %v7829, %v8156
      %v8158 = vpop.f32.mrf.mxu0
      %v8159 = vadd.f32 %v7833, %v8158
      %8160 = vmatmul.bf16.gmra.mxu0 %v7771
      %v8161 = vpop.f32.mrf.mxu0
      %v8162 = vadd.f32 %v7837, %v8161
      %v8163 = vpop.f32.mrf.mxu0
      %v8164 = vadd.f32 %v7841, %v8163
      %8165 = vmatmul.bf16.gmra.mxu0 %v7772
      %v8166 = vpop.f32.mrf.mxu0
      %v8167 = vadd.f32 %v7845, %v8166
      %v8168 = vpop.f32.mrf.mxu0
      %v8169 = vadd.f32 %v7849, %v8168
      %8170 = vmatmul.bf16.gmra.mxu0 %v7773
      %v8171 = vpop.f32.mrf.mxu0
      %v8172 = vadd.f32 %v7853, %v8171
      %v8173 = vpop.f32.mrf.mxu0
      %v8174 = vadd.f32 %v7857, %v8173
      %8175 = vmatmul.bf16.gmra.mxu0 %v7774
      %v8176 = vpop.f32.mrf.mxu0
      %v8177 = vadd.f32 %v7861, %v8176
      %v8178 = vpop.f32.mrf.mxu0
      %v8179 = vadd.f32 %v7865, %v8178
      %8180 = vmatmul.bf16.gmra.mxu0 %v7775
      %v8181 = vpop.f32.mrf.mxu0
      %v8182 = vadd.f32 %v7869, %v8181
      %v8183 = vpop.f32.mrf.mxu0
      %v8184 = vadd.f32 %v7873, %v8183
      %8185 = vmatmul.bf16.gmra.mxu0 %v7776
      %v8186 = vpop.f32.mrf.mxu0
      %v8187 = vadd.f32 %v7877, %v8186
      %v8188 = vpop.f32.mrf.mxu0
      %v8189 = vadd.f32 %v7881, %v8188
      %8190 = vmatmul.bf16.gmra.mxu0 %v7777
      %v8191 = vpop.f32.mrf.mxu0
      %v8192 = vadd.f32 %v7885, %v8191
      %v8193 = vpop.f32.mrf.mxu0
      %v8194 = vadd.f32 %v7889, %v8193
      %8195 = vmatmul.bf16.gmra.mxu0 %v7778
      %v8196 = vpop.f32.mrf.mxu0
      %v8197 = vadd.f32 %v7893, %v8196
      %v8198 = vpop.f32.mrf.mxu0
      %v8199 = vadd.f32 %v7897, %v8198
      %8200 = vmatmul.bf16.gmra.mxu0 %v7779
      %v8201 = vpop.f32.mrf.mxu0
      %v8202 = vadd.f32 %v7901, %v8201
      %v8203 = vpop.f32.mrf.mxu0
      %v8204 = vadd.f32 %v7905, %v8203
      %8205 = vdwg.mxu0
      %8206 = vmatpush.bf16.msra.mxu0 %v8034
      %8207 = vmatpush.bf16.msra.mxu0 %v8030
      %8208 = vmatpush.bf16.msra.mxu0 %v8026
      %8209 = vmatpush.bf16.msra.mxu0 %v8022
      %8210 = vmatpush.bf16.msra.mxu0 %v8018
      %8211 = vmatpush.bf16.msra.mxu0 %v8014
      %8212 = vmatpush.bf16.msra.mxu0 %v8010
      %8213 = vmatpush.bf16.msra.mxu0 %v8006
      %8214 = vmatmul.bf16.gmra.mxu0 %v7768
      %v8215 = vpop.f32.mrf.mxu0
      %v8216 = vadd.f32 %v7814, %v8215
      %v8217 = vpop.f32.mrf.mxu0
      %v8218 = vadd.f32 %v7818, %v8217
      %8219 = vmatmul.bf16.gmra.mxu0 %v7769
      %v8220 = vpop.f32.mrf.mxu0
      %v8221 = vadd.f32 %v7822, %v8220
      %v8222 = vpop.f32.mrf.mxu0
      %v8223 = vadd.f32 %v7826, %v8222
      %8224 = vmatmul.bf16.gmra.mxu0 %v7770
      %v8225 = vpop.f32.mrf.mxu0
      %v8226 = vadd.f32 %v7830, %v8225
      %v8227 = vpop.f32.mrf.mxu0
      %v8228 = vadd.f32 %v7834, %v8227
      %8229 = vmatmul.bf16.gmra.mxu0 %v7771
      %v8230 = vpop.f32.mrf.mxu0
      %v8231 = vadd.f32 %v7838, %v8230
      %v8232 = vpop.f32.mrf.mxu0
      %v8233 = vadd.f32 %v7842, %v8232
      %8234 = vmatmul.bf16.gmra.mxu0 %v7772
      %v8235 = vpop.f32.mrf.mxu0
      %v8236 = vadd.f32 %v7846, %v8235
      %v8237 = vpop.f32.mrf.mxu0
      %v8238 = vadd.f32 %v7850, %v8237
      %8239 = vmatmul.bf16.gmra.mxu0 %v7773
      %v8240 = vpop.f32.mrf.mxu0
      %v8241 = vadd.f32 %v7854, %v8240
      %v8242 = vpop.f32.mrf.mxu0
      %v8243 = vadd.f32 %v7858, %v8242
      %8244 = vmatmul.bf16.gmra.mxu0 %v7774
      %v8245 = vpop.f32.mrf.mxu0
      %v8246 = vadd.f32 %v7862, %v8245
      %v8247 = vpop.f32.mrf.mxu0
      %v8248 = vadd.f32 %v7866, %v8247
      %8249 = vmatmul.bf16.gmra.mxu0 %v7775
      %v8250 = vpop.f32.mrf.mxu0
      %v8251 = vadd.f32 %v7870, %v8250
      %v8252 = vpop.f32.mrf.mxu0
      %v8253 = vadd.f32 %v7874, %v8252
      %8254 = vmatmul.bf16.gmra.mxu0 %v7776
      %v8255 = vpop.f32.mrf.mxu0
      %v8256 = vadd.f32 %v7878, %v8255
      %v8257 = vpop.f32.mrf.mxu0
      %v8258 = vadd.f32 %v7882, %v8257
      %8259 = vmatmul.bf16.gmra.mxu0 %v7777
      %v8260 = vpop.f32.mrf.mxu0
      %v8261 = vadd.f32 %v7886, %v8260
      %v8262 = vpop.f32.mrf.mxu0
      %v8263 = vadd.f32 %v7890, %v8262
      %8264 = vmatmul.bf16.gmra.mxu0 %v7778
      %v8265 = vpop.f32.mrf.mxu0
      %v8266 = vadd.f32 %v7894, %v8265
      %v8267 = vpop.f32.mrf.mxu0
      %v8268 = vadd.f32 %v7898, %v8267
      %8269 = vmatmul.bf16.gmra.mxu0 %v7779
      %v8270 = vpop.f32.mrf.mxu0
      %v8271 = vadd.f32 %v7902, %v8270
      %v8272 = vpop.f32.mrf.mxu0
      %v8273 = vadd.f32 %v7906, %v8272
      %8274 = vdwg.mxu0
      %8275 = vmatpush.bf16.msra.mxu0 %v8035
      %8276 = vmatpush.bf16.msra.mxu0 %v8031
      %8277 = vmatpush.bf16.msra.mxu0 %v8027
      %8278 = vmatpush.bf16.msra.mxu0 %v8023
      %8279 = vmatpush.bf16.msra.mxu0 %v8019
      %8280 = vmatpush.bf16.msra.mxu0 %v8015
      %8281 = vmatpush.bf16.msra.mxu0 %v8011
      %8282 = vmatpush.bf16.msra.mxu0 %v8007
      %8283 = vmatmul.bf16.gmra.mxu0 %v7768
      %v8284 = vpop.f32.mrf.mxu0
      %v8285 = vadd.f32 %v7815, %v8284
      %v8286 = vpop.f32.mrf.mxu0
      %v8287 = vadd.f32 %v7819, %v8286
      %8288 = vmatmul.bf16.gmra.mxu0 %v7769
      %v8289 = vpop.f32.mrf.mxu0
      %v8290 = vadd.f32 %v7823, %v8289
      %v8291 = vpop.f32.mrf.mxu0
      %v8292 = vadd.f32 %v7827, %v8291
      %8293 = vmatmul.bf16.gmra.mxu0 %v7770
      %v8294 = vpop.f32.mrf.mxu0
      %v8295 = vadd.f32 %v7831, %v8294
      %v8296 = vpop.f32.mrf.mxu0
      %v8297 = vadd.f32 %v7835, %v8296
      %8298 = vmatmul.bf16.gmra.mxu0 %v7771
      %v8299 = vpop.f32.mrf.mxu0
      %v8300 = vadd.f32 %v7839, %v8299
      %v8301 = vpop.f32.mrf.mxu0
      %v8302 = vadd.f32 %v7843, %v8301
      %8303 = vmatmul.bf16.gmra.mxu0 %v7772
      %v8304 = vpop.f32.mrf.mxu0
      %v8305 = vadd.f32 %v7847, %v8304
      %v8306 = vpop.f32.mrf.mxu0
      %v8307 = vadd.f32 %v7851, %v8306
      %8308 = vmatmul.bf16.gmra.mxu0 %v7773
      %v8309 = vpop.f32.mrf.mxu0
      %v8310 = vadd.f32 %v7855, %v8309
      %v8311 = vpop.f32.mrf.mxu0
      %v8312 = vadd.f32 %v7859, %v8311
      %8313 = vmatmul.bf16.gmra.mxu0 %v7774
      %v8314 = vpop.f32.mrf.mxu0
      %v8315 = vadd.f32 %v7863, %v8314
      %v8316 = vpop.f32.mrf.mxu0
      %v8317 = vadd.f32 %v7867, %v8316
      %8318 = vmatmul.bf16.gmra.mxu0 %v7775
      %v8319 = vpop.f32.mrf.mxu0
      %v8320 = vadd.f32 %v7871, %v8319
      %v8321 = vpop.f32.mrf.mxu0
      %v8322 = vadd.f32 %v7875, %v8321
      %8323 = vmatmul.bf16.gmra.mxu0 %v7776
      %v8324 = vpop.f32.mrf.mxu0
      %v8325 = vadd.f32 %v7879, %v8324
      %v8326 = vpop.f32.mrf.mxu0
      %v8327 = vadd.f32 %v7883, %v8326
      %8328 = vmatmul.bf16.gmra.mxu0 %v7777
      %v8329 = vpop.f32.mrf.mxu0
      %v8330 = vadd.f32 %v7887, %v8329
      %v8331 = vpop.f32.mrf.mxu0
      %v8332 = vadd.f32 %v7891, %v8331
      %8333 = vmatmul.bf16.gmra.mxu0 %v7778
      %v8334 = vpop.f32.mrf.mxu0
      %v8335 = vadd.f32 %v7895, %v8334
      %v8336 = vpop.f32.mrf.mxu0
      %v8337 = vadd.f32 %v7899, %v8336
      %8338 = vmatmul.bf16.gmra.mxu0 %v7779
      %v8339 = vpop.f32.mrf.mxu0
      %v8340 = vadd.f32 %v7903, %v8339
      %v8341 = vpop.f32.mrf.mxu0
      %v8342 = vadd.f32 %v7907, %v8341
      %8343 = vdwg.mxu0
      %v8344 = vmul.f32 %v8216, %v8216
      %v8345 = vmul.f32 %v8285, %v8285
      %v8346 = vmul.f32 %v8218, %v8218
      %v8347 = vmul.f32 %v8287, %v8287
      %v8348 = vmul.f32 %v8221, %v8221
      %v8349 = vmul.f32 %v8290, %v8290
      %v8350 = vmul.f32 %v8223, %v8223
      %v8351 = vmul.f32 %v8292, %v8292
      %v8352 = vmul.f32 %v8226, %v8226
      %v8353 = vmul.f32 %v8295, %v8295
      %v8354 = vmul.f32 %v8228, %v8228
      %v8355 = vmul.f32 %v8297, %v8297
      %v8356 = vmul.f32 %v8231, %v8231
      %v8357 = vmul.f32 %v8300, %v8300
      %v8358 = vmul.f32 %v8233, %v8233
      %v8359 = vmul.f32 %v8302, %v8302
      %v8360 = vmul.f32 %v8236, %v8236
      %v8361 = vmul.f32 %v8305, %v8305
      %v8362 = vmul.f32 %v8238, %v8238
      %v8363 = vmul.f32 %v8307, %v8307
      %v8364 = vmul.f32 %v8241, %v8241
      %v8365 = vmul.f32 %v8310, %v8310
      %v8366 = vmul.f32 %v8243, %v8243
      %v8367 = vmul.f32 %v8312, %v8312
      %v8368 = vmul.f32 %v8246, %v8246
      %v8369 = vmul.f32 %v8315, %v8315
      %v8370 = vmul.f32 %v8248, %v8248
      %v8371 = vmul.f32 %v8317, %v8317
      %v8372 = vmul.f32 %v8251, %v8251
      %v8373 = vmul.f32 %v8320, %v8320
      %v8374 = vmul.f32 %v8253, %v8253
      %v8375 = vmul.f32 %v8322, %v8322
      %v8376 = vmul.f32 %v8256, %v8256
      %v8377 = vmul.f32 %v8325, %v8325
      %v8378 = vmul.f32 %v8258, %v8258
      %v8379 = vmul.f32 %v8327, %v8327
      %v8380 = vmul.f32 %v8261, %v8261
      %v8381 = vmul.f32 %v8330, %v8330
      %v8382 = vmul.f32 %v8263, %v8263
      %v8383 = vmul.f32 %v8332, %v8332
      %v8384 = vmul.f32 %v8266, %v8266
      %v8385 = vmul.f32 %v8335, %v8335
      %v8386 = vmul.f32 %v8268, %v8268
      %v8387 = vmul.f32 %v8337, %v8337
      %v8388 = vmul.f32 %v8271, %v8271
      %v8389 = vmul.f32 %v8340, %v8340
      %v8390 = vmul.f32 %v8273, %v8273
      %v8391 = vmul.f32 %v8342, %v8342
      %v8392 = vmul.f32 %v8216, %v8344
      %v8393 = vmul.f32 %v8285, %v8345
      %v8394 = vmul.f32 %v8218, %v8346
      %v8395 = vmul.f32 %v8287, %v8347
      %v8396 = vmul.f32 %v8221, %v8348
      %v8397 = vmul.f32 %v8290, %v8349
      %v8398 = vmul.f32 %v8223, %v8350
      %v8399 = vmul.f32 %v8292, %v8351
      %v8400 = vmul.f32 %v8226, %v8352
      %v8401 = vmul.f32 %v8295, %v8353
      %v8402 = vmul.f32 %v8228, %v8354
      %v8403 = vmul.f32 %v8297, %v8355
      %v8404 = vmul.f32 %v8231, %v8356
      %v8405 = vmul.f32 %v8300, %v8357
      %v8406 = vmul.f32 %v8233, %v8358
      %v8407 = vmul.f32 %v8302, %v8359
      %v8408 = vmul.f32 %v8236, %v8360
      %v8409 = vmul.f32 %v8305, %v8361
      %v8410 = vmul.f32 %v8238, %v8362
      %v8411 = vmul.f32 %v8307, %v8363
      %v8412 = vmul.f32 %v8241, %v8364
      %v8413 = vmul.f32 %v8310, %v8365
      %v8414 = vmul.f32 %v8243, %v8366
      %v8415 = vmul.f32 %v8312, %v8367
      %v8416 = vmul.f32 %v8246, %v8368
      %v8417 = vmul.f32 %v8315, %v8369
      %v8418 = vmul.f32 %v8248, %v8370
      %v8419 = vmul.f32 %v8317, %v8371
      %v8420 = vmul.f32 %v8251, %v8372
      %v8421 = vmul.f32 %v8320, %v8373
      %v8422 = vmul.f32 %v8253, %v8374
      %v8423 = vmul.f32 %v8322, %v8375
      %v8424 = vmul.f32 %v8256, %v8376
      %v8425 = vmul.f32 %v8325, %v8377
      %v8426 = vmul.f32 %v8258, %v8378
      %v8427 = vmul.f32 %v8327, %v8379
      %v8428 = vmul.f32 %v8261, %v8380
      %v8429 = vmul.f32 %v8330, %v8381
      %v8430 = vmul.f32 %v8263, %v8382
      %v8431 = vmul.f32 %v8332, %v8383
      %v8432 = vmul.f32 %v8266, %v8384
      %v8433 = vmul.f32 %v8335, %v8385
      %v8434 = vmul.f32 %v8268, %v8386
      %v8435 = vmul.f32 %v8337, %v8387
      %v8436 = vmul.f32 %v8271, %v8388
      %v8437 = vmul.f32 %v8340, %v8389
      %v8438 = vmul.f32 %v8273, %v8390
      %v8439 = vmul.f32 %v8342, %v8391
      %v8440 = vmul.f32 %v8392, 0.044715
      %v8441 = vmul.f32 %v8393, 0.044715
      %v8442 = vmul.f32 %v8394, 0.044715
      %v8443 = vmul.f32 %v8395, 0.044715
      %v8444 = vmul.f32 %v8396, 0.044715
      %v8445 = vmul.f32 %v8397, 0.044715
      %v8446 = vmul.f32 %v8398, 0.044715
      %v8447 = vmul.f32 %v8399, 0.044715
      %v8448 = vmul.f32 %v8400, 0.044715
      %v8449 = vmul.f32 %v8401, 0.044715
      %v8450 = vmul.f32 %v8402, 0.044715
      %v8451 = vmul.f32 %v8403, 0.044715
      %v8452 = vmul.f32 %v8404, 0.044715
      %v8453 = vmul.f32 %v8405, 0.044715
      %v8454 = vmul.f32 %v8406, 0.044715
      %v8455 = vmul.f32 %v8407, 0.044715
      %v8456 = vmul.f32 %v8408, 0.044715
      %v8457 = vmul.f32 %v8409, 0.044715
      %v8458 = vmul.f32 %v8410, 0.044715
      %v8459 = vmul.f32 %v8411, 0.044715
      %v8460 = vmul.f32 %v8412, 0.044715
      %v8461 = vmul.f32 %v8413, 0.044715
      %v8462 = vmul.f32 %v8414, 0.044715
      %v8463 = vmul.f32 %v8415, 0.044715
      %v8464 = vmul.f32 %v8416, 0.044715
      %v8465 = vmul.f32 %v8417, 0.044715
      %v8466 = vmul.f32 %v8418, 0.044715
      %v8467 = vmul.f32 %v8419, 0.044715
      %v8468 = vmul.f32 %v8420, 0.044715
      %v8469 = vmul.f32 %v8421, 0.044715
      %v8470 = vmul.f32 %v8422, 0.044715
      %v8471 = vmul.f32 %v8423, 0.044715
      %v8472 = vmul.f32 %v8424, 0.044715
      %v8473 = vmul.f32 %v8425, 0.044715
      %v8474 = vmul.f32 %v8426, 0.044715
      %v8475 = vmul.f32 %v8427, 0.044715
      %v8476 = vmul.f32 %v8428, 0.044715
      %v8477 = vmul.f32 %v8429, 0.044715
      %v8478 = vmul.f32 %v8430, 0.044715
      %v8479 = vmul.f32 %v8431, 0.044715
      %v8480 = vmul.f32 %v8432, 0.044715
      %v8481 = vmul.f32 %v8433, 0.044715
      %v8482 = vmul.f32 %v8434, 0.044715
      %v8483 = vmul.f32 %v8435, 0.044715
      %v8484 = vmul.f32 %v8436, 0.044715
      %v8485 = vmul.f32 %v8437, 0.044715
      %v8486 = vmul.f32 %v8438, 0.044715
      %v8487 = vmul.f32 %v8439, 0.044715
      %v8488 = vadd.f32 %v8216, %v8440
      %v8489 = vadd.f32 %v8285, %v8441
      %v8490 = vadd.f32 %v8218, %v8442
      %v8491 = vadd.f32 %v8287, %v8443
      %v8492 = vadd.f32 %v8221, %v8444
      %v8493 = vadd.f32 %v8290, %v8445
      %v8494 = vadd.f32 %v8223, %v8446
      %v8495 = vadd.f32 %v8292, %v8447
      %v8496 = vadd.f32 %v8226, %v8448
      %v8497 = vadd.f32 %v8295, %v8449
      %v8498 = vadd.f32 %v8228, %v8450
      %v8499 = vadd.f32 %v8297, %v8451
      %v8500 = vadd.f32 %v8231, %v8452
      %v8501 = vadd.f32 %v8300, %v8453
      %v8502 = vadd.f32 %v8233, %v8454
      %v8503 = vadd.f32 %v8302, %v8455
      %v8504 = vadd.f32 %v8236, %v8456
      %v8505 = vadd.f32 %v8305, %v8457
      %v8506 = vadd.f32 %v8238, %v8458
      %v8507 = vadd.f32 %v8307, %v8459
      %v8508 = vadd.f32 %v8241, %v8460
      %v8509 = vadd.f32 %v8310, %v8461
      %v8510 = vadd.f32 %v8243, %v8462
      %v8511 = vadd.f32 %v8312, %v8463
      %v8512 = vadd.f32 %v8246, %v8464
      %v8513 = vadd.f32 %v8315, %v8465
      %v8514 = vadd.f32 %v8248, %v8466
      %v8515 = vadd.f32 %v8317, %v8467
      %v8516 = vadd.f32 %v8251, %v8468
      %v8517 = vadd.f32 %v8320, %v8469
      %v8518 = vadd.f32 %v8253, %v8470
      %v8519 = vadd.f32 %v8322, %v8471
      %v8520 = vadd.f32 %v8256, %v8472
      %v8521 = vadd.f32 %v8325, %v8473
      %v8522 = vadd.f32 %v8258, %v8474
      %v8523 = vadd.f32 %v8327, %v8475
      %v8524 = vadd.f32 %v8261, %v8476
      %v8525 = vadd.f32 %v8330, %v8477
      %v8526 = vadd.f32 %v8263, %v8478
      %v8527 = vadd.f32 %v8332, %v8479
      %v8528 = vadd.f32 %v8266, %v8480
      %v8529 = vadd.f32 %v8335, %v8481
      %v8530 = vadd.f32 %v8268, %v8482
      %v8531 = vadd.f32 %v8337, %v8483
      %v8532 = vadd.f32 %v8271, %v8484
      %v8533 = vadd.f32 %v8340, %v8485
      %v8534 = vadd.f32 %v8273, %v8486
      %v8535 = vadd.f32 %v8342, %v8487
      %v8536 = vmul.f32 %v8488, 0.7978846
      %v8537 = vmul.f32 %v8489, 0.7978846
      %v8538 = vmul.f32 %v8490, 0.7978846
      %v8539 = vmul.f32 %v8491, 0.7978846
      %v8540 = vmul.f32 %v8492, 0.7978846
      %v8541 = vmul.f32 %v8493, 0.7978846
      %v8542 = vmul.f32 %v8494, 0.7978846
      %v8543 = vmul.f32 %v8495, 0.7978846
      %v8544 = vmul.f32 %v8496, 0.7978846
      %v8545 = vmul.f32 %v8497, 0.7978846
      %v8546 = vmul.f32 %v8498, 0.7978846
      %v8547 = vmul.f32 %v8499, 0.7978846
      %v8548 = vmul.f32 %v8500, 0.7978846
      %v8549 = vmul.f32 %v8501, 0.7978846
      %v8550 = vmul.f32 %v8502, 0.7978846
      %v8551 = vmul.f32 %v8503, 0.7978846
      %v8552 = vmul.f32 %v8504, 0.7978846
      %v8553 = vmul.f32 %v8505, 0.7978846
      %v8554 = vmul.f32 %v8506, 0.7978846
      %v8555 = vmul.f32 %v8507, 0.7978846
      %v8556 = vmul.f32 %v8508, 0.7978846
      %v8557 = vmul.f32 %v8509, 0.7978846
      %v8558 = vmul.f32 %v8510, 0.7978846
      %v8559 = vmul.f32 %v8511, 0.7978846
      %v8560 = vmul.f32 %v8512, 0.7978846
      %v8561 = vmul.f32 %v8513, 0.7978846
      %v8562 = vmul.f32 %v8514, 0.7978846
      %v8563 = vmul.f32 %v8515, 0.7978846
      %v8564 = vmul.f32 %v8516, 0.7978846
      %v8565 = vmul.f32 %v8517, 0.7978846
      %v8566 = vmul.f32 %v8518, 0.7978846
      %v8567 = vmul.f32 %v8519, 0.7978846
      %v8568 = vmul.f32 %v8520, 0.7978846
      %v8569 = vmul.f32 %v8521, 0.7978846
      %v8570 = vmul.f32 %v8522, 0.7978846
      %v8571 = vmul.f32 %v8523, 0.7978846
      %v8572 = vmul.f32 %v8524, 0.7978846
      %v8573 = vmul.f32 %v8525, 0.7978846
      %v8574 = vmul.f32 %v8526, 0.7978846
      %v8575 = vmul.f32 %v8527, 0.7978846
      %v8576 = vmul.f32 %v8528, 0.7978846
      %v8577 = vmul.f32 %v8529, 0.7978846
      %v8578 = vmul.f32 %v8530, 0.7978846
      %v8579 = vmul.f32 %v8531, 0.7978846
      %v8580 = vmul.f32 %v8532, 0.7978846
      %v8581 = vmul.f32 %v8533, 0.7978846
      %v8582 = vmul.f32 %v8534, 0.7978846
      %v8583 = vmul.f32 %v8535, 0.7978846
      %v8584 = vtanh.pop %v8536
      %v8585 = vtanh.pop %v8537
      %v8586 = vtanh.pop %v8538
      %v8587 = vtanh.pop %v8539
      %v8588 = vtanh.pop %v8540
      %v8589 = vtanh.pop %v8541
      %v8590 = vtanh.pop %v8542
      %v8591 = vtanh.pop %v8543
      %v8592 = vtanh.pop %v8544
      %v8593 = vtanh.pop %v8545
      %v8594 = vtanh.pop %v8546
      %v8595 = vtanh.pop %v8547
      %v8596 = vtanh.pop %v8548
      %v8597 = vtanh.pop %v8549
      %v8598 = vtanh.pop %v8550
      %v8599 = vtanh.pop %v8551
      %v8600 = vtanh.pop %v8552
      %v8601 = vtanh.pop %v8553
      %v8602 = vtanh.pop %v8554
      %v8603 = vtanh.pop %v8555
      %v8604 = vtanh.pop %v8556
      %v8605 = vtanh.pop %v8557
      %v8606 = vtanh.pop %v8558
      %v8607 = vtanh.pop %v8559
      %v8608 = vtanh.pop %v8560
      %v8609 = vtanh.pop %v8561
      %v8610 = vtanh.pop %v8562
      %v8611 = vtanh.pop %v8563
      %v8612 = vtanh.pop %v8564
      %v8613 = vtanh.pop %v8565
      %v8614 = vtanh.pop %v8566
      %v8615 = vtanh.pop %v8567
      %v8616 = vtanh.pop %v8568
      %v8617 = vtanh.pop %v8569
      %v8618 = vtanh.pop %v8570
      %v8619 = vtanh.pop %v8571
      %v8620 = vtanh.pop %v8572
      %v8621 = vtanh.pop %v8573
      %v8622 = vtanh.pop %v8574
      %v8623 = vtanh.pop %v8575
      %v8624 = vtanh.pop %v8576
      %v8625 = vtanh.pop %v8577
      %v8626 = vtanh.pop %v8578
      %v8627 = vtanh.pop %v8579
      %v8628 = vtanh.pop %v8580
      %v8629 = vtanh.pop %v8581
      %v8630 = vtanh.pop %v8582
      %v8631 = vtanh.pop %v8583
      %v8632 = vadd.f32 %v8584, 1.0
      %v8633 = vadd.f32 %v8585, 1.0
      %v8634 = vadd.f32 %v8586, 1.0
      %v8635 = vadd.f32 %v8587, 1.0
      %v8636 = vadd.f32 %v8588, 1.0
      %v8637 = vadd.f32 %v8589, 1.0
      %v8638 = vadd.f32 %v8590, 1.0
      %v8639 = vadd.f32 %v8591, 1.0
      %v8640 = vadd.f32 %v8592, 1.0
      %v8641 = vadd.f32 %v8593, 1.0
      %v8642 = vadd.f32 %v8594, 1.0
      %v8643 = vadd.f32 %v8595, 1.0
      %v8644 = vadd.f32 %v8596, 1.0
      %v8645 = vadd.f32 %v8597, 1.0
      %v8646 = vadd.f32 %v8598, 1.0
      %v8647 = vadd.f32 %v8599, 1.0
      %v8648 = vadd.f32 %v8600, 1.0
      %v8649 = vadd.f32 %v8601, 1.0
      %v8650 = vadd.f32 %v8602, 1.0
      %v8651 = vadd.f32 %v8603, 1.0
      %v8652 = vadd.f32 %v8604, 1.0
      %v8653 = vadd.f32 %v8605, 1.0
      %v8654 = vadd.f32 %v8606, 1.0
      %v8655 = vadd.f32 %v8607, 1.0
      %v8656 = vadd.f32 %v8608, 1.0
      %v8657 = vadd.f32 %v8609, 1.0
      %v8658 = vadd.f32 %v8610, 1.0
      %v8659 = vadd.f32 %v8611, 1.0
      %v8660 = vadd.f32 %v8612, 1.0
      %v8661 = vadd.f32 %v8613, 1.0
      %v8662 = vadd.f32 %v8614, 1.0
      %v8663 = vadd.f32 %v8615, 1.0
      %v8664 = vadd.f32 %v8616, 1.0
      %v8665 = vadd.f32 %v8617, 1.0
      %v8666 = vadd.f32 %v8618, 1.0
      %v8667 = vadd.f32 %v8619, 1.0
      %v8668 = vadd.f32 %v8620, 1.0
      %v8669 = vadd.f32 %v8621, 1.0
      %v8670 = vadd.f32 %v8622, 1.0
      %v8671 = vadd.f32 %v8623, 1.0
      %v8672 = vadd.f32 %v8624, 1.0
      %v8673 = vadd.f32 %v8625, 1.0
      %v8674 = vadd.f32 %v8626, 1.0
      %v8675 = vadd.f32 %v8627, 1.0
      %v8676 = vadd.f32 %v8628, 1.0
      %v8677 = vadd.f32 %v8629, 1.0
      %v8678 = vadd.f32 %v8630, 1.0
      %v8679 = vadd.f32 %v8631, 1.0
      %v8680 = vmul.f32 %v8632, 0.5
      %v8681 = vmul.f32 %v8633, 0.5
      %v8682 = vmul.f32 %v8634, 0.5
      %v8683 = vmul.f32 %v8635, 0.5
      %v8684 = vmul.f32 %v8636, 0.5
      %v8685 = vmul.f32 %v8637, 0.5
      %v8686 = vmul.f32 %v8638, 0.5
      %v8687 = vmul.f32 %v8639, 0.5
      %v8688 = vmul.f32 %v8640, 0.5
      %v8689 = vmul.f32 %v8641, 0.5
      %v8690 = vmul.f32 %v8642, 0.5
      %v8691 = vmul.f32 %v8643, 0.5
      %v8692 = vmul.f32 %v8644, 0.5
      %v8693 = vmul.f32 %v8645, 0.5
      %v8694 = vmul.f32 %v8646, 0.5
      %v8695 = vmul.f32 %v8647, 0.5
      %v8696 = vmul.f32 %v8648, 0.5
      %v8697 = vmul.f32 %v8649, 0.5
      %v8698 = vmul.f32 %v8650, 0.5
      %v8699 = vmul.f32 %v8651, 0.5
      %v8700 = vmul.f32 %v8652, 0.5
      %v8701 = vmul.f32 %v8653, 0.5
      %v8702 = vmul.f32 %v8654, 0.5
      %v8703 = vmul.f32 %v8655, 0.5
      %v8704 = vmul.f32 %v8656, 0.5
      %v8705 = vmul.f32 %v8657, 0.5
      %v8706 = vmul.f32 %v8658, 0.5
      %v8707 = vmul.f32 %v8659, 0.5
      %v8708 = vmul.f32 %v8660, 0.5
      %v8709 = vmul.f32 %v8661, 0.5
      %v8710 = vmul.f32 %v8662, 0.5
      %v8711 = vmul.f32 %v8663, 0.5
      %v8712 = vmul.f32 %v8664, 0.5
      %v8713 = vmul.f32 %v8665, 0.5
      %v8714 = vmul.f32 %v8666, 0.5
      %v8715 = vmul.f32 %v8667, 0.5
      %v8716 = vmul.f32 %v8668, 0.5
      %v8717 = vmul.f32 %v8669, 0.5
      %v8718 = vmul.f32 %v8670, 0.5
      %v8719 = vmul.f32 %v8671, 0.5
      %v8720 = vmul.f32 %v8672, 0.5
      %v8721 = vmul.f32 %v8673, 0.5
      %v8722 = vmul.f32 %v8674, 0.5
      %v8723 = vmul.f32 %v8675, 0.5
      %v8724 = vmul.f32 %v8676, 0.5
      %v8725 = vmul.f32 %v8677, 0.5
      %v8726 = vmul.f32 %v8678, 0.5
      %v8727 = vmul.f32 %v8679, 0.5
      %v8728 = vmul.f32 %v8216, %v8680
      %v8729 = vmul.f32 %v8285, %v8681
      %v8730 = vmul.f32 %v8218, %v8682
      %v8731 = vmul.f32 %v8287, %v8683
      %v8732 = vmul.f32 %v8221, %v8684
      %v8733 = vmul.f32 %v8290, %v8685
      %v8734 = vmul.f32 %v8223, %v8686
      %v8735 = vmul.f32 %v8292, %v8687
      %v8736 = vmul.f32 %v8226, %v8688
      %v8737 = vmul.f32 %v8295, %v8689
      %v8738 = vmul.f32 %v8228, %v8690
      %v8739 = vmul.f32 %v8297, %v8691
      %v8740 = vmul.f32 %v8231, %v8692
      %v8741 = vmul.f32 %v8300, %v8693
      %v8742 = vmul.f32 %v8233, %v8694
      %v8743 = vmul.f32 %v8302, %v8695
      %v8744 = vmul.f32 %v8236, %v8696
      %v8745 = vmul.f32 %v8305, %v8697
      %v8746 = vmul.f32 %v8238, %v8698
      %v8747 = vmul.f32 %v8307, %v8699
      %v8748 = vmul.f32 %v8241, %v8700
      %v8749 = vmul.f32 %v8310, %v8701
      %v8750 = vmul.f32 %v8243, %v8702
      %v8751 = vmul.f32 %v8312, %v8703
      %v8752 = vmul.f32 %v8246, %v8704
      %v8753 = vmul.f32 %v8315, %v8705
      %v8754 = vmul.f32 %v8248, %v8706
      %v8755 = vmul.f32 %v8317, %v8707
      %v8756 = vmul.f32 %v8251, %v8708
      %v8757 = vmul.f32 %v8320, %v8709
      %v8758 = vmul.f32 %v8253, %v8710
      %v8759 = vmul.f32 %v8322, %v8711
      %v8760 = vmul.f32 %v8256, %v8712
      %v8761 = vmul.f32 %v8325, %v8713
      %v8762 = vmul.f32 %v8258, %v8714
      %v8763 = vmul.f32 %v8327, %v8715
      %v8764 = vmul.f32 %v8261, %v8716
      %v8765 = vmul.f32 %v8330, %v8717
      %v8766 = vmul.f32 %v8263, %v8718
      %v8767 = vmul.f32 %v8332, %v8719
      %v8768 = vmul.f32 %v8266, %v8720
      %v8769 = vmul.f32 %v8335, %v8721
      %v8770 = vmul.f32 %v8268, %v8722
      %v8771 = vmul.f32 %v8337, %v8723
      %v8772 = vmul.f32 %v8271, %v8724
      %v8773 = vmul.f32 %v8340, %v8725
      %v8774 = vmul.f32 %v8273, %v8726
      %v8775 = vmul.f32 %v8342, %v8727
      %v8776 = vmul.f32 %v8078, %v8728
      %v8777 = vmul.f32 %v8147, %v8729
      %v8778 = vmul.f32 %v8080, %v8730
      %v8779 = vmul.f32 %v8149, %v8731
      %v8780 = vmul.f32 %v8083, %v8732
      %v8781 = vmul.f32 %v8152, %v8733
      %v8782 = vmul.f32 %v8085, %v8734
      %v8783 = vmul.f32 %v8154, %v8735
      %v8784 = vmul.f32 %v8088, %v8736
      %v8785 = vmul.f32 %v8157, %v8737
      %v8786 = vmul.f32 %v8090, %v8738
      %v8787 = vmul.f32 %v8159, %v8739
      %v8788 = vmul.f32 %v8093, %v8740
      %v8789 = vmul.f32 %v8162, %v8741
      %v8790 = vmul.f32 %v8095, %v8742
      %v8791 = vmul.f32 %v8164, %v8743
      %v8792 = vmul.f32 %v8098, %v8744
      %v8793 = vmul.f32 %v8167, %v8745
      %v8794 = vmul.f32 %v8100, %v8746
      %v8795 = vmul.f32 %v8169, %v8747
      %v8796 = vmul.f32 %v8103, %v8748
      %v8797 = vmul.f32 %v8172, %v8749
      %v8798 = vmul.f32 %v8105, %v8750
      %v8799 = vmul.f32 %v8174, %v8751
      %v8800 = vmul.f32 %v8108, %v8752
      %v8801 = vmul.f32 %v8177, %v8753
      %v8802 = vmul.f32 %v8110, %v8754
      %v8803 = vmul.f32 %v8179, %v8755
      %v8804 = vmul.f32 %v8113, %v8756
      %v8805 = vmul.f32 %v8182, %v8757
      %v8806 = vmul.f32 %v8115, %v8758
      %v8807 = vmul.f32 %v8184, %v8759
      %v8808 = vmul.f32 %v8118, %v8760
      %v8809 = vmul.f32 %v8187, %v8761
      %v8810 = vmul.f32 %v8120, %v8762
      %v8811 = vmul.f32 %v8189, %v8763
      %v8812 = vmul.f32 %v8123, %v8764
      %v8813 = vmul.f32 %v8192, %v8765
      %v8814 = vmul.f32 %v8125, %v8766
      %v8815 = vmul.f32 %v8194, %v8767
      %v8816 = vmul.f32 %v8128, %v8768
      %v8817 = vmul.f32 %v8197, %v8769
      %v8818 = vmul.f32 %v8130, %v8770
      %v8819 = vmul.f32 %v8199, %v8771
      %v8820 = vmul.f32 %v8133, %v8772
      %v8821 = vmul.f32 %v8202, %v8773
      %v8822 = vmul.f32 %v8135, %v8774
      %v8823 = vmul.f32 %v8204, %v8775
      %v8824 = vpack.c.bf16 %v8778, %v8776
      %v8825 = vpack.c.bf16 %v8779, %v8777
      %v8826 = vpack.c.bf16 %v8782, %v8780
      %v8827 = vpack.c.bf16 %v8783, %v8781
      %v8828 = vpack.c.bf16 %v8786, %v8784
      %v8829 = vpack.c.bf16 %v8787, %v8785
      %v8830 = vpack.c.bf16 %v8790, %v8788
      %v8831 = vpack.c.bf16 %v8791, %v8789
      %v8832 = vpack.c.bf16 %v8794, %v8792
      %v8833 = vpack.c.bf16 %v8795, %v8793
      %v8834 = vpack.c.bf16 %v8798, %v8796
      %v8835 = vpack.c.bf16 %v8799, %v8797
      %v8836 = vpack.c.bf16 %v8802, %v8800
      %v8837 = vpack.c.bf16 %v8803, %v8801
      %v8838 = vpack.c.bf16 %v8806, %v8804
      %v8839 = vpack.c.bf16 %v8807, %v8805
      %v8840 = vpack.c.bf16 %v8810, %v8808
      %v8841 = vpack.c.bf16 %v8811, %v8809
      %v8842 = vpack.c.bf16 %v8814, %v8812
      %v8843 = vpack.c.bf16 %v8815, %v8813
      %v8844 = vpack.c.bf16 %v8818, %v8816
      %v8845 = vpack.c.bf16 %v8819, %v8817
      %v8846 = vpack.c.bf16 %v8822, %v8820
      %v8847 = vpack.c.bf16 %v8823, %v8821
      %v8848 = vld [vmem:[%s3] sm:$0xf]
      %v8849 = vld [vmem:[%s3 + $0x4] sm:$0xf]
      %v8850 = vld [vmem:[%s3 + $0x8] sm:$0xf]
      %v8851 = vld [vmem:[%s3 + $0xc] sm:$0xf]
      %v8852 = vld [vmem:[%s3 + $0x10] sm:$0xf]
      %v8853 = vld [vmem:[%s3 + $0x14] sm:$0xf]
      %v8854 = vld [vmem:[%s3 + $0x18] sm:$0xf]
      %v8855 = vld [vmem:[%s3 + $0x1c] sm:$0xf]
      %v8856 = vld [vmem:[%s3 + $0x20] sm:$0xf]
      %v8857 = vld [vmem:[%s3 + $0x24] sm:$0xf]
      %v8858 = vld [vmem:[%s3 + $0x28] sm:$0xf]
      %v8859 = vld [vmem:[%s3 + $0x2c] sm:$0xf]
      %v8860 = vld [vmem:[%s3 + $0x30] sm:$0xf]
      %v8861 = vld [vmem:[%s3 + $0x34] sm:$0xf]
      %v8862 = vld [vmem:[%s3 + $0x38] sm:$0xf]
      %v8863 = vld [vmem:[%s3 + $0x3c] sm:$0xf]
      %v8864 = vld [vmem:[%s3 + $0x40] sm:$0xf]
      %v8865 = vld [vmem:[%s3 + $0x44] sm:$0xf]
      %v8866 = vld [vmem:[%s3 + $0x48] sm:$0xf]
      %v8867 = vld [vmem:[%s3 + $0x4c] sm:$0xf]
      %v8868 = vld [vmem:[%s3 + $0x50] sm:$0xf]
      %v8869 = vld [vmem:[%s3 + $0x54] sm:$0xf]
      %v8870 = vld [vmem:[%s3 + $0x58] sm:$0xf]
      %v8871 = vld [vmem:[%s3 + $0x5c] sm:$0xf]
      %v8872 = vld [vmem:[%s3 + $0x60] sm:$0xf]
      %v8873 = vld [vmem:[%s3 + $0x64] sm:$0xf]
      %v8874 = vld [vmem:[%s3 + $0x68] sm:$0xf]
      %v8875 = vld [vmem:[%s3 + $0x6c] sm:$0xf]
      %v8876 = vld [vmem:[%s3 + $0x70] sm:$0xf]
      %v8877 = vld [vmem:[%s3 + $0x74] sm:$0xf]
      %v8878 = vld [vmem:[%s3 + $0x78] sm:$0xf]
      %v8879 = vld [vmem:[%s3 + $0x7c] sm:$0xf]
      %v8880 = vld [vmem:[%s4 + $0x2] sm:$0x1]
      %v8881 = vperm.slane %v8880, 0
      %v8914 = vunpack.c.l.b16 %v8848
      %v8915 = vunpack.c.l.b16 %v8849
      %v8916 = vunpack.c.l.b16 %v8850
      %v8917 = vunpack.c.l.b16 %v8851
      %v8918 = vunpack.c.l.b16 %v8852
      %v8919 = vunpack.c.l.b16 %v8853
      %v8920 = vunpack.c.l.b16 %v8854
      %v8921 = vunpack.c.l.b16 %v8855
      %v8922 = vunpack.c.l.b16 %v8856
      %v8923 = vunpack.c.l.b16 %v8857
      %v8924 = vunpack.c.l.b16 %v8858
      %v8925 = vunpack.c.l.b16 %v8859
      %v8926 = vunpack.c.l.b16 %v8860
      %v8927 = vunpack.c.l.b16 %v8861
      %v8928 = vunpack.c.l.b16 %v8862
      %v8929 = vunpack.c.l.b16 %v8863
      %v8930 = vunpack.c.l.b16 %v8864
      %v8931 = vunpack.c.l.b16 %v8865
      %v8932 = vunpack.c.l.b16 %v8866
      %v8933 = vunpack.c.l.b16 %v8867
      %v8934 = vunpack.c.l.b16 %v8868
      %v8935 = vunpack.c.l.b16 %v8869
      %v8936 = vunpack.c.l.b16 %v8870
      %v8937 = vunpack.c.l.b16 %v8871
      %v8938 = vunpack.c.l.b16 %v8872
      %v8939 = vunpack.c.l.b16 %v8873
      %v8940 = vunpack.c.l.b16 %v8874
      %v8941 = vunpack.c.l.b16 %v8875
      %v8942 = vunpack.c.l.b16 %v8876
      %v8943 = vunpack.c.l.b16 %v8877
      %v8944 = vunpack.c.l.b16 %v8878
      %v8945 = vunpack.c.l.b16 %v8879
      %v8946 = vpack.c.b16 %v8915, %v8914
      %v8947 = vpack.c.b16 %v8917, %v8916
      %v8948 = vpack.c.b16 %v8919, %v8918
      %v8949 = vpack.c.b16 %v8921, %v8920
      %v8950 = vpack.c.b16 %v8923, %v8922
      %v8951 = vpack.c.b16 %v8925, %v8924
      %v8952 = vpack.c.b16 %v8927, %v8926
      %v8953 = vpack.c.b16 %v8929, %v8928
      %v8954 = vpack.c.b16 %v8931, %v8930
      %v8955 = vpack.c.b16 %v8933, %v8932
      %v8956 = vpack.c.b16 %v8935, %v8934
      %v8957 = vpack.c.b16 %v8937, %v8936
      %v8958 = vpack.c.b16 %v8939, %v8938
      %v8959 = vpack.c.b16 %v8941, %v8940
      %v8960 = vpack.c.b16 %v8943, %v8942
      %v8961 = vpack.c.b16 %v8945, %v8944
      %8978 = vmatpush.bf16.msra.mxu0 %v8953
      %8979 = vmatpush.bf16.msra.mxu0 %v8952
      %8980 = vmatpush.bf16.msra.mxu0 %v8951
      %8981 = vmatpush.bf16.msra.mxu0 %v8950
      %8982 = vmatpush.bf16.msra.mxu0 %v8949
      %8983 = vmatpush.bf16.msra.mxu0 %v8948
      %8984 = vmatpush.bf16.msra.mxu0 %v8947
      %8985 = vmatpush.bf16.msra.mxu0 %v8946
      %8986 = vmatmul.bf16.gmra.mxu0 %v8824
      %v8987 = vpop.f32.mrf.mxu0
      %v8988 = vadd.f32 %v8881, %v8987
      %v8989 = vpop.f32.mrf.mxu0
      %v8990 = vadd.f32 %v8881, %v8989
      %8991 = vmatmul.bf16.gmra.mxu0 %v8826
      %v8992 = vpop.f32.mrf.mxu0
      %v8993 = vadd.f32 %v8881, %v8992
      %v8994 = vpop.f32.mrf.mxu0
      %v8995 = vadd.f32 %v8881, %v8994
      %8996 = vmatmul.bf16.gmra.mxu0 %v8828
      %v8997 = vpop.f32.mrf.mxu0
      %v8998 = vadd.f32 %v8881, %v8997
      %v8999 = vpop.f32.mrf.mxu0
      %v9000 = vadd.f32 %v8881, %v8999
      %9001 = vmatmul.bf16.gmra.mxu0 %v8830
      %v9002 = vpop.f32.mrf.mxu0
      %v9003 = vadd.f32 %v8881, %v9002
      %v9004 = vpop.f32.mrf.mxu0
      %v9005 = vadd.f32 %v8881, %v9004
      %9006 = vmatmul.bf16.gmra.mxu0 %v8832
      %v9007 = vpop.f32.mrf.mxu0
      %v9008 = vadd.f32 %v8881, %v9007
      %v9009 = vpop.f32.mrf.mxu0
      %v9010 = vadd.f32 %v8881, %v9009
      %9011 = vmatmul.bf16.gmra.mxu0 %v8834
      %v9012 = vpop.f32.mrf.mxu0
      %v9013 = vadd.f32 %v8881, %v9012
      %v9014 = vpop.f32.mrf.mxu0
      %v9015 = vadd.f32 %v8881, %v9014
      %9016 = vmatmul.bf16.gmra.mxu0 %v8836
      %v9017 = vpop.f32.mrf.mxu0
      %v9018 = vadd.f32 %v8881, %v9017
      %v9019 = vpop.f32.mrf.mxu0
      %v9020 = vadd.f32 %v8881, %v9019
      %9021 = vmatmul.bf16.gmra.mxu0 %v8838
      %v9022 = vpop.f32.mrf.mxu0
      %v9023 = vadd.f32 %v8881, %v9022
      %v9024 = vpop.f32.mrf.mxu0
      %v9025 = vadd.f32 %v8881, %v9024
      %9026 = vmatmul.bf16.gmra.mxu0 %v8840
      %v9027 = vpop.f32.mrf.mxu0
      %v9028 = vadd.f32 %v8881, %v9027
      %v9029 = vpop.f32.mrf.mxu0
      %v9030 = vadd.f32 %v8881, %v9029
      %9031 = vmatmul.bf16.gmra.mxu0 %v8842
      %v9032 = vpop.f32.mrf.mxu0
      %v9033 = vadd.f32 %v8881, %v9032
      %v9034 = vpop.f32.mrf.mxu0
      %v9035 = vadd.f32 %v8881, %v9034
      %9036 = vmatmul.bf16.gmra.mxu0 %v8844
      %v9037 = vpop.f32.mrf.mxu0
      %v9038 = vadd.f32 %v8881, %v9037
      %v9039 = vpop.f32.mrf.mxu0
      %v9040 = vadd.f32 %v8881, %v9039
      %9041 = vmatmul.bf16.gmra.mxu0 %v8846
      %v9042 = vpop.f32.mrf.mxu0
      %v9043 = vadd.f32 %v8881, %v9042
      %v9044 = vpop.f32.mrf.mxu0
      %v9045 = vadd.f32 %v8881, %v9044
      %9046 = vdwg.mxu0
      %9047 = vmatpush.bf16.msra.mxu0 %v8961
      %9048 = vmatpush.bf16.msra.mxu0 %v8960
      %9049 = vmatpush.bf16.msra.mxu0 %v8959
      %9050 = vmatpush.bf16.msra.mxu0 %v8958
      %9051 = vmatpush.bf16.msra.mxu0 %v8957
      %9052 = vmatpush.bf16.msra.mxu0 %v8956
      %9053 = vmatpush.bf16.msra.mxu0 %v8955
      %9054 = vmatpush.bf16.msra.mxu0 %v8954
      %9055 = vmatmul.bf16.gmra.mxu0 %v8825
      %v9056 = vpop.f32.mrf.mxu0
      %v9057 = vadd.f32 %v8988, %v9056
      %v9058 = vpop.f32.mrf.mxu0
      %v9059 = vadd.f32 %v8990, %v9058
      %9060 = vmatmul.bf16.gmra.mxu0 %v8827
      %v9061 = vpop.f32.mrf.mxu0
      %v9062 = vadd.f32 %v8993, %v9061
      %v9063 = vpop.f32.mrf.mxu0
      %v9064 = vadd.f32 %v8995, %v9063
      %9065 = vmatmul.bf16.gmra.mxu0 %v8829
      %v9066 = vpop.f32.mrf.mxu0
      %v9067 = vadd.f32 %v8998, %v9066
      %v9068 = vpop.f32.mrf.mxu0
      %v9069 = vadd.f32 %v9000, %v9068
      %9070 = vmatmul.bf16.gmra.mxu0 %v8831
      %v9071 = vpop.f32.mrf.mxu0
      %v9072 = vadd.f32 %v9003, %v9071
      %v9073 = vpop.f32.mrf.mxu0
      %v9074 = vadd.f32 %v9005, %v9073
      %9075 = vmatmul.bf16.gmra.mxu0 %v8833
      %v9076 = vpop.f32.mrf.mxu0
      %v9077 = vadd.f32 %v9008, %v9076
      %v9078 = vpop.f32.mrf.mxu0
      %v9079 = vadd.f32 %v9010, %v9078
      %9080 = vmatmul.bf16.gmra.mxu0 %v8835
      %v9081 = vpop.f32.mrf.mxu0
      %v9082 = vadd.f32 %v9013, %v9081
      %v9083 = vpop.f32.mrf.mxu0
      %v9084 = vadd.f32 %v9015, %v9083
      %9085 = vmatmul.bf16.gmra.mxu0 %v8837
      %v9086 = vpop.f32.mrf.mxu0
      %v9087 = vadd.f32 %v9018, %v9086
      %v9088 = vpop.f32.mrf.mxu0
      %v9089 = vadd.f32 %v9020, %v9088
      %9090 = vmatmul.bf16.gmra.mxu0 %v8839
      %v9091 = vpop.f32.mrf.mxu0
      %v9092 = vadd.f32 %v9023, %v9091
      %v9093 = vpop.f32.mrf.mxu0
      %v9094 = vadd.f32 %v9025, %v9093
      %9095 = vmatmul.bf16.gmra.mxu0 %v8841
      %v9096 = vpop.f32.mrf.mxu0
      %v9097 = vadd.f32 %v9028, %v9096
      %v9098 = vpop.f32.mrf.mxu0
      %v9099 = vadd.f32 %v9030, %v9098
      %9100 = vmatmul.bf16.gmra.mxu0 %v8843
      %v9101 = vpop.f32.mrf.mxu0
      %v9102 = vadd.f32 %v9033, %v9101
      %v9103 = vpop.f32.mrf.mxu0
      %v9104 = vadd.f32 %v9035, %v9103
      %9105 = vmatmul.bf16.gmra.mxu0 %v8845
      %v9106 = vpop.f32.mrf.mxu0
      %v9107 = vadd.f32 %v9038, %v9106
      %v9108 = vpop.f32.mrf.mxu0
      %v9109 = vadd.f32 %v9040, %v9108
      %9110 = vmatmul.bf16.gmra.mxu0 %v8847
      %v9111 = vpop.f32.mrf.mxu0
      %v9112 = vadd.f32 %v9043, %v9111
      %v9113 = vpop.f32.mrf.mxu0
      %v9114 = vadd.f32 %v9045, %v9113
      %9115 = vdwg.mxu0
      %9116 = vst [vmem:[%s226] sm:$0xff] %v9057
      %9117 = vst [vmem:[%s226 + $0x8] sm:$0xff] %v9059
      %9118 = vst [vmem:[%s226 + $0x10] sm:$0xff] %v9062
      %9119 = vst [vmem:[%s226 + $0x18] sm:$0xff] %v9064
      %9120 = vst [vmem:[%s226 + $0x20] sm:$0xff] %v9067
      %9121 = vst [vmem:[%s226 + $0x28] sm:$0xff] %v9069
      %9122 = vst [vmem:[%s226 + $0x30] sm:$0xff] %v9072
      %9123 = vst [vmem:[%s226 + $0x38] sm:$0xff] %v9074
      %9124 = vst [vmem:[%s226 + $0x40] sm:$0xff] %v9077
      %9125 = vst [vmem:[%s226 + $0x48] sm:$0xff] %v9079
      %9126 = vst [vmem:[%s226 + $0x50] sm:$0xff] %v9082
      %9127 = vst [vmem:[%s226 + $0x58] sm:$0xff] %v9084
      %9128 = vst [vmem:[%s226 + $0x60] sm:$0xff] %v9087
      %9129 = vst [vmem:[%s226 + $0x68] sm:$0xff] %v9089
      %9130 = vst [vmem:[%s226 + $0x70] sm:$0xff] %v9092
      %9131 = vst [vmem:[%s226 + $0x78] sm:$0xff] %v9094
      %9132 = vst [vmem:[%s226 + $0x80] sm:$0xff] %v9097
      %9133 = vst [vmem:[%s226 + $0x88] sm:$0xff] %v9099
      %9134 = vst [vmem:[%s226 + $0x90] sm:$0xff] %v9102
      %9135 = vst [vmem:[%s226 + $0x98] sm:$0xff] %v9104
      %9136 = vst [vmem:[%s226 + $0xa0] sm:$0xff] %v9107
      %9137 = vst [vmem:[%s226 + $0xa8] sm:$0xff] %v9109
      %9138 = vst [vmem:[%s226 + $0xb0] sm:$0xff] %v9112
      %9139 = vst [vmem:[%s226 + $0xb8] sm:$0xff] %v9114
      %s9140 = smul.u32 24, %s16
      %p9141 = scmp.lt.s32.totalorder %s9140, 47
      %s9142 = scalar_select %p9141, %s9140, 47
      %s9143 = smul.addr %s9142, 8
      %s9144 = scalar_lea.vmem %s5, %s9143
      // Predicated region
      $region41: #{fn.1} parent=39 // pred_check
        %p9145 = pneg %p144
      $region42: #{fn.1} parent=39 // pred_check_branch
        %9147 = sbr.rel (%p9145) target = $region44
      $region43: #{fn.1} parent=39 // pred_region
        %s9148 = smul.u32 24, %s16
      $region44: #{fn.1} parent=39 // pred_fallthru
        _
    $region40: #{fn.1} parent=5 // pred_fallthru
      _
    %p9149 = scmp.le.s32.totalorder 2, %s11
    // Predicated region
    $region45: #{fn.1} parent=5 // pred_check
      %p9150 = pneg %p9149
    $region46: #{fn.1} parent=5 // pred_check_branch
      %9152 = sbr.rel (%p9150) target = $region48
    $region47: #{fn.1} parent=5 // pred_region
      %s9153 = ssub.s32 %s11, 2
      // Predicated region
      $region49: #{fn.1} parent=47 // pred_check
        %p9154 = pneg %p150
      $region50: #{fn.1} parent=47 // pred_check_branch
        %9156 = sbr.rel (%p9154) target = $region52
      $region51: #{fn.1} parent=47 // pred_region
        %s9157 = smul.u32 24, %s17
        %p9158 = scmp.lt.s32.totalorder %s9157, 47
        %s9159 = scalar_select %p9158, %s9157, 47
        %s9160 = smul.addr %s9159, 8
        %s9161 = scalar_lea.vmem %s5, %s9160
      $region52: #{fn.1} parent=47 // pred_fallthru
        _
    $region48: #{fn.1} parent=5 // pred_fallthru
      _
  $region6: #{fn.1} parent=0 // loop_footer
    %s15 = sadd.s32 1, %s11
  $region7: #{fn.1} parent=0 // loop_footer_branch
    %10 = sbr.rel target = $region3
  $region8: #{fn.1} parent=0 // loop_exit
    _

</llo_original>
